<compile_context>
chip_gen: v5e
topology: v5e:2x2
jax: 0.10.0
libtpu: 0.0.40
codegen_flags: <defaults>
</compile_context>

<pallas_src>
import math

import jax
import jax.numpy as jnp
from jax.experimental import pallas as pl
from jax.experimental.pallas import tpu as pltpu

NUM_CLASSES = 1000


def _round_up(x, m):
    return ((x + m - 1) // m) * m


# ----------------------------- Pallas kernel --------------------------------

def make_stage_kernel(C, Cin, Cout, has_stem, has_fca):
    """One fused encoder stage: a chain of dsc layers, two per grid step.

    Optionally fuses the stem conv at k == 0 and the fca head at k == last.
    Scratch: two (1, H+2, Wp, C) bf16 buffers with a permanent zero halo.
    """

    def kernel(*args):
        i = 0
        if has_stem:
            p_ref, sw_ref, ssh_ref, sa_ref = args[i:i + 4]; i += 4
        else:
            x0_ref = args[i]; i += 1
        dw_ref, pw_ref, sh_ref, alpha_ref = args[i:i + 4]; i += 4
        if has_fca:
            fcw_ref, cw_ref, fsh_ref, fa_ref = args[i:i + 4]; i += 4
        o_ref, abuf, bbuf = args[i:i + 3]

        k = pl.program_id(1)
        nsteps = pl.num_programs(1)
        H, W = o_ref.shape[1], o_ref.shape[2]
        Hp, Wp = abuf.shape[1], abuf.shape[2]

        # ---- init: zero only the halo strips, load this sample into abuf ----
        @pl.when(k == 0)
        def _init():
            zrow = jnp.zeros((1, 1, Wp, C), abuf.dtype)
            zcol = jnp.zeros((1, Hp, 1, C), abuf.dtype)
            for buf in (abuf, bbuf):           # bbuf interior is overwritten
                buf[:, 0:1, :, :] = zrow       # before every read -> halo only
                buf[:, H + 1:H + 2, :, :] = zrow
                buf[:, :, 0:1, :] = zcol
                buf[:, :, W + 1:W + 2, :] = zcol
            if has_stem:
                # stem 3x3/s2 conv as (H*W, 27) @ (27, C) + folded-BN + PReLU
                p = p_ref[...].reshape(H * W, p_ref.shape[-1])
                y = jnp.dot(p, sw_ref[...], preferred_element_type=jnp.float32)
                y = y + ssh_ref[...]
                a = sa_ref[0]
                y = jnp.where(y >= 0, y, a * y)
                abuf[:, 1:H + 1, 1:W + 1, :] = (
                    y.reshape(1, H, W, C).astype(abuf.dtype))
            else:
                abuf[:, 1:H + 1, 1:W + 1, :Cin] = x0_ref[...].astype(abuf.dtype)
                if Cin < C:   # clear channel-pad lanes (stale from previous n)
                    abuf[:, 1:H + 1, 1:W + 1, Cin:] = jnp.zeros(
                        (1, H, W, C - Cin), abuf.dtype)

        # ---- two dsc layers per grid step ----
        def dsc_layer(src_ref, j):
            dw = dw_ref[0, j].astype(jnp.float32)                  # (9, C)
            acc = jnp.zeros((1, H, W, C), jnp.float32)
            # kx outermost: 3 sublane-unaligned loads per layer instead of 9;
            # the ky slice is a major-axis slice (free).
            for kx in range(3):
                slab = src_ref[:, :, kx:kx + W, :].astype(jnp.float32)  # (1,Hp,W,C)
                for ky in range(3):
                    t = ky * 3 + kx
                    tap = dw[t:t + 1, :].reshape(1, 1, 1, C)
                    acc = acc + slab[:, ky:ky + H, :, :] * tap
            # pointwise 1x1 (BN scale pre-folded): bf16 MXU matmul, f32 acc
            y = jnp.dot(acc.reshape(H * W, C).astype(jnp.bfloat16), pw_ref[0, j],
                        preferred_element_type=jnp.float32)         # (H*W, C)
            y = y + sh_ref[0, j]                                     # folded BN shift
            a = alpha_ref[2 * k + j]
            y = jnp.where(y >= 0, y, a * y)                          # PReLU
            return y.reshape(1, H, W, C)

        y1 = dsc_layer(abuf, 0)
        bbuf[:, 1:H + 1, 1:W + 1, :] = y1.astype(bbuf.dtype)
        y2 = dsc_layer(bbuf, 1)

        @pl.when(k + 1 < nsteps)                 # skip the dead last writeback
        def _carry():
            abuf[:, 1:H + 1, 1:W + 1, :] = y2.astype(abuf.dtype)

        @pl.when(k == nsteps - 1)
        def _finalize():
            if has_fca:
                x = y2                                               # (1,H,W,C) f32
                pooled = jnp.mean(x.reshape(1, H * W, C), axis=1)    # GAP -> (1, C)
                t = jnp.dot(pooled.astype(jnp.bfloat16), fcw_ref[...],
                            preferred_element_type=jnp.float32)      # FC
                att = jnp.dot(t.astype(jnp.bfloat16), cw_ref[...],
                              preferred_element_type=jnp.float32)    # 1x1 conv
                att = att + fsh_ref[...]                             # folded BN shift
                att = jnp.where(att >= 0, att, fa_ref[0] * att)      # bna PReLU
                y = x * att.reshape(1, 1, 1, C)                      # expand_as(x) * x
                y = jnp.where(y >= 0, y, fa_ref[1] * y)              # out PReLU
                o_ref[...] = y.astype(o_ref.dtype)
            else:
                if Cout < C:
                    o_ref[...] = y2[:, :, :, :Cout].astype(o_ref.dtype)
                else:
                    o_ref[...] = y2.astype(o_ref.dtype)

    return kernel


# ------------------------------ wrapper --------------------------------------

def stage_apply(x_in, stage, out_dtype):
    dw, pw, sh, alphas = stage["chain"]
    steps, _, _, C = dw.shape
    has_stem = stage["stem"] is not None
    has_fca = stage["fca"] is not None
    N, H, W = x_in.shape[0], x_in.shape[1], x_in.shape[2]
    Cin = C if has_stem else x_in.shape[3]
    Cout = C
    Hp, Wp = H + 2, _round_up(W + 2, 8)     # keep scratch sublane dim tile-aligned

    def nbytes(a):
        return math.prod(a.shape) * a.dtype.itemsize

    inputs, in_specs, const_bytes = [], [], 0
    if has_stem:
        sw, ssh, sa = stage["stem"]
        K = sw.shape[0]
        inputs += [x_in, sw, ssh, sa]
        in_specs += [
            pl.BlockSpec((1, H, W, K), lambda n, k: (n, 0, 0, 0)),
            # TODO(synk): mark constant-index weights pl.Buffered(1) once
            # single-buffer pipeline_mode is validated on all target chips.
            pl.BlockSpec((K, C), lambda n, k: (0, 0)),
            pl.BlockSpec((1, C), lambda n, k: (0, 0)),
            pl.BlockSpec(memory_space=pltpu.MemorySpace.SMEM),
        ]
        const_bytes += nbytes(sw) + nbytes(ssh)
    else:
        inputs += [x_in]
        in_specs += [pl.BlockSpec((1, H, W, Cin), lambda n, k: (n, 0, 0, 0))]

    inputs += [dw, pw, sh, alphas]
    in_specs += [
        pl.BlockSpec((1, 2, 9, C), lambda n, k: (k, 0, 0, 0)),   # depthwise taps
        pl.BlockSpec((1, 2, C, C), lambda n, k: (k, 0, 0, 0)),   # pointwise (BN folded)
        pl.BlockSpec((1, 2, 1, C), lambda n, k: (k, 0, 0, 0)),   # BN shift
        pl.BlockSpec(memory_space=pltpu.MemorySpace.SMEM),        # PReLU slopes
    ]

    if has_fca:
        fcw, cw, fsh, fa = stage["fca"]
        NC = fcw.shape[1]
        inputs += [fcw, cw, fsh, fa]
        in_specs += [
            pl.BlockSpec((C, NC), lambda n, k: (0, 0)),
            pl.BlockSpec((NC, C), lambda n, k: (0, 0)),
            pl.BlockSpec((1, C), lambda n, k: (0, 0)),
            pl.BlockSpec(memory_space=pltpu.MemorySpace.SMEM),
        ]
        const_bytes += nbytes(fcw) + nbytes(cw) + nbytes(fsh)

    # Explicit scoped-VMEM budget: 2 bf16 ping-pong buffers + double-buffered
    # streamed per-step weights + resident in/out blocks + constants, 2x headroom.
    est = 2 * Hp * Wp * C * 2
    est += 2 * (nbytes(dw) + nbytes(pw) + nbytes(sh)) // steps
    est += 2 * (nbytes(x_in) // N)
    est += 2 * H * W * Cout * jnp.dtype(out_dtype).itemsize
    est += 2 * const_bytes
    vmem_limit = int(min(max(2 * est, 16 * 1024 * 1024), 48 * 1024 * 1024))

    kernel = make_stage_kernel(C, Cin, Cout, has_stem, has_fca)
    return pl.pallas_call(
        kernel,
        out_shape=jax.ShapeDtypeStruct((N, H, W, Cout), out_dtype),
        grid=(N, steps),
        in_specs=in_specs,
        out_specs=pl.BlockSpec((1, H, W, Cout), lambda n, k: (n, 0, 0, 0)),
        scratch_shapes=[pltpu.VMEM((1, Hp, Wp, C), jnp.bfloat16),
                        pltpu.VMEM((1, Hp, Wp, C), jnp.bfloat16)],
        # N axis parallel (megacore / v7x 2 TCs); layer axis is a sequential
        # dependence chain -> "arbitrary".
        compiler_params=pltpu.CompilerParams(
            dimension_semantics=("parallel", "arbitrary"),
            vmem_limit_bytes=vmem_limit),
    )(*inputs)


def im2col_3x3_s2(x):
    """x: (N, H, W, 3) -> (N, H//2, W//2, 27); patch order (ky, kx, c)."""
    # TODO(synk): at real DFANet resolutions fold the im2col into the stage-1
    # kernel (3 shifted row-slab loads) instead of materializing 9x input bytes.
    N, H, W, C = x.shape
    Ho, Wo = H // 2, W // 2
    xp = jnp.pad(x, ((0, 0), (1, 1), (1, 1), (0, 0)))
    cols = []
    for ky in range(3):
        for kx in range(3):
            cols.append(xp[:, ky:ky + 2 * Ho:2, kx:kx + 2 * Wo:2, :])
    return jnp.concatenate(cols, axis=-1)


# ------------------------------ parameters ----------------------------------

def _folded_bn(key, c, eps=1e-5):
    k1, k2, k3, k4 = jax.random.split(key, 4)
    gamma = jax.random.uniform(k1, (c,), jnp.float32, 0.8, 1.2)
    beta = 0.1 * jax.random.normal(k2, (c,), jnp.float32)
    mean = 0.1 * jax.random.normal(k3, (c,), jnp.float32)
    var = jax.random.uniform(k4, (c,), jnp.float32, 0.5, 1.5)
    scale = gamma / jnp.sqrt(var + eps)
    shift = beta - mean * scale
    return scale, shift


def _make_chain(keys, plan, C):
    dws, pws, shs, alphas = [], [], [], []
    for cin, cout in plan:
        dw = jax.random.normal(next(keys), (9, cin), jnp.float32) / 3.0
        pw = jax.random.normal(next(keys), (cin, cout), jnp.float32) / jnp.sqrt(float(cin))
        scale, shift = _folded_bn(next(keys), cout)
        pw = pw * scale[None, :]                                  # fold BN scale
        dws.append(jnp.pad(dw, ((0, 0), (0, C - cin))))
        pws.append(jnp.pad(pw, ((0, C - cin), (0, C - cout))).astype(jnp.bfloat16))
        shs.append(jnp.pad(shift, (0, C - cout)))
        alphas.append(0.25)
    L = len(plan)
    assert L % 2 == 0
    return (jnp.stack(dws).reshape(L // 2, 2, 9, C),
            jnp.stack(pws).reshape(L // 2, 2, C, C),
            jnp.stack(shs).reshape(L // 2, 2, 1, C),
            jnp.asarray(alphas, jnp.float32))


def build_params(key):
    keys = iter(jax.random.split(key, 512))
    C2, C3, C4 = 128, 128, 192        # stage-specific channel padding

    # stem: Conv2d(3, 8, 3, stride=2, pad=1, bias=False) + BN + PReLU
    w = jax.random.normal(next(keys), (3, 3, 3, 8), jnp.float32) / jnp.sqrt(27.0)
    scale, shift = _folded_bn(next(keys), 8)
    w27 = w.reshape(27, 8) * scale[None, :]
    stem = (jnp.pad(w27, ((0, 0), (0, C2 - 8))).astype(jnp.bfloat16),
            jnp.pad(shift, (0, C2 - 8)).reshape(1, C2),
            jnp.full((1,), 0.25, jnp.float32))

    def blocks(cins, mid, cout):
        p = []
        for cin in cins:
            p += [(cin, mid), (mid, mid), (mid, cout)]
        return p

    plan2 = blocks((8, 48, 48, 48), 12, 48)                 # enc2: 12 layers
    plan3 = blocks((48, 96, 96, 96, 96, 96), 24, 96)        # enc3: 18 layers
    plan4 = blocks((96, 192, 192, 192), 48, 192)            # enc4: 12 layers

    chain2 = _make_chain(keys, plan2, C2)
    chain3 = _make_chain(keys, plan3, C3)
    chain4 = _make_chain(keys, plan4, C4)

    # fca: Linear(192,1000,bias=False), Conv2d(1000,192,1,bias=False), BN, 2x PReLU
    Cf, NC = 192, NUM_CLASSES
    fcw = (jax.random.normal(next(keys), (Cf, NC), jnp.float32)
           / jnp.sqrt(float(Cf))).astype(jnp.bfloat16)
    cw = jax.random.normal(next(keys), (NC, Cf), jnp.float32) / jnp.sqrt(float(NC))
    scale, shift = _folded_bn(next(keys), Cf)
    cw = (cw * scale[None, :]).astype(jnp.bfloat16)          # fold BN scale
    fca = (fcw, cw, shift.reshape(1, Cf), jnp.asarray([0.25, 0.25], jnp.float32))

    return [
        dict(stem=stem, fca=None, chain=chain2),             # stem + enc2
        dict(stem=None, fca=None, chain=chain3),             # enc3
        dict(stem=None, fca=fca, chain=chain4),              # enc4 + fca
    ]


# ------------------------------ forward -------------------------------------

def xception_a_forward(x_nchw, stages):
    x = jnp.transpose(x_nchw, (0, 2, 3, 1))                  # NCHW -> NHWC
    x = im2col_3x3_s2(x).astype(jnp.bfloat16)                # stem patches (Cin=3)
    x = stage_apply(x, stages[0], jnp.bfloat16)              # stem + enc2
    x = stage_apply(x, stages[1], jnp.bfloat16)              # enc3
    x = stage_apply(x, stages[2], jnp.float32)               # enc4 + fca head
    return jnp.transpose(x, (0, 3, 1, 2))                    # NHWC -> NCHW


if __name__ == "__main__":
    key = jax.random.PRNGKey(0)
    kx, kp = jax.random.split(key)
    x = jax.random.normal(kx, (2, 3, 16, 16), jnp.float32)   # NCHW like PyTorch
    stages = build_params(kp)
    fwd = jax.jit(xception_a_forward)
    out = jax.block_until_ready(fwd(x, stages))
    assert out.shape == (2, 192, 8, 8), out.shape
    assert bool(jnp.all(jnp.isfinite(out)))
    print("KERNEL_OK")
</pallas_src>

<mosaic_0001>
module attributes {stable_mosaic.version = 11 : i64} {
  func.func @kernel(%arg0: i32, %arg1: i32, %arg2: memref<1x8x8x128xbf16, #tpu.memory_space<vmem>>, %arg3: memref<1x2x9x128xf32, #tpu.memory_space<vmem>>, %arg4: memref<1x2x128x128xbf16, #tpu.memory_space<vmem>>, %arg5: memref<1x2x1x128xf32, #tpu.memory_space<vmem>>, %arg6: memref<18xf32, #tpu.memory_space<smem>>, %arg7: memref<1x8x8x128xbf16, #tpu.memory_space<vmem>>, %arg8: memref<1x10x16x128xbf16, #tpu.memory_space<vmem>>, %arg9: memref<1x10x16x128xbf16, #tpu.memory_space<vmem>>) attributes {dimension_semantics = [#tpu.dimension_semantics<parallel>, #tpu.dimension_semantics<arbitrary>], iteration_bounds = array<i64: 2, 9>, scalar_prefetch = 0 : i64, scratch_operands = 2 : i64, tpu.core_type = #tpu.core_type<tc>, window_params = [{transform_indices = @transform_0, window_bounds = array<i64: 1, 8, 8, 128>}, {transform_indices = @transform_1, window_bounds = array<i64: 1, 2, 9, 128>}, {transform_indices = @transform_2, window_bounds = array<i64: 1, 2, 128, 128>}, {transform_indices = @transform_3, window_bounds = array<i64: 1, 2, 1, 128>}, {transform_indices = @transform_4, window_bounds = array<i64: 18>}, {transform_indices = @transform_5, window_bounds = array<i64: 1, 8, 8, 128>}]} {
    %c0_i32 = arith.constant 0 : i32
    %0 = arith.cmpi eq, %arg1, %c0_i32 : i32
    %1 = arith.extui %0 : i1 to i32
    %c0_i32_0 = arith.constant 0 : i32
    %2 = arith.cmpi ne, %1, %c0_i32_0 : i32
    scf.if %2 {
      %cst_60 = arith.constant 0.000000e+00 : bf16
      %176 = vector.broadcast %cst_60 : bf16 to vector<1x1x16x128xbf16>
      %cst_61 = arith.constant 0.000000e+00 : bf16
      %177 = vector.broadcast %cst_61 : bf16 to vector<1x10x1x128xbf16>
      %c0_62 = arith.constant 0 : index
      %c0_63 = arith.constant 0 : index
      %c0_64 = arith.constant 0 : index
      %c0_65 = arith.constant 0 : index
      %178 = vector.load %arg8[%c0_62, %c0_63, %c0_64, %c0_65] : memref<1x10x16x128xbf16, #tpu.memory_space<vmem>>, vector<1x1x16x128xbf16>
      tpu.vector_store %arg8[%c0_62, %c0_63, %c0_64, %c0_65], %176 {strides = array<i32>} : memref<1x10x16x128xbf16, #tpu.memory_space<vmem>>, vector<1x1x16x128xbf16>,
      %c0_66 = arith.constant 0 : index
      %c9 = arith.constant 9 : index
      %c0_67 = arith.constant 0 : index
      %c0_68 = arith.constant 0 : index
      %179 = vector.load %arg8[%c0_66, %c9, %c0_67, %c0_68] : memref<1x10x16x128xbf16, #tpu.memory_space<vmem>>, vector<1x1x16x128xbf16>
      tpu.vector_store %arg8[%c0_66, %c9, %c0_67, %c0_68], %176 {strides = array<i32>} : memref<1x10x16x128xbf16, #tpu.memory_space<vmem>>, vector<1x1x16x128xbf16>,
      %c0_69 = arith.constant 0 : index
      %c0_70 = arith.constant 0 : index
      %c0_71 = arith.constant 0 : index
      %c0_72 = arith.constant 0 : index
      %180 = vector.load %arg8[%c0_69, %c0_70, %c0_71, %c0_72] : memref<1x10x16x128xbf16, #tpu.memory_space<vmem>>, vector<1x10x1x128xbf16>
      tpu.vector_store %arg8[%c0_69, %c0_70, %c0_71, %c0_72], %177 {strides = array<i32>} : memref<1x10x16x128xbf16, #tpu.memory_space<vmem>>, vector<1x10x1x128xbf16>,
      %c0_73 = arith.constant 0 : index
      %c0_74 = arith.constant 0 : index
      %c9_75 = arith.constant 9 : index
      %c0_76 = arith.constant 0 : index
      %181 = vector.load %arg8[%c0_73, %c0_74, %c9_75, %c0_76] : memref<1x10x16x128xbf16, #tpu.memory_space<vmem>>, vector<1x10x1x128xbf16>
      tpu.vector_store %arg8[%c0_73, %c0_74, %c9_75, %c0_76], %177 {strides = array<i32>} : memref<1x10x16x128xbf16, #tpu.memory_space<vmem>>, vector<1x10x1x128xbf16>,
      %c0_77 = arith.constant 0 : index
      %c0_78 = arith.constant 0 : index
      %c0_79 = arith.constant 0 : index
      %c0_80 = arith.constant 0 : index
      %182 = vector.load %arg9[%c0_77, %c0_78, %c0_79, %c0_80] : memref<1x10x16x128xbf16, #tpu.memory_space<vmem>>, vector<1x1x16x128xbf16>
      tpu.vector_store %arg9[%c0_77, %c0_78, %c0_79, %c0_80], %176 {strides = array<i32>} : memref<1x10x16x128xbf16, #tpu.memory_space<vmem>>, vector<1x1x16x128xbf16>,
      %c0_81 = arith.constant 0 : index
      %c9_82 = arith.constant 9 : index
      %c0_83 = arith.constant 0 : index
      %c0_84 = arith.constant 0 : index
      %183 = vector.load %arg9[%c0_81, %c9_82, %c0_83, %c0_84] : memref<1x10x16x128xbf16, #tpu.memory_space<vmem>>, vector<1x1x16x128xbf16>
      tpu.vector_store %arg9[%c0_81, %c9_82, %c0_83, %c0_84], %176 {strides = array<i32>} : memref<1x10x16x128xbf16, #tpu.memory_space<vmem>>, vector<1x1x16x128xbf16>,
      %c0_85 = arith.constant 0 : index
      %c0_86 = arith.constant 0 : index
      %c0_87 = arith.constant 0 : index
      %c0_88 = arith.constant 0 : index
      %184 = vector.load %arg9[%c0_85, %c0_86, %c0_87, %c0_88] : memref<1x10x16x128xbf16, #tpu.memory_space<vmem>>, vector<1x10x1x128xbf16>
      tpu.vector_store %arg9[%c0_85, %c0_86, %c0_87, %c0_88], %177 {strides = array<i32>} : memref<1x10x16x128xbf16, #tpu.memory_space<vmem>>, vector<1x10x1x128xbf16>,
      %c0_89 = arith.constant 0 : index
      %c0_90 = arith.constant 0 : index
      %c9_91 = arith.constant 9 : index
      %c0_92 = arith.constant 0 : index
      %185 = vector.load %arg9[%c0_89, %c0_90, %c9_91, %c0_92] : memref<1x10x16x128xbf16, #tpu.memory_space<vmem>>, vector<1x10x1x128xbf16>
      tpu.vector_store %arg9[%c0_89, %c0_90, %c9_91, %c0_92], %177 {strides = array<i32>} : memref<1x10x16x128xbf16, #tpu.memory_space<vmem>>, vector<1x10x1x128xbf16>,
      %c0_93 = arith.constant 0 : index
      %c0_94 = arith.constant 0 : index
      %c0_95 = arith.constant 0 : index
      %c0_96 = arith.constant 0 : index
      %186 = vector.load %arg2[%c0_93, %c0_94, %c0_95, %c0_96] : memref<1x8x8x128xbf16, #tpu.memory_space<vmem>>, vector<1x8x8x128xbf16>
      %c0_97 = arith.constant 0 : index
      %c1_98 = arith.constant 1 : index
      %c1_99 = arith.constant 1 : index
      %c0_100 = arith.constant 0 : index
      %187 = vector.load %arg8[%c0_97, %c1_98, %c1_99, %c0_100] : memref<1x10x16x128xbf16, #tpu.memory_space<vmem>>, vector<1x8x8x128xbf16>
      tpu.vector_store %arg8[%c0_97, %c1_98, %c1_99, %c0_100], %186 {strides = array<i32>} : memref<1x10x16x128xbf16, #tpu.memory_space<vmem>>, vector<1x8x8x128xbf16>,
    } else {
    }
    %c0 = arith.constant 0 : index
    %c0_1 = arith.constant 0 : index
    %c0_2 = arith.constant 0 : index
    %c0_3 = arith.constant 0 : index
    %3 = vector.load %arg3[%c0, %c0_1, %c0_2, %c0_3] : memref<1x2x9x128xf32, #tpu.memory_space<vmem>>, vector<1x1x9x128xf32>
    %4 = vector.shape_cast %3 : vector<1x1x9x128xf32> to vector<9x128xf32>
    %cst = arith.constant 0.000000e+00 : f32
    %5 = vector.broadcast %cst : f32 to vector<1x8x8x128xf32>
    %c0_4 = arith.constant 0 : index
    %c0_5 = arith.constant 0 : index
    %c0_6 = arith.constant 0 : index
    %c0_7 = arith.constant 0 : index
    %6 = vector.load %arg8[%c0_4, %c0_5, %c0_6, %c0_7] : memref<1x10x16x128xbf16, #tpu.memory_space<vmem>>, vector<1x10x8x128xbf16>
    %7 = arith.extf %6 : vector<1x10x8x128xbf16> to vector<1x10x8x128xf32>
    %8 = vector.extract_strided_slice %4 {offsets = [0, 0], sizes = [1, 128], strides = [1, 1]} : vector<9x128xf32> to vector<1x128xf32>
    %9 = vector.shape_cast %8 : vector<1x128xf32> to vector<1x1x1x128xf32>
    %10 = vector.extract_strided_slice %7 {offsets = [0, 0, 0, 0], sizes = [1, 8, 8, 128], strides = [1, 1, 1, 1]} : vector<1x10x8x128xf32> to vector<1x8x8x128xf32>
    %11 = vector.broadcast %9 : vector<1x1x1x128xf32> to vector<1x8x8x128xf32>
    %12 = arith.mulf %10, %11 : vector<1x8x8x128xf32>
    %13 = arith.addf %5, %12 : vector<1x8x8x128xf32>
    %14 = vector.extract_strided_slice %4 {offsets = [3, 0], sizes = [1, 128], strides = [1, 1]} : vector<9x128xf32> to vector<1x128xf32>
    %15 = vector.shape_cast %14 : vector<1x128xf32> to vector<1x1x1x128xf32>
    %16 = vector.extract_strided_slice %7 {offsets = [0, 1, 0, 0], sizes = [1, 8, 8, 128], strides = [1, 1, 1, 1]} : vector<1x10x8x128xf32> to vector<1x8x8x128xf32>
    %17 = vector.broadcast %15 : vector<1x1x1x128xf32> to vector<1x8x8x128xf32>
    %18 = arith.mulf %16, %17 : vector<1x8x8x128xf32>
    %19 = arith.addf %13, %18 : vector<1x8x8x128xf32>
    %20 = vector.extract_strided_slice %4 {offsets = [6, 0], sizes = [1, 128], strides = [1, 1]} : vector<9x128xf32> to vector<1x128xf32>
    %21 = vector.shape_cast %20 : vector<1x128xf32> to vector<1x1x1x128xf32>
    %22 = vector.extract_strided_slice %7 {offsets = [0, 2, 0, 0], sizes = [1, 8, 8, 128], strides = [1, 1, 1, 1]} : vector<1x10x8x128xf32> to vector<1x8x8x128xf32>
    %23 = vector.broadcast %21 : vector<1x1x1x128xf32> to vector<1x8x8x128xf32>
    %24 = arith.mulf %22, %23 : vector<1x8x8x128xf32>
    %25 = arith.addf %19, %24 : vector<1x8x8x128xf32>
    %c0_8 = arith.constant 0 : index
    %c0_9 = arith.constant 0 : index
    %c1 = arith.constant 1 : index
    %c0_10 = arith.constant 0 : index
    %26 = vector.load %arg8[%c0_8, %c0_9, %c1, %c0_10] : memref<1x10x16x128xbf16, #tpu.memory_space<vmem>>, vector<1x10x8x128xbf16>
    %27 = arith.extf %26 : vector<1x10x8x128xbf16> to vector<1x10x8x128xf32>
    %28 = vector.extract_strided_slice %4 {offsets = [1, 0], sizes = [1, 128], strides = [1, 1]} : vector<9x128xf32> to vector<1x128xf32>
    %29 = vector.shape_cast %28 : vector<1x128xf32> to vector<1x1x1x128xf32>
    %30 = vector.extract_strided_slice %27 {offsets = [0, 0, 0, 0], sizes = [1, 8, 8, 128], strides = [1, 1, 1, 1]} : vector<1x10x8x128xf32> to vector<1x8x8x128xf32>
    %31 = vector.broadcast %29 : vector<1x1x1x128xf32> to vector<1x8x8x128xf32>
    %32 = arith.mulf %30, %31 : vector<1x8x8x128xf32>
    %33 = arith.addf %25, %32 : vector<1x8x8x128xf32>
    %34 = vector.extract_strided_slice %4 {offsets = [4, 0], sizes = [1, 128], strides = [1, 1]} : vector<9x128xf32> to vector<1x128xf32>
    %35 = vector.shape_cast %34 : vector<1x128xf32> to vector<1x1x1x128xf32>
    %36 = vector.extract_strided_slice %27 {offsets = [0, 1, 0, 0], sizes = [1, 8, 8, 128], strides = [1, 1, 1, 1]} : vector<1x10x8x128xf32> to vector<1x8x8x128xf32>
    %37 = vector.broadcast %35 : vector<1x1x1x128xf32> to vector<1x8x8x128xf32>
    %38 = arith.mulf %36, %37 : vector<1x8x8x128xf32>
    %39 = arith.addf %33, %38 : vector<1x8x8x128xf32>
    %40 = vector.extract_strided_slice %4 {offsets = [7, 0], sizes = [1, 128], strides = [1, 1]} : vector<9x128xf32> to vector<1x128xf32>
    %41 = vector.shape_cast %40 : vector<1x128xf32> to vector<1x1x1x128xf32>
    %42 = vector.extract_strided_slice %27 {offsets = [0, 2, 0, 0], sizes = [1, 8, 8, 128], strides = [1, 1, 1, 1]} : vector<1x10x8x128xf32> to vector<1x8x8x128xf32>
    %43 = vector.broadcast %41 : vector<1x1x1x128xf32> to vector<1x8x8x128xf32>
    %44 = arith.mulf %42, %43 : vector<1x8x8x128xf32>
    %45 = arith.addf %39, %44 : vector<1x8x8x128xf32>
    %c0_11 = arith.constant 0 : index
    %c0_12 = arith.constant 0 : index
    %c2 = arith.constant 2 : index
    %c0_13 = arith.constant 0 : index
    %46 = vector.load %arg8[%c0_11, %c0_12, %c2, %c0_13] : memref<1x10x16x128xbf16, #tpu.memory_space<vmem>>, vector<1x10x8x128xbf16>
    %47 = arith.extf %46 : vector<1x10x8x128xbf16> to vector<1x10x8x128xf32>
    %48 = vector.extract_strided_slice %4 {offsets = [2, 0], sizes = [1, 128], strides = [1, 1]} : vector<9x128xf32> to vector<1x128xf32>
    %49 = vector.shape_cast %48 : vector<1x128xf32> to vector<1x1x1x128xf32>
    %50 = vector.extract_strided_slice %47 {offsets = [0, 0, 0, 0], sizes = [1, 8, 8, 128], strides = [1, 1, 1, 1]} : vector<1x10x8x128xf32> to vector<1x8x8x128xf32>
    %51 = vector.broadcast %49 : vector<1x1x1x128xf32> to vector<1x8x8x128xf32>
    %52 = arith.mulf %50, %51 : vector<1x8x8x128xf32>
    %53 = arith.addf %45, %52 : vector<1x8x8x128xf32>
    %54 = vector.extract_strided_slice %4 {offsets = [5, 0], sizes = [1, 128], strides = [1, 1]} : vector<9x128xf32> to vector<1x128xf32>
    %55 = vector.shape_cast %54 : vector<1x128xf32> to vector<1x1x1x128xf32>
    %56 = vector.extract_strided_slice %47 {offsets = [0, 1, 0, 0], sizes = [1, 8, 8, 128], strides = [1, 1, 1, 1]} : vector<1x10x8x128xf32> to vector<1x8x8x128xf32>
    %57 = vector.broadcast %55 : vector<1x1x1x128xf32> to vector<1x8x8x128xf32>
    %58 = arith.mulf %56, %57 : vector<1x8x8x128xf32>
    %59 = arith.addf %53, %58 : vector<1x8x8x128xf32>
    %60 = vector.extract_strided_slice %4 {offsets = [8, 0], sizes = [1, 128], strides = [1, 1]} : vector<9x128xf32> to vector<1x128xf32>
    %61 = vector.shape_cast %60 : vector<1x128xf32> to vector<1x1x1x128xf32>
    %62 = vector.extract_strided_slice %47 {offsets = [0, 2, 0, 0], sizes = [1, 8, 8, 128], strides = [1, 1, 1, 1]} : vector<1x10x8x128xf32> to vector<1x8x8x128xf32>
    %63 = vector.broadcast %61 : vector<1x1x1x128xf32> to vector<1x8x8x128xf32>
    %64 = arith.mulf %62, %63 : vector<1x8x8x128xf32>
    %65 = arith.addf %59, %64 : vector<1x8x8x128xf32>
    %66 = vector.shape_cast %65 : vector<1x8x8x128xf32> to vector<64x128xf32>
    %67 = arith.truncf %66 : vector<64x128xf32> to vector<64x128xbf16>
    %c0_14 = arith.constant 0 : index
    %c0_15 = arith.constant 0 : index
    %c0_16 = arith.constant 0 : index
    %c0_17 = arith.constant 0 : index
    %68 = vector.load %arg4[%c0_14, %c0_15, %c0_16, %c0_17] : memref<1x2x128x128xbf16, #tpu.memory_space<vmem>>, vector<1x1x128x128xbf16>
    %69 = vector.shape_cast %68 : vector<1x1x128x128xbf16> to vector<128x128xbf16>
    %cst_18 = arith.constant dense<0.000000e+00> : vector<64x128xf32>
    %70 = tpu.matmul %67, %69, %cst_18 {dimension_numbers = #tpu.dot_dimension_numbers<[1], [0], [0], [1], [0, 0, 1, 1], [], []>} : vector<64x128xbf16>, vector<128x128xbf16>, vector<64x128xf32> -> vector<64x128xf32>
    %c0_19 = arith.constant 0 : index
    %c0_20 = arith.constant 0 : index
    %c0_21 = arith.constant 0 : index
    %c0_22 = arith.constant 0 : index
    %71 = vector.load %arg5[%c0_19, %c0_20, %c0_21, %c0_22] : memref<1x2x1x128xf32, #tpu.memory_space<vmem>>, vector<1x1x1x128xf32>
    %72 = vector.shape_cast %71 : vector<1x1x1x128xf32> to vector<1x128xf32>
    %73 = vector.broadcast %72 : vector<1x128xf32> to vector<64x128xf32>
    %74 = arith.addf %70, %73 : vector<64x128xf32>
    %c2_i32 = arith.constant 2 : i32
    %75 = arith.muli %c2_i32, %arg1 : i32
    %c0_i32_23 = arith.constant 0 : i32
    %76 = arith.addi %75, %c0_i32_23 : i32
    %77 = arith.index_cast %76 : i32 to index
    %78 = memref.load %arg6[%77] : memref<18xf32, #tpu.memory_space<smem>>
    %cst_24 = arith.constant 0.000000e+00 : f32
    %79 = vector.broadcast %cst_24 : f32 to vector<64x128xf32>
    %80 = arith.cmpf oge, %74, %79 : vector<64x128xf32>
    %81 = vector.broadcast %78 : f32 to vector<64x128xf32>
    %82 = arith.mulf %81, %74 : vector<64x128xf32>
    %83 = arith.select %80, %74, %82 : vector<64x128xi1>, vector<64x128xf32>
    %84 = vector.shape_cast %83 : vector<64x128xf32> to vector<1x8x8x128xf32>
    %85 = arith.truncf %84 : vector<1x8x8x128xf32> to vector<1x8x8x128xbf16>
    %c0_25 = arith.constant 0 : index
    %c1_26 = arith.constant 1 : index
    %c1_27 = arith.constant 1 : index
    %c0_28 = arith.constant 0 : index
    %86 = vector.load %arg9[%c0_25, %c1_26, %c1_27, %c0_28] : memref<1x10x16x128xbf16, #tpu.memory_space<vmem>>, vector<1x8x8x128xbf16>
    tpu.vector_store %arg9[%c0_25, %c1_26, %c1_27, %c0_28], %85 {strides = array<i32>} : memref<1x10x16x128xbf16, #tpu.memory_space<vmem>>, vector<1x8x8x128xbf16>,
    %c0_29 = arith.constant 0 : index
    %c1_30 = arith.constant 1 : index
    %c0_31 = arith.constant 0 : index
    %c0_32 = arith.constant 0 : index
    %87 = vector.load %arg3[%c0_29, %c1_30, %c0_31, %c0_32] : memref<1x2x9x128xf32, #tpu.memory_space<vmem>>, vector<1x1x9x128xf32>
    %88 = vector.shape_cast %87 : vector<1x1x9x128xf32> to vector<9x128xf32>
    %cst_33 = arith.constant 0.000000e+00 : f32
    %89 = vector.broadcast %cst_33 : f32 to vector<1x8x8x128xf32>
    %c0_34 = arith.constant 0 : index
    %c0_35 = arith.constant 0 : index
    %c0_36 = arith.constant 0 : index
    %c0_37 = arith.constant 0 : index
    %90 = vector.load %arg9[%c0_34, %c0_35, %c0_36, %c0_37] : memref<1x10x16x128xbf16, #tpu.memory_space<vmem>>, vector<1x10x8x128xbf16>
    %91 = arith.extf %90 : vector<1x10x8x128xbf16> to vector<1x10x8x128xf32>
    %92 = vector.extract_strided_slice %88 {offsets = [0, 0], sizes = [1, 128], strides = [1, 1]} : vector<9x128xf32> to vector<1x128xf32>
    %93 = vector.shape_cast %92 : vector<1x128xf32> to vector<1x1x1x128xf32>
    %94 = vector.extract_strided_slice %91 {offsets = [0, 0, 0, 0], sizes = [1, 8, 8, 128], strides = [1, 1, 1, 1]} : vector<1x10x8x128xf32> to vector<1x8x8x128xf32>
    %95 = vector.broadcast %93 : vector<1x1x1x128xf32> to vector<1x8x8x128xf32>
    %96 = arith.mulf %94, %95 : vector<1x8x8x128xf32>
    %97 = arith.addf %89, %96 : vector<1x8x8x128xf32>
    %98 = vector.extract_strided_slice %88 {offsets = [3, 0], sizes = [1, 128], strides = [1, 1]} : vector<9x128xf32> to vector<1x128xf32>
    %99 = vector.shape_cast %98 : vector<1x128xf32> to vector<1x1x1x128xf32>
    %100 = vector.extract_strided_slice %91 {offsets = [0, 1, 0, 0], sizes = [1, 8, 8, 128], strides = [1, 1, 1, 1]} : vector<1x10x8x128xf32> to vector<1x8x8x128xf32>
    %101 = vector.broadcast %99 : vector<1x1x1x128xf32> to vector<1x8x8x128xf32>
    %102 = arith.mulf %100, %101 : vector<1x8x8x128xf32>
    %103 = arith.addf %97, %102 : vector<1x8x8x128xf32>
    %104 = vector.extract_strided_slice %88 {offsets = [6, 0], sizes = [1, 128], strides = [1, 1]} : vector<9x128xf32> to vector<1x128xf32>
    %105 = vector.shape_cast %104 : vector<1x128xf32> to vector<1x1x1x128xf32>
    %106 = vector.extract_strided_slice %91 {offsets = [0, 2, 0, 0], sizes = [1, 8, 8, 128], strides = [1, 1, 1, 1]} : vector<1x10x8x128xf32> to vector<1x8x8x128xf32>
    %107 = vector.broadcast %105 : vector<1x1x1x128xf32> to vector<1x8x8x128xf32>
    %108 = arith.mulf %106, %107 : vector<1x8x8x128xf32>
    %109 = arith.addf %103, %108 : vector<1x8x8x128xf32>
    %c0_38 = arith.constant 0 : index
    %c0_39 = arith.constant 0 : index
    %c1_40 = arith.constant 1 : index
    %c0_41 = arith.constant 0 : index
    %110 = vector.load %arg9[%c0_38, %c0_39, %c1_40, %c0_41] : memref<1x10x16x128xbf16, #tpu.memory_space<vmem>>, vector<1x10x8x128xbf16>
    %111 = arith.extf %110 : vector<1x10x8x128xbf16> to vector<1x10x8x128xf32>
    %112 = vector.extract_strided_slice %88 {offsets = [1, 0], sizes = [1, 128], strides = [1, 1]} : vector<9x128xf32> to vector<1x128xf32>
    %113 = vector.shape_cast %112 : vector<1x128xf32> to vector<1x1x1x128xf32>
    %114 = vector.extract_strided_slice %111 {offsets = [0, 0, 0, 0], sizes = [1, 8, 8, 128], strides = [1, 1, 1, 1]} : vector<1x10x8x128xf32> to vector<1x8x8x128xf32>
    %115 = vector.broadcast %113 : vector<1x1x1x128xf32> to vector<1x8x8x128xf32>
    %116 = arith.mulf %114, %115 : vector<1x8x8x128xf32>
    %117 = arith.addf %109, %116 : vector<1x8x8x128xf32>
    %118 = vector.extract_strided_slice %88 {offsets = [4, 0], sizes = [1, 128], strides = [1, 1]} : vector<9x128xf32> to vector<1x128xf32>
    %119 = vector.shape_cast %118 : vector<1x128xf32> to vector<1x1x1x128xf32>
    %120 = vector.extract_strided_slice %111 {offsets = [0, 1, 0, 0], sizes = [1, 8, 8, 128], strides = [1, 1, 1, 1]} : vector<1x10x8x128xf32> to vector<1x8x8x128xf32>
    %121 = vector.broadcast %119 : vector<1x1x1x128xf32> to vector<1x8x8x128xf32>
    %122 = arith.mulf %120, %121 : vector<1x8x8x128xf32>
    %123 = arith.addf %117, %122 : vector<1x8x8x128xf32>
    %124 = vector.extract_strided_slice %88 {offsets = [7, 0], sizes = [1, 128], strides = [1, 1]} : vector<9x128xf32> to vector<1x128xf32>
    %125 = vector.shape_cast %124 : vector<1x128xf32> to vector<1x1x1x128xf32>
    %126 = vector.extract_strided_slice %111 {offsets = [0, 2, 0, 0], sizes = [1, 8, 8, 128], strides = [1, 1, 1, 1]} : vector<1x10x8x128xf32> to vector<1x8x8x128xf32>
    %127 = vector.broadcast %125 : vector<1x1x1x128xf32> to vector<1x8x8x128xf32>
    %128 = arith.mulf %126, %127 : vector<1x8x8x128xf32>
    %129 = arith.addf %123, %128 : vector<1x8x8x128xf32>
    %c0_42 = arith.constant 0 : index
    %c0_43 = arith.constant 0 : index
    %c2_44 = arith.constant 2 : index
    %c0_45 = arith.constant 0 : index
    %130 = vector.load %arg9[%c0_42, %c0_43, %c2_44, %c0_45] : memref<1x10x16x128xbf16, #tpu.memory_space<vmem>>, vector<1x10x8x128xbf16>
    %131 = arith.extf %130 : vector<1x10x8x128xbf16> to vector<1x10x8x128xf32>
    %132 = vector.extract_strided_slice %88 {offsets = [2, 0], sizes = [1, 128], strides = [1, 1]} : vector<9x128xf32> to vector<1x128xf32>
    %133 = vector.shape_cast %132 : vector<1x128xf32> to vector<1x1x1x128xf32>
    %134 = vector.extract_strided_slice %131 {offsets = [0, 0, 0, 0], sizes = [1, 8, 8, 128], strides = [1, 1, 1, 1]} : vector<1x10x8x128xf32> to vector<1x8x8x128xf32>
    %135 = vector.broadcast %133 : vector<1x1x1x128xf32> to vector<1x8x8x128xf32>
    %136 = arith.mulf %134, %135 : vector<1x8x8x128xf32>
    %137 = arith.addf %129, %136 : vector<1x8x8x128xf32>
    %138 = vector.extract_strided_slice %88 {offsets = [5, 0], sizes = [1, 128], strides = [1, 1]} : vector<9x128xf32> to vector<1x128xf32>
    %139 = vector.shape_cast %138 : vector<1x128xf32> to vector<1x1x1x128xf32>
    %140 = vector.extract_strided_slice %131 {offsets = [0, 1, 0, 0], sizes = [1, 8, 8, 128], strides = [1, 1, 1, 1]} : vector<1x10x8x128xf32> to vector<1x8x8x128xf32>
    %141 = vector.broadcast %139 : vector<1x1x1x128xf32> to vector<1x8x8x128xf32>
    %142 = arith.mulf %140, %141 : vector<1x8x8x128xf32>
    %143 = arith.addf %137, %142 : vector<1x8x8x128xf32>
    %144 = vector.extract_strided_slice %88 {offsets = [8, 0], sizes = [1, 128], strides = [1, 1]} : vector<9x128xf32> to vector<1x128xf32>
    %145 = vector.shape_cast %144 : vector<1x128xf32> to vector<1x1x1x128xf32>
    %146 = vector.extract_strided_slice %131 {offsets = [0, 2, 0, 0], sizes = [1, 8, 8, 128], strides = [1, 1, 1, 1]} : vector<1x10x8x128xf32> to vector<1x8x8x128xf32>
    %147 = vector.broadcast %145 : vector<1x1x1x128xf32> to vector<1x8x8x128xf32>
    %148 = arith.mulf %146, %147 : vector<1x8x8x128xf32>
    %149 = arith.addf %143, %148 : vector<1x8x8x128xf32>
    %150 = vector.shape_cast %149 : vector<1x8x8x128xf32> to vector<64x128xf32>
    %151 = arith.truncf %150 : vector<64x128xf32> to vector<64x128xbf16>
    %c0_46 = arith.constant 0 : index
    %c1_47 = arith.constant 1 : index
    %c0_48 = arith.constant 0 : index
    %c0_49 = arith.constant 0 : index
    %152 = vector.load %arg4[%c0_46, %c1_47, %c0_48, %c0_49] : memref<1x2x128x128xbf16, #tpu.memory_space<vmem>>, vector<1x1x128x128xbf16>
    %153 = vector.shape_cast %152 : vector<1x1x128x128xbf16> to vector<128x128xbf16>
    %cst_50 = arith.constant dense<0.000000e+00> : vector<64x128xf32>
    %154 = tpu.matmul %151, %153, %cst_50 {dimension_numbers = #tpu.dot_dimension_numbers<[1], [0], [0], [1], [0, 0, 1, 1], [], []>} : vector<64x128xbf16>, vector<128x128xbf16>, vector<64x128xf32> -> vector<64x128xf32>
    %c0_51 = arith.constant 0 : index
    %c1_52 = arith.constant 1 : index
    %c0_53 = arith.constant 0 : index
    %c0_54 = arith.constant 0 : index
    %155 = vector.load %arg5[%c0_51, %c1_52, %c0_53, %c0_54] : memref<1x2x1x128xf32, #tpu.memory_space<vmem>>, vector<1x1x1x128xf32>
    %156 = vector.shape_cast %155 : vector<1x1x1x128xf32> to vector<1x128xf32>
    %157 = vector.broadcast %156 : vector<1x128xf32> to vector<64x128xf32>
    %158 = arith.addf %154, %157 : vector<64x128xf32>
    %c2_i32_55 = arith.constant 2 : i32
    %159 = arith.muli %c2_i32_55, %arg1 : i32
    %c1_i32 = arith.constant 1 : i32
    %160 = arith.addi %159, %c1_i32 : i32
    %161 = arith.index_cast %160 : i32 to index
    %162 = memref.load %arg6[%161] : memref<18xf32, #tpu.memory_space<smem>>
    %cst_56 = arith.constant 0.000000e+00 : f32
    %163 = vector.broadcast %cst_56 : f32 to vector<64x128xf32>
    %164 = arith.cmpf oge, %158, %163 : vector<64x128xf32>
    %165 = vector.broadcast %162 : f32 to vector<64x128xf32>
    %166 = arith.mulf %165, %158 : vector<64x128xf32>
    %167 = arith.select %164, %158, %166 : vector<64x128xi1>, vector<64x128xf32>
    %168 = vector.shape_cast %167 : vector<64x128xf32> to vector<1x8x8x128xf32>
    %c1_i32_57 = arith.constant 1 : i32
    %169 = arith.addi %arg1, %c1_i32_57 : i32
    %c9_i32 = arith.constant 9 : i32
    %170 = arith.cmpi slt, %169, %c9_i32 : i32
    %171 = arith.extui %170 : i1 to i32
    %c0_i32_58 = arith.constant 0 : i32
    %172 = arith.cmpi ne, %171, %c0_i32_58 : i32
    scf.if %172 {
      %176 = arith.truncf %168 : vector<1x8x8x128xf32> to vector<1x8x8x128xbf16>
      %c0_60 = arith.constant 0 : index
      %c1_61 = arith.constant 1 : index
      %c1_62 = arith.constant 1 : index
      %c0_63 = arith.constant 0 : index
      %177 = vector.load %arg8[%c0_60, %c1_61, %c1_62, %c0_63] : memref<1x10x16x128xbf16, #tpu.memory_space<vmem>>, vector<1x8x8x128xbf16>
      tpu.vector_store %arg8[%c0_60, %c1_61, %c1_62, %c0_63], %176 {strides = array<i32>} : memref<1x10x16x128xbf16, #tpu.memory_space<vmem>>, vector<1x8x8x128xbf16>,
    } else {
    }
    %c8_i32 = arith.constant 8 : i32
    %173 = arith.cmpi eq, %arg1, %c8_i32 : i32
    %174 = arith.extui %173 : i1 to i32
    %c0_i32_59 = arith.constant 0 : i32
    %175 = arith.cmpi ne, %174, %c0_i32_59 : i32
    scf.if %175 {
      %176 = arith.truncf %168 : vector<1x8x8x128xf32> to vector<1x8x8x128xbf16>
      %c0_60 = arith.constant 0 : index
      %c0_61 = arith.constant 0 : index
      %c0_62 = arith.constant 0 : index
      %c0_63 = arith.constant 0 : index
      %177 = vector.load %arg7[%c0_60, %c0_61, %c0_62, %c0_63] : memref<1x8x8x128xbf16, #tpu.memory_space<vmem>>, vector<1x8x8x128xbf16>
      tpu.vector_store %arg7[%c0_60, %c0_61, %c0_62, %c0_63], %176 {strides = array<i32>} : memref<1x8x8x128xbf16, #tpu.memory_space<vmem>>, vector<1x8x8x128xbf16>,
    } else {
    }
    return
  }
  func.func @transform_0(%arg0: i32, %arg1: i32) -> (i32, i32, i32, i32) {
    %c0_i32 = arith.constant 0 : i32
    %c0_i32_0 = arith.constant 0 : i32
    %c0_i32_1 = arith.constant 0 : i32
    %c0_i32_2 = arith.constant 0 : i32
    return %arg0, %c0_i32, %c0_i32_0, %c0_i32_1 : i32, i32, i32, i32
  }
  func.func @transform_1(%arg0: i32, %arg1: i32) -> (i32, i32, i32, i32) {
    %c0_i32 = arith.constant 0 : i32
    %c0_i32_0 = arith.constant 0 : i32
    %c0_i32_1 = arith.constant 0 : i32
    %c0_i32_2 = arith.constant 0 : i32
    return %arg1, %c0_i32, %c0_i32_0, %c0_i32_1 : i32, i32, i32, i32
  }
  func.func @transform_2(%arg0: i32, %arg1: i32) -> (i32, i32, i32, i32) {
    %c0_i32 = arith.constant 0 : i32
    %c0_i32_0 = arith.constant 0 : i32
    %c0_i32_1 = arith.constant 0 : i32
    %c0_i32_2 = arith.constant 0 : i32
    return %arg1, %c0_i32, %c0_i32_0, %c0_i32_1 : i32, i32, i32, i32
  }
  func.func @transform_3(%arg0: i32, %arg1: i32) -> (i32, i32, i32, i32) {
    %c0_i32 = arith.constant 0 : i32
    %c0_i32_0 = arith.constant 0 : i32
    %c0_i32_1 = arith.constant 0 : i32
    %c0_i32_2 = arith.constant 0 : i32
    return %arg1, %c0_i32, %c0_i32_0, %c0_i32_1 : i32, i32, i32, i32
  }
  func.func @transform_4(%arg0: i32, %arg1: i32) -> i32 {
    %c0_i32 = arith.constant 0 : i32
    %c0_i32_0 = arith.constant 0 : i32
    return %c0_i32 : i32
  }
  func.func @transform_5(%arg0: i32, %arg1: i32) -> (i32, i32, i32, i32) {
    %c0_i32 = arith.constant 0 : i32
    %c0_i32_0 = arith.constant 0 : i32
    %c0_i32_1 = arith.constant 0 : i32
    %c0_i32_2 = arith.constant 0 : i32
    return %arg0, %c0_i32, %c0_i32_0, %c0_i32_1 : i32, i32, i32, i32
  }
}

module attributes {stable_mosaic.version = 11 : i64} {
  func.func @kernel(%arg0: i32, %arg1: i32, %arg2: memref<1x8x8x27xbf16, #tpu.memory_space<vmem>>, %arg3: memref<27x128xbf16, #tpu.memory_space<vmem>>, %arg4: memref<1x128xf32, #tpu.memory_space<vmem>>, %arg5: memref<1xf32, #tpu.memory_space<smem>>, %arg6: memref<1x2x9x128xf32, #tpu.memory_space<vmem>>, %arg7: memref<1x2x128x128xbf16, #tpu.memory_space<vmem>>, %arg8: memref<1x2x1x128xf32, #tpu.memory_space<vmem>>, %arg9: memref<12xf32, #tpu.memory_space<smem>>, %arg10: memref<1x8x8x128xbf16, #tpu.memory_space<vmem>>, %arg11: memref<1x10x16x128xbf16, #tpu.memory_space<vmem>>, %arg12: memref<1x10x16x128xbf16, #tpu.memory_space<vmem>>) attributes {dimension_semantics = [#tpu.dimension_semantics<parallel>, #tpu.dimension_semantics<arbitrary>], iteration_bounds = array<i64: 2, 6>, scalar_prefetch = 0 : i64, scratch_operands = 2 : i64, tpu.core_type = #tpu.core_type<tc>, window_params = [{transform_indices = @transform_0, window_bounds = array<i64: 1, 8, 8, 27>}, {pipeline_mode = #tpu.pipeline_mode<synchronous>, transform_indices = @transform_1, window_bounds = array<i64: 27, 128>}, {pipeline_mode = #tpu.pipeline_mode<synchronous>, transform_indices = @transform_2, window_bounds = array<i64: 1, 128>}, {transform_indices = @transform_3, window_bounds = array<i64: 1>}, {transform_indices = @transform_4, window_bounds = array<i64: 1, 2, 9, 128>}, {transform_indices = @transform_5, window_bounds = array<i64: 1, 2, 128, 128>}, {transform_indices = @transform_6, window_bounds = array<i64: 1, 2, 1, 128>}, {transform_indices = @transform_7, window_bounds = array<i64: 12>}, {transform_indices = @transform_8, window_bounds = array<i64: 1, 8, 8, 128>}]} {
    %c0_i32 = arith.constant 0 : i32
    %0 = arith.cmpi eq, %arg1, %c0_i32 : i32
    %1 = arith.extui %0 : i1 to i32
    %c0_i32_0 = arith.constant 0 : i32
    %2 = arith.cmpi ne, %1, %c0_i32_0 : i32
    scf.if %2 {
      %cst_60 = arith.constant 0.000000e+00 : bf16
      %176 = vector.broadcast %cst_60 : bf16 to vector<1x1x16x128xbf16>
      %cst_61 = arith.constant 0.000000e+00 : bf16
      %177 = vector.broadcast %cst_61 : bf16 to vector<1x10x1x128xbf16>
      %c0_62 = arith.constant 0 : index
      %c0_63 = arith.constant 0 : index
      %c0_64 = arith.constant 0 : index
      %c0_65 = arith.constant 0 : index
      %178 = vector.load %arg11[%c0_62, %c0_63, %c0_64, %c0_65] : memref<1x10x16x128xbf16, #tpu.memory_space<vmem>>, vector<1x1x16x128xbf16>
      tpu.vector_store %arg11[%c0_62, %c0_63, %c0_64, %c0_65], %176 {strides = array<i32>} : memref<1x10x16x128xbf16, #tpu.memory_space<vmem>>, vector<1x1x16x128xbf16>,
      %c0_66 = arith.constant 0 : index
      %c9 = arith.constant 9 : index
      %c0_67 = arith.constant 0 : index
      %c0_68 = arith.constant 0 : index
      %179 = vector.load %arg11[%c0_66, %c9, %c0_67, %c0_68] : memref<1x10x16x128xbf16, #tpu.memory_space<vmem>>, vector<1x1x16x128xbf16>
      tpu.vector_store %arg11[%c0_66, %c9, %c0_67, %c0_68], %176 {strides = array<i32>} : memref<1x10x16x128xbf16, #tpu.memory_space<vmem>>, vector<1x1x16x128xbf16>,
      %c0_69 = arith.constant 0 : index
      %c0_70 = arith.constant 0 : index
      %c0_71 = arith.constant 0 : index
      %c0_72 = arith.constant 0 : index
      %180 = vector.load %arg11[%c0_69, %c0_70, %c0_71, %c0_72] : memref<1x10x16x128xbf16, #tpu.memory_space<vmem>>, vector<1x10x1x128xbf16>
      tpu.vector_store %arg11[%c0_69, %c0_70, %c0_71, %c0_72], %177 {strides = array<i32>} : memref<1x10x16x128xbf16, #tpu.memory_space<vmem>>, vector<1x10x1x128xbf16>,
      %c0_73 = arith.constant 0 : index
      %c0_74 = arith.constant 0 : index
      %c9_75 = arith.constant 9 : index
      %c0_76 = arith.constant 0 : index
      %181 = vector.load %arg11[%c0_73, %c0_74, %c9_75, %c0_76] : memref<1x10x16x128xbf16, #tpu.memory_space<vmem>>, vector<1x10x1x128xbf16>
      tpu.vector_store %arg11[%c0_73, %c0_74, %c9_75, %c0_76], %177 {strides = array<i32>} : memref<1x10x16x128xbf16, #tpu.memory_space<vmem>>, vector<1x10x1x128xbf16>,
      %c0_77 = arith.constant 0 : index
      %c0_78 = arith.constant 0 : index
      %c0_79 = arith.constant 0 : index
      %c0_80 = arith.constant 0 : index
      %182 = vector.load %arg12[%c0_77, %c0_78, %c0_79, %c0_80] : memref<1x10x16x128xbf16, #tpu.memory_space<vmem>>, vector<1x1x16x128xbf16>
      tpu.vector_store %arg12[%c0_77, %c0_78, %c0_79, %c0_80], %176 {strides = array<i32>} : memref<1x10x16x128xbf16, #tpu.memory_space<vmem>>, vector<1x1x16x128xbf16>,
      %c0_81 = arith.constant 0 : index
      %c9_82 = arith.constant 9 : index
      %c0_83 = arith.constant 0 : index
      %c0_84 = arith.constant 0 : index
      %183 = vector.load %arg12[%c0_81, %c9_82, %c0_83, %c0_84] : memref<1x10x16x128xbf16, #tpu.memory_space<vmem>>, vector<1x1x16x128xbf16>
      tpu.vector_store %arg12[%c0_81, %c9_82, %c0_83, %c0_84], %176 {strides = array<i32>} : memref<1x10x16x128xbf16, #tpu.memory_space<vmem>>, vector<1x1x16x128xbf16>,
      %c0_85 = arith.constant 0 : index
      %c0_86 = arith.constant 0 : index
      %c0_87 = arith.constant 0 : index
      %c0_88 = arith.constant 0 : index
      %184 = vector.load %arg12[%c0_85, %c0_86, %c0_87, %c0_88] : memref<1x10x16x128xbf16, #tpu.memory_space<vmem>>, vector<1x10x1x128xbf16>
      tpu.vector_store %arg12[%c0_85, %c0_86, %c0_87, %c0_88], %177 {strides = array<i32>} : memref<1x10x16x128xbf16, #tpu.memory_space<vmem>>, vector<1x10x1x128xbf16>,
      %c0_89 = arith.constant 0 : index
      %c0_90 = arith.constant 0 : index
      %c9_91 = arith.constant 9 : index
      %c0_92 = arith.constant 0 : index
      %185 = vector.load %arg12[%c0_89, %c0_90, %c9_91, %c0_92] : memref<1x10x16x128xbf16, #tpu.memory_space<vmem>>, vector<1x10x1x128xbf16>
      tpu.vector_store %arg12[%c0_89, %c0_90, %c9_91, %c0_92], %177 {strides = array<i32>} : memref<1x10x16x128xbf16, #tpu.memory_space<vmem>>, vector<1x10x1x128xbf16>,
      %c0_93 = arith.constant 0 : index
      %c0_94 = arith.constant 0 : index
      %c0_95 = arith.constant 0 : index
      %c0_96 = arith.constant 0 : index
      %186 = vector.load %arg2[%c0_93, %c0_94, %c0_95, %c0_96] : memref<1x8x8x27xbf16, #tpu.memory_space<vmem>>, vector<1x8x8x27xbf16>
      %187 = vector.shape_cast %186 : vector<1x8x8x27xbf16> to vector<64x27xbf16>
      %c0_97 = arith.constant 0 : index
      %c0_98 = arith.constant 0 : index
      %188 = vector.load %arg3[%c0_97, %c0_98] : memref<27x128xbf16, #tpu.memory_space<vmem>>, vector<27x128xbf16>
      %cst_99 = arith.constant dense<0.000000e+00> : vector<64x128xf32>
      %189 = tpu.matmul %187, %188, %cst_99 {dimension_numbers = #tpu.dot_dimension_numbers<[1], [0], [0], [1], [0, 0, 1, 1], [], []>} : vector<64x27xbf16>, vector<27x128xbf16>, vector<64x128xf32> -> vector<64x128xf32>
      %c0_100 = arith.constant 0 : index
      %c0_101 = arith.constant 0 : index
      %190 = vector.load %arg4[%c0_100, %c0_101] : memref<1x128xf32, #tpu.memory_space<vmem>>, vector<1x128xf32>
      %191 = vector.broadcast %190 : vector<1x128xf32> to vector<64x128xf32>
      %192 = arith.addf %189, %191 : vector<64x128xf32>
      %c0_102 = arith.constant 0 : index
      %193 = memref.load %arg5[%c0_102] : memref<1xf32, #tpu.memory_space<smem>>
      %cst_103 = arith.constant 0.000000e+00 : f32
      %194 = vector.broadcast %cst_103 : f32 to vector<64x128xf32>
      %195 = arith.cmpf oge, %192, %194 : vector<64x128xf32>
      %196 = vector.broadcast %193 : f32 to vector<64x128xf32>
      %197 = arith.mulf %196, %192 : vector<64x128xf32>
      %198 = arith.select %195, %192, %197 : vector<64x128xi1>, vector<64x128xf32>
      %199 = vector.shape_cast %198 : vector<64x128xf32> to vector<1x8x8x128xf32>
      %200 = arith.truncf %199 : vector<1x8x8x128xf32> to vector<1x8x8x128xbf16>
      %c0_104 = arith.constant 0 : index
      %c1_105 = arith.constant 1 : index
      %c1_106 = arith.constant 1 : index
      %c0_107 = arith.constant 0 : index
      %201 = vector.load %arg11[%c0_104, %c1_105, %c1_106, %c0_107] : memref<1x10x16x128xbf16, #tpu.memory_space<vmem>>, vector<1x8x8x128xbf16>
      tpu.vector_store %arg11[%c0_104, %c1_105, %c1_106, %c0_107], %200 {strides = array<i32>} : memref<1x10x16x128xbf16, #tpu.memory_space<vmem>>, vector<1x8x8x128xbf16>,
    } else {
    }
    %c0 = arith.constant 0 : index
    %c0_1 = arith.constant 0 : index
    %c0_2 = arith.constant 0 : index
    %c0_3 = arith.constant 0 : index
    %3 = vector.load %arg6[%c0, %c0_1, %c0_2, %c0_3] : memref<1x2x9x128xf32, #tpu.memory_space<vmem>>, vector<1x1x9x128xf32>
    %4 = vector.shape_cast %3 : vector<1x1x9x128xf32> to vector<9x128xf32>
    %cst = arith.constant 0.000000e+00 : f32
    %5 = vector.broadcast %cst : f32 to vector<1x8x8x128xf32>
    %c0_4 = arith.constant 0 : index
    %c0_5 = arith.constant 0 : index
    %c0_6 = arith.constant 0 : index
    %c0_7 = arith.constant 0 : index
    %6 = vector.load %arg11[%c0_4, %c0_5, %c0_6, %c0_7] : memref<1x10x16x128xbf16, #tpu.memory_space<vmem>>, vector<1x10x8x128xbf16>
    %7 = arith.extf %6 : vector<1x10x8x128xbf16> to vector<1x10x8x128xf32>
    %8 = vector.extract_strided_slice %4 {offsets = [0, 0], sizes = [1, 128], strides = [1, 1]} : vector<9x128xf32> to vector<1x128xf32>
    %9 = vector.shape_cast %8 : vector<1x128xf32> to vector<1x1x1x128xf32>
    %10 = vector.extract_strided_slice %7 {offsets = [0, 0, 0, 0], sizes = [1, 8, 8, 128], strides = [1, 1, 1, 1]} : vector<1x10x8x128xf32> to vector<1x8x8x128xf32>
    %11 = vector.broadcast %9 : vector<1x1x1x128xf32> to vector<1x8x8x128xf32>
    %12 = arith.mulf %10, %11 : vector<1x8x8x128xf32>
    %13 = arith.addf %5, %12 : vector<1x8x8x128xf32>
    %14 = vector.extract_strided_slice %4 {offsets = [3, 0], sizes = [1, 128], strides = [1, 1]} : vector<9x128xf32> to vector<1x128xf32>
    %15 = vector.shape_cast %14 : vector<1x128xf32> to vector<1x1x1x128xf32>
    %16 = vector.extract_strided_slice %7 {offsets = [0, 1, 0, 0], sizes = [1, 8, 8, 128], strides = [1, 1, 1, 1]} : vector<1x10x8x128xf32> to vector<1x8x8x128xf32>
    %17 = vector.broadcast %15 : vector<1x1x1x128xf32> to vector<1x8x8x128xf32>
    %18 = arith.mulf %16, %17 : vector<1x8x8x128xf32>
    %19 = arith.addf %13, %18 : vector<1x8x8x128xf32>
    %20 = vector.extract_strided_slice %4 {offsets = [6, 0], sizes = [1, 128], strides = [1, 1]} : vector<9x128xf32> to vector<1x128xf32>
    %21 = vector.shape_cast %20 : vector<1x128xf32> to vector<1x1x1x128xf32>
    %22 = vector.extract_strided_slice %7 {offsets = [0, 2, 0, 0], sizes = [1, 8, 8, 128], strides = [1, 1, 1, 1]} : vector<1x10x8x128xf32> to vector<1x8x8x128xf32>
    %23 = vector.broadcast %21 : vector<1x1x1x128xf32> to vector<1x8x8x128xf32>
    %24 = arith.mulf %22, %23 : vector<1x8x8x128xf32>
    %25 = arith.addf %19, %24 : vector<1x8x8x128xf32>
    %c0_8 = arith.constant 0 : index
    %c0_9 = arith.constant 0 : index
    %c1 = arith.constant 1 : index
    %c0_10 = arith.constant 0 : index
    %26 = vector.load %arg11[%c0_8, %c0_9, %c1, %c0_10] : memref<1x10x16x128xbf16, #tpu.memory_space<vmem>>, vector<1x10x8x128xbf16>
    %27 = arith.extf %26 : vector<1x10x8x128xbf16> to vector<1x10x8x128xf32>
    %28 = vector.extract_strided_slice %4 {offsets = [1, 0], sizes = [1, 128], strides = [1, 1]} : vector<9x128xf32> to vector<1x128xf32>
    %29 = vector.shape_cast %28 : vector<1x128xf32> to vector<1x1x1x128xf32>
    %30 = vector.extract_strided_slice %27 {offsets = [0, 0, 0, 0], sizes = [1, 8, 8, 128], strides = [1, 1, 1, 1]} : vector<1x10x8x128xf32> to vector<1x8x8x128xf32>
    %31 = vector.broadcast %29 : vector<1x1x1x128xf32> to vector<1x8x8x128xf32>
    %32 = arith.mulf %30, %31 : vector<1x8x8x128xf32>
    %33 = arith.addf %25, %32 : vector<1x8x8x128xf32>
    %34 = vector.extract_strided_slice %4 {offsets = [4, 0], sizes = [1, 128], strides = [1, 1]} : vector<9x128xf32> to vector<1x128xf32>
    %35 = vector.shape_cast %34 : vector<1x128xf32> to vector<1x1x1x128xf32>
    %36 = vector.extract_strided_slice %27 {offsets = [0, 1, 0, 0], sizes = [1, 8, 8, 128], strides = [1, 1, 1, 1]} : vector<1x10x8x128xf32> to vector<1x8x8x128xf32>
    %37 = vector.broadcast %35 : vector<1x1x1x128xf32> to vector<1x8x8x128xf32>
    %38 = arith.mulf %36, %37 : vector<1x8x8x128xf32>
    %39 = arith.addf %33, %38 : vector<1x8x8x128xf32>
    %40 = vector.extract_strided_slice %4 {offsets = [7, 0], sizes = [1, 128], strides = [1, 1]} : vector<9x128xf32> to vector<1x128xf32>
    %41 = vector.shape_cast %40 : vector<1x128xf32> to vector<1x1x1x128xf32>
    %42 = vector.extract_strided_slice %27 {offsets = [0, 2, 0, 0], sizes = [1, 8, 8, 128], strides = [1, 1, 1, 1]} : vector<1x10x8x128xf32> to vector<1x8x8x128xf32>
    %43 = vector.broadcast %41 : vector<1x1x1x128xf32> to vector<1x8x8x128xf32>
    %44 = arith.mulf %42, %43 : vector<1x8x8x128xf32>
    %45 = arith.addf %39, %44 : vector<1x8x8x128xf32>
    %c0_11 = arith.constant 0 : index
    %c0_12 = arith.constant 0 : index
    %c2 = arith.constant 2 : index
    %c0_13 = arith.constant 0 : index
    %46 = vector.load %arg11[%c0_11, %c0_12, %c2, %c0_13] : memref<1x10x16x128xbf16, #tpu.memory_space<vmem>>, vector<1x10x8x128xbf16>
    %47 = arith.extf %46 : vector<1x10x8x128xbf16> to vector<1x10x8x128xf32>
    %48 = vector.extract_strided_slice %4 {offsets = [2, 0], sizes = [1, 128], strides = [1, 1]} : vector<9x128xf32> to vector<1x128xf32>
    %49 = vector.shape_cast %48 : vector<1x128xf32> to vector<1x1x1x128xf32>
    %50 = vector.extract_strided_slice %47 {offsets = [0, 0, 0, 0], sizes = [1, 8, 8, 128], strides = [1, 1, 1, 1]} : vector<1x10x8x128xf32> to vector<1x8x8x128xf32>
    %51 = vector.broadcast %49 : vector<1x1x1x128xf32> to vector<1x8x8x128xf32>
    %52 = arith.mulf %50, %51 : vector<1x8x8x128xf32>
    %53 = arith.addf %45, %52 : vector<1x8x8x128xf32>
    %54 = vector.extract_strided_slice %4 {offsets = [5, 0], sizes = [1, 128], strides = [1, 1]} : vector<9x128xf32> to vector<1x128xf32>
    %55 = vector.shape_cast %54 : vector<1x128xf32> to vector<1x1x1x128xf32>
    %56 = vector.extract_strided_slice %47 {offsets = [0, 1, 0, 0], sizes = [1, 8, 8, 128], strides = [1, 1, 1, 1]} : vector<1x10x8x128xf32> to vector<1x8x8x128xf32>
    %57 = vector.broadcast %55 : vector<1x1x1x128xf32> to vector<1x8x8x128xf32>
    %58 = arith.mulf %56, %57 : vector<1x8x8x128xf32>
    %59 = arith.addf %53, %58 : vector<1x8x8x128xf32>
    %60 = vector.extract_strided_slice %4 {offsets = [8, 0], sizes = [1, 128], strides = [1, 1]} : vector<9x128xf32> to vector<1x128xf32>
    %61 = vector.shape_cast %60 : vector<1x128xf32> to vector<1x1x1x128xf32>
    %62 = vector.extract_strided_slice %47 {offsets = [0, 2, 0, 0], sizes = [1, 8, 8, 128], strides = [1, 1, 1, 1]} : vector<1x10x8x128xf32> to vector<1x8x8x128xf32>
    %63 = vector.broadcast %61 : vector<1x1x1x128xf32> to vector<1x8x8x128xf32>
    %64 = arith.mulf %62, %63 : vector<1x8x8x128xf32>
    %65 = arith.addf %59, %64 : vector<1x8x8x128xf32>
    %66 = vector.shape_cast %65 : vector<1x8x8x128xf32> to vector<64x128xf32>
    %67 = arith.truncf %66 : vector<64x128xf32> to vector<64x128xbf16>
    %c0_14 = arith.constant 0 : index
    %c0_15 = arith.constant 0 : index
    %c0_16 = arith.constant 0 : index
    %c0_17 = arith.constant 0 : index
    %68 = vector.load %arg7[%c0_14, %c0_15, %c0_16, %c0_17] : memref<1x2x128x128xbf16, #tpu.memory_space<vmem>>, vector<1x1x128x128xbf16>
    %69 = vector.shape_cast %68 : vector<1x1x128x128xbf16> to vector<128x128xbf16>
    %cst_18 = arith.constant dense<0.000000e+00> : vector<64x128xf32>
    %70 = tpu.matmul %67, %69, %cst_18 {dimension_numbers = #tpu.dot_dimension_numbers<[1], [0], [0], [1], [0, 0, 1, 1], [], []>} : vector<64x128xbf16>, vector<128x128xbf16>, vector<64x128xf32> -> vector<64x128xf32>
    %c0_19 = arith.constant 0 : index
    %c0_20 = arith.constant 0 : index
    %c0_21 = arith.constant 0 : index
    %c0_22 = arith.constant 0 : index
    %71 = vector.load %arg8[%c0_19, %c0_20, %c0_21, %c0_22] : memref<1x2x1x128xf32, #tpu.memory_space<vmem>>, vector<1x1x1x128xf32>
    %72 = vector.shape_cast %71 : vector<1x1x1x128xf32> to vector<1x128xf32>
    %73 = vector.broadcast %72 : vector<1x128xf32> to vector<64x128xf32>
    %74 = arith.addf %70, %73 : vector<64x128xf32>
    %c2_i32 = arith.constant 2 : i32
    %75 = arith.muli %c2_i32, %arg1 : i32
    %c0_i32_23 = arith.constant 0 : i32
    %76 = arith.addi %75, %c0_i32_23 : i32
    %77 = arith.index_cast %76 : i32 to index
    %78 = memref.load %arg9[%77] : memref<12xf32, #tpu.memory_space<smem>>
    %cst_24 = arith.constant 0.000000e+00 : f32
    %79 = vector.broadcast %cst_24 : f32 to vector<64x128xf32>
    %80 = arith.cmpf oge, %74, %79 : vector<64x128xf32>
    %81 = vector.broadcast %78 : f32 to vector<64x128xf32>
    %82 = arith.mulf %81, %74 : vector<64x128xf32>
    %83 = arith.select %80, %74, %82 : vector<64x128xi1>, vector<64x128xf32>
    %84 = vector.shape_cast %83 : vector<64x128xf32> to vector<1x8x8x128xf32>
    %85 = arith.truncf %84 : vector<1x8x8x128xf32> to vector<1x8x8x128xbf16>
    %c0_25 = arith.constant 0 : index
    %c1_26 = arith.constant 1 : index
    %c1_27 = arith.constant 1 : index
    %c0_28 = arith.constant 0 : index
    %86 = vector.load %arg12[%c0_25, %c1_26, %c1_27, %c0_28] : memref<1x10x16x128xbf16, #tpu.memory_space<vmem>>, vector<1x8x8x128xbf16>
    tpu.vector_store %arg12[%c0_25, %c1_26, %c1_27, %c0_28], %85 {strides = array<i32>} : memref<1x10x16x128xbf16, #tpu.memory_space<vmem>>, vector<1x8x8x128xbf16>,
    %c0_29 = arith.constant 0 : index
    %c1_30 = arith.constant 1 : index
    %c0_31 = arith.constant 0 : index
    %c0_32 = arith.constant 0 : index
    %87 = vector.load %arg6[%c0_29, %c1_30, %c0_31, %c0_32] : memref<1x2x9x128xf32, #tpu.memory_space<vmem>>, vector<1x1x9x128xf32>
    %88 = vector.shape_cast %87 : vector<1x1x9x128xf32> to vector<9x128xf32>
    %cst_33 = arith.constant 0.000000e+00 : f32
    %89 = vector.broadcast %cst_33 : f32 to vector<1x8x8x128xf32>
    %c0_34 = arith.constant 0 : index
    %c0_35 = arith.constant 0 : index
    %c0_36 = arith.constant 0 : index
    %c0_37 = arith.constant 0 : index
    %90 = vector.load %arg12[%c0_34, %c0_35, %c0_36, %c0_37] : memref<1x10x16x128xbf16, #tpu.memory_space<vmem>>, vector<1x10x8x128xbf16>
    %91 = arith.extf %90 : vector<1x10x8x128xbf16> to vector<1x10x8x128xf32>
    %92 = vector.extract_strided_slice %88 {offsets = [0, 0], sizes = [1, 128], strides = [1, 1]} : vector<9x128xf32> to vector<1x128xf32>
    %93 = vector.shape_cast %92 : vector<1x128xf32> to vector<1x1x1x128xf32>
    %94 = vector.extract_strided_slice %91 {offsets = [0, 0, 0, 0], sizes = [1, 8, 8, 128], strides = [1, 1, 1, 1]} : vector<1x10x8x128xf32> to vector<1x8x8x128xf32>
    %95 = vector.broadcast %93 : vector<1x1x1x128xf32> to vector<1x8x8x128xf32>
    %96 = arith.mulf %94, %95 : vector<1x8x8x128xf32>
    %97 = arith.addf %89, %96 : vector<1x8x8x128xf32>
    %98 = vector.extract_strided_slice %88 {offsets = [3, 0], sizes = [1, 128], strides = [1, 1]} : vector<9x128xf32> to vector<1x128xf32>
    %99 = vector.shape_cast %98 : vector<1x128xf32> to vector<1x1x1x128xf32>
    %100 = vector.extract_strided_slice %91 {offsets = [0, 1, 0, 0], sizes = [1, 8, 8, 128], strides = [1, 1, 1, 1]} : vector<1x10x8x128xf32> to vector<1x8x8x128xf32>
    %101 = vector.broadcast %99 : vector<1x1x1x128xf32> to vector<1x8x8x128xf32>
    %102 = arith.mulf %100, %101 : vector<1x8x8x128xf32>
    %103 = arith.addf %97, %102 : vector<1x8x8x128xf32>
    %104 = vector.extract_strided_slice %88 {offsets = [6, 0], sizes = [1, 128], strides = [1, 1]} : vector<9x128xf32> to vector<1x128xf32>
    %105 = vector.shape_cast %104 : vector<1x128xf32> to vector<1x1x1x128xf32>
    %106 = vector.extract_strided_slice %91 {offsets = [0, 2, 0, 0], sizes = [1, 8, 8, 128], strides = [1, 1, 1, 1]} : vector<1x10x8x128xf32> to vector<1x8x8x128xf32>
    %107 = vector.broadcast %105 : vector<1x1x1x128xf32> to vector<1x8x8x128xf32>
    %108 = arith.mulf %106, %107 : vector<1x8x8x128xf32>
    %109 = arith.addf %103, %108 : vector<1x8x8x128xf32>
    %c0_38 = arith.constant 0 : index
    %c0_39 = arith.constant 0 : index
    %c1_40 = arith.constant 1 : index
    %c0_41 = arith.constant 0 : index
    %110 = vector.load %arg12[%c0_38, %c0_39, %c1_40, %c0_41] : memref<1x10x16x128xbf16, #tpu.memory_space<vmem>>, vector<1x10x8x128xbf16>
    %111 = arith.extf %110 : vector<1x10x8x128xbf16> to vector<1x10x8x128xf32>
    %112 = vector.extract_strided_slice %88 {offsets = [1, 0], sizes = [1, 128], strides = [1, 1]} : vector<9x128xf32> to vector<1x128xf32>
    %113 = vector.shape_cast %112 : vector<1x128xf32> to vector<1x1x1x128xf32>
    %114 = vector.extract_strided_slice %111 {offsets = [0, 0, 0, 0], sizes = [1, 8, 8, 128], strides = [1, 1, 1, 1]} : vector<1x10x8x128xf32> to vector<1x8x8x128xf32>
    %115 = vector.broadcast %113 : vector<1x1x1x128xf32> to vector<1x8x8x128xf32>
    %116 = arith.mulf %114, %115 : vector<1x8x8x128xf32>
    %117 = arith.addf %109, %116 : vector<1x8x8x128xf32>
    %118 = vector.extract_strided_slice %88 {offsets = [4, 0], sizes = [1, 128], strides = [1, 1]} : vector<9x128xf32> to vector<1x128xf32>
    %119 = vector.shape_cast %118 : vector<1x128xf32> to vector<1x1x1x128xf32>
    %120 = vector.extract_strided_slice %111 {offsets = [0, 1, 0, 0], sizes = [1, 8, 8, 128], strides = [1, 1, 1, 1]} : vector<1x10x8x128xf32> to vector<1x8x8x128xf32>
    %121 = vector.broadcast %119 : vector<1x1x1x128xf32> to vector<1x8x8x128xf32>
    %122 = arith.mulf %120, %121 : vector<1x8x8x128xf32>
    %123 = arith.addf %117, %122 : vector<1x8x8x128xf32>
    %124 = vector.extract_strided_slice %88 {offsets = [7, 0], sizes = [1, 128], strides = [1, 1]} : vector<9x128xf32> to vector<1x128xf32>
    %125 = vector.shape_cast %124 : vector<1x128xf32> to vector<1x1x1x128xf32>
    %126 = vector.extract_strided_slice %111 {offsets = [0, 2, 0, 0], sizes = [1, 8, 8, 128], strides = [1, 1, 1, 1]} : vector<1x10x8x128xf32> to vector<1x8x8x128xf32>
    %127 = vector.broadcast %125 : vector<1x1x1x128xf32> to vector<1x8x8x128xf32>
    %128 = arith.mulf %126, %127 : vector<1x8x8x128xf32>
    %129 = arith.addf %123, %128 : vector<1x8x8x128xf32>
    %c0_42 = arith.constant 0 : index
    %c0_43 = arith.constant 0 : index
    %c2_44 = arith.constant 2 : index
    %c0_45 = arith.constant 0 : index
    %130 = vector.load %arg12[%c0_42, %c0_43, %c2_44, %c0_45] : memref<1x10x16x128xbf16, #tpu.memory_space<vmem>>, vector<1x10x8x128xbf16>
    %131 = arith.extf %130 : vector<1x10x8x128xbf16> to vector<1x10x8x128xf32>
    %132 = vector.extract_strided_slice %88 {offsets = [2, 0], sizes = [1, 128], strides = [1, 1]} : vector<9x128xf32> to vector<1x128xf32>
    %133 = vector.shape_cast %132 : vector<1x128xf32> to vector<1x1x1x128xf32>
    %134 = vector.extract_strided_slice %131 {offsets = [0, 0, 0, 0], sizes = [1, 8, 8, 128], strides = [1, 1, 1, 1]} : vector<1x10x8x128xf32> to vector<1x8x8x128xf32>
    %135 = vector.broadcast %133 : vector<1x1x1x128xf32> to vector<1x8x8x128xf32>
    %136 = arith.mulf %134, %135 : vector<1x8x8x128xf32>
    %137 = arith.addf %129, %136 : vector<1x8x8x128xf32>
    %138 = vector.extract_strided_slice %88 {offsets = [5, 0], sizes = [1, 128], strides = [1, 1]} : vector<9x128xf32> to vector<1x128xf32>
    %139 = vector.shape_cast %138 : vector<1x128xf32> to vector<1x1x1x128xf32>
    %140 = vector.extract_strided_slice %131 {offsets = [0, 1, 0, 0], sizes = [1, 8, 8, 128], strides = [1, 1, 1, 1]} : vector<1x10x8x128xf32> to vector<1x8x8x128xf32>
    %141 = vector.broadcast %139 : vector<1x1x1x128xf32> to vector<1x8x8x128xf32>
    %142 = arith.mulf %140, %141 : vector<1x8x8x128xf32>
    %143 = arith.addf %137, %142 : vector<1x8x8x128xf32>
    %144 = vector.extract_strided_slice %88 {offsets = [8, 0], sizes = [1, 128], strides = [1, 1]} : vector<9x128xf32> to vector<1x128xf32>
    %145 = vector.shape_cast %144 : vector<1x128xf32> to vector<1x1x1x128xf32>
    %146 = vector.extract_strided_slice %131 {offsets = [0, 2, 0, 0], sizes = [1, 8, 8, 128], strides = [1, 1, 1, 1]} : vector<1x10x8x128xf32> to vector<1x8x8x128xf32>
    %147 = vector.broadcast %145 : vector<1x1x1x128xf32> to vector<1x8x8x128xf32>
    %148 = arith.mulf %146, %147 : vector<1x8x8x128xf32>
    %149 = arith.addf %143, %148 : vector<1x8x8x128xf32>
    %150 = vector.shape_cast %149 : vector<1x8x8x128xf32> to vector<64x128xf32>
    %151 = arith.truncf %150 : vector<64x128xf32> to vector<64x128xbf16>
    %c0_46 = arith.constant 0 : index
    %c1_47 = arith.constant 1 : index
    %c0_48 = arith.constant 0 : index
    %c0_49 = arith.constant 0 : index
    %152 = vector.load %arg7[%c0_46, %c1_47, %c0_48, %c0_49] : memref<1x2x128x128xbf16, #tpu.memory_space<vmem>>, vector<1x1x128x128xbf16>
    %153 = vector.shape_cast %152 : vector<1x1x128x128xbf16> to vector<128x128xbf16>
    %cst_50 = arith.constant dense<0.000000e+00> : vector<64x128xf32>
    %154 = tpu.matmul %151, %153, %cst_50 {dimension_numbers = #tpu.dot_dimension_numbers<[1], [0], [0], [1], [0, 0, 1, 1], [], []>} : vector<64x128xbf16>, vector<128x128xbf16>, vector<64x128xf32> -> vector<64x128xf32>
    %c0_51 = arith.constant 0 : index
    %c1_52 = arith.constant 1 : index
    %c0_53 = arith.constant 0 : index
    %c0_54 = arith.constant 0 : index
    %155 = vector.load %arg8[%c0_51, %c1_52, %c0_53, %c0_54] : memref<1x2x1x128xf32, #tpu.memory_space<vmem>>, vector<1x1x1x128xf32>
    %156 = vector.shape_cast %155 : vector<1x1x1x128xf32> to vector<1x128xf32>
    %157 = vector.broadcast %156 : vector<1x128xf32> to vector<64x128xf32>
    %158 = arith.addf %154, %157 : vector<64x128xf32>
    %c2_i32_55 = arith.constant 2 : i32
    %159 = arith.muli %c2_i32_55, %arg1 : i32
    %c1_i32 = arith.constant 1 : i32
    %160 = arith.addi %159, %c1_i32 : i32
    %161 = arith.index_cast %160 : i32 to index
    %162 = memref.load %arg9[%161] : memref<12xf32, #tpu.memory_space<smem>>
    %cst_56 = arith.constant 0.000000e+00 : f32
    %163 = vector.broadcast %cst_56 : f32 to vector<64x128xf32>
    %164 = arith.cmpf oge, %158, %163 : vector<64x128xf32>
    %165 = vector.broadcast %162 : f32 to vector<64x128xf32>
    %166 = arith.mulf %165, %158 : vector<64x128xf32>
    %167 = arith.select %164, %158, %166 : vector<64x128xi1>, vector<64x128xf32>
    %168 = vector.shape_cast %167 : vector<64x128xf32> to vector<1x8x8x128xf32>
    %c1_i32_57 = arith.constant 1 : i32
    %169 = arith.addi %arg1, %c1_i32_57 : i32
    %c6_i32 = arith.constant 6 : i32
    %170 = arith.cmpi slt, %169, %c6_i32 : i32
    %171 = arith.extui %170 : i1 to i32
    %c0_i32_58 = arith.constant 0 : i32
    %172 = arith.cmpi ne, %171, %c0_i32_58 : i32
    scf.if %172 {
      %176 = arith.truncf %168 : vector<1x8x8x128xf32> to vector<1x8x8x128xbf16>
      %c0_60 = arith.constant 0 : index
      %c1_61 = arith.constant 1 : index
      %c1_62 = arith.constant 1 : index
      %c0_63 = arith.constant 0 : index
      %177 = vector.load %arg11[%c0_60, %c1_61, %c1_62, %c0_63] : memref<1x10x16x128xbf16, #tpu.memory_space<vmem>>, vector<1x8x8x128xbf16>
      tpu.vector_store %arg11[%c0_60, %c1_61, %c1_62, %c0_63], %176 {strides = array<i32>} : memref<1x10x16x128xbf16, #tpu.memory_space<vmem>>, vector<1x8x8x128xbf16>,
    } else {
    }
    %c5_i32 = arith.constant 5 : i32
    %173 = arith.cmpi eq, %arg1, %c5_i32 : i32
    %174 = arith.extui %173 : i1 to i32
    %c0_i32_59 = arith.constant 0 : i32
    %175 = arith.cmpi ne, %174, %c0_i32_59 : i32
    scf.if %175 {
      %176 = arith.truncf %168 : vector<1x8x8x128xf32> to vector<1x8x8x128xbf16>
      %c0_60 = arith.constant 0 : index
      %c0_61 = arith.constant 0 : index
      %c0_62 = arith.constant 0 : index
      %c0_63 = arith.constant 0 : index
      %177 = vector.load %arg10[%c0_60, %c0_61, %c0_62, %c0_63] : memref<1x8x8x128xbf16, #tpu.memory_space<vmem>>, vector<1x8x8x128xbf16>
      tpu.vector_store %arg10[%c0_60, %c0_61, %c0_62, %c0_63], %176 {strides = array<i32>} : memref<1x8x8x128xbf16, #tpu.memory_space<vmem>>, vector<1x8x8x128xbf16>,
    } else {
    }
    return
  }
  func.func @transform_0(%arg0: i32, %arg1: i32) -> (i32, i32, i32, i32) {
    %c0_i32 = arith.constant 0 : i32
    %c0_i32_0 = arith.constant 0 : i32
    %c0_i32_1 = arith.constant 0 : i32
    %c0_i32_2 = arith.constant 0 : i32
    return %arg0, %c0_i32, %c0_i32_0, %c0_i32_1 : i32, i32, i32, i32
  }
  func.func @transform_1(%arg0: i32, %arg1: i32) -> (i32, i32) {
    %c0_i32 = arith.constant 0 : i32
    %c0_i32_0 = arith.constant 0 : i32
    %c0_i32_1 = arith.constant 0 : i32
    return %c0_i32, %c0_i32_0 : i32, i32
  }
  func.func @transform_2(%arg0: i32, %arg1: i32) -> (i32, i32) {
    %c0_i32 = arith.constant 0 : i32
    %c0_i32_0 = arith.constant 0 : i32
    %c0_i32_1 = arith.constant 0 : i32
    return %c0_i32, %c0_i32_0 : i32, i32
  }
  func.func @transform_3(%arg0: i32, %arg1: i32) -> i32 {
    %c0_i32 = arith.constant 0 : i32
    %c0_i32_0 = arith.constant 0 : i32
    return %c0_i32 : i32
  }
  func.func @transform_4(%arg0: i32, %arg1: i32) -> (i32, i32, i32, i32) {
    %c0_i32 = arith.constant 0 : i32
    %c0_i32_0 = arith.constant 0 : i32
    %c0_i32_1 = arith.constant 0 : i32
    %c0_i32_2 = arith.constant 0 : i32
    return %arg1, %c0_i32, %c0_i32_0, %c0_i32_1 : i32, i32, i32, i32
  }
  func.func @transform_5(%arg0: i32, %arg1: i32) -> (i32, i32, i32, i32) {
    %c0_i32 = arith.constant 0 : i32
    %c0_i32_0 = arith.constant 0 : i32
    %c0_i32_1 = arith.constant 0 : i32
    %c0_i32_2 = arith.constant 0 : i32
    return %arg1, %c0_i32, %c0_i32_0, %c0_i32_1 : i32, i32, i32, i32
  }
  func.func @transform_6(%arg0: i32, %arg1: i32) -> (i32, i32, i32, i32) {
    %c0_i32 = arith.constant 0 : i32
    %c0_i32_0 = arith.constant 0 : i32
    %c0_i32_1 = arith.constant 0 : i32
    %c0_i32_2 = arith.constant 0 : i32
    return %arg1, %c0_i32, %c0_i32_0, %c0_i32_1 : i32, i32, i32, i32
  }
  func.func @transform_7(%arg0: i32, %arg1: i32) -> i32 {
    %c0_i32 = arith.constant 0 : i32
    %c0_i32_0 = arith.constant 0 : i32
    return %c0_i32 : i32
  }
  func.func @transform_8(%arg0: i32, %arg1: i32) -> (i32, i32, i32, i32) {
    %c0_i32 = arith.constant 0 : i32
    %c0_i32_0 = arith.constant 0 : i32
    %c0_i32_1 = arith.constant 0 : i32
    %c0_i32_2 = arith.constant 0 : i32
    return %arg0, %c0_i32, %c0_i32_0, %c0_i32_1 : i32, i32, i32, i32
  }
}

module attributes {stable_mosaic.version = 11 : i64} {
  func.func @kernel(%arg0: i32, %arg1: i32, %arg2: memref<1x8x8x128xbf16, #tpu.memory_space<vmem>>, %arg3: memref<1x2x9x192xf32, #tpu.memory_space<vmem>>, %arg4: memref<1x2x192x192xbf16, #tpu.memory_space<vmem>>, %arg5: memref<1x2x1x192xf32, #tpu.memory_space<vmem>>, %arg6: memref<12xf32, #tpu.memory_space<smem>>, %arg7: memref<192x1000xbf16, #tpu.memory_space<vmem>>, %arg8: memref<1000x192xbf16, #tpu.memory_space<vmem>>, %arg9: memref<1x192xf32, #tpu.memory_space<vmem>>, %arg10: memref<2xf32, #tpu.memory_space<smem>>, %arg11: memref<1x8x8x192xf32, #tpu.memory_space<vmem>>, %arg12: memref<1x10x16x192xbf16, #tpu.memory_space<vmem>>, %arg13: memref<1x10x16x192xbf16, #tpu.memory_space<vmem>>) attributes {dimension_semantics = [#tpu.dimension_semantics<parallel>, #tpu.dimension_semantics<arbitrary>], iteration_bounds = array<i64: 2, 6>, scalar_prefetch = 0 : i64, scratch_operands = 2 : i64, tpu.core_type = #tpu.core_type<tc>, window_params = [{transform_indices = @transform_0, window_bounds = array<i64: 1, 8, 8, 128>}, {transform_indices = @transform_1, window_bounds = array<i64: 1, 2, 9, 192>}, {transform_indices = @transform_2, window_bounds = array<i64: 1, 2, 192, 192>}, {transform_indices = @transform_3, window_bounds = array<i64: 1, 2, 1, 192>}, {transform_indices = @transform_4, window_bounds = array<i64: 12>}, {pipeline_mode = #tpu.pipeline_mode<synchronous>, transform_indices = @transform_5, window_bounds = array<i64: 192, 1000>}, {pipeline_mode = #tpu.pipeline_mode<synchronous>, transform_indices = @transform_6, window_bounds = array<i64: 1000, 192>}, {pipeline_mode = #tpu.pipeline_mode<synchronous>, transform_indices = @transform_7, window_bounds = array<i64: 1, 192>}, {transform_indices = @transform_8, window_bounds = array<i64: 2>}, {transform_indices = @transform_9, window_bounds = array<i64: 1, 8, 8, 192>}]} {
    %c0_i32 = arith.constant 0 : i32
    %0 = arith.cmpi eq, %arg1, %c0_i32 : i32
    %1 = arith.extui %0 : i1 to i32
    %c0_i32_0 = arith.constant 0 : i32
    %2 = arith.cmpi ne, %1, %c0_i32_0 : i32
    scf.if %2 {
      %cst_60 = arith.constant 0.000000e+00 : bf16
      %176 = vector.broadcast %cst_60 : bf16 to vector<1x1x16x192xbf16>
      %cst_61 = arith.constant 0.000000e+00 : bf16
      %177 = vector.broadcast %cst_61 : bf16 to vector<1x10x1x192xbf16>
      %c0_62 = arith.constant 0 : index
      %c0_63 = arith.constant 0 : index
      %c0_64 = arith.constant 0 : index
      %c0_65 = arith.constant 0 : index
      %178 = vector.load %arg12[%c0_62, %c0_63, %c0_64, %c0_65] : memref<1x10x16x192xbf16, #tpu.memory_space<vmem>>, vector<1x1x16x192xbf16>
      tpu.vector_store %arg12[%c0_62, %c0_63, %c0_64, %c0_65], %176 {strides = array<i32>} : memref<1x10x16x192xbf16, #tpu.memory_space<vmem>>, vector<1x1x16x192xbf16>,
      %c0_66 = arith.constant 0 : index
      %c9 = arith.constant 9 : index
      %c0_67 = arith.constant 0 : index
      %c0_68 = arith.constant 0 : index
      %179 = vector.load %arg12[%c0_66, %c9, %c0_67, %c0_68] : memref<1x10x16x192xbf16, #tpu.memory_space<vmem>>, vector<1x1x16x192xbf16>
      tpu.vector_store %arg12[%c0_66, %c9, %c0_67, %c0_68], %176 {strides = array<i32>} : memref<1x10x16x192xbf16, #tpu.memory_space<vmem>>, vector<1x1x16x192xbf16>,
      %c0_69 = arith.constant 0 : index
      %c0_70 = arith.constant 0 : index
      %c0_71 = arith.constant 0 : index
      %c0_72 = arith.constant 0 : index
      %180 = vector.load %arg12[%c0_69, %c0_70, %c0_71, %c0_72] : memref<1x10x16x192xbf16, #tpu.memory_space<vmem>>, vector<1x10x1x192xbf16>
      tpu.vector_store %arg12[%c0_69, %c0_70, %c0_71, %c0_72], %177 {strides = array<i32>} : memref<1x10x16x192xbf16, #tpu.memory_space<vmem>>, vector<1x10x1x192xbf16>,
      %c0_73 = arith.constant 0 : index
      %c0_74 = arith.constant 0 : index
      %c9_75 = arith.constant 9 : index
      %c0_76 = arith.constant 0 : index
      %181 = vector.load %arg12[%c0_73, %c0_74, %c9_75, %c0_76] : memref<1x10x16x192xbf16, #tpu.memory_space<vmem>>, vector<1x10x1x192xbf16>
      tpu.vector_store %arg12[%c0_73, %c0_74, %c9_75, %c0_76], %177 {strides = array<i32>} : memref<1x10x16x192xbf16, #tpu.memory_space<vmem>>, vector<1x10x1x192xbf16>,
      %c0_77 = arith.constant 0 : index
      %c0_78 = arith.constant 0 : index
      %c0_79 = arith.constant 0 : index
      %c0_80 = arith.constant 0 : index
      %182 = vector.load %arg13[%c0_77, %c0_78, %c0_79, %c0_80] : memref<1x10x16x192xbf16, #tpu.memory_space<vmem>>, vector<1x1x16x192xbf16>
      tpu.vector_store %arg13[%c0_77, %c0_78, %c0_79, %c0_80], %176 {strides = array<i32>} : memref<1x10x16x192xbf16, #tpu.memory_space<vmem>>, vector<1x1x16x192xbf16>,
      %c0_81 = arith.constant 0 : index
      %c9_82 = arith.constant 9 : index
      %c0_83 = arith.constant 0 : index
      %c0_84 = arith.constant 0 : index
      %183 = vector.load %arg13[%c0_81, %c9_82, %c0_83, %c0_84] : memref<1x10x16x192xbf16, #tpu.memory_space<vmem>>, vector<1x1x16x192xbf16>
      tpu.vector_store %arg13[%c0_81, %c9_82, %c0_83, %c0_84], %176 {strides = array<i32>} : memref<1x10x16x192xbf16, #tpu.memory_space<vmem>>, vector<1x1x16x192xbf16>,
      %c0_85 = arith.constant 0 : index
      %c0_86 = arith.constant 0 : index
      %c0_87 = arith.constant 0 : index
      %c0_88 = arith.constant 0 : index
      %184 = vector.load %arg13[%c0_85, %c0_86, %c0_87, %c0_88] : memref<1x10x16x192xbf16, #tpu.memory_space<vmem>>, vector<1x10x1x192xbf16>
      tpu.vector_store %arg13[%c0_85, %c0_86, %c0_87, %c0_88], %177 {strides = array<i32>} : memref<1x10x16x192xbf16, #tpu.memory_space<vmem>>, vector<1x10x1x192xbf16>,
      %c0_89 = arith.constant 0 : index
      %c0_90 = arith.constant 0 : index
      %c9_91 = arith.constant 9 : index
      %c0_92 = arith.constant 0 : index
      %185 = vector.load %arg13[%c0_89, %c0_90, %c9_91, %c0_92] : memref<1x10x16x192xbf16, #tpu.memory_space<vmem>>, vector<1x10x1x192xbf16>
      tpu.vector_store %arg13[%c0_89, %c0_90, %c9_91, %c0_92], %177 {strides = array<i32>} : memref<1x10x16x192xbf16, #tpu.memory_space<vmem>>, vector<1x10x1x192xbf16>,
      %c0_93 = arith.constant 0 : index
      %c0_94 = arith.constant 0 : index
      %c0_95 = arith.constant 0 : index
      %c0_96 = arith.constant 0 : index
      %186 = vector.load %arg2[%c0_93, %c0_94, %c0_95, %c0_96] : memref<1x8x8x128xbf16, #tpu.memory_space<vmem>>, vector<1x8x8x128xbf16>
      %c0_97 = arith.constant 0 : index
      %c1_98 = arith.constant 1 : index
      %c1_99 = arith.constant 1 : index
      %c0_100 = arith.constant 0 : index
      %187 = vector.load %arg12[%c0_97, %c1_98, %c1_99, %c0_100] : memref<1x10x16x192xbf16, #tpu.memory_space<vmem>>, vector<1x8x8x128xbf16>
      tpu.vector_store %arg12[%c0_97, %c1_98, %c1_99, %c0_100], %186 {strides = array<i32>} : memref<1x10x16x192xbf16, #tpu.memory_space<vmem>>, vector<1x8x8x128xbf16>,
      %cst_101 = arith.constant 0.000000e+00 : bf16
      %188 = vector.broadcast %cst_101 : bf16 to vector<1x8x8x64xbf16>
      %c0_102 = arith.constant 0 : index
      %c1_103 = arith.constant 1 : index
      %c1_104 = arith.constant 1 : index
      %c128 = arith.constant 128 : index
      %189 = vector.load %arg12[%c0_102, %c1_103, %c1_104, %c128] : memref<1x10x16x192xbf16, #tpu.memory_space<vmem>>, vector<1x8x8x64xbf16>
      tpu.vector_store %arg12[%c0_102, %c1_103, %c1_104, %c128], %188 {strides = array<i32>} : memref<1x10x16x192xbf16, #tpu.memory_space<vmem>>, vector<1x8x8x64xbf16>,
    } else {
    }
    %c0 = arith.constant 0 : index
    %c0_1 = arith.constant 0 : index
    %c0_2 = arith.constant 0 : index
    %c0_3 = arith.constant 0 : index
    %3 = vector.load %arg3[%c0, %c0_1, %c0_2, %c0_3] : memref<1x2x9x192xf32, #tpu.memory_space<vmem>>, vector<1x1x9x192xf32>
    %4 = vector.shape_cast %3 : vector<1x1x9x192xf32> to vector<9x192xf32>
    %cst = arith.constant 0.000000e+00 : f32
    %5 = vector.broadcast %cst : f32 to vector<1x8x8x192xf32>
    %c0_4 = arith.constant 0 : index
    %c0_5 = arith.constant 0 : index
    %c0_6 = arith.constant 0 : index
    %c0_7 = arith.constant 0 : index
    %6 = vector.load %arg12[%c0_4, %c0_5, %c0_6, %c0_7] : memref<1x10x16x192xbf16, #tpu.memory_space<vmem>>, vector<1x10x8x192xbf16>
    %7 = arith.extf %6 : vector<1x10x8x192xbf16> to vector<1x10x8x192xf32>
    %8 = vector.extract_strided_slice %4 {offsets = [0, 0], sizes = [1, 192], strides = [1, 1]} : vector<9x192xf32> to vector<1x192xf32>
    %9 = vector.shape_cast %8 : vector<1x192xf32> to vector<1x1x1x192xf32>
    %10 = vector.extract_strided_slice %7 {offsets = [0, 0, 0, 0], sizes = [1, 8, 8, 192], strides = [1, 1, 1, 1]} : vector<1x10x8x192xf32> to vector<1x8x8x192xf32>
    %11 = vector.broadcast %9 : vector<1x1x1x192xf32> to vector<1x8x8x192xf32>
    %12 = arith.mulf %10, %11 : vector<1x8x8x192xf32>
    %13 = arith.addf %5, %12 : vector<1x8x8x192xf32>
    %14 = vector.extract_strided_slice %4 {offsets = [3, 0], sizes = [1, 192], strides = [1, 1]} : vector<9x192xf32> to vector<1x192xf32>
    %15 = vector.shape_cast %14 : vector<1x192xf32> to vector<1x1x1x192xf32>
    %16 = vector.extract_strided_slice %7 {offsets = [0, 1, 0, 0], sizes = [1, 8, 8, 192], strides = [1, 1, 1, 1]} : vector<1x10x8x192xf32> to vector<1x8x8x192xf32>
    %17 = vector.broadcast %15 : vector<1x1x1x192xf32> to vector<1x8x8x192xf32>
    %18 = arith.mulf %16, %17 : vector<1x8x8x192xf32>
    %19 = arith.addf %13, %18 : vector<1x8x8x192xf32>
    %20 = vector.extract_strided_slice %4 {offsets = [6, 0], sizes = [1, 192], strides = [1, 1]} : vector<9x192xf32> to vector<1x192xf32>
    %21 = vector.shape_cast %20 : vector<1x192xf32> to vector<1x1x1x192xf32>
    %22 = vector.extract_strided_slice %7 {offsets = [0, 2, 0, 0], sizes = [1, 8, 8, 192], strides = [1, 1, 1, 1]} : vector<1x10x8x192xf32> to vector<1x8x8x192xf32>
    %23 = vector.broadcast %21 : vector<1x1x1x192xf32> to vector<1x8x8x192xf32>
    %24 = arith.mulf %22, %23 : vector<1x8x8x192xf32>
    %25 = arith.addf %19, %24 : vector<1x8x8x192xf32>
    %c0_8 = arith.constant 0 : index
    %c0_9 = arith.constant 0 : index
    %c1 = arith.constant 1 : index
    %c0_10 = arith.constant 0 : index
    %26 = vector.load %arg12[%c0_8, %c0_9, %c1, %c0_10] : memref<1x10x16x192xbf16, #tpu.memory_space<vmem>>, vector<1x10x8x192xbf16>
    %27 = arith.extf %26 : vector<1x10x8x192xbf16> to vector<1x10x8x192xf32>
    %28 = vector.extract_strided_slice %4 {offsets = [1, 0], sizes = [1, 192], strides = [1, 1]} : vector<9x192xf32> to vector<1x192xf32>
    %29 = vector.shape_cast %28 : vector<1x192xf32> to vector<1x1x1x192xf32>
    %30 = vector.extract_strided_slice %27 {offsets = [0, 0, 0, 0], sizes = [1, 8, 8, 192], strides = [1, 1, 1, 1]} : vector<1x10x8x192xf32> to vector<1x8x8x192xf32>
    %31 = vector.broadcast %29 : vector<1x1x1x192xf32> to vector<1x8x8x192xf32>
    %32 = arith.mulf %30, %31 : vector<1x8x8x192xf32>
    %33 = arith.addf %25, %32 : vector<1x8x8x192xf32>
    %34 = vector.extract_strided_slice %4 {offsets = [4, 0], sizes = [1, 192], strides = [1, 1]} : vector<9x192xf32> to vector<1x192xf32>
    %35 = vector.shape_cast %34 : vector<1x192xf32> to vector<1x1x1x192xf32>
    %36 = vector.extract_strided_slice %27 {offsets = [0, 1, 0, 0], sizes = [1, 8, 8, 192], strides = [1, 1, 1, 1]} : vector<1x10x8x192xf32> to vector<1x8x8x192xf32>
    %37 = vector.broadcast %35 : vector<1x1x1x192xf32> to vector<1x8x8x192xf32>
    %38 = arith.mulf %36, %37 : vector<1x8x8x192xf32>
    %39 = arith.addf %33, %38 : vector<1x8x8x192xf32>
    %40 = vector.extract_strided_slice %4 {offsets = [7, 0], sizes = [1, 192], strides = [1, 1]} : vector<9x192xf32> to vector<1x192xf32>
    %41 = vector.shape_cast %40 : vector<1x192xf32> to vector<1x1x1x192xf32>
    %42 = vector.extract_strided_slice %27 {offsets = [0, 2, 0, 0], sizes = [1, 8, 8, 192], strides = [1, 1, 1, 1]} : vector<1x10x8x192xf32> to vector<1x8x8x192xf32>
    %43 = vector.broadcast %41 : vector<1x1x1x192xf32> to vector<1x8x8x192xf32>
    %44 = arith.mulf %42, %43 : vector<1x8x8x192xf32>
    %45 = arith.addf %39, %44 : vector<1x8x8x192xf32>
    %c0_11 = arith.constant 0 : index
    %c0_12 = arith.constant 0 : index
    %c2 = arith.constant 2 : index
    %c0_13 = arith.constant 0 : index
    %46 = vector.load %arg12[%c0_11, %c0_12, %c2, %c0_13] : memref<1x10x16x192xbf16, #tpu.memory_space<vmem>>, vector<1x10x8x192xbf16>
    %47 = arith.extf %46 : vector<1x10x8x192xbf16> to vector<1x10x8x192xf32>
    %48 = vector.extract_strided_slice %4 {offsets = [2, 0], sizes = [1, 192], strides = [1, 1]} : vector<9x192xf32> to vector<1x192xf32>
    %49 = vector.shape_cast %48 : vector<1x192xf32> to vector<1x1x1x192xf32>
    %50 = vector.extract_strided_slice %47 {offsets = [0, 0, 0, 0], sizes = [1, 8, 8, 192], strides = [1, 1, 1, 1]} : vector<1x10x8x192xf32> to vector<1x8x8x192xf32>
    %51 = vector.broadcast %49 : vector<1x1x1x192xf32> to vector<1x8x8x192xf32>
    %52 = arith.mulf %50, %51 : vector<1x8x8x192xf32>
    %53 = arith.addf %45, %52 : vector<1x8x8x192xf32>
    %54 = vector.extract_strided_slice %4 {offsets = [5, 0], sizes = [1, 192], strides = [1, 1]} : vector<9x192xf32> to vector<1x192xf32>
    %55 = vector.shape_cast %54 : vector<1x192xf32> to vector<1x1x1x192xf32>
    %56 = vector.extract_strided_slice %47 {offsets = [0, 1, 0, 0], sizes = [1, 8, 8, 192], strides = [1, 1, 1, 1]} : vector<1x10x8x192xf32> to vector<1x8x8x192xf32>
    %57 = vector.broadcast %55 : vector<1x1x1x192xf32> to vector<1x8x8x192xf32>
    %58 = arith.mulf %56, %57 : vector<1x8x8x192xf32>
    %59 = arith.addf %53, %58 : vector<1x8x8x192xf32>
    %60 = vector.extract_strided_slice %4 {offsets = [8, 0], sizes = [1, 192], strides = [1, 1]} : vector<9x192xf32> to vector<1x192xf32>
    %61 = vector.shape_cast %60 : vector<1x192xf32> to vector<1x1x1x192xf32>
    %62 = vector.extract_strided_slice %47 {offsets = [0, 2, 0, 0], sizes = [1, 8, 8, 192], strides = [1, 1, 1, 1]} : vector<1x10x8x192xf32> to vector<1x8x8x192xf32>
    %63 = vector.broadcast %61 : vector<1x1x1x192xf32> to vector<1x8x8x192xf32>
    %64 = arith.mulf %62, %63 : vector<1x8x8x192xf32>
    %65 = arith.addf %59, %64 : vector<1x8x8x192xf32>
    %66 = vector.shape_cast %65 : vector<1x8x8x192xf32> to vector<64x192xf32>
    %67 = arith.truncf %66 : vector<64x192xf32> to vector<64x192xbf16>
    %c0_14 = arith.constant 0 : index
    %c0_15 = arith.constant 0 : index
    %c0_16 = arith.constant 0 : index
    %c0_17 = arith.constant 0 : index
    %68 = vector.load %arg4[%c0_14, %c0_15, %c0_16, %c0_17] : memref<1x2x192x192xbf16, #tpu.memory_space<vmem>>, vector<1x1x192x192xbf16>
    %69 = vector.shape_cast %68 : vector<1x1x192x192xbf16> to vector<192x192xbf16>
    %cst_18 = arith.constant dense<0.000000e+00> : vector<64x192xf32>
    %70 = tpu.matmul %67, %69, %cst_18 {dimension_numbers = #tpu.dot_dimension_numbers<[1], [0], [0], [1], [0, 0, 1, 1], [], []>} : vector<64x192xbf16>, vector<192x192xbf16>, vector<64x192xf32> -> vector<64x192xf32>
    %c0_19 = arith.constant 0 : index
    %c0_20 = arith.constant 0 : index
    %c0_21 = arith.constant 0 : index
    %c0_22 = arith.constant 0 : index
    %71 = vector.load %arg5[%c0_19, %c0_20, %c0_21, %c0_22] : memref<1x2x1x192xf32, #tpu.memory_space<vmem>>, vector<1x1x1x192xf32>
    %72 = vector.shape_cast %71 : vector<1x1x1x192xf32> to vector<1x192xf32>
    %73 = vector.broadcast %72 : vector<1x192xf32> to vector<64x192xf32>
    %74 = arith.addf %70, %73 : vector<64x192xf32>
    %c2_i32 = arith.constant 2 : i32
    %75 = arith.muli %c2_i32, %arg1 : i32
    %c0_i32_23 = arith.constant 0 : i32
    %76 = arith.addi %75, %c0_i32_23 : i32
    %77 = arith.index_cast %76 : i32 to index
    %78 = memref.load %arg6[%77] : memref<12xf32, #tpu.memory_space<smem>>
    %cst_24 = arith.constant 0.000000e+00 : f32
    %79 = vector.broadcast %cst_24 : f32 to vector<64x192xf32>
    %80 = arith.cmpf oge, %74, %79 : vector<64x192xf32>
    %81 = vector.broadcast %78 : f32 to vector<64x192xf32>
    %82 = arith.mulf %81, %74 : vector<64x192xf32>
    %83 = arith.select %80, %74, %82 : vector<64x192xi1>, vector<64x192xf32>
    %84 = vector.shape_cast %83 : vector<64x192xf32> to vector<1x8x8x192xf32>
    %85 = arith.truncf %84 : vector<1x8x8x192xf32> to vector<1x8x8x192xbf16>
    %c0_25 = arith.constant 0 : index
    %c1_26 = arith.constant 1 : index
    %c1_27 = arith.constant 1 : index
    %c0_28 = arith.constant 0 : index
    %86 = vector.load %arg13[%c0_25, %c1_26, %c1_27, %c0_28] : memref<1x10x16x192xbf16, #tpu.memory_space<vmem>>, vector<1x8x8x192xbf16>
    tpu.vector_store %arg13[%c0_25, %c1_26, %c1_27, %c0_28], %85 {strides = array<i32>} : memref<1x10x16x192xbf16, #tpu.memory_space<vmem>>, vector<1x8x8x192xbf16>,
    %c0_29 = arith.constant 0 : index
    %c1_30 = arith.constant 1 : index
    %c0_31 = arith.constant 0 : index
    %c0_32 = arith.constant 0 : index
    %87 = vector.load %arg3[%c0_29, %c1_30, %c0_31, %c0_32] : memref<1x2x9x192xf32, #tpu.memory_space<vmem>>, vector<1x1x9x192xf32>
    %88 = vector.shape_cast %87 : vector<1x1x9x192xf32> to vector<9x192xf32>
    %cst_33 = arith.constant 0.000000e+00 : f32
    %89 = vector.broadcast %cst_33 : f32 to vector<1x8x8x192xf32>
    %c0_34 = arith.constant 0 : index
    %c0_35 = arith.constant 0 : index
    %c0_36 = arith.constant 0 : index
    %c0_37 = arith.constant 0 : index
    %90 = vector.load %arg13[%c0_34, %c0_35, %c0_36, %c0_37] : memref<1x10x16x192xbf16, #tpu.memory_space<vmem>>, vector<1x10x8x192xbf16>
    %91 = arith.extf %90 : vector<1x10x8x192xbf16> to vector<1x10x8x192xf32>
    %92 = vector.extract_strided_slice %88 {offsets = [0, 0], sizes = [1, 192], strides = [1, 1]} : vector<9x192xf32> to vector<1x192xf32>
    %93 = vector.shape_cast %92 : vector<1x192xf32> to vector<1x1x1x192xf32>
    %94 = vector.extract_strided_slice %91 {offsets = [0, 0, 0, 0], sizes = [1, 8, 8, 192], strides = [1, 1, 1, 1]} : vector<1x10x8x192xf32> to vector<1x8x8x192xf32>
    %95 = vector.broadcast %93 : vector<1x1x1x192xf32> to vector<1x8x8x192xf32>
    %96 = arith.mulf %94, %95 : vector<1x8x8x192xf32>
    %97 = arith.addf %89, %96 : vector<1x8x8x192xf32>
    %98 = vector.extract_strided_slice %88 {offsets = [3, 0], sizes = [1, 192], strides = [1, 1]} : vector<9x192xf32> to vector<1x192xf32>
    %99 = vector.shape_cast %98 : vector<1x192xf32> to vector<1x1x1x192xf32>
    %100 = vector.extract_strided_slice %91 {offsets = [0, 1, 0, 0], sizes = [1, 8, 8, 192], strides = [1, 1, 1, 1]} : vector<1x10x8x192xf32> to vector<1x8x8x192xf32>
    %101 = vector.broadcast %99 : vector<1x1x1x192xf32> to vector<1x8x8x192xf32>
    %102 = arith.mulf %100, %101 : vector<1x8x8x192xf32>
    %103 = arith.addf %97, %102 : vector<1x8x8x192xf32>
    %104 = vector.extract_strided_slice %88 {offsets = [6, 0], sizes = [1, 192], strides = [1, 1]} : vector<9x192xf32> to vector<1x192xf32>
    %105 = vector.shape_cast %104 : vector<1x192xf32> to vector<1x1x1x192xf32>
    %106 = vector.extract_strided_slice %91 {offsets = [0, 2, 0, 0], sizes = [1, 8, 8, 192], strides = [1, 1, 1, 1]} : vector<1x10x8x192xf32> to vector<1x8x8x192xf32>
    %107 = vector.broadcast %105 : vector<1x1x1x192xf32> to vector<1x8x8x192xf32>
    %108 = arith.mulf %106, %107 : vector<1x8x8x192xf32>
    %109 = arith.addf %103, %108 : vector<1x8x8x192xf32>
    %c0_38 = arith.constant 0 : index
    %c0_39 = arith.constant 0 : index
    %c1_40 = arith.constant 1 : index
    %c0_41 = arith.constant 0 : index
    %110 = vector.load %arg13[%c0_38, %c0_39, %c1_40, %c0_41] : memref<1x10x16x192xbf16, #tpu.memory_space<vmem>>, vector<1x10x8x192xbf16>
    %111 = arith.extf %110 : vector<1x10x8x192xbf16> to vector<1x10x8x192xf32>
    %112 = vector.extract_strided_slice %88 {offsets = [1, 0], sizes = [1, 192], strides = [1, 1]} : vector<9x192xf32> to vector<1x192xf32>
    %113 = vector.shape_cast %112 : vector<1x192xf32> to vector<1x1x1x192xf32>
    %114 = vector.extract_strided_slice %111 {offsets = [0, 0, 0, 0], sizes = [1, 8, 8, 192], strides = [1, 1, 1, 1]} : vector<1x10x8x192xf32> to vector<1x8x8x192xf32>
    %115 = vector.broadcast %113 : vector<1x1x1x192xf32> to vector<1x8x8x192xf32>
    %116 = arith.mulf %114, %115 : vector<1x8x8x192xf32>
    %117 = arith.addf %109, %116 : vector<1x8x8x192xf32>
    %118 = vector.extract_strided_slice %88 {offsets = [4, 0], sizes = [1, 192], strides = [1, 1]} : vector<9x192xf32> to vector<1x192xf32>
    %119 = vector.shape_cast %118 : vector<1x192xf32> to vector<1x1x1x192xf32>
    %120 = vector.extract_strided_slice %111 {offsets = [0, 1, 0, 0], sizes = [1, 8, 8, 192], strides = [1, 1, 1, 1]} : vector<1x10x8x192xf32> to vector<1x8x8x192xf32>
    %121 = vector.broadcast %119 : vector<1x1x1x192xf32> to vector<1x8x8x192xf32>
    %122 = arith.mulf %120, %121 : vector<1x8x8x192xf32>
    %123 = arith.addf %117, %122 : vector<1x8x8x192xf32>
    %124 = vector.extract_strided_slice %88 {offsets = [7, 0], sizes = [1, 192], strides = [1, 1]} : vector<9x192xf32> to vector<1x192xf32>
    %125 = vector.shape_cast %124 : vector<1x192xf32> to vector<1x1x1x192xf32>
    %126 = vector.extract_strided_slice %111 {offsets = [0, 2, 0, 0], sizes = [1, 8, 8, 192], strides = [1, 1, 1, 1]} : vector<1x10x8x192xf32> to vector<1x8x8x192xf32>
    %127 = vector.broadcast %125 : vector<1x1x1x192xf32> to vector<1x8x8x192xf32>
    %128 = arith.mulf %126, %127 : vector<1x8x8x192xf32>
    %129 = arith.addf %123, %128 : vector<1x8x8x192xf32>
    %c0_42 = arith.constant 0 : index
    %c0_43 = arith.constant 0 : index
    %c2_44 = arith.constant 2 : index
    %c0_45 = arith.constant 0 : index
    %130 = vector.load %arg13[%c0_42, %c0_43, %c2_44, %c0_45] : memref<1x10x16x192xbf16, #tpu.memory_space<vmem>>, vector<1x10x8x192xbf16>
    %131 = arith.extf %130 : vector<1x10x8x192xbf16> to vector<1x10x8x192xf32>
    %132 = vector.extract_strided_slice %88 {offsets = [2, 0], sizes = [1, 192], strides = [1, 1]} : vector<9x192xf32> to vector<1x192xf32>
    %133 = vector.shape_cast %132 : vector<1x192xf32> to vector<1x1x1x192xf32>
    %134 = vector.extract_strided_slice %131 {offsets = [0, 0, 0, 0], sizes = [1, 8, 8, 192], strides = [1, 1, 1, 1]} : vector<1x10x8x192xf32> to vector<1x8x8x192xf32>
    %135 = vector.broadcast %133 : vector<1x1x1x192xf32> to vector<1x8x8x192xf32>
    %136 = arith.mulf %134, %135 : vector<1x8x8x192xf32>
    %137 = arith.addf %129, %136 : vector<1x8x8x192xf32>
    %138 = vector.extract_strided_slice %88 {offsets = [5, 0], sizes = [1, 192], strides = [1, 1]} : vector<9x192xf32> to vector<1x192xf32>
    %139 = vector.shape_cast %138 : vector<1x192xf32> to vector<1x1x1x192xf32>
    %140 = vector.extract_strided_slice %131 {offsets = [0, 1, 0, 0], sizes = [1, 8, 8, 192], strides = [1, 1, 1, 1]} : vector<1x10x8x192xf32> to vector<1x8x8x192xf32>
    %141 = vector.broadcast %139 : vector<1x1x1x192xf32> to vector<1x8x8x192xf32>
    %142 = arith.mulf %140, %141 : vector<1x8x8x192xf32>
    %143 = arith.addf %137, %142 : vector<1x8x8x192xf32>
    %144 = vector.extract_strided_slice %88 {offsets = [8, 0], sizes = [1, 192], strides = [1, 1]} : vector<9x192xf32> to vector<1x192xf32>
    %145 = vector.shape_cast %144 : vector<1x192xf32> to vector<1x1x1x192xf32>
    %146 = vector.extract_strided_slice %131 {offsets = [0, 2, 0, 0], sizes = [1, 8, 8, 192], strides = [1, 1, 1, 1]} : vector<1x10x8x192xf32> to vector<1x8x8x192xf32>
    %147 = vector.broadcast %145 : vector<1x1x1x192xf32> to vector<1x8x8x192xf32>
    %148 = arith.mulf %146, %147 : vector<1x8x8x192xf32>
    %149 = arith.addf %143, %148 : vector<1x8x8x192xf32>
    %150 = vector.shape_cast %149 : vector<1x8x8x192xf32> to vector<64x192xf32>
    %151 = arith.truncf %150 : vector<64x192xf32> to vector<64x192xbf16>
    %c0_46 = arith.constant 0 : index
    %c1_47 = arith.constant 1 : index
    %c0_48 = arith.constant 0 : index
    %c0_49 = arith.constant 0 : index
    %152 = vector.load %arg4[%c0_46, %c1_47, %c0_48, %c0_49] : memref<1x2x192x192xbf16, #tpu.memory_space<vmem>>, vector<1x1x192x192xbf16>
    %153 = vector.shape_cast %152 : vector<1x1x192x192xbf16> to vector<192x192xbf16>
    %cst_50 = arith.constant dense<0.000000e+00> : vector<64x192xf32>
    %154 = tpu.matmul %151, %153, %cst_50 {dimension_numbers = #tpu.dot_dimension_numbers<[1], [0], [0], [1], [0, 0, 1, 1], [], []>} : vector<64x192xbf16>, vector<192x192xbf16>, vector<64x192xf32> -> vector<64x192xf32>
    %c0_51 = arith.constant 0 : index
    %c1_52 = arith.constant 1 : index
    %c0_53 = arith.constant 0 : index
    %c0_54 = arith.constant 0 : index
    %155 = vector.load %arg5[%c0_51, %c1_52, %c0_53, %c0_54] : memref<1x2x1x192xf32, #tpu.memory_space<vmem>>, vector<1x1x1x192xf32>
    %156 = vector.shape_cast %155 : vector<1x1x1x192xf32> to vector<1x192xf32>
    %157 = vector.broadcast %156 : vector<1x192xf32> to vector<64x192xf32>
    %158 = arith.addf %154, %157 : vector<64x192xf32>
    %c2_i32_55 = arith.constant 2 : i32
    %159 = arith.muli %c2_i32_55, %arg1 : i32
    %c1_i32 = arith.constant 1 : i32
    %160 = arith.addi %159, %c1_i32 : i32
    %161 = arith.index_cast %160 : i32 to index
    %162 = memref.load %arg6[%161] : memref<12xf32, #tpu.memory_space<smem>>
    %cst_56 = arith.constant 0.000000e+00 : f32
    %163 = vector.broadcast %cst_56 : f32 to vector<64x192xf32>
    %164 = arith.cmpf oge, %158, %163 : vector<64x192xf32>
    %165 = vector.broadcast %162 : f32 to vector<64x192xf32>
    %166 = arith.mulf %165, %158 : vector<64x192xf32>
    %167 = arith.select %164, %158, %166 : vector<64x192xi1>, vector<64x192xf32>
    %168 = vector.shape_cast %167 : vector<64x192xf32> to vector<1x8x8x192xf32>
    %c1_i32_57 = arith.constant 1 : i32
    %169 = arith.addi %arg1, %c1_i32_57 : i32
    %c6_i32 = arith.constant 6 : i32
    %170 = arith.cmpi slt, %169, %c6_i32 : i32
    %171 = arith.extui %170 : i1 to i32
    %c0_i32_58 = arith.constant 0 : i32
    %172 = arith.cmpi ne, %171, %c0_i32_58 : i32
    scf.if %172 {
      %176 = arith.truncf %168 : vector<1x8x8x192xf32> to vector<1x8x8x192xbf16>
      %c0_60 = arith.constant 0 : index
      %c1_61 = arith.constant 1 : index
      %c1_62 = arith.constant 1 : index
      %c0_63 = arith.constant 0 : index
      %177 = vector.load %arg12[%c0_60, %c1_61, %c1_62, %c0_63] : memref<1x10x16x192xbf16, #tpu.memory_space<vmem>>, vector<1x8x8x192xbf16>
      tpu.vector_store %arg12[%c0_60, %c1_61, %c1_62, %c0_63], %176 {strides = array<i32>} : memref<1x10x16x192xbf16, #tpu.memory_space<vmem>>, vector<1x8x8x192xbf16>,
    } else {
    }
    %c5_i32 = arith.constant 5 : i32
    %173 = arith.cmpi eq, %arg1, %c5_i32 : i32
    %174 = arith.extui %173 : i1 to i32
    %c0_i32_59 = arith.constant 0 : i32
    %175 = arith.cmpi ne, %174, %c0_i32_59 : i32
    scf.if %175 {
      %176 = vector.shape_cast %168 : vector<1x8x8x192xf32> to vector<1x64x192xf32>
      %cst_60 = arith.constant dense<0.000000e+00> : vector<1x192xf32>
      %177 = vector.multi_reduction <add>, %176, %cst_60 [1] : vector<1x64x192xf32> to vector<1x192xf32>
      %cst_61 = arith.constant 6.400000e+01 : f32
      %178 = vector.broadcast %cst_61 : f32 to vector<1x192xf32>
      %179 = arith.divf %177, %178 : vector<1x192xf32>
      %180 = arith.truncf %179 : vector<1x192xf32> to vector<1x192xbf16>
      %c0_62 = arith.constant 0 : index
      %c0_63 = arith.constant 0 : index
      %181 = vector.load %arg7[%c0_62, %c0_63] : memref<192x1000xbf16, #tpu.memory_space<vmem>>, vector<192x1000xbf16>
      %cst_64 = arith.constant dense<0.000000e+00> : vector<1x1000xf32>
      %182 = tpu.matmul %180, %181, %cst_64 {dimension_numbers = #tpu.dot_dimension_numbers<[1], [0], [0], [1], [0, 0, 1, 1], [], []>} : vector<1x192xbf16>, vector<192x1000xbf16>, vector<1x1000xf32> -> vector<1x1000xf32>
      %183 = arith.truncf %182 : vector<1x1000xf32> to vector<1x1000xbf16>
      %c0_65 = arith.constant 0 : index
      %c0_66 = arith.constant 0 : index
      %184 = vector.load %arg8[%c0_65, %c0_66] : memref<1000x192xbf16, #tpu.memory_space<vmem>>, vector<1000x192xbf16>
      %cst_67 = arith.constant dense<0.000000e+00> : vector<1x192xf32>
      %185 = tpu.matmul %183, %184, %cst_67 {dimension_numbers = #tpu.dot_dimension_numbers<[1], [0], [0], [1], [0, 0, 1, 1], [], []>} : vector<1x1000xbf16>, vector<1000x192xbf16>, vector<1x192xf32> -> vector<1x192xf32>
      %c0_68 = arith.constant 0 : index
      %c0_69 = arith.constant 0 : index
      %186 = vector.load %arg9[%c0_68, %c0_69] : memref<1x192xf32, #tpu.memory_space<vmem>>, vector<1x192xf32>
      %187 = arith.addf %185, %186 : vector<1x192xf32>
      %cst_70 = arith.constant 0.000000e+00 : f32
      %188 = vector.broadcast %cst_70 : f32 to vector<1x192xf32>
      %189 = arith.cmpf oge, %187, %188 : vector<1x192xf32>
      %c0_71 = arith.constant 0 : index
      %190 = memref.load %arg10[%c0_71] : memref<2xf32, #tpu.memory_space<smem>>
      %191 = vector.broadcast %190 : f32 to vector<1x192xf32>
      %192 = arith.mulf %191, %187 : vector<1x192xf32>
      %193 = arith.select %189, %187, %192 : vector<1x192xi1>, vector<1x192xf32>
      %194 = vector.shape_cast %193 : vector<1x192xf32> to vector<1x1x1x192xf32>
      %195 = vector.broadcast %194 : vector<1x1x1x192xf32> to vector<1x8x8x192xf32>
      %196 = arith.mulf %168, %195 : vector<1x8x8x192xf32>
      %cst_72 = arith.constant 0.000000e+00 : f32
      %197 = vector.broadcast %cst_72 : f32 to vector<1x8x8x192xf32>
      %198 = arith.cmpf oge, %196, %197 : vector<1x8x8x192xf32>
      %c1_73 = arith.constant 1 : index
      %199 = memref.load %arg10[%c1_73] : memref<2xf32, #tpu.memory_space<smem>>
      %200 = vector.broadcast %199 : f32 to vector<1x8x8x192xf32>
      %201 = arith.mulf %200, %196 : vector<1x8x8x192xf32>
      %202 = arith.select %198, %196, %201 : vector<1x8x8x192xi1>, vector<1x8x8x192xf32>
      %c0_74 = arith.constant 0 : index
      %c0_75 = arith.constant 0 : index
      %c0_76 = arith.constant 0 : index
      %c0_77 = arith.constant 0 : index
      %203 = vector.load %arg11[%c0_74, %c0_75, %c0_76, %c0_77] : memref<1x8x8x192xf32, #tpu.memory_space<vmem>>, vector<1x8x8x192xf32>
      tpu.vector_store %arg11[%c0_74, %c0_75, %c0_76, %c0_77], %202 {strides = array<i32>} : memref<1x8x8x192xf32, #tpu.memory_space<vmem>>, vector<1x8x8x192xf32>,
    } else {
    }
    return
  }
  func.func @transform_0(%arg0: i32, %arg1: i32) -> (i32, i32, i32, i32) {
    %c0_i32 = arith.constant 0 : i32
    %c0_i32_0 = arith.constant 0 : i32
    %c0_i32_1 = arith.constant 0 : i32
    %c0_i32_2 = arith.constant 0 : i32
    return %arg0, %c0_i32, %c0_i32_0, %c0_i32_1 : i32, i32, i32, i32
  }
  func.func @transform_1(%arg0: i32, %arg1: i32) -> (i32, i32, i32, i32) {
    %c0_i32 = arith.constant 0 : i32
    %c0_i32_0 = arith.constant 0 : i32
    %c0_i32_1 = arith.constant 0 : i32
    %c0_i32_2 = arith.constant 0 : i32
    return %arg1, %c0_i32, %c0_i32_0, %c0_i32_1 : i32, i32, i32, i32
  }
  func.func @transform_2(%arg0: i32, %arg1: i32) -> (i32, i32, i32, i32) {
    %c0_i32 = arith.constant 0 : i32
    %c0_i32_0 = arith.constant 0 : i32
    %c0_i32_1 = arith.constant 0 : i32
    %c0_i32_2 = arith.constant 0 : i32
    return %arg1, %c0_i32, %c0_i32_0, %c0_i32_1 : i32, i32, i32, i32
  }
  func.func @transform_3(%arg0: i32, %arg1: i32) -> (i32, i32, i32, i32) {
    %c0_i32 = arith.constant 0 : i32
    %c0_i32_0 = arith.constant 0 : i32
    %c0_i32_1 = arith.constant 0 : i32
    %c0_i32_2 = arith.constant 0 : i32
    return %arg1, %c0_i32, %c0_i32_0, %c0_i32_1 : i32, i32, i32, i32
  }
  func.func @transform_4(%arg0: i32, %arg1: i32) -> i32 {
    %c0_i32 = arith.constant 0 : i32
    %c0_i32_0 = arith.constant 0 : i32
    return %c0_i32 : i32
  }
  func.func @transform_5(%arg0: i32, %arg1: i32) -> (i32, i32) {
    %c0_i32 = arith.constant 0 : i32
    %c0_i32_0 = arith.constant 0 : i32
    %c0_i32_1 = arith.constant 0 : i32
    return %c0_i32, %c0_i32_0 : i32, i32
  }
  func.func @transform_6(%arg0: i32, %arg1: i32) -> (i32, i32) {
    %c0_i32 = arith.constant 0 : i32
    %c0_i32_0 = arith.constant 0 : i32
    %c0_i32_1 = arith.constant 0 : i32
    return %c0_i32, %c0_i32_0 : i32, i32
  }
  func.func @transform_7(%arg0: i32, %arg1: i32) -> (i32, i32) {
    %c0_i32 = arith.constant 0 : i32
    %c0_i32_0 = arith.constant 0 : i32
    %c0_i32_1 = arith.constant 0 : i32
    return %c0_i32, %c0_i32_0 : i32, i32
  }
  func.func @transform_8(%arg0: i32, %arg1: i32) -> i32 {
    %c0_i32 = arith.constant 0 : i32
    %c0_i32_0 = arith.constant 0 : i32
    return %c0_i32 : i32
  }
  func.func @transform_9(%arg0: i32, %arg1: i32) -> (i32, i32, i32, i32) {
    %c0_i32 = arith.constant 0 : i32
    %c0_i32_0 = arith.constant 0 : i32
    %c0_i32_1 = arith.constant 0 : i32
    %c0_i32_2 = arith.constant 0 : i32
    return %arg0, %c0_i32, %c0_i32_0, %c0_i32_1 : i32, i32, i32, i32
  }
}

</mosaic_0001>

<llo_original>
// kernel: xception_a_forward.3
$region0: #{xception_a_forward.3}
  #allocation0 [shape = 'u32[]', space=smem, size = 0x4, offset = 0x4, fixed_abs, tag = 'smem constant byte address 0x4 - core index']
  #allocation1 [shape = 'u32[72,128]{1,0:T(1,128)}', space=vmem, size = 0x9000, scoped, tag = 'internal scratch']
  #allocation2 [shape = 'bf16[1,10,16,128]{3,2,1,0:T(8,128)(2,1)}', space=vmem, size = 0xa000, scoped, tag = 'scratch operand']
  #allocation3 [shape = 'bf16[1,10,16,128]{3,2,1,0:T(8,128)(2,1)}', space=vmem, size = 0xa000, scoped, tag = 'scratch operand']
  #allocation4 [shape = 'f32[1]{0:T(128)S(6)}', space=smem, size = 0x200, scoped, tag = 'scoped memory for xception_a_forward.3']
  %s0 = inlined_call_operand.vmem [shape: bf16[2,8,8,27], index: 0, kind: input, shape index: {}]
  %s1 = inlined_call_operand.vmem [shape: bf16[27,128], index: 1, kind: input, shape index: {}]
  %s2 = inlined_call_operand.vmem [shape: f32[1,128], index: 2, kind: input, shape index: {}]
  %s3 = inlined_call_operand.<no memory space> [shape: f32[1], index: 3, kind: input, shape index: {}]
  %s4 = inlined_call_operand.vmem [shape: f32[6,2,9,128], index: 4, kind: input, shape index: {}]
  %s5 = inlined_call_operand.vmem [shape: bf16[6,2,128,128], index: 5, kind: input, shape index: {}]
  %s6 = inlined_call_operand.vmem [shape: f32[6,2,1,128], index: 6, kind: input, shape index: {}]
  %s7 = inlined_call_operand.vmem [shape: f32[12], index: 7, kind: input, shape index: {}]
  %s8 = inlined_call_operand.vmem [shape: bf16[2,8,8,128], index: 8, kind: output, shape index: {}]
  %s9 = sld [smem:[#allocation0]]
  $region81: #{xception_a_forward.3} parent=0
    _
  %s11 = ssub.s32 1, %s9
  %s12 = scalar_select 0, %s11, %s9
  %13 = sst [smem:[#allocation4]] %s3
  $region1: #{xception_a_forward.3} parent=0
    #allocation5 [shape = 'u8[512]{0}', space=smem, size = 0x200, scoped, tag = 'input window, operand 7, single buffered']
    #allocation6 [shape = 's32[2]{0}', space=sflag, size = 0x8, scoped, tag = 'scoped memory for xception_a_forward.3']
    %14 = vsyncpa [#allocation6], 0
    loop: start=0, step=1, limit=14
    $region2: #{xception_a_forward.3} parent=1 // loop_pre_header
      _
    $region3: #{xception_a_forward.3} parent=1 // loop_header
      %s16 = sphi 0, %s20
      %p17 = scmp.ge.s32.totalorder %s16, 14
      %s23 = sphi 0, %s35
      %s24 = sphi 0, %s31
      %s25 = sphi 0, %s23
      %s26 = sphi 0, %s24
      %s27 = sphi 0, %s25
      %s28 = sphi 0, %s26
      %s38 = sphi 0, %s40
      %s41 = sphi 0, %s38
      %s42 = sphi 0, %s41
      %s58 = sphi 0, %s42
      %s62 = sphi 0, %s62
      %s64 = sphi 0, %s62
      %s65 = sphi 0, %s64
      %s79 = sphi 0, %s65
      %s83 = sphi 0, %s83
      %s85 = sphi 0, %s83
      %s86 = sphi 0, %s85
      %s100 = sphi 0, %s86
      %s104 = sphi 0, %s104
      %s106 = sphi 0, %s104
      %s107 = sphi 0, %s106
      %s121 = sphi 0, %s107
      %s127 = sphi 0, %s129
      %s130 = sphi 0, %s127
      %s131 = sphi 0, %s130
      %s147 = sphi 0, %s131
      %s153 = sphi 0, %s155
      %s156 = sphi 0, %s153
      %s157 = sphi 0, %s156
      %s173 = sphi 0, %s157
      %s179 = sphi 0, %s181
      %s182 = sphi 0, %s179
      %s183 = sphi 0, %s182
      %s199 = sphi 0, %s183
      %s203 = sphi 0, %s203
      %s205 = sphi 0, %s203
      %s206 = sphi 0, %s205
      %s220 = sphi 0, %s206
      %s226 = sphi 0, %s228
      %s229 = sphi 0, %s226
      %s230 = sphi 0, %s229
      %s246 = sphi 0, %s230
    $region4: #{xception_a_forward.3} parent=1 // loop_header_branch
      %19 = sbr.rel (%p17) target = $region8
    $region5: #{xception_a_forward.3} parent=1 // loop_body
      %s21 = ssub.s32 %s16, 1
      %s22 = ssub.s32 %s16, 2
      %s29 = sadd.s32 1, %s24
      %p30 = scmp.ge.s32.totalorder %s29, 6
      %s31 = scalar_select %p30, 0, %s29
      %s32 = sadd.s32 1, %s23
      %s33 = scalar_select %p30, %s32, %s23
      %p34 = scmp.ge.s32.totalorder %s33, 2
      %s35 = scalar_select %p34, 0, %s33
      %s36 = ssub.s32 %s23, %s35
      %p37 = scmp.eq.s32.totalorder %s36, 0
      %s39 = sadd.s32 %s38, 1
      %s40 = scalar_select %p37, %s38, %s39
      %p43 = pneg %p37
      %p44 = scmp.eq.s32.totalorder %s16, 11
      %p45 = por %p43, %p44
      %p46 = scmp.ne.s32.totalorder %s38, %s41
      %p47 = scmp.eq.s32.totalorder %s16, 0
      %p48 = por %p46, %p47
      %p49 = scmp.ne.s32.totalorder %s38, %s41
      %p50 = scmp.eq.s32.totalorder %s21, 11
      %p51 = por %p49, %p50
      %p52 = scmp.ne.s32.totalorder %s41, %s42
      %p53 = scmp.eq.s32.totalorder %s21, 0
      %p54 = por %p52, %p53
      %p55 = scmp.ne.s32.totalorder %s41, %s42
      %p56 = scmp.eq.s32.totalorder %s22, 11
      %p57 = por %p55, %p56
      %p59 = scmp.ne.s32.totalorder %s42, %s58
      %p60 = scmp.eq.s32.totalorder %s22, 0
      %p61 = por %p59, %p60
      %s63 = sadd.s32 %s62, 1
      %p66 = scmp.eq.s32.totalorder %s16, 11
      %p67 = scmp.ne.s32.totalorder %s62, %s64
      %p68 = scmp.eq.s32.totalorder %s16, 0
      %p69 = por %p67, %p68
      %p70 = scmp.ne.s32.totalorder %s62, %s64
      %p71 = scmp.eq.s32.totalorder %s21, 11
      %p72 = por %p70, %p71
      %p73 = scmp.ne.s32.totalorder %s64, %s65
      %p74 = scmp.eq.s32.totalorder %s21, 0
      %p75 = por %p73, %p74
      %p76 = scmp.ne.s32.totalorder %s64, %s65
      %p77 = scmp.eq.s32.totalorder %s22, 11
      %p78 = por %p76, %p77
      %p80 = scmp.ne.s32.totalorder %s65, %s79
      %p81 = scmp.eq.s32.totalorder %s22, 0
      %p82 = por %p80, %p81
      %s84 = sadd.s32 %s83, 1
      %p87 = scmp.eq.s32.totalorder %s16, 11
      %p88 = scmp.ne.s32.totalorder %s83, %s85
      %p89 = scmp.eq.s32.totalorder %s16, 0
      %p90 = por %p88, %p89
      %p91 = scmp.ne.s32.totalorder %s83, %s85
      %p92 = scmp.eq.s32.totalorder %s21, 11
      %p93 = por %p91, %p92
      %p94 = scmp.ne.s32.totalorder %s85, %s86
      %p95 = scmp.eq.s32.totalorder %s21, 0
      %p96 = por %p94, %p95
      %p97 = scmp.ne.s32.totalorder %s85, %s86
      %p98 = scmp.eq.s32.totalorder %s22, 11
      %p99 = por %p97, %p98
      %p101 = scmp.ne.s32.totalorder %s86, %s100
      %p102 = scmp.eq.s32.totalorder %s22, 0
      %p103 = por %p101, %p102
      %s105 = sadd.s32 %s104, 1
      %p108 = scmp.eq.s32.totalorder %s16, 11
      %p109 = scmp.ne.s32.totalorder %s104, %s106
      %p110 = scmp.eq.s32.totalorder %s16, 0
      %p111 = por %p109, %p110
      %p112 = scmp.ne.s32.totalorder %s104, %s106
      %p113 = scmp.eq.s32.totalorder %s21, 11
      %p114 = por %p112, %p113
      %p115 = scmp.ne.s32.totalorder %s106, %s107
      %p116 = scmp.eq.s32.totalorder %s21, 0
      %p117 = por %p115, %p116
      %p118 = scmp.ne.s32.totalorder %s106, %s107
      %p119 = scmp.eq.s32.totalorder %s22, 11
      %p120 = por %p118, %p119
      %p122 = scmp.ne.s32.totalorder %s107, %s121
      %p123 = scmp.eq.s32.totalorder %s22, 0
      %p124 = por %p122, %p123
      %s125 = ssub.s32 %s24, %s31
      %p126 = scmp.eq.s32.totalorder %s125, 0
      %s128 = sadd.s32 %s127, 1
      %s129 = scalar_select %p126, %s127, %s128
      %p132 = pneg %p126
      %p133 = scmp.eq.s32.totalorder %s16, 11
      %p134 = por %p132, %p133
      %p135 = scmp.ne.s32.totalorder %s127, %s130
      %p136 = scmp.eq.s32.totalorder %s16, 0
      %p137 = por %p135, %p136
      %p138 = scmp.ne.s32.totalorder %s127, %s130
      %p139 = scmp.eq.s32.totalorder %s21, 11
      %p140 = por %p138, %p139
      %p141 = scmp.ne.s32.totalorder %s130, %s131
      %p142 = scmp.eq.s32.totalorder %s21, 0
      %p143 = por %p141, %p142
      %p144 = scmp.ne.s32.totalorder %s130, %s131
      %p145 = scmp.eq.s32.totalorder %s22, 11
      %p146 = por %p144, %p145
      %p148 = scmp.ne.s32.totalorder %s131, %s147
      %p149 = scmp.eq.s32.totalorder %s22, 0
      %p150 = por %p148, %p149
      %s151 = ssub.s32 %s24, %s31
      %p152 = scmp.eq.s32.totalorder %s151, 0
      %s154 = sadd.s32 %s153, 1
      %s155 = scalar_select %p152, %s153, %s154
      %p158 = pneg %p152
      %p159 = scmp.eq.s32.totalorder %s16, 11
      %p160 = por %p158, %p159
      %p161 = scmp.ne.s32.totalorder %s153, %s156
      %p162 = scmp.eq.s32.totalorder %s16, 0
      %p163 = por %p161, %p162
      %p164 = scmp.ne.s32.totalorder %s153, %s156
      %p165 = scmp.eq.s32.totalorder %s21, 11
      %p166 = por %p164, %p165
      %p167 = scmp.ne.s32.totalorder %s156, %s157
      %p168 = scmp.eq.s32.totalorder %s21, 0
      %p169 = por %p167, %p168
      %p170 = scmp.ne.s32.totalorder %s156, %s157
      %p171 = scmp.eq.s32.totalorder %s22, 11
      %p172 = por %p170, %p171
      %p174 = scmp.ne.s32.totalorder %s157, %s173
      %p175 = scmp.eq.s32.totalorder %s22, 0
      %p176 = por %p174, %p175
      %s177 = ssub.s32 %s24, %s31
      %p178 = scmp.eq.s32.totalorder %s177, 0
      %s180 = sadd.s32 %s179, 1
      %s181 = scalar_select %p178, %s179, %s180
      %p184 = pneg %p178
      %p185 = scmp.eq.s32.totalorder %s16, 11
      %p186 = por %p184, %p185
      %p187 = scmp.ne.s32.totalorder %s179, %s182
      %p188 = scmp.eq.s32.totalorder %s16, 0
      %p189 = por %p187, %p188
      %p190 = scmp.ne.s32.totalorder %s179, %s182
      %p191 = scmp.eq.s32.totalorder %s21, 11
      %p192 = por %p190, %p191
      %p193 = scmp.ne.s32.totalorder %s182, %s183
      %p194 = scmp.eq.s32.totalorder %s21, 0
      %p195 = por %p193, %p194
      %p196 = scmp.ne.s32.totalorder %s182, %s183
      %p197 = scmp.eq.s32.totalorder %s22, 11
      %p198 = por %p196, %p197
      %p200 = scmp.ne.s32.totalorder %s183, %s199
      %p201 = scmp.eq.s32.totalorder %s22, 0
      %p202 = por %p200, %p201
      %s204 = sadd.s32 %s203, 1
      %p207 = scmp.eq.s32.totalorder %s16, 11
      %p208 = scmp.ne.s32.totalorder %s203, %s205
      %p209 = scmp.eq.s32.totalorder %s16, 0
      %p210 = por %p208, %p209
      %p211 = scmp.ne.s32.totalorder %s203, %s205
      %p212 = scmp.eq.s32.totalorder %s21, 11
      %p213 = por %p211, %p212
      %p214 = scmp.ne.s32.totalorder %s205, %s206
      %p215 = scmp.eq.s32.totalorder %s21, 0
      %p216 = por %p214, %p215
      %p217 = scmp.ne.s32.totalorder %s205, %s206
      %p218 = scmp.eq.s32.totalorder %s22, 11
      %p219 = por %p217, %p218
      %p221 = scmp.ne.s32.totalorder %s206, %s220
      %p222 = scmp.eq.s32.totalorder %s22, 0
      %p223 = por %p221, %p222
      %s224 = ssub.s32 %s23, %s35
      %p225 = scmp.eq.s32.totalorder %s224, 0
      %s227 = sadd.s32 %s226, 1
      %s228 = scalar_select %p225, %s226, %s227
      %p231 = pneg %p225
      %p232 = scmp.eq.s32.totalorder %s16, 11
      %p233 = por %p231, %p232
      %p234 = scmp.ne.s32.totalorder %s226, %s229
      %p235 = scmp.eq.s32.totalorder %s16, 0
      %p236 = por %p234, %p235
      %p237 = scmp.ne.s32.totalorder %s226, %s229
      %p238 = scmp.eq.s32.totalorder %s21, 11
      %p239 = por %p237, %p238
      %p240 = scmp.ne.s32.totalorder %s229, %s230
      %p241 = scmp.eq.s32.totalorder %s21, 0
      %p242 = por %p240, %p241
      %p243 = scmp.ne.s32.totalorder %s229, %s230
      %p244 = scmp.eq.s32.totalorder %s22, 11
      %p245 = por %p243, %p244
      %p247 = scmp.ne.s32.totalorder %s230, %s246
      %p248 = scmp.eq.s32.totalorder %s22, 0
      %p249 = por %p247, %p248
      %p250 = scmp.le.s32.totalorder 1, %s16
      %p251 = scmp.lt.s32.totalorder %s16, 13
      %p252 = pnand %p250, %p251
      %p253 = pneg %p252
      // Predicated region
      $region9: #{xception_a_forward.3} parent=5 // pred_check
        _
      $region10: #{xception_a_forward.3} parent=5 // pred_check_branch
        %255 = sbr.rel (%p252) target = $region12
      $region11: #{xception_a_forward.3} parent=5 // pred_region
        %s256 = ssub.s32 %s16, 1
        // Predicated region
        $region13: #{xception_a_forward.3} parent=11 // pred_check
          %p257 = pneg %p75
        $region14: #{xception_a_forward.3} parent=11 // pred_check_branch
          %259 = sbr.rel (%p257) target = $region16
        $region15: #{xception_a_forward.3} parent=11 // pred_region
          _
        $region16: #{xception_a_forward.3} parent=11 // pred_fallthru
          _
        // Predicated region
        $region17: #{xception_a_forward.3} parent=11 // pred_check
          %p260 = pneg %p96
        $region18: #{xception_a_forward.3} parent=11 // pred_check_branch
          %262 = sbr.rel (%p260) target = $region20
        $region19: #{xception_a_forward.3} parent=11 // pred_region
          _
        $region20: #{xception_a_forward.3} parent=11 // pred_fallthru
          _
        // Predicated region
        $region21: #{xception_a_forward.3} parent=11 // pred_check
          %p263 = pneg %p117
        $region22: #{xception_a_forward.3} parent=11 // pred_check_branch
          %265 = sbr.rel (%p263) target = $region24
        $region23: #{xception_a_forward.3} parent=11 // pred_region
          _
        $region24: #{xception_a_forward.3} parent=11 // pred_fallthru
          _
        // Predicated region
        $region25: #{xception_a_forward.3} parent=11 // pred_check
          %p266 = pneg %p216
        $region26: #{xception_a_forward.3} parent=11 // pred_check_branch
          %268 = sbr.rel (%p266) target = $region28
        $region27: #{xception_a_forward.3} parent=11 // pred_region
          %270 = vsyncadd [#allocation6], 0
          %s272 = sshll.u32 %s7, 4
          %s273 = int_to_ptr.vmem [resolvable:$true] %s272
          %275 = dma.vmem_to_smem %s273, 16, [#allocation5], [#allocation6]
        $region28: #{xception_a_forward.3} parent=11 // pred_fallthru
          _
      $region12: #{xception_a_forward.3} parent=5 // pred_fallthru
        _
      %p276 = scmp.lt.s32.totalorder %s16, 12
      // Predicated region
      $region29: #{xception_a_forward.3} parent=5 // pred_check
        %p277 = pneg %p276
      $region30: #{xception_a_forward.3} parent=5 // pred_check_branch
        %279 = sbr.rel (%p277) target = $region32
      $region31: #{xception_a_forward.3} parent=5 // pred_region
        // Predicated region
        $region33: #{xception_a_forward.3} parent=31 // pred_check
          %p280 = pneg %p48
        $region34: #{xception_a_forward.3} parent=31 // pred_check_branch
          %282 = sbr.rel (%p280) target = $region36
        $region35: #{xception_a_forward.3} parent=31 // pred_region
          %p283 = scmp.lt.s32.totalorder %s23, 1
          %s284 = scalar_select %p283, %s23, 1
          %s285 = smul.addr %s284, 8
          %s286 = smul.addr %s285, 4
          %s287 = scalar_lea.vmem %s0, %s286
        $region36: #{xception_a_forward.3} parent=31 // pred_fallthru
          _
        // Predicated region
        $region37: #{xception_a_forward.3} parent=31 // pred_check
          %p288 = pneg %p137
        $region38: #{xception_a_forward.3} parent=31 // pred_check_branch
          %290 = sbr.rel (%p288) target = $region40
        $region39: #{xception_a_forward.3} parent=31 // pred_region
          %p291 = scmp.lt.s32.totalorder %s24, 5
          %s292 = scalar_select %p291, %s24, 5
          %s293 = smul.addr %s292, 4
          %s294 = smul.addr %s293, 8
          %s295 = scalar_lea.vmem %s4, %s294
        $region40: #{xception_a_forward.3} parent=31 // pred_fallthru
          _
        // Predicated region
        $region41: #{xception_a_forward.3} parent=31 // pred_check
          %p296 = pneg %p163
        $region42: #{xception_a_forward.3} parent=31 // pred_check_branch
          %298 = sbr.rel (%p296) target = $region44
        $region43: #{xception_a_forward.3} parent=31 // pred_region
          %p299 = scmp.lt.s32.totalorder %s24, 5
          %s300 = scalar_select %p299, %s24, 5
          %s301 = smul.addr %s300, 32
          %s302 = smul.addr %s301, 4
          %s303 = scalar_lea.vmem %s5, %s302
        $region44: #{xception_a_forward.3} parent=31 // pred_fallthru
          _
        // Predicated region
        $region45: #{xception_a_forward.3} parent=31 // pred_check
          %p304 = pneg %p189
        $region46: #{xception_a_forward.3} parent=31 // pred_check_branch
          %306 = sbr.rel (%p304) target = $region48
        $region47: #{xception_a_forward.3} parent=31 // pred_region
          %p307 = scmp.lt.s32.totalorder %s24, 5
          %s308 = scalar_select %p307, %s24, 5
          %s309 = smul.addr %s308, 2
          %s310 = scalar_lea.vmem %s6, %s309
        $region48: #{xception_a_forward.3} parent=31 // pred_fallthru
          _
      $region32: #{xception_a_forward.3} parent=5 // pred_fallthru
        _
      %p311 = scmp.le.s32.totalorder 1, %s16
      %p312 = scmp.lt.s32.totalorder %s16, 13
      %p313 = pnand %p311, %p312
      %p314 = pneg %p313
      // Predicated region
      $region49: #{xception_a_forward.3} parent=5 // pred_check
        _
      $region50: #{xception_a_forward.3} parent=5 // pred_check_branch
        %316 = sbr.rel (%p313) target = $region52
      $region51: #{xception_a_forward.3} parent=5 // pred_region
        %s317 = ssub.s32 %s16, 1
        // Predicated region
        $region53: #{xception_a_forward.3} parent=51 // pred_check
          %p318 = pneg %p216
        $region54: #{xception_a_forward.3} parent=51 // pred_check_branch
          %320 = sbr.rel (%p318) target = $region56
        $region55: #{xception_a_forward.3} parent=51 // pred_region
          %322 = dma.done [#allocation6], 16
        $region56: #{xception_a_forward.3} parent=51 // pred_fallthru
          _
        %323 = sfence
        %p324 = scmp.lt.s32.totalorder %s25, 1
        %s325 = scalar_select %p324, %s25, 1
        %s326 = smul.addr %s325, 8
        %s327 = smul.addr %s326, 4
        %s328 = scalar_lea.vmem %s0, %s327
        %p329 = pneg %p54
        %p330 = pneg %p51
        %p331 = pneg %p75
        %p332 = pneg %p72
        %p333 = pneg %p96
        %p334 = pneg %p93
        %p335 = pneg %p117
        %p336 = pneg %p114
        %p337 = scmp.lt.s32.totalorder %s26, 5
        %s338 = scalar_select %p337, %s26, 5
        %s339 = smul.addr %s338, 4
        %s340 = smul.addr %s339, 8
        %s341 = scalar_lea.vmem %s4, %s340
        %p342 = pneg %p143
        %p343 = pneg %p140
        %p344 = scmp.lt.s32.totalorder %s26, 5
        %s345 = scalar_select %p344, %s26, 5
        %s346 = smul.addr %s345, 32
        %s347 = smul.addr %s346, 4
        %s348 = scalar_lea.vmem %s5, %s347
        %p349 = pneg %p169
        %p350 = pneg %p166
        %p351 = scmp.lt.s32.totalorder %s26, 5
        %s352 = scalar_select %p351, %s26, 5
        %s353 = smul.addr %s352, 2
        %s354 = scalar_lea.vmem %s6, %s353
        %p355 = pneg %p195
        %p356 = pneg %p192
        %p357 = pneg %p216
        %p358 = pneg %p213
        %p359 = pneg %p242
        %p360 = pneg %p239
        %p361 = scmp.lt.s32.totalorder %s25, 1
        %s362 = scalar_select %p361, %s25, 1
        %s363 = smul.addr %s362, 8
        %s364 = smul.addr %s363, 4
        %s365 = scalar_lea.vmem %s8, %s364
        %p366 = scmp.lt.s32.totalorder %s25, 1
        %s367 = scalar_select %p366, %s25, 1
        %s368 = smul.addr %s367, 8
        %s369 = smul.addr %s368, 4
        %s370 = scalar_lea.vmem %s0, %s369
        %p371 = scmp.lt.s32.totalorder %s26, 5
        %s372 = scalar_select %p371, %s26, 5
        %s373 = smul.addr %s372, 4
        %s374 = smul.addr %s373, 8
        %s375 = scalar_lea.vmem %s4, %s374
        %p376 = scmp.lt.s32.totalorder %s26, 5
        %s377 = scalar_select %p376, %s26, 5
        %s378 = smul.addr %s377, 32
        %s379 = smul.addr %s378, 4
        %s380 = scalar_lea.vmem %s5, %s379
        %p381 = scmp.lt.s32.totalorder %s26, 5
        %s382 = scalar_select %p381, %s26, 5
        %s383 = smul.addr %s382, 2
        %s384 = scalar_lea.vmem %s6, %s383
        %p385 = scmp.lt.s32.totalorder %s25, 1
        %s386 = scalar_select %p385, %s25, 1
        %s387 = smul.addr %s386, 8
        %s388 = smul.addr %s387, 4
        %s389 = scalar_lea.vmem %s8, %s388
        %p391 = scmp.eq.s32.totalorder %s26, 0
        // Predicated region
        $region57: #{xception_a_forward.3} parent=51 // pred_check
          %p392 = pneg %p391
        $region58: #{xception_a_forward.3} parent=51 // pred_check_branch
          %394 = sbr.rel (%p392) target = $region60
        $region59: #{xception_a_forward.3} parent=51 // pred_region
          %395 = vst [vmem:[#allocation2] sm:$0xf] 0
          %396 = vst [vmem:[#allocation2 + $0x4] sm:$0xf] 0
          %s397 = scalar_lea.vmem [#allocation2], 72
          %398 = vst [vmem:[%s397] sm:$0xf] 0
          %399 = vst [vmem:[%s397 + $0x4] sm:$0xf] 0
          %vm400 = vcmask 1040384
          %vm401 = vsmask.f32 256
          %vm402 = vmand %vm400, %vm401
          %v403 = vld [vmem:[#allocation2] sm:$0x1]
          %v404 = vsel %vm402, 0, %v403
          %405 = vst [vmem:[#allocation2] sm:$0x1] %v404
          %v406 = vld [vmem:[#allocation2 + $0x8] sm:$0x1]
          %v407 = vsel %vm402, 0, %v406
          %408 = vst [vmem:[#allocation2 + $0x8] sm:$0x1] %v407
          %v409 = vld [vmem:[#allocation2 + $0x10] sm:$0x1]
          %v410 = vsel %vm402, 0, %v409
          %411 = vst [vmem:[#allocation2 + $0x10] sm:$0x1] %v410
          %v412 = vld [vmem:[#allocation2 + $0x18] sm:$0x1]
          %v413 = vsel %vm402, 0, %v412
          %414 = vst [vmem:[#allocation2 + $0x18] sm:$0x1] %v413
          %v415 = vld [vmem:[#allocation2 + $0x20] sm:$0x1]
          %v416 = vsel %vm402, 0, %v415
          %417 = vst [vmem:[#allocation2 + $0x20] sm:$0x1] %v416
          %v418 = vld [vmem:[#allocation2 + $0x28] sm:$0x1]
          %v419 = vsel %vm402, 0, %v418
          %420 = vst [vmem:[#allocation2 + $0x28] sm:$0x1] %v419
          %v421 = vld [vmem:[#allocation2 + $0x30] sm:$0x1]
          %v422 = vsel %vm402, 0, %v421
          %423 = vst [vmem:[#allocation2 + $0x30] sm:$0x1] %v422
          %v424 = vld [vmem:[#allocation2 + $0x38] sm:$0x1]
          %v425 = vsel %vm402, 0, %v424
          %426 = vst [vmem:[#allocation2 + $0x38] sm:$0x1] %v425
          %v427 = vld [vmem:[#allocation2 + $0x40] sm:$0x1]
          %v428 = vsel %vm402, 0, %v427
          %429 = vst [vmem:[#allocation2 + $0x40] sm:$0x1] %v428
          %v430 = vld [vmem:[#allocation2 + $0x48] sm:$0x1]
          %v431 = vsel %vm402, 0, %v430
          %432 = vst [vmem:[#allocation2 + $0x48] sm:$0x1] %v431
          %vm433 = vsmask.f32 7938
          %vm434 = vmand %vm400, %vm433
          %v435 = vld [vmem:[#allocation2 + $0x4] sm:$0x1]
          %v436 = vsel %vm434, 0, %v435
          %437 = vst [vmem:[#allocation2 + $0x4] sm:$0x1] %v436
          %v438 = vld [vmem:[#allocation2 + $0xc] sm:$0x1]
          %v439 = vsel %vm434, 0, %v438
          %440 = vst [vmem:[#allocation2 + $0xc] sm:$0x1] %v439
          %v441 = vld [vmem:[#allocation2 + $0x14] sm:$0x1]
          %v442 = vsel %vm434, 0, %v441
          %443 = vst [vmem:[#allocation2 + $0x14] sm:$0x1] %v442
          %v444 = vld [vmem:[#allocation2 + $0x1c] sm:$0x1]
          %v445 = vsel %vm434, 0, %v444
          %446 = vst [vmem:[#allocation2 + $0x1c] sm:$0x1] %v445
          %v447 = vld [vmem:[#allocation2 + $0x24] sm:$0x1]
          %v448 = vsel %vm434, 0, %v447
          %449 = vst [vmem:[#allocation2 + $0x24] sm:$0x1] %v448
          %v450 = vld [vmem:[#allocation2 + $0x2c] sm:$0x1]
          %v451 = vsel %vm434, 0, %v450
          %452 = vst [vmem:[#allocation2 + $0x2c] sm:$0x1] %v451
          %v453 = vld [vmem:[#allocation2 + $0x34] sm:$0x1]
          %v454 = vsel %vm434, 0, %v453
          %455 = vst [vmem:[#allocation2 + $0x34] sm:$0x1] %v454
          %v456 = vld [vmem:[#allocation2 + $0x3c] sm:$0x1]
          %v457 = vsel %vm434, 0, %v456
          %458 = vst [vmem:[#allocation2 + $0x3c] sm:$0x1] %v457
          %v459 = vld [vmem:[#allocation2 + $0x44] sm:$0x1]
          %v460 = vsel %vm434, 0, %v459
          %461 = vst [vmem:[#allocation2 + $0x44] sm:$0x1] %v460
          %v462 = vld [vmem:[#allocation2 + $0x4c] sm:$0x1]
          %v463 = vsel %vm434, 0, %v462
          %464 = vst [vmem:[#allocation2 + $0x4c] sm:$0x1] %v463
          %465 = vst [vmem:[#allocation3] sm:$0xf] 0
          %466 = vst [vmem:[#allocation3 + $0x4] sm:$0xf] 0
          %s467 = scalar_lea.vmem [#allocation3], 72
          %468 = vst [vmem:[%s467] sm:$0xf] 0
          %469 = vst [vmem:[%s467 + $0x4] sm:$0xf] 0
          %v470 = vld [vmem:[#allocation3] sm:$0x1]
          %v471 = vsel %vm402, 0, %v470
          %472 = vst [vmem:[#allocation3] sm:$0x1] %v471
          %v473 = vld [vmem:[#allocation3 + $0x8] sm:$0x1]
          %v474 = vsel %vm402, 0, %v473
          %475 = vst [vmem:[#allocation3 + $0x8] sm:$0x1] %v474
          %v476 = vld [vmem:[#allocation3 + $0x10] sm:$0x1]
          %v477 = vsel %vm402, 0, %v476
          %478 = vst [vmem:[#allocation3 + $0x10] sm:$0x1] %v477
          %v479 = vld [vmem:[#allocation3 + $0x18] sm:$0x1]
          %v480 = vsel %vm402, 0, %v479
          %481 = vst [vmem:[#allocation3 + $0x18] sm:$0x1] %v480
          %v482 = vld [vmem:[#allocation3 + $0x20] sm:$0x1]
          %v483 = vsel %vm402, 0, %v482
          %484 = vst [vmem:[#allocation3 + $0x20] sm:$0x1] %v483
          %v485 = vld [vmem:[#allocation3 + $0x28] sm:$0x1]
          %v486 = vsel %vm402, 0, %v485
          %487 = vst [vmem:[#allocation3 + $0x28] sm:$0x1] %v486
          %v488 = vld [vmem:[#allocation3 + $0x30] sm:$0x1]
          %v489 = vsel %vm402, 0, %v488
          %490 = vst [vmem:[#allocation3 + $0x30] sm:$0x1] %v489
          %v491 = vld [vmem:[#allocation3 + $0x38] sm:$0x1]
          %v492 = vsel %vm402, 0, %v491
          %493 = vst [vmem:[#allocation3 + $0x38] sm:$0x1] %v492
          %v494 = vld [vmem:[#allocation3 + $0x40] sm:$0x1]
          %v495 = vsel %vm402, 0, %v494
          %496 = vst [vmem:[#allocation3 + $0x40] sm:$0x1] %v495
          %v497 = vld [vmem:[#allocation3 + $0x48] sm:$0x1]
          %v498 = vsel %vm402, 0, %v497
          %499 = vst [vmem:[#allocation3 + $0x48] sm:$0x1] %v498
          %v500 = vld [vmem:[#allocation3 + $0x4] sm:$0x1]
          %v501 = vsel %vm434, 0, %v500
          %502 = vst [vmem:[#allocation3 + $0x4] sm:$0x1] %v501
          %v503 = vld [vmem:[#allocation3 + $0xc] sm:$0x1]
          %v504 = vsel %vm434, 0, %v503
          %505 = vst [vmem:[#allocation3 + $0xc] sm:$0x1] %v504
          %v506 = vld [vmem:[#allocation3 + $0x14] sm:$0x1]
          %v507 = vsel %vm434, 0, %v506
          %508 = vst [vmem:[#allocation3 + $0x14] sm:$0x1] %v507
          %v509 = vld [vmem:[#allocation3 + $0x1c] sm:$0x1]
          %v510 = vsel %vm434, 0, %v509
          %511 = vst [vmem:[#allocation3 + $0x1c] sm:$0x1] %v510
          %v512 = vld [vmem:[#allocation3 + $0x24] sm:$0x1]
          %v513 = vsel %vm434, 0, %v512
          %514 = vst [vmem:[#allocation3 + $0x24] sm:$0x1] %v513
          %v515 = vld [vmem:[#allocation3 + $0x2c] sm:$0x1]
          %v516 = vsel %vm434, 0, %v515
          %517 = vst [vmem:[#allocation3 + $0x2c] sm:$0x1] %v516
          %v518 = vld [vmem:[#allocation3 + $0x34] sm:$0x1]
          %v519 = vsel %vm434, 0, %v518
          %520 = vst [vmem:[#allocation3 + $0x34] sm:$0x1] %v519
          %v521 = vld [vmem:[#allocation3 + $0x3c] sm:$0x1]
          %v522 = vsel %vm434, 0, %v521
          %523 = vst [vmem:[#allocation3 + $0x3c] sm:$0x1] %v522
          %v524 = vld [vmem:[#allocation3 + $0x44] sm:$0x1]
          %v525 = vsel %vm434, 0, %v524
          %526 = vst [vmem:[#allocation3 + $0x44] sm:$0x1] %v525
          %v527 = vld [vmem:[#allocation3 + $0x4c] sm:$0x1]
          %v528 = vsel %vm434, 0, %v527
          %529 = vst [vmem:[#allocation3 + $0x4c] sm:$0x1] %v528
          %v530 = vld [vmem:[%s370] sm:$0xf]
          %v531 = vld [vmem:[%s370 + $0x4] sm:$0xf]
          %v532 = vld [vmem:[%s370 + $0x8] sm:$0xf]
          %v533 = vld [vmem:[%s370 + $0xc] sm:$0xf]
          %v534 = vld [vmem:[%s370 + $0x10] sm:$0xf]
          %v535 = vld [vmem:[%s370 + $0x14] sm:$0xf]
          %v536 = vld [vmem:[%s370 + $0x18] sm:$0xf]
          %v537 = vld [vmem:[%s370 + $0x1c] sm:$0xf]
          %v538 = vld [vmem:[%s1] sm:$0xf]
          %v539 = vld [vmem:[%s1 + $0x4] sm:$0xf]
          %v540 = vld [vmem:[%s1 + $0x8] sm:$0xf]
          %v541 = vld [vmem:[%s1 + $0xc] sm:$0x3]
          %v542 = vld [vmem:[%s2] sm:$0x1]
          %v544 = vperm.slane %v542, 0
          %v554 = vunpack.c.l.b16 %v530
          %v555 = vunpack.c.l.b16 %v531
          %v556 = vunpack.c.l.b16 %v532
          %v557 = vunpack.c.l.b16 %v533
          %v558 = vunpack.c.l.b16 %v534
          %v559 = vunpack.c.l.b16 %v535
          %v560 = vunpack.c.l.b16 %v536
          %v561 = vunpack.c.l.b16 %v537
          %v562 = vpack.c.b16 %v555, %v554
          %v563 = vpack.c.b16 %v557, %v556
          %v564 = vpack.c.b16 %v559, %v558
          %v565 = vpack.c.b16 %v561, %v560
          %v570 = vunpack.c.l.b16 %v538
          %v571 = vunpack.c.l.b16 %v539
          %v572 = vunpack.c.l.b16 %v540
          %v573 = vunpack.c.l.b16 %v541
          %v574 = vpack.c.b16 %v571, %v570
          %v575 = vpack.c.b16 %v573, %v572
          %vm577 = vcmask 220160
          %v579 = vsel %vm577, %v562, 0
          %v582 = vsel %vm577, %v563, 0
          %v585 = vsel %vm577, %v564, 0
          %v588 = vsel %vm577, %v565, 0
          %vm590 = vcmask 1044480
          %vm591 = vcmask 1045504
          %v592 = vsel %vm590, 4294967295, 65535
          %v593 = vsel %vm591, %v592, 0
          %v595 = vand.u32 %v575, %v593
          %597 = vmatpush.bf16.msra.mxu0 0
          %598 = vmatpush.bf16.msra.mxu0 0
          %599 = vmatpush.bf16.msra.mxu0 0
          %600 = vmatpush.bf16.msra.mxu0 0
          %601 = vmatpush.bf16.msra.mxu0 0
          %602 = vmatpush.bf16.msra.mxu0 0
          %603 = vmatpush.bf16.msra.mxu0 %v595
          %604 = vmatpush.bf16.msra.mxu0 %v574
          %605 = vmatmul.bf16.gmra.mxu0 %v579
          %v606 = vpop.f32.mrf.mxu0
          %v607 = vadd.f32 %v544, %v606
          %v608 = vpop.f32.mrf.mxu0
          %v609 = vadd.f32 %v544, %v608
          %610 = vmatmul.bf16.gmra.mxu0 %v582
          %v611 = vpop.f32.mrf.mxu0
          %v612 = vadd.f32 %v544, %v611
          %v613 = vpop.f32.mrf.mxu0
          %v614 = vadd.f32 %v544, %v613
          %615 = vmatmul.bf16.gmra.mxu0 %v585
          %v616 = vpop.f32.mrf.mxu0
          %v617 = vadd.f32 %v544, %v616
          %v618 = vpop.f32.mrf.mxu0
          %v619 = vadd.f32 %v544, %v618
          %620 = vmatmul.bf16.gmra.mxu0 %v588
          %v621 = vpop.f32.mrf.mxu0
          %v622 = vadd.f32 %v544, %v621
          %v623 = vpop.f32.mrf.mxu0
          %v624 = vadd.f32 %v544, %v623
          %625 = vdwg.mxu0
          %s626 = sld [smem:[#allocation4]]
          %vm627 = vcmp.ge.f32.partialorder %v607, 0.0
          %vm628 = vcmp.ge.f32.partialorder %v609, 0.0
          %vm629 = vcmp.ge.f32.partialorder %v612, 0.0
          %vm630 = vcmp.ge.f32.partialorder %v614, 0.0
          %vm631 = vcmp.ge.f32.partialorder %v617, 0.0
          %vm632 = vcmp.ge.f32.partialorder %v619, 0.0
          %vm633 = vcmp.ge.f32.partialorder %v622, 0.0
          %vm634 = vcmp.ge.f32.partialorder %v624, 0.0
          %v635 = vstv %s626
          %v636 = vmul.f32 %v635, %v607
          %v637 = vmul.f32 %v635, %v609
          %v638 = vmul.f32 %v635, %v612
          %v639 = vmul.f32 %v635, %v614
          %v640 = vmul.f32 %v635, %v617
          %v641 = vmul.f32 %v635, %v619
          %v642 = vmul.f32 %v635, %v622
          %v643 = vmul.f32 %v635, %v624
          %v644 = vsel %vm627, %v607, %v636
          %v645 = vsel %vm628, %v609, %v637
          %v646 = vsel %vm629, %v612, %v638
          %v647 = vsel %vm630, %v614, %v639
          %v648 = vsel %vm631, %v617, %v640
          %v649 = vsel %vm632, %v619, %v641
          %v650 = vsel %vm633, %v622, %v642
          %v651 = vsel %vm634, %v624, %v643
          %v652 = vpack.c.bf16 %v644, %v644
          %v653 = vpack.c.bf16 %v645, %v645
          %v654 = vpack.c.bf16 %v646, %v646
          %v655 = vpack.c.bf16 %v647, %v647
          %v656 = vpack.c.bf16 %v648, %v648
          %v657 = vpack.c.bf16 %v649, %v649
          %v658 = vpack.c.bf16 %v650, %v650
          %v659 = vpack.c.bf16 %v651, %v651
          %v661 = vshrl.u32 %v652, 16
          %v663 = vrot.slane %v661, 7
          %v664 = vshll.u32 %v652, 16
          %v666 = vor.u32 %v663, %v664
          %v667 = vrot.slane %v663, 4
          %v669 = vshrl.u32 %v653, 16
          %v671 = vrot.slane %v669, 7
          %v672 = vshll.u32 %v653, 16
          %v674 = vor.u32 %v671, %v672
          %v675 = vrot.slane %v671, 4
          %v677 = vshrl.u32 %v654, 16
          %v679 = vrot.slane %v677, 7
          %v680 = vshll.u32 %v654, 16
          %v682 = vor.u32 %v679, %v680
          %v683 = vrot.slane %v679, 4
          %v685 = vshrl.u32 %v655, 16
          %v687 = vrot.slane %v685, 7
          %v688 = vshll.u32 %v655, 16
          %v690 = vor.u32 %v687, %v688
          %v691 = vrot.slane %v687, 4
          %v693 = vshrl.u32 %v656, 16
          %v695 = vrot.slane %v693, 7
          %v696 = vshll.u32 %v656, 16
          %v698 = vor.u32 %v695, %v696
          %v699 = vrot.slane %v695, 4
          %v701 = vshrl.u32 %v657, 16
          %v703 = vrot.slane %v701, 7
          %v704 = vshll.u32 %v657, 16
          %v706 = vor.u32 %v703, %v704
          %v707 = vrot.slane %v703, 4
          %v709 = vshrl.u32 %v658, 16
          %v711 = vrot.slane %v709, 7
          %v712 = vshll.u32 %v658, 16
          %v714 = vor.u32 %v711, %v712
          %v715 = vrot.slane %v711, 4
          %v717 = vshrl.u32 %v659, 16
          %v719 = vrot.slane %v717, 7
          %v720 = vshll.u32 %v659, 16
          %v722 = vor.u32 %v719, %v720
          %v723 = vrot.slane %v719, 4
          %s740 = scalar_lea.vmem [#allocation2], 8
          %vm741 = vcmask 1043456
          %vm742 = vmand %vm741, %vm433
          %v743 = vld [vmem:[%s740] sm:$0xf]
          %v744 = vsel %vm742, %v666, %v743
          %745 = vst [vmem:[%s740] sm:$0xf] %v744
          %v746 = vld [vmem:[%s740 + $0x4] sm:$0x1]
          %v747 = vsel %vm402, %v667, %v746
          %748 = vst [vmem:[%s740 + $0x4] sm:$0x1] %v747
          %v749 = vld [vmem:[%s740 + $0x8] sm:$0xf]
          %v750 = vsel %vm742, %v674, %v749
          %751 = vst [vmem:[%s740 + $0x8] sm:$0xf] %v750
          %v752 = vld [vmem:[%s740 + $0xc] sm:$0x1]
          %v753 = vsel %vm402, %v675, %v752
          %754 = vst [vmem:[%s740 + $0xc] sm:$0x1] %v753
          %v755 = vld [vmem:[%s740 + $0x10] sm:$0xf]
          %v756 = vsel %vm742, %v682, %v755
          %757 = vst [vmem:[%s740 + $0x10] sm:$0xf] %v756
          %v758 = vld [vmem:[%s740 + $0x14] sm:$0x1]
          %v759 = vsel %vm402, %v683, %v758
          %760 = vst [vmem:[%s740 + $0x14] sm:$0x1] %v759
          %v761 = vld [vmem:[%s740 + $0x18] sm:$0xf]
          %v762 = vsel %vm742, %v690, %v761
          %763 = vst [vmem:[%s740 + $0x18] sm:$0xf] %v762
          %v764 = vld [vmem:[%s740 + $0x1c] sm:$0x1]
          %v765 = vsel %vm402, %v691, %v764
          %766 = vst [vmem:[%s740 + $0x1c] sm:$0x1] %v765
          %v767 = vld [vmem:[%s740 + $0x20] sm:$0xf]
          %v768 = vsel %vm742, %v698, %v767
          %769 = vst [vmem:[%s740 + $0x20] sm:$0xf] %v768
          %v770 = vld [vmem:[%s740 + $0x24] sm:$0x1]
          %v771 = vsel %vm402, %v699, %v770
          %772 = vst [vmem:[%s740 + $0x24] sm:$0x1] %v771
          %v773 = vld [vmem:[%s740 + $0x28] sm:$0xf]
          %v774 = vsel %vm742, %v706, %v773
          %775 = vst [vmem:[%s740 + $0x28] sm:$0xf] %v774
          %v776 = vld [vmem:[%s740 + $0x2c] sm:$0x1]
          %v777 = vsel %vm402, %v707, %v776
          %778 = vst [vmem:[%s740 + $0x2c] sm:$0x1] %v777
          %v779 = vld [vmem:[%s740 + $0x30] sm:$0xf]
          %v780 = vsel %vm742, %v714, %v779
          %781 = vst [vmem:[%s740 + $0x30] sm:$0xf] %v780
          %v782 = vld [vmem:[%s740 + $0x34] sm:$0x1]
          %v783 = vsel %vm402, %v715, %v782
          %784 = vst [vmem:[%s740 + $0x34] sm:$0x1] %v783
          %v785 = vld [vmem:[%s740 + $0x38] sm:$0xf]
          %v786 = vsel %vm742, %v722, %v785
          %787 = vst [vmem:[%s740 + $0x38] sm:$0xf] %v786
          %v788 = vld [vmem:[%s740 + $0x3c] sm:$0x1]
          %v789 = vsel %vm402, %v723, %v788
          %790 = vst [vmem:[%s740 + $0x3c] sm:$0x1] %v789
        $region60: #{xception_a_forward.3} parent=51 // pred_fallthru
          _
        %v791 = vld [vmem:[%s375] sm:$0xff]
        %v792 = vld [vmem:[%s375 + $0x8] sm:$0x1]
        %v793 = vld [vmem:[#allocation2] sm:$0xf]
        %v794 = vld [vmem:[#allocation2 + $0x8] sm:$0xf]
        %v795 = vld [vmem:[#allocation2 + $0x10] sm:$0xf]
        %v796 = vld [vmem:[#allocation2 + $0x18] sm:$0xf]
        %v797 = vld [vmem:[#allocation2 + $0x20] sm:$0xf]
        %v798 = vld [vmem:[#allocation2 + $0x28] sm:$0xf]
        %v799 = vld [vmem:[#allocation2 + $0x30] sm:$0xf]
        %v800 = vld [vmem:[#allocation2 + $0x38] sm:$0xf]
        %v801 = vld [vmem:[#allocation2 + $0x40] sm:$0xf]
        %v802 = vld [vmem:[#allocation2 + $0x48] sm:$0xf]
        %v803 = vunpack.c.l.bf16 %v793
        %v804 = vunpack.c.l.bf16 %v794
        %v805 = vunpack.c.l.bf16 %v795
        %v806 = vunpack.c.l.bf16 %v796
        %v807 = vunpack.c.l.bf16 %v797
        %v808 = vunpack.c.l.bf16 %v798
        %v809 = vunpack.c.l.bf16 %v799
        %v810 = vunpack.c.l.bf16 %v800
        %v811 = vunpack.c.l.bf16 %v801
        %v812 = vunpack.c.l.bf16 %v802
        %v813 = vperm.slane %v791, 0
        %v814 = vmul.f32 %v803, %v813
        %v815 = vmul.f32 %v804, %v813
        %v816 = vmul.f32 %v805, %v813
        %v817 = vmul.f32 %v806, %v813
        %v818 = vmul.f32 %v807, %v813
        %v819 = vmul.f32 %v808, %v813
        %v820 = vmul.f32 %v809, %v813
        %v821 = vmul.f32 %v810, %v813
        %v822 = vadd.f32 %v814, 0.0
        %v823 = vadd.f32 %v815, 0.0
        %v824 = vadd.f32 %v816, 0.0
        %v825 = vadd.f32 %v817, 0.0
        %v826 = vadd.f32 %v818, 0.0
        %v827 = vadd.f32 %v819, 0.0
        %v828 = vadd.f32 %v820, 0.0
        %v829 = vadd.f32 %v821, 0.0
        %v830 = vperm.slane %v791, 3
        %v831 = vmul.f32 %v804, %v830
        %v832 = vmul.f32 %v805, %v830
        %v833 = vmul.f32 %v806, %v830
        %v834 = vmul.f32 %v807, %v830
        %v835 = vmul.f32 %v808, %v830
        %v836 = vmul.f32 %v809, %v830
        %v837 = vmul.f32 %v810, %v830
        %v838 = vmul.f32 %v811, %v830
        %v839 = vadd.f32 %v822, %v831
        %v840 = vadd.f32 %v823, %v832
        %v841 = vadd.f32 %v824, %v833
        %v842 = vadd.f32 %v825, %v834
        %v843 = vadd.f32 %v826, %v835
        %v844 = vadd.f32 %v827, %v836
        %v845 = vadd.f32 %v828, %v837
        %v846 = vadd.f32 %v829, %v838
        %v847 = vperm.slane %v791, 6
        %v848 = vmul.f32 %v805, %v847
        %v849 = vmul.f32 %v806, %v847
        %v850 = vmul.f32 %v807, %v847
        %v851 = vmul.f32 %v808, %v847
        %v852 = vmul.f32 %v809, %v847
        %v853 = vmul.f32 %v810, %v847
        %v854 = vmul.f32 %v811, %v847
        %v855 = vmul.f32 %v812, %v847
        %v856 = vadd.f32 %v839, %v848
        %v857 = vadd.f32 %v840, %v849
        %v858 = vadd.f32 %v841, %v850
        %v859 = vadd.f32 %v842, %v851
        %v860 = vadd.f32 %v843, %v852
        %v861 = vadd.f32 %v844, %v853
        %v862 = vadd.f32 %v845, %v854
        %v863 = vadd.f32 %v846, %v855
        %v864 = vld [vmem:[#allocation2] sm:$0xf]
        %v865 = vld [vmem:[#allocation2 + $0x4] sm:$0x1]
        %v866 = vld [vmem:[#allocation2 + $0x8] sm:$0xf]
        %v867 = vld [vmem:[#allocation2 + $0xc] sm:$0x1]
        %v868 = vld [vmem:[#allocation2 + $0x10] sm:$0xf]
        %v869 = vld [vmem:[#allocation2 + $0x14] sm:$0x1]
        %v870 = vld [vmem:[#allocation2 + $0x18] sm:$0xf]
        %v871 = vld [vmem:[#allocation2 + $0x1c] sm:$0x1]
        %v872 = vld [vmem:[#allocation2 + $0x20] sm:$0xf]
        %v873 = vld [vmem:[#allocation2 + $0x24] sm:$0x1]
        %v874 = vld [vmem:[#allocation2 + $0x28] sm:$0xf]
        %v875 = vld [vmem:[#allocation2 + $0x2c] sm:$0x1]
        %v876 = vld [vmem:[#allocation2 + $0x30] sm:$0xf]
        %v877 = vld [vmem:[#allocation2 + $0x34] sm:$0x1]
        %v878 = vld [vmem:[#allocation2 + $0x38] sm:$0xf]
        %v879 = vld [vmem:[#allocation2 + $0x3c] sm:$0x1]
        %v880 = vld [vmem:[#allocation2 + $0x40] sm:$0xf]
        %v881 = vld [vmem:[#allocation2 + $0x44] sm:$0x1]
        %v882 = vld [vmem:[#allocation2 + $0x48] sm:$0xf]
        %v883 = vld [vmem:[#allocation2 + $0x4c] sm:$0x1]
        %v884 = vunpack.c.l.bf16 %v864
        %v885 = vunpack.c.l.bf16 %v865
        %v886 = vunpack.c.l.bf16 %v866
        %v887 = vunpack.c.l.bf16 %v867
        %v888 = vunpack.c.l.bf16 %v868
        %v889 = vunpack.c.l.bf16 %v869
        %v890 = vunpack.c.l.bf16 %v870
        %v891 = vunpack.c.l.bf16 %v871
        %v892 = vunpack.c.l.bf16 %v872
        %v893 = vunpack.c.l.bf16 %v873
        %v894 = vunpack.c.l.bf16 %v874
        %v895 = vunpack.c.l.bf16 %v875
        %v896 = vunpack.c.l.bf16 %v876
        %v897 = vunpack.c.l.bf16 %v877
        %v898 = vunpack.c.l.bf16 %v878
        %v899 = vunpack.c.l.bf16 %v879
        %v900 = vunpack.c.l.bf16 %v880
        %v901 = vunpack.c.l.bf16 %v881
        %v902 = vunpack.c.l.bf16 %v882
        %v903 = vunpack.c.l.bf16 %v883
        %v904 = vperm.slane %v791, 1
        %v905 = vmul.f32 %v884, %v904
        %v906 = vmul.f32 %v885, %v904
        %v907 = vmul.f32 %v886, %v904
        %v908 = vmul.f32 %v887, %v904
        %v909 = vmul.f32 %v888, %v904
        %v910 = vmul.f32 %v889, %v904
        %v911 = vmul.f32 %v890, %v904
        %v912 = vmul.f32 %v891, %v904
        %v913 = vmul.f32 %v892, %v904
        %v914 = vmul.f32 %v893, %v904
        %v915 = vmul.f32 %v894, %v904
        %v916 = vmul.f32 %v895, %v904
        %v917 = vmul.f32 %v896, %v904
        %v918 = vmul.f32 %v897, %v904
        %v919 = vmul.f32 %v898, %v904
        %v920 = vmul.f32 %v899, %v904
        %vm937 = vcmask 1046528
        %v938 = vrot.slane %v905, 1
        %v939 = vrot.slane %v906, 1
        %v940 = vsel %vm937, %v938, %v939
        %v941 = vrot.slane %v907, 1
        %v942 = vrot.slane %v908, 1
        %v943 = vsel %vm937, %v941, %v942
        %v944 = vrot.slane %v909, 1
        %v945 = vrot.slane %v910, 1
        %v946 = vsel %vm937, %v944, %v945
        %v947 = vrot.slane %v911, 1
        %v948 = vrot.slane %v912, 1
        %v949 = vsel %vm937, %v947, %v948
        %v950 = vrot.slane %v913, 1
        %v951 = vrot.slane %v914, 1
        %v952 = vsel %vm937, %v950, %v951
        %v953 = vrot.slane %v915, 1
        %v954 = vrot.slane %v916, 1
        %v955 = vsel %vm937, %v953, %v954
        %v956 = vrot.slane %v917, 1
        %v957 = vrot.slane %v918, 1
        %v958 = vsel %vm937, %v956, %v957
        %v959 = vrot.slane %v919, 1
        %v960 = vrot.slane %v920, 1
        %v961 = vsel %vm937, %v959, %v960
        %v970 = vadd.f32 %v856, %v940
        %v971 = vadd.f32 %v857, %v943
        %v972 = vadd.f32 %v858, %v946
        %v973 = vadd.f32 %v859, %v949
        %v974 = vadd.f32 %v860, %v952
        %v975 = vadd.f32 %v861, %v955
        %v976 = vadd.f32 %v862, %v958
        %v977 = vadd.f32 %v863, %v961
        %v978 = vperm.slane %v791, 4
        %v979 = vmul.f32 %v886, %v978
        %v980 = vmul.f32 %v887, %v978
        %v981 = vmul.f32 %v888, %v978
        %v982 = vmul.f32 %v889, %v978
        %v983 = vmul.f32 %v890, %v978
        %v984 = vmul.f32 %v891, %v978
        %v985 = vmul.f32 %v892, %v978
        %v986 = vmul.f32 %v893, %v978
        %v987 = vmul.f32 %v894, %v978
        %v988 = vmul.f32 %v895, %v978
        %v989 = vmul.f32 %v896, %v978
        %v990 = vmul.f32 %v897, %v978
        %v991 = vmul.f32 %v898, %v978
        %v992 = vmul.f32 %v899, %v978
        %v993 = vmul.f32 %v900, %v978
        %v994 = vmul.f32 %v901, %v978
        %v1011 = vrot.slane %v979, 1
        %v1012 = vrot.slane %v980, 1
        %v1013 = vsel %vm937, %v1011, %v1012
        %v1014 = vrot.slane %v981, 1
        %v1015 = vrot.slane %v982, 1
        %v1016 = vsel %vm937, %v1014, %v1015
        %v1017 = vrot.slane %v983, 1
        %v1018 = vrot.slane %v984, 1
        %v1019 = vsel %vm937, %v1017, %v1018
        %v1020 = vrot.slane %v985, 1
        %v1021 = vrot.slane %v986, 1
        %v1022 = vsel %vm937, %v1020, %v1021
        %v1023 = vrot.slane %v987, 1
        %v1024 = vrot.slane %v988, 1
        %v1025 = vsel %vm937, %v1023, %v1024
        %v1026 = vrot.slane %v989, 1
        %v1027 = vrot.slane %v990, 1
        %v1028 = vsel %vm937, %v1026, %v1027
        %v1029 = vrot.slane %v991, 1
        %v1030 = vrot.slane %v992, 1
        %v1031 = vsel %vm937, %v1029, %v1030
        %v1032 = vrot.slane %v993, 1
        %v1033 = vrot.slane %v994, 1
        %v1034 = vsel %vm937, %v1032, %v1033
        %v1043 = vadd.f32 %v970, %v1013
        %v1044 = vadd.f32 %v971, %v1016
        %v1045 = vadd.f32 %v972, %v1019
        %v1046 = vadd.f32 %v973, %v1022
        %v1047 = vadd.f32 %v974, %v1025
        %v1048 = vadd.f32 %v975, %v1028
        %v1049 = vadd.f32 %v976, %v1031
        %v1050 = vadd.f32 %v977, %v1034
        %v1051 = vperm.slane %v791, 7
        %v1052 = vmul.f32 %v888, %v1051
        %v1053 = vmul.f32 %v889, %v1051
        %v1054 = vmul.f32 %v890, %v1051
        %v1055 = vmul.f32 %v891, %v1051
        %v1056 = vmul.f32 %v892, %v1051
        %v1057 = vmul.f32 %v893, %v1051
        %v1058 = vmul.f32 %v894, %v1051
        %v1059 = vmul.f32 %v895, %v1051
        %v1060 = vmul.f32 %v896, %v1051
        %v1061 = vmul.f32 %v897, %v1051
        %v1062 = vmul.f32 %v898, %v1051
        %v1063 = vmul.f32 %v899, %v1051
        %v1064 = vmul.f32 %v900, %v1051
        %v1065 = vmul.f32 %v901, %v1051
        %v1066 = vmul.f32 %v902, %v1051
        %v1067 = vmul.f32 %v903, %v1051
        %v1084 = vrot.slane %v1052, 1
        %v1085 = vrot.slane %v1053, 1
        %v1086 = vsel %vm937, %v1084, %v1085
        %v1087 = vrot.slane %v1054, 1
        %v1088 = vrot.slane %v1055, 1
        %v1089 = vsel %vm937, %v1087, %v1088
        %v1090 = vrot.slane %v1056, 1
        %v1091 = vrot.slane %v1057, 1
        %v1092 = vsel %vm937, %v1090, %v1091
        %v1093 = vrot.slane %v1058, 1
        %v1094 = vrot.slane %v1059, 1
        %v1095 = vsel %vm937, %v1093, %v1094
        %v1096 = vrot.slane %v1060, 1
        %v1097 = vrot.slane %v1061, 1
        %v1098 = vsel %vm937, %v1096, %v1097
        %v1099 = vrot.slane %v1062, 1
        %v1100 = vrot.slane %v1063, 1
        %v1101 = vsel %vm937, %v1099, %v1100
        %v1102 = vrot.slane %v1064, 1
        %v1103 = vrot.slane %v1065, 1
        %v1104 = vsel %vm937, %v1102, %v1103
        %v1105 = vrot.slane %v1066, 1
        %v1106 = vrot.slane %v1067, 1
        %v1107 = vsel %vm937, %v1105, %v1106
        %v1116 = vadd.f32 %v1043, %v1086
        %v1117 = vadd.f32 %v1044, %v1089
        %v1118 = vadd.f32 %v1045, %v1092
        %v1119 = vadd.f32 %v1046, %v1095
        %v1120 = vadd.f32 %v1047, %v1098
        %v1121 = vadd.f32 %v1048, %v1101
        %v1122 = vadd.f32 %v1049, %v1104
        %v1123 = vadd.f32 %v1050, %v1107
        %v1124 = vld [vmem:[#allocation2] sm:$0xe]
        %v1125 = vld [vmem:[#allocation2 + $0x8] sm:$0xe]
        %v1126 = vld [vmem:[#allocation2 + $0x10] sm:$0xe]
        %v1127 = vld [vmem:[#allocation2 + $0x18] sm:$0xe]
        %v1128 = vld [vmem:[#allocation2 + $0x20] sm:$0xe]
        %v1129 = vld [vmem:[#allocation2 + $0x28] sm:$0xe]
        %v1130 = vld [vmem:[#allocation2 + $0x30] sm:$0xe]
        %v1131 = vld [vmem:[#allocation2 + $0x38] sm:$0xe]
        %v1132 = vld [vmem:[#allocation2 + $0x40] sm:$0xe]
        %v1133 = vld [vmem:[#allocation2 + $0x48] sm:$0xe]
        %v1134 = vunpack.c.l.bf16 %v1124
        %v1135 = vunpack.c.l.bf16 %v1125
        %v1136 = vunpack.c.l.bf16 %v1126
        %v1137 = vunpack.c.l.bf16 %v1127
        %v1138 = vunpack.c.l.bf16 %v1128
        %v1139 = vunpack.c.l.bf16 %v1129
        %v1140 = vunpack.c.l.bf16 %v1130
        %v1141 = vunpack.c.l.bf16 %v1131
        %v1142 = vunpack.c.l.bf16 %v1132
        %v1143 = vunpack.c.l.bf16 %v1133
        %v1144 = vperm.slane %v791, 2
        %v1145 = vmul.f32 %v1134, %v1144
        %v1146 = vmul.f32 %v885, %v1144
        %v1147 = vmul.f32 %v1135, %v1144
        %v1148 = vmul.f32 %v887, %v1144
        %v1149 = vmul.f32 %v1136, %v1144
        %v1150 = vmul.f32 %v889, %v1144
        %v1151 = vmul.f32 %v1137, %v1144
        %v1152 = vmul.f32 %v891, %v1144
        %v1153 = vmul.f32 %v1138, %v1144
        %v1154 = vmul.f32 %v893, %v1144
        %v1155 = vmul.f32 %v1139, %v1144
        %v1156 = vmul.f32 %v895, %v1144
        %v1157 = vmul.f32 %v1140, %v1144
        %v1158 = vmul.f32 %v897, %v1144
        %v1159 = vmul.f32 %v1141, %v1144
        %v1160 = vmul.f32 %v899, %v1144
        %vm1177 = vcmask 1045504
        %v1178 = vrot.slane %v1145, 2
        %v1179 = vrot.slane %v1146, 2
        %v1180 = vsel %vm1177, %v1178, %v1179
        %v1181 = vrot.slane %v1147, 2
        %v1182 = vrot.slane %v1148, 2
        %v1183 = vsel %vm1177, %v1181, %v1182
        %v1184 = vrot.slane %v1149, 2
        %v1185 = vrot.slane %v1150, 2
        %v1186 = vsel %vm1177, %v1184, %v1185
        %v1187 = vrot.slane %v1151, 2
        %v1188 = vrot.slane %v1152, 2
        %v1189 = vsel %vm1177, %v1187, %v1188
        %v1190 = vrot.slane %v1153, 2
        %v1191 = vrot.slane %v1154, 2
        %v1192 = vsel %vm1177, %v1190, %v1191
        %v1193 = vrot.slane %v1155, 2
        %v1194 = vrot.slane %v1156, 2
        %v1195 = vsel %vm1177, %v1193, %v1194
        %v1196 = vrot.slane %v1157, 2
        %v1197 = vrot.slane %v1158, 2
        %v1198 = vsel %vm1177, %v1196, %v1197
        %v1199 = vrot.slane %v1159, 2
        %v1200 = vrot.slane %v1160, 2
        %v1201 = vsel %vm1177, %v1199, %v1200
        %v1210 = vadd.f32 %v1116, %v1180
        %v1211 = vadd.f32 %v1117, %v1183
        %v1212 = vadd.f32 %v1118, %v1186
        %v1213 = vadd.f32 %v1119, %v1189
        %v1214 = vadd.f32 %v1120, %v1192
        %v1215 = vadd.f32 %v1121, %v1195
        %v1216 = vadd.f32 %v1122, %v1198
        %v1217 = vadd.f32 %v1123, %v1201
        %v1218 = vperm.slane %v791, 5
        %v1219 = vmul.f32 %v1135, %v1218
        %v1220 = vmul.f32 %v887, %v1218
        %v1221 = vmul.f32 %v1136, %v1218
        %v1222 = vmul.f32 %v889, %v1218
        %v1223 = vmul.f32 %v1137, %v1218
        %v1224 = vmul.f32 %v891, %v1218
        %v1225 = vmul.f32 %v1138, %v1218
        %v1226 = vmul.f32 %v893, %v1218
        %v1227 = vmul.f32 %v1139, %v1218
        %v1228 = vmul.f32 %v895, %v1218
        %v1229 = vmul.f32 %v1140, %v1218
        %v1230 = vmul.f32 %v897, %v1218
        %v1231 = vmul.f32 %v1141, %v1218
        %v1232 = vmul.f32 %v899, %v1218
        %v1233 = vmul.f32 %v1142, %v1218
        %v1234 = vmul.f32 %v901, %v1218
        %v1251 = vrot.slane %v1219, 2
        %v1252 = vrot.slane %v1220, 2
        %v1253 = vsel %vm1177, %v1251, %v1252
        %v1254 = vrot.slane %v1221, 2
        %v1255 = vrot.slane %v1222, 2
        %v1256 = vsel %vm1177, %v1254, %v1255
        %v1257 = vrot.slane %v1223, 2
        %v1258 = vrot.slane %v1224, 2
        %v1259 = vsel %vm1177, %v1257, %v1258
        %v1260 = vrot.slane %v1225, 2
        %v1261 = vrot.slane %v1226, 2
        %v1262 = vsel %vm1177, %v1260, %v1261
        %v1263 = vrot.slane %v1227, 2
        %v1264 = vrot.slane %v1228, 2
        %v1265 = vsel %vm1177, %v1263, %v1264
        %v1266 = vrot.slane %v1229, 2
        %v1267 = vrot.slane %v1230, 2
        %v1268 = vsel %vm1177, %v1266, %v1267
        %v1269 = vrot.slane %v1231, 2
        %v1270 = vrot.slane %v1232, 2
        %v1271 = vsel %vm1177, %v1269, %v1270
        %v1272 = vrot.slane %v1233, 2
        %v1273 = vrot.slane %v1234, 2
        %v1274 = vsel %vm1177, %v1272, %v1273
        %v1283 = vadd.f32 %v1210, %v1253
        %v1284 = vadd.f32 %v1211, %v1256
        %v1285 = vadd.f32 %v1212, %v1259
        %v1286 = vadd.f32 %v1213, %v1262
        %v1287 = vadd.f32 %v1214, %v1265
        %v1288 = vadd.f32 %v1215, %v1268
        %v1289 = vadd.f32 %v1216, %v1271
        %v1290 = vadd.f32 %v1217, %v1274
        %v1291 = vperm.slane %v792, 0
        %v1292 = vmul.f32 %v1136, %v1291
        %v1293 = vmul.f32 %v889, %v1291
        %v1294 = vmul.f32 %v1137, %v1291
        %v1295 = vmul.f32 %v891, %v1291
        %v1296 = vmul.f32 %v1138, %v1291
        %v1297 = vmul.f32 %v893, %v1291
        %v1298 = vmul.f32 %v1139, %v1291
        %v1299 = vmul.f32 %v895, %v1291
        %v1300 = vmul.f32 %v1140, %v1291
        %v1301 = vmul.f32 %v897, %v1291
        %v1302 = vmul.f32 %v1141, %v1291
        %v1303 = vmul.f32 %v899, %v1291
        %v1304 = vmul.f32 %v1142, %v1291
        %v1305 = vmul.f32 %v901, %v1291
        %v1306 = vmul.f32 %v1143, %v1291
        %v1307 = vmul.f32 %v903, %v1291
        %v1324 = vrot.slane %v1292, 2
        %v1325 = vrot.slane %v1293, 2
        %v1326 = vsel %vm1177, %v1324, %v1325
        %v1327 = vrot.slane %v1294, 2
        %v1328 = vrot.slane %v1295, 2
        %v1329 = vsel %vm1177, %v1327, %v1328
        %v1330 = vrot.slane %v1296, 2
        %v1331 = vrot.slane %v1297, 2
        %v1332 = vsel %vm1177, %v1330, %v1331
        %v1333 = vrot.slane %v1298, 2
        %v1334 = vrot.slane %v1299, 2
        %v1335 = vsel %vm1177, %v1333, %v1334
        %v1336 = vrot.slane %v1300, 2
        %v1337 = vrot.slane %v1301, 2
        %v1338 = vsel %vm1177, %v1336, %v1337
        %v1339 = vrot.slane %v1302, 2
        %v1340 = vrot.slane %v1303, 2
        %v1341 = vsel %vm1177, %v1339, %v1340
        %v1342 = vrot.slane %v1304, 2
        %v1343 = vrot.slane %v1305, 2
        %v1344 = vsel %vm1177, %v1342, %v1343
        %v1345 = vrot.slane %v1306, 2
        %v1346 = vrot.slane %v1307, 2
        %v1347 = vsel %vm1177, %v1345, %v1346
        %v1356 = vadd.f32 %v1283, %v1326
        %v1357 = vadd.f32 %v1284, %v1329
        %v1358 = vadd.f32 %v1285, %v1332
        %v1359 = vadd.f32 %v1286, %v1335
        %v1360 = vadd.f32 %v1287, %v1338
        %v1361 = vadd.f32 %v1288, %v1341
        %v1362 = vadd.f32 %v1289, %v1344
        %v1363 = vadd.f32 %v1290, %v1347
        %v1364 = vpack.c.bf16 %v1357, %v1356
        %v1365 = vpack.c.bf16 %v1359, %v1358
        %v1366 = vpack.c.bf16 %v1361, %v1360
        %v1367 = vpack.c.bf16 %v1363, %v1362
        %v1368 = vld [vmem:[%s380] sm:$0xf]
        %v1369 = vld [vmem:[%s380 + $0x4] sm:$0xf]
        %v1370 = vld [vmem:[%s380 + $0x8] sm:$0xf]
        %v1371 = vld [vmem:[%s380 + $0xc] sm:$0xf]
        %v1372 = vld [vmem:[%s380 + $0x10] sm:$0xf]
        %v1373 = vld [vmem:[%s380 + $0x14] sm:$0xf]
        %v1374 = vld [vmem:[%s380 + $0x18] sm:$0xf]
        %v1375 = vld [vmem:[%s380 + $0x1c] sm:$0xf]
        %v1376 = vld [vmem:[%s380 + $0x20] sm:$0xf]
        %v1377 = vld [vmem:[%s380 + $0x24] sm:$0xf]
        %v1378 = vld [vmem:[%s380 + $0x28] sm:$0xf]
        %v1379 = vld [vmem:[%s380 + $0x2c] sm:$0xf]
        %v1380 = vld [vmem:[%s380 + $0x30] sm:$0xf]
        %v1381 = vld [vmem:[%s380 + $0x34] sm:$0xf]
        %v1382 = vld [vmem:[%s380 + $0x38] sm:$0xf]
        %v1383 = vld [vmem:[%s380 + $0x3c] sm:$0xf]
        %v1384 = vld [vmem:[%s384] sm:$0x1]
        %v1386 = vperm.slane %v1384, 0
        %v1404 = vunpack.c.l.b16 %v1368
        %v1405 = vunpack.c.l.b16 %v1369
        %v1406 = vunpack.c.l.b16 %v1370
        %v1407 = vunpack.c.l.b16 %v1371
        %v1408 = vunpack.c.l.b16 %v1372
        %v1409 = vunpack.c.l.b16 %v1373
        %v1410 = vunpack.c.l.b16 %v1374
        %v1411 = vunpack.c.l.b16 %v1375
        %v1412 = vunpack.c.l.b16 %v1376
        %v1413 = vunpack.c.l.b16 %v1377
        %v1414 = vunpack.c.l.b16 %v1378
        %v1415 = vunpack.c.l.b16 %v1379
        %v1416 = vunpack.c.l.b16 %v1380
        %v1417 = vunpack.c.l.b16 %v1381
        %v1418 = vunpack.c.l.b16 %v1382
        %v1419 = vunpack.c.l.b16 %v1383
        %v1420 = vpack.c.b16 %v1405, %v1404
        %v1421 = vpack.c.b16 %v1407, %v1406
        %v1422 = vpack.c.b16 %v1409, %v1408
        %v1423 = vpack.c.b16 %v1411, %v1410
        %v1424 = vpack.c.b16 %v1413, %v1412
        %v1425 = vpack.c.b16 %v1415, %v1414
        %v1426 = vpack.c.b16 %v1417, %v1416
        %v1427 = vpack.c.b16 %v1419, %v1418
        %1436 = vmatpush.bf16.msra.mxu0 %v1427
        %1437 = vmatpush.bf16.msra.mxu0 %v1426
        %1438 = vmatpush.bf16.msra.mxu0 %v1425
        %1439 = vmatpush.bf16.msra.mxu0 %v1424
        %1440 = vmatpush.bf16.msra.mxu0 %v1423
        %1441 = vmatpush.bf16.msra.mxu0 %v1422
        %1442 = vmatpush.bf16.msra.mxu0 %v1421
        %1443 = vmatpush.bf16.msra.mxu0 %v1420
        %1444 = vmatmul.bf16.gmra.mxu0 %v1364
        %v1445 = vpop.f32.mrf.mxu0
        %v1446 = vadd.f32 %v1386, %v1445
        %v1447 = vpop.f32.mrf.mxu0
        %v1448 = vadd.f32 %v1386, %v1447
        %1449 = vmatmul.bf16.gmra.mxu0 %v1365
        %v1450 = vpop.f32.mrf.mxu0
        %v1451 = vadd.f32 %v1386, %v1450
        %v1452 = vpop.f32.mrf.mxu0
        %v1453 = vadd.f32 %v1386, %v1452
        %1454 = vmatmul.bf16.gmra.mxu0 %v1366
        %v1455 = vpop.f32.mrf.mxu0
        %v1456 = vadd.f32 %v1386, %v1455
        %v1457 = vpop.f32.mrf.mxu0
        %v1458 = vadd.f32 %v1386, %v1457
        %1459 = vmatmul.bf16.gmra.mxu0 %v1367
        %v1460 = vpop.f32.mrf.mxu0
        %v1461 = vadd.f32 %v1386, %v1460
        %v1462 = vpop.f32.mrf.mxu0
        %v1463 = vadd.f32 %v1386, %v1462
        %1464 = vdwg.mxu0
        %s1465 = smul.u32 %s26, 2
        %s1466 = sld [smem:[#allocation5 + %s1465]]
        %vm1467 = vcmp.ge.f32.partialorder %v1446, 0.0
        %vm1468 = vcmp.ge.f32.partialorder %v1448, 0.0
        %vm1469 = vcmp.ge.f32.partialorder %v1451, 0.0
        %vm1470 = vcmp.ge.f32.partialorder %v1453, 0.0
        %vm1471 = vcmp.ge.f32.partialorder %v1456, 0.0
        %vm1472 = vcmp.ge.f32.partialorder %v1458, 0.0
        %vm1473 = vcmp.ge.f32.partialorder %v1461, 0.0
        %vm1474 = vcmp.ge.f32.partialorder %v1463, 0.0
        %v1475 = vstv %s1466
        %v1476 = vmul.f32 %v1475, %v1446
        %v1477 = vmul.f32 %v1475, %v1448
        %v1478 = vmul.f32 %v1475, %v1451
        %v1479 = vmul.f32 %v1475, %v1453
        %v1480 = vmul.f32 %v1475, %v1456
        %v1481 = vmul.f32 %v1475, %v1458
        %v1482 = vmul.f32 %v1475, %v1461
        %v1483 = vmul.f32 %v1475, %v1463
        %v1484 = vsel %vm1467, %v1446, %v1476
        %v1485 = vsel %vm1468, %v1448, %v1477
        %v1486 = vsel %vm1469, %v1451, %v1478
        %v1487 = vsel %vm1470, %v1453, %v1479
        %v1488 = vsel %vm1471, %v1456, %v1480
        %v1489 = vsel %vm1472, %v1458, %v1481
        %v1490 = vsel %vm1473, %v1461, %v1482
        %v1491 = vsel %vm1474, %v1463, %v1483
        %v1492 = vpack.c.bf16 %v1484, %v1484
        %v1493 = vpack.c.bf16 %v1485, %v1485
        %v1494 = vpack.c.bf16 %v1486, %v1486
        %v1495 = vpack.c.bf16 %v1487, %v1487
        %v1496 = vpack.c.bf16 %v1488, %v1488
        %v1497 = vpack.c.bf16 %v1489, %v1489
        %v1498 = vpack.c.bf16 %v1490, %v1490
        %v1499 = vpack.c.bf16 %v1491, %v1491
        %v1501 = vshrl.u32 %v1492, 16
        %v1503 = vrot.slane %v1501, 7
        %v1504 = vshll.u32 %v1492, 16
        %v1506 = vor.u32 %v1503, %v1504
        %v1507 = vrot.slane %v1503, 4
        %v1509 = vshrl.u32 %v1493, 16
        %v1511 = vrot.slane %v1509, 7
        %v1512 = vshll.u32 %v1493, 16
        %v1514 = vor.u32 %v1511, %v1512
        %v1515 = vrot.slane %v1511, 4
        %v1517 = vshrl.u32 %v1494, 16
        %v1519 = vrot.slane %v1517, 7
        %v1520 = vshll.u32 %v1494, 16
        %v1522 = vor.u32 %v1519, %v1520
        %v1523 = vrot.slane %v1519, 4
        %v1525 = vshrl.u32 %v1495, 16
        %v1527 = vrot.slane %v1525, 7
        %v1528 = vshll.u32 %v1495, 16
        %v1530 = vor.u32 %v1527, %v1528
        %v1531 = vrot.slane %v1527, 4
        %v1533 = vshrl.u32 %v1496, 16
        %v1535 = vrot.slane %v1533, 7
        %v1536 = vshll.u32 %v1496, 16
        %v1538 = vor.u32 %v1535, %v1536
        %v1539 = vrot.slane %v1535, 4
        %v1541 = vshrl.u32 %v1497, 16
        %v1543 = vrot.slane %v1541, 7
        %v1544 = vshll.u32 %v1497, 16
        %v1546 = vor.u32 %v1543, %v1544
        %v1547 = vrot.slane %v1543, 4
        %v1549 = vshrl.u32 %v1498, 16
        %v1551 = vrot.slane %v1549, 7
        %v1552 = vshll.u32 %v1498, 16
        %v1554 = vor.u32 %v1551, %v1552
        %v1555 = vrot.slane %v1551, 4
        %v1557 = vshrl.u32 %v1499, 16
        %v1559 = vrot.slane %v1557, 7
        %v1560 = vshll.u32 %v1499, 16
        %v1562 = vor.u32 %v1559, %v1560
        %v1563 = vrot.slane %v1559, 4
        %s1580 = scalar_lea.vmem [#allocation3], 8
        %vm1581 = vcmask 1043456
        %vm1582 = vsmask.f32 7938
        %vm1583 = vmand %vm1581, %vm1582
        %v1584 = vld [vmem:[%s1580] sm:$0xf]
        %v1585 = vsel %vm1583, %v1506, %v1584
        %1586 = vst [vmem:[%s1580] sm:$0xf] %v1585
        %vm1587 = vcmask 1040384
        %vm1588 = vsmask.f32 256
        %vm1589 = vmand %vm1587, %vm1588
        %v1590 = vld [vmem:[%s1580 + $0x4] sm:$0x1]
        %v1591 = vsel %vm1589, %v1507, %v1590
        %1592 = vst [vmem:[%s1580 + $0x4] sm:$0x1] %v1591
        %v1593 = vld [vmem:[%s1580 + $0x8] sm:$0xf]
        %v1594 = vsel %vm1583, %v1514, %v1593
        %1595 = vst [vmem:[%s1580 + $0x8] sm:$0xf] %v1594
        %v1596 = vld [vmem:[%s1580 + $0xc] sm:$0x1]
        %v1597 = vsel %vm1589, %v1515, %v1596
        %1598 = vst [vmem:[%s1580 + $0xc] sm:$0x1] %v1597
        %v1599 = vld [vmem:[%s1580 + $0x10] sm:$0xf]
        %v1600 = vsel %vm1583, %v1522, %v1599
        %1601 = vst [vmem:[%s1580 + $0x10] sm:$0xf] %v1600
        %v1602 = vld [vmem:[%s1580 + $0x14] sm:$0x1]
        %v1603 = vsel %vm1589, %v1523, %v1602
        %1604 = vst [vmem:[%s1580 + $0x14] sm:$0x1] %v1603
        %v1605 = vld [vmem:[%s1580 + $0x18] sm:$0xf]
        %v1606 = vsel %vm1583, %v1530, %v1605
        %1607 = vst [vmem:[%s1580 + $0x18] sm:$0xf] %v1606
        %v1608 = vld [vmem:[%s1580 + $0x1c] sm:$0x1]
        %v1609 = vsel %vm1589, %v1531, %v1608
        %1610 = vst [vmem:[%s1580 + $0x1c] sm:$0x1] %v1609
        %v1611 = vld [vmem:[%s1580 + $0x20] sm:$0xf]
        %v1612 = vsel %vm1583, %v1538, %v1611
        %1613 = vst [vmem:[%s1580 + $0x20] sm:$0xf] %v1612
        %v1614 = vld [vmem:[%s1580 + $0x24] sm:$0x1]
        %v1615 = vsel %vm1589, %v1539, %v1614
        %1616 = vst [vmem:[%s1580 + $0x24] sm:$0x1] %v1615
        %v1617 = vld [vmem:[%s1580 + $0x28] sm:$0xf]
        %v1618 = vsel %vm1583, %v1546, %v1617
        %1619 = vst [vmem:[%s1580 + $0x28] sm:$0xf] %v1618
        %v1620 = vld [vmem:[%s1580 + $0x2c] sm:$0x1]
        %v1621 = vsel %vm1589, %v1547, %v1620
        %1622 = vst [vmem:[%s1580 + $0x2c] sm:$0x1] %v1621
        %v1623 = vld [vmem:[%s1580 + $0x30] sm:$0xf]
        %v1624 = vsel %vm1583, %v1554, %v1623
        %1625 = vst [vmem:[%s1580 + $0x30] sm:$0xf] %v1624
        %v1626 = vld [vmem:[%s1580 + $0x34] sm:$0x1]
        %v1627 = vsel %vm1589, %v1555, %v1626
        %1628 = vst [vmem:[%s1580 + $0x34] sm:$0x1] %v1627
        %v1629 = vld [vmem:[%s1580 + $0x38] sm:$0xf]
        %v1630 = vsel %vm1583, %v1562, %v1629
        %1631 = vst [vmem:[%s1580 + $0x38] sm:$0xf] %v1630
        %v1632 = vld [vmem:[%s1580 + $0x3c] sm:$0x1]
        %v1633 = vsel %vm1589, %v1563, %v1632
        %1634 = vst [vmem:[%s1580 + $0x3c] sm:$0x1] %v1633
        %s1635 = scalar_lea.vmem %s375, 16
        %v1636 = vld [vmem:[%s1635] sm:$0xff]
        %v1637 = vld [vmem:[%s1635 + $0x8] sm:$0x1]
        %v1638 = vld [vmem:[#allocation3] sm:$0xf]
        %v1639 = vld [vmem:[#allocation3 + $0x8] sm:$0xf]
        %v1640 = vld [vmem:[#allocation3 + $0x10] sm:$0xf]
        %v1641 = vld [vmem:[#allocation3 + $0x18] sm:$0xf]
        %v1642 = vld [vmem:[#allocation3 + $0x20] sm:$0xf]
        %v1643 = vld [vmem:[#allocation3 + $0x28] sm:$0xf]
        %v1644 = vld [vmem:[#allocation3 + $0x30] sm:$0xf]
        %v1645 = vld [vmem:[#allocation3 + $0x38] sm:$0xf]
        %v1646 = vld [vmem:[#allocation3 + $0x40] sm:$0xf]
        %v1647 = vld [vmem:[#allocation3 + $0x48] sm:$0xf]
        %v1648 = vunpack.c.l.bf16 %v1638
        %v1649 = vunpack.c.l.bf16 %v1639
        %v1650 = vunpack.c.l.bf16 %v1640
        %v1651 = vunpack.c.l.bf16 %v1641
        %v1652 = vunpack.c.l.bf16 %v1642
        %v1653 = vunpack.c.l.bf16 %v1643
        %v1654 = vunpack.c.l.bf16 %v1644
        %v1655 = vunpack.c.l.bf16 %v1645
        %v1656 = vunpack.c.l.bf16 %v1646
        %v1657 = vunpack.c.l.bf16 %v1647
        %v1658 = vperm.slane %v1636, 0
        %v1659 = vmul.f32 %v1648, %v1658
        %v1660 = vmul.f32 %v1649, %v1658
        %v1661 = vmul.f32 %v1650, %v1658
        %v1662 = vmul.f32 %v1651, %v1658
        %v1663 = vmul.f32 %v1652, %v1658
        %v1664 = vmul.f32 %v1653, %v1658
        %v1665 = vmul.f32 %v1654, %v1658
        %v1666 = vmul.f32 %v1655, %v1658
        %v1667 = vadd.f32 %v1659, 0.0
        %v1668 = vadd.f32 %v1660, 0.0
        %v1669 = vadd.f32 %v1661, 0.0
        %v1670 = vadd.f32 %v1662, 0.0
        %v1671 = vadd.f32 %v1663, 0.0
        %v1672 = vadd.f32 %v1664, 0.0
        %v1673 = vadd.f32 %v1665, 0.0
        %v1674 = vadd.f32 %v1666, 0.0
        %v1675 = vperm.slane %v1636, 3
        %v1676 = vmul.f32 %v1649, %v1675
        %v1677 = vmul.f32 %v1650, %v1675
        %v1678 = vmul.f32 %v1651, %v1675
        %v1679 = vmul.f32 %v1652, %v1675
        %v1680 = vmul.f32 %v1653, %v1675
        %v1681 = vmul.f32 %v1654, %v1675
        %v1682 = vmul.f32 %v1655, %v1675
        %v1683 = vmul.f32 %v1656, %v1675
        %v1684 = vadd.f32 %v1667, %v1676
        %v1685 = vadd.f32 %v1668, %v1677
        %v1686 = vadd.f32 %v1669, %v1678
        %v1687 = vadd.f32 %v1670, %v1679
        %v1688 = vadd.f32 %v1671, %v1680
        %v1689 = vadd.f32 %v1672, %v1681
        %v1690 = vadd.f32 %v1673, %v1682
        %v1691 = vadd.f32 %v1674, %v1683
        %v1692 = vperm.slane %v1636, 6
        %v1693 = vmul.f32 %v1650, %v1692
        %v1694 = vmul.f32 %v1651, %v1692
        %v1695 = vmul.f32 %v1652, %v1692
        %v1696 = vmul.f32 %v1653, %v1692
        %v1697 = vmul.f32 %v1654, %v1692
        %v1698 = vmul.f32 %v1655, %v1692
        %v1699 = vmul.f32 %v1656, %v1692
        %v1700 = vmul.f32 %v1657, %v1692
        %v1701 = vadd.f32 %v1684, %v1693
        %v1702 = vadd.f32 %v1685, %v1694
        %v1703 = vadd.f32 %v1686, %v1695
        %v1704 = vadd.f32 %v1687, %v1696
        %v1705 = vadd.f32 %v1688, %v1697
        %v1706 = vadd.f32 %v1689, %v1698
        %v1707 = vadd.f32 %v1690, %v1699
        %v1708 = vadd.f32 %v1691, %v1700
        %v1709 = vld [vmem:[#allocation3] sm:$0xf]
        %v1710 = vld [vmem:[#allocation3 + $0x4] sm:$0x1]
        %v1711 = vld [vmem:[#allocation3 + $0x8] sm:$0xf]
        %v1712 = vld [vmem:[#allocation3 + $0xc] sm:$0x1]
        %v1713 = vld [vmem:[#allocation3 + $0x10] sm:$0xf]
        %v1714 = vld [vmem:[#allocation3 + $0x14] sm:$0x1]
        %v1715 = vld [vmem:[#allocation3 + $0x18] sm:$0xf]
        %v1716 = vld [vmem:[#allocation3 + $0x1c] sm:$0x1]
        %v1717 = vld [vmem:[#allocation3 + $0x20] sm:$0xf]
        %v1718 = vld [vmem:[#allocation3 + $0x24] sm:$0x1]
        %v1719 = vld [vmem:[#allocation3 + $0x28] sm:$0xf]
        %v1720 = vld [vmem:[#allocation3 + $0x2c] sm:$0x1]
        %v1721 = vld [vmem:[#allocation3 + $0x30] sm:$0xf]
        %v1722 = vld [vmem:[#allocation3 + $0x34] sm:$0x1]
        %v1723 = vld [vmem:[#allocation3 + $0x38] sm:$0xf]
        %v1724 = vld [vmem:[#allocation3 + $0x3c] sm:$0x1]
        %v1725 = vld [vmem:[#allocation3 + $0x40] sm:$0xf]
        %v1726 = vld [vmem:[#allocation3 + $0x44] sm:$0x1]
        %v1727 = vld [vmem:[#allocation3 + $0x48] sm:$0xf]
        %v1728 = vld [vmem:[#allocation3 + $0x4c] sm:$0x1]
        %v1729 = vunpack.c.l.bf16 %v1709
        %v1730 = vunpack.c.l.bf16 %v1710
        %v1731 = vunpack.c.l.bf16 %v1711
        %v1732 = vunpack.c.l.bf16 %v1712
        %v1733 = vunpack.c.l.bf16 %v1713
        %v1734 = vunpack.c.l.bf16 %v1714
        %v1735 = vunpack.c.l.bf16 %v1715
        %v1736 = vunpack.c.l.bf16 %v1716
        %v1737 = vunpack.c.l.bf16 %v1717
        %v1738 = vunpack.c.l.bf16 %v1718
        %v1739 = vunpack.c.l.bf16 %v1719
        %v1740 = vunpack.c.l.bf16 %v1720
        %v1741 = vunpack.c.l.bf16 %v1721
        %v1742 = vunpack.c.l.bf16 %v1722
        %v1743 = vunpack.c.l.bf16 %v1723
        %v1744 = vunpack.c.l.bf16 %v1724
        %v1745 = vunpack.c.l.bf16 %v1725
        %v1746 = vunpack.c.l.bf16 %v1726
        %v1747 = vunpack.c.l.bf16 %v1727
        %v1748 = vunpack.c.l.bf16 %v1728
        %v1749 = vperm.slane %v1636, 1
        %v1750 = vmul.f32 %v1729, %v1749
        %v1751 = vmul.f32 %v1730, %v1749
        %v1752 = vmul.f32 %v1731, %v1749
        %v1753 = vmul.f32 %v1732, %v1749
        %v1754 = vmul.f32 %v1733, %v1749
        %v1755 = vmul.f32 %v1734, %v1749
        %v1756 = vmul.f32 %v1735, %v1749
        %v1757 = vmul.f32 %v1736, %v1749
        %v1758 = vmul.f32 %v1737, %v1749
        %v1759 = vmul.f32 %v1738, %v1749
        %v1760 = vmul.f32 %v1739, %v1749
        %v1761 = vmul.f32 %v1740, %v1749
        %v1762 = vmul.f32 %v1741, %v1749
        %v1763 = vmul.f32 %v1742, %v1749
        %v1764 = vmul.f32 %v1743, %v1749
        %v1765 = vmul.f32 %v1744, %v1749
        %v1782 = vrot.slane %v1750, 1
        %v1783 = vrot.slane %v1751, 1
        %v1784 = vsel %vm937, %v1782, %v1783
        %v1785 = vrot.slane %v1752, 1
        %v1786 = vrot.slane %v1753, 1
        %v1787 = vsel %vm937, %v1785, %v1786
        %v1788 = vrot.slane %v1754, 1
        %v1789 = vrot.slane %v1755, 1
        %v1790 = vsel %vm937, %v1788, %v1789
        %v1791 = vrot.slane %v1756, 1
        %v1792 = vrot.slane %v1757, 1
        %v1793 = vsel %vm937, %v1791, %v1792
        %v1794 = vrot.slane %v1758, 1
        %v1795 = vrot.slane %v1759, 1
        %v1796 = vsel %vm937, %v1794, %v1795
        %v1797 = vrot.slane %v1760, 1
        %v1798 = vrot.slane %v1761, 1
        %v1799 = vsel %vm937, %v1797, %v1798
        %v1800 = vrot.slane %v1762, 1
        %v1801 = vrot.slane %v1763, 1
        %v1802 = vsel %vm937, %v1800, %v1801
        %v1803 = vrot.slane %v1764, 1
        %v1804 = vrot.slane %v1765, 1
        %v1805 = vsel %vm937, %v1803, %v1804
        %v1814 = vadd.f32 %v1701, %v1784
        %v1815 = vadd.f32 %v1702, %v1787
        %v1816 = vadd.f32 %v1703, %v1790
        %v1817 = vadd.f32 %v1704, %v1793
        %v1818 = vadd.f32 %v1705, %v1796
        %v1819 = vadd.f32 %v1706, %v1799
        %v1820 = vadd.f32 %v1707, %v1802
        %v1821 = vadd.f32 %v1708, %v1805
        %v1822 = vperm.slane %v1636, 4
        %v1823 = vmul.f32 %v1731, %v1822
        %v1824 = vmul.f32 %v1732, %v1822
        %v1825 = vmul.f32 %v1733, %v1822
        %v1826 = vmul.f32 %v1734, %v1822
        %v1827 = vmul.f32 %v1735, %v1822
        %v1828 = vmul.f32 %v1736, %v1822
        %v1829 = vmul.f32 %v1737, %v1822
        %v1830 = vmul.f32 %v1738, %v1822
        %v1831 = vmul.f32 %v1739, %v1822
        %v1832 = vmul.f32 %v1740, %v1822
        %v1833 = vmul.f32 %v1741, %v1822
        %v1834 = vmul.f32 %v1742, %v1822
        %v1835 = vmul.f32 %v1743, %v1822
        %v1836 = vmul.f32 %v1744, %v1822
        %v1837 = vmul.f32 %v1745, %v1822
        %v1838 = vmul.f32 %v1746, %v1822
        %v1855 = vrot.slane %v1823, 1
        %v1856 = vrot.slane %v1824, 1
        %v1857 = vsel %vm937, %v1855, %v1856
        %v1858 = vrot.slane %v1825, 1
        %v1859 = vrot.slane %v1826, 1
        %v1860 = vsel %vm937, %v1858, %v1859
        %v1861 = vrot.slane %v1827, 1
        %v1862 = vrot.slane %v1828, 1
        %v1863 = vsel %vm937, %v1861, %v1862
        %v1864 = vrot.slane %v1829, 1
        %v1865 = vrot.slane %v1830, 1
        %v1866 = vsel %vm937, %v1864, %v1865
        %v1867 = vrot.slane %v1831, 1
        %v1868 = vrot.slane %v1832, 1
        %v1869 = vsel %vm937, %v1867, %v1868
        %v1870 = vrot.slane %v1833, 1
        %v1871 = vrot.slane %v1834, 1
        %v1872 = vsel %vm937, %v1870, %v1871
        %v1873 = vrot.slane %v1835, 1
        %v1874 = vrot.slane %v1836, 1
        %v1875 = vsel %vm937, %v1873, %v1874
        %v1876 = vrot.slane %v1837, 1
        %v1877 = vrot.slane %v1838, 1
        %v1878 = vsel %vm937, %v1876, %v1877
        %v1887 = vadd.f32 %v1814, %v1857
        %v1888 = vadd.f32 %v1815, %v1860
        %v1889 = vadd.f32 %v1816, %v1863
        %v1890 = vadd.f32 %v1817, %v1866
        %v1891 = vadd.f32 %v1818, %v1869
        %v1892 = vadd.f32 %v1819, %v1872
        %v1893 = vadd.f32 %v1820, %v1875
        %v1894 = vadd.f32 %v1821, %v1878
        %v1895 = vperm.slane %v1636, 7
        %v1896 = vmul.f32 %v1733, %v1895
        %v1897 = vmul.f32 %v1734, %v1895
        %v1898 = vmul.f32 %v1735, %v1895
        %v1899 = vmul.f32 %v1736, %v1895
        %v1900 = vmul.f32 %v1737, %v1895
        %v1901 = vmul.f32 %v1738, %v1895
        %v1902 = vmul.f32 %v1739, %v1895
        %v1903 = vmul.f32 %v1740, %v1895
        %v1904 = vmul.f32 %v1741, %v1895
        %v1905 = vmul.f32 %v1742, %v1895
        %v1906 = vmul.f32 %v1743, %v1895
        %v1907 = vmul.f32 %v1744, %v1895
        %v1908 = vmul.f32 %v1745, %v1895
        %v1909 = vmul.f32 %v1746, %v1895
        %v1910 = vmul.f32 %v1747, %v1895
        %v1911 = vmul.f32 %v1748, %v1895
        %v1928 = vrot.slane %v1896, 1
        %v1929 = vrot.slane %v1897, 1
        %v1930 = vsel %vm937, %v1928, %v1929
        %v1931 = vrot.slane %v1898, 1
        %v1932 = vrot.slane %v1899, 1
        %v1933 = vsel %vm937, %v1931, %v1932
        %v1934 = vrot.slane %v1900, 1
        %v1935 = vrot.slane %v1901, 1
        %v1936 = vsel %vm937, %v1934, %v1935
        %v1937 = vrot.slane %v1902, 1
        %v1938 = vrot.slane %v1903, 1
        %v1939 = vsel %vm937, %v1937, %v1938
        %v1940 = vrot.slane %v1904, 1
        %v1941 = vrot.slane %v1905, 1
        %v1942 = vsel %vm937, %v1940, %v1941
        %v1943 = vrot.slane %v1906, 1
        %v1944 = vrot.slane %v1907, 1
        %v1945 = vsel %vm937, %v1943, %v1944
        %v1946 = vrot.slane %v1908, 1
        %v1947 = vrot.slane %v1909, 1
        %v1948 = vsel %vm937, %v1946, %v1947
        %v1949 = vrot.slane %v1910, 1
        %v1950 = vrot.slane %v1911, 1
        %v1951 = vsel %vm937, %v1949, %v1950
        %v1960 = vadd.f32 %v1887, %v1930
        %v1961 = vadd.f32 %v1888, %v1933
        %v1962 = vadd.f32 %v1889, %v1936
        %v1963 = vadd.f32 %v1890, %v1939
        %v1964 = vadd.f32 %v1891, %v1942
        %v1965 = vadd.f32 %v1892, %v1945
        %v1966 = vadd.f32 %v1893, %v1948
        %v1967 = vadd.f32 %v1894, %v1951
        %v1968 = vld [vmem:[#allocation3] sm:$0xe]
        %v1969 = vld [vmem:[#allocation3 + $0x8] sm:$0xe]
        %v1970 = vld [vmem:[#allocation3 + $0x10] sm:$0xe]
        %v1971 = vld [vmem:[#allocation3 + $0x18] sm:$0xe]
        %v1972 = vld [vmem:[#allocation3 + $0x20] sm:$0xe]
        %v1973 = vld [vmem:[#allocation3 + $0x28] sm:$0xe]
        %v1974 = vld [vmem:[#allocation3 + $0x30] sm:$0xe]
        %v1975 = vld [vmem:[#allocation3 + $0x38] sm:$0xe]
        %v1976 = vld [vmem:[#allocation3 + $0x40] sm:$0xe]
        %v1977 = vld [vmem:[#allocation3 + $0x48] sm:$0xe]
        %v1978 = vunpack.c.l.bf16 %v1968
        %v1979 = vunpack.c.l.bf16 %v1969
        %v1980 = vunpack.c.l.bf16 %v1970
        %v1981 = vunpack.c.l.bf16 %v1971
        %v1982 = vunpack.c.l.bf16 %v1972
        %v1983 = vunpack.c.l.bf16 %v1973
        %v1984 = vunpack.c.l.bf16 %v1974
        %v1985 = vunpack.c.l.bf16 %v1975
        %v1986 = vunpack.c.l.bf16 %v1976
        %v1987 = vunpack.c.l.bf16 %v1977
        %v1988 = vperm.slane %v1636, 2
        %v1989 = vmul.f32 %v1978, %v1988
        %v1990 = vmul.f32 %v1730, %v1988
        %v1991 = vmul.f32 %v1979, %v1988
        %v1992 = vmul.f32 %v1732, %v1988
        %v1993 = vmul.f32 %v1980, %v1988
        %v1994 = vmul.f32 %v1734, %v1988
        %v1995 = vmul.f32 %v1981, %v1988
        %v1996 = vmul.f32 %v1736, %v1988
        %v1997 = vmul.f32 %v1982, %v1988
        %v1998 = vmul.f32 %v1738, %v1988
        %v1999 = vmul.f32 %v1983, %v1988
        %v2000 = vmul.f32 %v1740, %v1988
        %v2001 = vmul.f32 %v1984, %v1988
        %v2002 = vmul.f32 %v1742, %v1988
        %v2003 = vmul.f32 %v1985, %v1988
        %v2004 = vmul.f32 %v1744, %v1988
        %v2021 = vrot.slane %v1989, 2
        %v2022 = vrot.slane %v1990, 2
        %v2023 = vsel %vm1177, %v2021, %v2022
        %v2024 = vrot.slane %v1991, 2
        %v2025 = vrot.slane %v1992, 2
        %v2026 = vsel %vm1177, %v2024, %v2025
        %v2027 = vrot.slane %v1993, 2
        %v2028 = vrot.slane %v1994, 2
        %v2029 = vsel %vm1177, %v2027, %v2028
        %v2030 = vrot.slane %v1995, 2
        %v2031 = vrot.slane %v1996, 2
        %v2032 = vsel %vm1177, %v2030, %v2031
        %v2033 = vrot.slane %v1997, 2
        %v2034 = vrot.slane %v1998, 2
        %v2035 = vsel %vm1177, %v2033, %v2034
        %v2036 = vrot.slane %v1999, 2
        %v2037 = vrot.slane %v2000, 2
        %v2038 = vsel %vm1177, %v2036, %v2037
        %v2039 = vrot.slane %v2001, 2
        %v2040 = vrot.slane %v2002, 2
        %v2041 = vsel %vm1177, %v2039, %v2040
        %v2042 = vrot.slane %v2003, 2
        %v2043 = vrot.slane %v2004, 2
        %v2044 = vsel %vm1177, %v2042, %v2043
        %v2053 = vadd.f32 %v1960, %v2023
        %v2054 = vadd.f32 %v1961, %v2026
        %v2055 = vadd.f32 %v1962, %v2029
        %v2056 = vadd.f32 %v1963, %v2032
        %v2057 = vadd.f32 %v1964, %v2035
        %v2058 = vadd.f32 %v1965, %v2038
        %v2059 = vadd.f32 %v1966, %v2041
        %v2060 = vadd.f32 %v1967, %v2044
        %v2061 = vperm.slane %v1636, 5
        %v2062 = vmul.f32 %v1979, %v2061
        %v2063 = vmul.f32 %v1732, %v2061
        %v2064 = vmul.f32 %v1980, %v2061
        %v2065 = vmul.f32 %v1734, %v2061
        %v2066 = vmul.f32 %v1981, %v2061
        %v2067 = vmul.f32 %v1736, %v2061
        %v2068 = vmul.f32 %v1982, %v2061
        %v2069 = vmul.f32 %v1738, %v2061
        %v2070 = vmul.f32 %v1983, %v2061
        %v2071 = vmul.f32 %v1740, %v2061
        %v2072 = vmul.f32 %v1984, %v2061
        %v2073 = vmul.f32 %v1742, %v2061
        %v2074 = vmul.f32 %v1985, %v2061
        %v2075 = vmul.f32 %v1744, %v2061
        %v2076 = vmul.f32 %v1986, %v2061
        %v2077 = vmul.f32 %v1746, %v2061
        %v2094 = vrot.slane %v2062, 2
        %v2095 = vrot.slane %v2063, 2
        %v2096 = vsel %vm1177, %v2094, %v2095
        %v2097 = vrot.slane %v2064, 2
        %v2098 = vrot.slane %v2065, 2
        %v2099 = vsel %vm1177, %v2097, %v2098
        %v2100 = vrot.slane %v2066, 2
        %v2101 = vrot.slane %v2067, 2
        %v2102 = vsel %vm1177, %v2100, %v2101
        %v2103 = vrot.slane %v2068, 2
        %v2104 = vrot.slane %v2069, 2
        %v2105 = vsel %vm1177, %v2103, %v2104
        %v2106 = vrot.slane %v2070, 2
        %v2107 = vrot.slane %v2071, 2
        %v2108 = vsel %vm1177, %v2106, %v2107
        %v2109 = vrot.slane %v2072, 2
        %v2110 = vrot.slane %v2073, 2
        %v2111 = vsel %vm1177, %v2109, %v2110
        %v2112 = vrot.slane %v2074, 2
        %v2113 = vrot.slane %v2075, 2
        %v2114 = vsel %vm1177, %v2112, %v2113
        %v2115 = vrot.slane %v2076, 2
        %v2116 = vrot.slane %v2077, 2
        %v2117 = vsel %vm1177, %v2115, %v2116
        %v2126 = vadd.f32 %v2053, %v2096
        %v2127 = vadd.f32 %v2054, %v2099
        %v2128 = vadd.f32 %v2055, %v2102
        %v2129 = vadd.f32 %v2056, %v2105
        %v2130 = vadd.f32 %v2057, %v2108
        %v2131 = vadd.f32 %v2058, %v2111
        %v2132 = vadd.f32 %v2059, %v2114
        %v2133 = vadd.f32 %v2060, %v2117
        %v2134 = vperm.slane %v1637, 0
        %v2135 = vmul.f32 %v1980, %v2134
        %v2136 = vmul.f32 %v1734, %v2134
        %v2137 = vmul.f32 %v1981, %v2134
        %v2138 = vmul.f32 %v1736, %v2134
        %v2139 = vmul.f32 %v1982, %v2134
        %v2140 = vmul.f32 %v1738, %v2134
        %v2141 = vmul.f32 %v1983, %v2134
        %v2142 = vmul.f32 %v1740, %v2134
        %v2143 = vmul.f32 %v1984, %v2134
        %v2144 = vmul.f32 %v1742, %v2134
        %v2145 = vmul.f32 %v1985, %v2134
        %v2146 = vmul.f32 %v1744, %v2134
        %v2147 = vmul.f32 %v1986, %v2134
        %v2148 = vmul.f32 %v1746, %v2134
        %v2149 = vmul.f32 %v1987, %v2134
        %v2150 = vmul.f32 %v1748, %v2134
        %v2167 = vrot.slane %v2135, 2
        %v2168 = vrot.slane %v2136, 2
        %v2169 = vsel %vm1177, %v2167, %v2168
        %v2170 = vrot.slane %v2137, 2
        %v2171 = vrot.slane %v2138, 2
        %v2172 = vsel %vm1177, %v2170, %v2171
        %v2173 = vrot.slane %v2139, 2
        %v2174 = vrot.slane %v2140, 2
        %v2175 = vsel %vm1177, %v2173, %v2174
        %v2176 = vrot.slane %v2141, 2
        %v2177 = vrot.slane %v2142, 2
        %v2178 = vsel %vm1177, %v2176, %v2177
        %v2179 = vrot.slane %v2143, 2
        %v2180 = vrot.slane %v2144, 2
        %v2181 = vsel %vm1177, %v2179, %v2180
        %v2182 = vrot.slane %v2145, 2
        %v2183 = vrot.slane %v2146, 2
        %v2184 = vsel %vm1177, %v2182, %v2183
        %v2185 = vrot.slane %v2147, 2
        %v2186 = vrot.slane %v2148, 2
        %v2187 = vsel %vm1177, %v2185, %v2186
        %v2188 = vrot.slane %v2149, 2
        %v2189 = vrot.slane %v2150, 2
        %v2190 = vsel %vm1177, %v2188, %v2189
        %v2199 = vadd.f32 %v2126, %v2169
        %v2200 = vadd.f32 %v2127, %v2172
        %v2201 = vadd.f32 %v2128, %v2175
        %v2202 = vadd.f32 %v2129, %v2178
        %v2203 = vadd.f32 %v2130, %v2181
        %v2204 = vadd.f32 %v2131, %v2184
        %v2205 = vadd.f32 %v2132, %v2187
        %v2206 = vadd.f32 %v2133, %v2190
        %v2207 = vpack.c.bf16 %v2200, %v2199
        %v2208 = vpack.c.bf16 %v2202, %v2201
        %v2209 = vpack.c.bf16 %v2204, %v2203
        %v2210 = vpack.c.bf16 %v2206, %v2205
        %s2211 = scalar_lea.vmem %s380, 64
        %v2212 = vld [vmem:[%s2211] sm:$0xf]
        %v2213 = vld [vmem:[%s2211 + $0x4] sm:$0xf]
        %v2214 = vld [vmem:[%s2211 + $0x8] sm:$0xf]
        %v2215 = vld [vmem:[%s2211 + $0xc] sm:$0xf]
        %v2216 = vld [vmem:[%s2211 + $0x10] sm:$0xf]
        %v2217 = vld [vmem:[%s2211 + $0x14] sm:$0xf]
        %v2218 = vld [vmem:[%s2211 + $0x18] sm:$0xf]
        %v2219 = vld [vmem:[%s2211 + $0x1c] sm:$0xf]
        %v2220 = vld [vmem:[%s2211 + $0x20] sm:$0xf]
        %v2221 = vld [vmem:[%s2211 + $0x24] sm:$0xf]
        %v2222 = vld [vmem:[%s2211 + $0x28] sm:$0xf]
        %v2223 = vld [vmem:[%s2211 + $0x2c] sm:$0xf]
        %v2224 = vld [vmem:[%s2211 + $0x30] sm:$0xf]
        %v2225 = vld [vmem:[%s2211 + $0x34] sm:$0xf]
        %v2226 = vld [vmem:[%s2211 + $0x38] sm:$0xf]
        %v2227 = vld [vmem:[%s2211 + $0x3c] sm:$0xf]
        %s2228 = scalar_lea.vmem %s384, 1
        %v2229 = vld [vmem:[%s2228] sm:$0x1]
        %v2231 = vperm.slane %v2229, 0
        %v2249 = vunpack.c.l.b16 %v2212
        %v2250 = vunpack.c.l.b16 %v2213
        %v2251 = vunpack.c.l.b16 %v2214
        %v2252 = vunpack.c.l.b16 %v2215
        %v2253 = vunpack.c.l.b16 %v2216
        %v2254 = vunpack.c.l.b16 %v2217
        %v2255 = vunpack.c.l.b16 %v2218
        %v2256 = vunpack.c.l.b16 %v2219
        %v2257 = vunpack.c.l.b16 %v2220
        %v2258 = vunpack.c.l.b16 %v2221
        %v2259 = vunpack.c.l.b16 %v2222
        %v2260 = vunpack.c.l.b16 %v2223
        %v2261 = vunpack.c.l.b16 %v2224
        %v2262 = vunpack.c.l.b16 %v2225
        %v2263 = vunpack.c.l.b16 %v2226
        %v2264 = vunpack.c.l.b16 %v2227
        %v2265 = vpack.c.b16 %v2250, %v2249
        %v2266 = vpack.c.b16 %v2252, %v2251
        %v2267 = vpack.c.b16 %v2254, %v2253
        %v2268 = vpack.c.b16 %v2256, %v2255
        %v2269 = vpack.c.b16 %v2258, %v2257
        %v2270 = vpack.c.b16 %v2260, %v2259
        %v2271 = vpack.c.b16 %v2262, %v2261
        %v2272 = vpack.c.b16 %v2264, %v2263
        %2281 = vmatpush.bf16.msra.mxu0 %v2272
        %2282 = vmatpush.bf16.msra.mxu0 %v2271
        %2283 = vmatpush.bf16.msra.mxu0 %v2270
        %2284 = vmatpush.bf16.msra.mxu0 %v2269
        %2285 = vmatpush.bf16.msra.mxu0 %v2268
        %2286 = vmatpush.bf16.msra.mxu0 %v2267
        %2287 = vmatpush.bf16.msra.mxu0 %v2266
        %2288 = vmatpush.bf16.msra.mxu0 %v2265
        %2289 = vmatmul.bf16.gmra.mxu0 %v2207
        %v2290 = vpop.f32.mrf.mxu0
        %v2291 = vadd.f32 %v2231, %v2290
        %v2292 = vpop.f32.mrf.mxu0
        %v2293 = vadd.f32 %v2231, %v2292
        %2294 = vmatmul.bf16.gmra.mxu0 %v2208
        %v2295 = vpop.f32.mrf.mxu0
        %v2296 = vadd.f32 %v2231, %v2295
        %v2297 = vpop.f32.mrf.mxu0
        %v2298 = vadd.f32 %v2231, %v2297
        %2299 = vmatmul.bf16.gmra.mxu0 %v2209
        %v2300 = vpop.f32.mrf.mxu0
        %v2301 = vadd.f32 %v2231, %v2300
        %v2302 = vpop.f32.mrf.mxu0
        %v2303 = vadd.f32 %v2231, %v2302
        %2304 = vmatmul.bf16.gmra.mxu0 %v2210
        %v2305 = vpop.f32.mrf.mxu0
        %v2306 = vadd.f32 %v2231, %v2305
        %v2307 = vpop.f32.mrf.mxu0
        %v2308 = vadd.f32 %v2231, %v2307
        %2309 = vdwg.mxu0
        %s2310 = sadd.s32 %s1465, 1
        %s2311 = sld [smem:[#allocation5 + %s2310]]
        %vm2312 = vcmp.ge.f32.partialorder %v2291, 0.0
        %vm2313 = vcmp.ge.f32.partialorder %v2293, 0.0
        %vm2314 = vcmp.ge.f32.partialorder %v2296, 0.0
        %vm2315 = vcmp.ge.f32.partialorder %v2298, 0.0
        %vm2316 = vcmp.ge.f32.partialorder %v2301, 0.0
        %vm2317 = vcmp.ge.f32.partialorder %v2303, 0.0
        %vm2318 = vcmp.ge.f32.partialorder %v2306, 0.0
        %vm2319 = vcmp.ge.f32.partialorder %v2308, 0.0
        %v2320 = vstv %s2311
        %v2321 = vmul.f32 %v2320, %v2291
        %v2322 = vmul.f32 %v2320, %v2293
        %v2323 = vmul.f32 %v2320, %v2296
        %v2324 = vmul.f32 %v2320, %v2298
        %v2325 = vmul.f32 %v2320, %v2301
        %v2326 = vmul.f32 %v2320, %v2303
        %v2327 = vmul.f32 %v2320, %v2306
        %v2328 = vmul.f32 %v2320, %v2308
        %v2329 = vsel %vm2312, %v2291, %v2321
        %v2330 = vsel %vm2313, %v2293, %v2322
        %v2331 = vsel %vm2314, %v2296, %v2323
        %v2332 = vsel %vm2315, %v2298, %v2324
        %v2333 = vsel %vm2316, %v2301, %v2325
        %v2334 = vsel %vm2317, %v2303, %v2326
        %v2335 = vsel %vm2318, %v2306, %v2327
        %v2336 = vsel %vm2319, %v2308, %v2328
        %s2337 = sadd.s32 %s26, 1
        %p2338 = scmp.lt.s32.totalorder %s2337, 6
        // Predicated region
        $region61: #{xception_a_forward.3} parent=51 // pred_check
          %p2339 = pneg %p2338
        $region62: #{xception_a_forward.3} parent=51 // pred_check_branch
          %2341 = sbr.rel (%p2339) target = $region64
        $region63: #{xception_a_forward.3} parent=51 // pred_region
          %v2342 = vpack.c.bf16 %v2329, %v2329
          %v2343 = vpack.c.bf16 %v2330, %v2330
          %v2344 = vpack.c.bf16 %v2331, %v2331
          %v2345 = vpack.c.bf16 %v2332, %v2332
          %v2346 = vpack.c.bf16 %v2333, %v2333
          %v2347 = vpack.c.bf16 %v2334, %v2334
          %v2348 = vpack.c.bf16 %v2335, %v2335
          %v2349 = vpack.c.bf16 %v2336, %v2336
          %v2351 = vshrl.u32 %v2342, 16
          %v2353 = vrot.slane %v2351, 7
          %v2354 = vshll.u32 %v2342, 16
          %v2356 = vor.u32 %v2353, %v2354
          %v2357 = vrot.slane %v2353, 4
          %v2359 = vshrl.u32 %v2343, 16
          %v2361 = vrot.slane %v2359, 7
          %v2362 = vshll.u32 %v2343, 16
          %v2364 = vor.u32 %v2361, %v2362
          %v2365 = vrot.slane %v2361, 4
          %v2367 = vshrl.u32 %v2344, 16
          %v2369 = vrot.slane %v2367, 7
          %v2370 = vshll.u32 %v2344, 16
          %v2372 = vor.u32 %v2369, %v2370
          %v2373 = vrot.slane %v2369, 4
          %v2375 = vshrl.u32 %v2345, 16
          %v2377 = vrot.slane %v2375, 7
          %v2378 = vshll.u32 %v2345, 16
          %v2380 = vor.u32 %v2377, %v2378
          %v2381 = vrot.slane %v2377, 4
          %v2383 = vshrl.u32 %v2346, 16
          %v2385 = vrot.slane %v2383, 7
          %v2386 = vshll.u32 %v2346, 16
          %v2388 = vor.u32 %v2385, %v2386
          %v2389 = vrot.slane %v2385, 4
          %v2391 = vshrl.u32 %v2347, 16
          %v2393 = vrot.slane %v2391, 7
          %v2394 = vshll.u32 %v2347, 16
          %v2396 = vor.u32 %v2393, %v2394
          %v2397 = vrot.slane %v2393, 4
          %v2399 = vshrl.u32 %v2348, 16
          %v2401 = vrot.slane %v2399, 7
          %v2402 = vshll.u32 %v2348, 16
          %v2404 = vor.u32 %v2401, %v2402
          %v2405 = vrot.slane %v2401, 4
          %v2407 = vshrl.u32 %v2349, 16
          %v2409 = vrot.slane %v2407, 7
          %v2410 = vshll.u32 %v2349, 16
          %v2412 = vor.u32 %v2409, %v2410
          %v2413 = vrot.slane %v2409, 4
          %s2430 = scalar_lea.vmem [#allocation2], 8
          %v2431 = vld [vmem:[%s2430] sm:$0xf]
          %v2432 = vsel %vm1583, %v2356, %v2431
          %2433 = vst [vmem:[%s2430] sm:$0xf] %v2432
          %v2434 = vld [vmem:[%s2430 + $0x4] sm:$0x1]
          %v2435 = vsel %vm1589, %v2357, %v2434
          %2436 = vst [vmem:[%s2430 + $0x4] sm:$0x1] %v2435
          %v2437 = vld [vmem:[%s2430 + $0x8] sm:$0xf]
          %v2438 = vsel %vm1583, %v2364, %v2437
          %2439 = vst [vmem:[%s2430 + $0x8] sm:$0xf] %v2438
          %v2440 = vld [vmem:[%s2430 + $0xc] sm:$0x1]
          %v2441 = vsel %vm1589, %v2365, %v2440
          %2442 = vst [vmem:[%s2430 + $0xc] sm:$0x1] %v2441
          %v2443 = vld [vmem:[%s2430 + $0x10] sm:$0xf]
          %v2444 = vsel %vm1583, %v2372, %v2443
          %2445 = vst [vmem:[%s2430 + $0x10] sm:$0xf] %v2444
          %v2446 = vld [vmem:[%s2430 + $0x14] sm:$0x1]
          %v2447 = vsel %vm1589, %v2373, %v2446
          %2448 = vst [vmem:[%s2430 + $0x14] sm:$0x1] %v2447
          %v2449 = vld [vmem:[%s2430 + $0x18] sm:$0xf]
          %v2450 = vsel %vm1583, %v2380, %v2449
          %2451 = vst [vmem:[%s2430 + $0x18] sm:$0xf] %v2450
          %v2452 = vld [vmem:[%s2430 + $0x1c] sm:$0x1]
          %v2453 = vsel %vm1589, %v2381, %v2452
          %2454 = vst [vmem:[%s2430 + $0x1c] sm:$0x1] %v2453
          %v2455 = vld [vmem:[%s2430 + $0x20] sm:$0xf]
          %v2456 = vsel %vm1583, %v2388, %v2455
          %2457 = vst [vmem:[%s2430 + $0x20] sm:$0xf] %v2456
          %v2458 = vld [vmem:[%s2430 + $0x24] sm:$0x1]
          %v2459 = vsel %vm1589, %v2389, %v2458
          %2460 = vst [vmem:[%s2430 + $0x24] sm:$0x1] %v2459
          %v2461 = vld [vmem:[%s2430 + $0x28] sm:$0xf]
          %v2462 = vsel %vm1583, %v2396, %v2461
          %2463 = vst [vmem:[%s2430 + $0x28] sm:$0xf] %v2462
          %v2464 = vld [vmem:[%s2430 + $0x2c] sm:$0x1]
          %v2465 = vsel %vm1589, %v2397, %v2464
          %2466 = vst [vmem:[%s2430 + $0x2c] sm:$0x1] %v2465
          %v2467 = vld [vmem:[%s2430 + $0x30] sm:$0xf]
          %v2468 = vsel %vm1583, %v2404, %v2467
          %2469 = vst [vmem:[%s2430 + $0x30] sm:$0xf] %v2468
          %v2470 = vld [vmem:[%s2430 + $0x34] sm:$0x1]
          %v2471 = vsel %vm1589, %v2405, %v2470
          %2472 = vst [vmem:[%s2430 + $0x34] sm:$0x1] %v2471
          %v2473 = vld [vmem:[%s2430 + $0x38] sm:$0xf]
          %v2474 = vsel %vm1583, %v2412, %v2473
          %2475 = vst [vmem:[%s2430 + $0x38] sm:$0xf] %v2474
          %v2476 = vld [vmem:[%s2430 + $0x3c] sm:$0x1]
          %v2477 = vsel %vm1589, %v2413, %v2476
          %2478 = vst [vmem:[%s2430 + $0x3c] sm:$0x1] %v2477
        $region64: #{xception_a_forward.3} parent=51 // pred_fallthru
          _
        %p2479 = scmp.eq.s32.totalorder %s26, 5
        // Predicated region
        $region65: #{xception_a_forward.3} parent=51 // pred_check
          %p2480 = pneg %p2479
        $region66: #{xception_a_forward.3} parent=51 // pred_check_branch
          %2482 = sbr.rel (%p2480) target = $region68
        $region67: #{xception_a_forward.3} parent=51 // pred_region
          %v2483 = vpack.c.bf16 %v2329, %v2329
          %v2484 = vpack.c.bf16 %v2330, %v2330
          %v2485 = vpack.c.bf16 %v2331, %v2331
          %v2486 = vpack.c.bf16 %v2332, %v2332
          %v2487 = vpack.c.bf16 %v2333, %v2333
          %v2488 = vpack.c.bf16 %v2334, %v2334
          %v2489 = vpack.c.bf16 %v2335, %v2335
          %v2490 = vpack.c.bf16 %v2336, %v2336
          %2491 = vst [vmem:[%s389] sm:$0xf] %v2483
          %2492 = vst [vmem:[%s389 + $0x4] sm:$0xf] %v2484
          %2493 = vst [vmem:[%s389 + $0x8] sm:$0xf] %v2485
          %2494 = vst [vmem:[%s389 + $0xc] sm:$0xf] %v2486
          %2495 = vst [vmem:[%s389 + $0x10] sm:$0xf] %v2487
          %2496 = vst [vmem:[%s389 + $0x14] sm:$0xf] %v2488
          %2497 = vst [vmem:[%s389 + $0x18] sm:$0xf] %v2489
          %2498 = vst [vmem:[%s389 + $0x1c] sm:$0xf] %v2490
        $region68: #{xception_a_forward.3} parent=51 // pred_fallthru
          _
        %p2499 = scmp.lt.s32.totalorder %s25, 1
        %s2500 = scalar_select %p2499, %s25, 1
        %s2501 = smul.addr %s2500, 8
        %s2502 = smul.addr %s2501, 4
        %s2503 = scalar_lea.vmem %s8, %s2502
        // Predicated region
        $region69: #{xception_a_forward.3} parent=51 // pred_check
          %p2504 = pneg %p239
        $region70: #{xception_a_forward.3} parent=51 // pred_check_branch
          %2506 = sbr.rel (%p2504) target = $region72
        $region71: #{xception_a_forward.3} parent=51 // pred_region
          _
        $region72: #{xception_a_forward.3} parent=51 // pred_fallthru
          _
      $region52: #{xception_a_forward.3} parent=5 // pred_fallthru
        _
      %p2507 = scmp.le.s32.totalorder 2, %s16
      // Predicated region
      $region73: #{xception_a_forward.3} parent=5 // pred_check
        %p2508 = pneg %p2507
      $region74: #{xception_a_forward.3} parent=5 // pred_check_branch
        %2510 = sbr.rel (%p2508) target = $region76
      $region75: #{xception_a_forward.3} parent=5 // pred_region
        %s2511 = ssub.s32 %s16, 2
        // Predicated region
        $region77: #{xception_a_forward.3} parent=75 // pred_check
          %p2512 = pneg %p245
        $region78: #{xception_a_forward.3} parent=75 // pred_check_branch
          %2514 = sbr.rel (%p2512) target = $region80
        $region79: #{xception_a_forward.3} parent=75 // pred_region
          %p2515 = scmp.lt.s32.totalorder %s27, 1
          %s2516 = scalar_select %p2515, %s27, 1
          %s2517 = smul.addr %s2516, 8
          %s2518 = smul.addr %s2517, 4
          %s2519 = scalar_lea.vmem %s8, %s2518
        $region80: #{xception_a_forward.3} parent=75 // pred_fallthru
          _
      $region76: #{xception_a_forward.3} parent=5 // pred_fallthru
        _
    $region6: #{xception_a_forward.3} parent=1 // loop_footer
      %s20 = sadd.s32 1, %s16
    $region7: #{xception_a_forward.3} parent=1 // loop_footer_branch
      %15 = sbr.rel target = $region3
    $region8: #{xception_a_forward.3} parent=1 // loop_exit
      _
    %2520 = vsyncpa [#allocation6], 1
    %s2521 = scalar_lea.sflag [#allocation6], 1
    %2522 = vsyncpa %s2521, 1

// kernel: xception_a_forward.4
$region0: #{xception_a_forward.4}
  #allocation0 [shape = 'u32[]', space=smem, size = 0x4, offset = 0x4, fixed_abs, tag = 'smem constant byte address 0x4 - core index']
  #allocation1 [shape = 'u32[72,128]{1,0:T(1,128)}', space=vmem, size = 0x9000, scoped, tag = 'internal scratch']
  #allocation2 [shape = 'bf16[1,10,16,128]{3,2,1,0:T(8,128)(2,1)}', space=vmem, size = 0xa000, scoped, tag = 'scratch operand']
  #allocation3 [shape = 'bf16[1,10,16,128]{3,2,1,0:T(8,128)(2,1)}', space=vmem, size = 0xa000, scoped, tag = 'scratch operand']
  %s0 = inlined_call_operand.vmem [shape: bf16[2,8,8,128], index: 0, kind: input, shape index: {}]
  %s1 = inlined_call_operand.vmem [shape: f32[9,2,9,128], index: 1, kind: input, shape index: {}]
  %s2 = inlined_call_operand.vmem [shape: bf16[9,2,128,128], index: 2, kind: input, shape index: {}]
  %s3 = inlined_call_operand.vmem [shape: f32[9,2,1,128], index: 3, kind: input, shape index: {}]
  %s4 = inlined_call_operand.vmem [shape: f32[18], index: 4, kind: input, shape index: {}]
  %s5 = inlined_call_operand.vmem [shape: bf16[2,8,8,128], index: 5, kind: output, shape index: {}]
  %s6 = sld [smem:[#allocation0]]
  $region69: #{xception_a_forward.4} parent=0
    _
  %s8 = ssub.s32 1, %s6
  %s9 = scalar_select 0, %s8, %s6
  $region1: #{xception_a_forward.4} parent=0
    #allocation4 [shape = 'u8[512]{0}', space=smem, size = 0x200, scoped, tag = 'input window, operand 4, single buffered']
    #allocation5 [shape = 's32[2]{0}', space=sflag, size = 0x8, scoped, tag = 'scoped memory for xception_a_forward.4']
    %10 = vsyncpa [#allocation5], 0
    loop: start=0, step=1, limit=20
    $region2: #{xception_a_forward.4} parent=1 // loop_pre_header
      _
    $region3: #{xception_a_forward.4} parent=1 // loop_header
      %s12 = sphi 0, %s16
      %p13 = scmp.ge.s32.totalorder %s12, 20
      %s19 = sphi 0, %s31
      %s20 = sphi 0, %s27
      %s21 = sphi 0, %s19
      %s22 = sphi 0, %s20
      %s23 = sphi 0, %s21
      %s24 = sphi 0, %s22
      %s34 = sphi 0, %s36
      %s37 = sphi 0, %s34
      %s38 = sphi 0, %s37
      %s54 = sphi 0, %s38
      %s60 = sphi 0, %s62
      %s63 = sphi 0, %s60
      %s64 = sphi 0, %s63
      %s80 = sphi 0, %s64
      %s86 = sphi 0, %s88
      %s89 = sphi 0, %s86
      %s90 = sphi 0, %s89
      %s106 = sphi 0, %s90
      %s112 = sphi 0, %s114
      %s115 = sphi 0, %s112
      %s116 = sphi 0, %s115
      %s132 = sphi 0, %s116
      %s136 = sphi 0, %s136
      %s138 = sphi 0, %s136
      %s139 = sphi 0, %s138
      %s153 = sphi 0, %s139
      %s159 = sphi 0, %s161
      %s162 = sphi 0, %s159
      %s163 = sphi 0, %s162
      %s179 = sphi 0, %s163
    $region4: #{xception_a_forward.4} parent=1 // loop_header_branch
      %15 = sbr.rel (%p13) target = $region8
    $region5: #{xception_a_forward.4} parent=1 // loop_body
      %s17 = ssub.s32 %s12, 1
      %s18 = ssub.s32 %s12, 2
      %s25 = sadd.s32 1, %s20
      %p26 = scmp.ge.s32.totalorder %s25, 9
      %s27 = scalar_select %p26, 0, %s25
      %s28 = sadd.s32 1, %s19
      %s29 = scalar_select %p26, %s28, %s19
      %p30 = scmp.ge.s32.totalorder %s29, 2
      %s31 = scalar_select %p30, 0, %s29
      %s32 = ssub.s32 %s19, %s31
      %p33 = scmp.eq.s32.totalorder %s32, 0
      %s35 = sadd.s32 %s34, 1
      %s36 = scalar_select %p33, %s34, %s35
      %p39 = pneg %p33
      %p40 = scmp.eq.s32.totalorder %s12, 17
      %p41 = por %p39, %p40
      %p42 = scmp.ne.s32.totalorder %s34, %s37
      %p43 = scmp.eq.s32.totalorder %s12, 0
      %p44 = por %p42, %p43
      %p45 = scmp.ne.s32.totalorder %s34, %s37
      %p46 = scmp.eq.s32.totalorder %s17, 17
      %p47 = por %p45, %p46
      %p48 = scmp.ne.s32.totalorder %s37, %s38
      %p49 = scmp.eq.s32.totalorder %s17, 0
      %p50 = por %p48, %p49
      %p51 = scmp.ne.s32.totalorder %s37, %s38
      %p52 = scmp.eq.s32.totalorder %s18, 17
      %p53 = por %p51, %p52
      %p55 = scmp.ne.s32.totalorder %s38, %s54
      %p56 = scmp.eq.s32.totalorder %s18, 0
      %p57 = por %p55, %p56
      %s58 = ssub.s32 %s20, %s27
      %p59 = scmp.eq.s32.totalorder %s58, 0
      %s61 = sadd.s32 %s60, 1
      %s62 = scalar_select %p59, %s60, %s61
      %p65 = pneg %p59
      %p66 = scmp.eq.s32.totalorder %s12, 17
      %p67 = por %p65, %p66
      %p68 = scmp.ne.s32.totalorder %s60, %s63
      %p69 = scmp.eq.s32.totalorder %s12, 0
      %p70 = por %p68, %p69
      %p71 = scmp.ne.s32.totalorder %s60, %s63
      %p72 = scmp.eq.s32.totalorder %s17, 17
      %p73 = por %p71, %p72
      %p74 = scmp.ne.s32.totalorder %s63, %s64
      %p75 = scmp.eq.s32.totalorder %s17, 0
      %p76 = por %p74, %p75
      %p77 = scmp.ne.s32.totalorder %s63, %s64
      %p78 = scmp.eq.s32.totalorder %s18, 17
      %p79 = por %p77, %p78
      %p81 = scmp.ne.s32.totalorder %s64, %s80
      %p82 = scmp.eq.s32.totalorder %s18, 0
      %p83 = por %p81, %p82
      %s84 = ssub.s32 %s20, %s27
      %p85 = scmp.eq.s32.totalorder %s84, 0
      %s87 = sadd.s32 %s86, 1
      %s88 = scalar_select %p85, %s86, %s87
      %p91 = pneg %p85
      %p92 = scmp.eq.s32.totalorder %s12, 17
      %p93 = por %p91, %p92
      %p94 = scmp.ne.s32.totalorder %s86, %s89
      %p95 = scmp.eq.s32.totalorder %s12, 0
      %p96 = por %p94, %p95
      %p97 = scmp.ne.s32.totalorder %s86, %s89
      %p98 = scmp.eq.s32.totalorder %s17, 17
      %p99 = por %p97, %p98
      %p100 = scmp.ne.s32.totalorder %s89, %s90
      %p101 = scmp.eq.s32.totalorder %s17, 0
      %p102 = por %p100, %p101
      %p103 = scmp.ne.s32.totalorder %s89, %s90
      %p104 = scmp.eq.s32.totalorder %s18, 17
      %p105 = por %p103, %p104
      %p107 = scmp.ne.s32.totalorder %s90, %s106
      %p108 = scmp.eq.s32.totalorder %s18, 0
      %p109 = por %p107, %p108
      %s110 = ssub.s32 %s20, %s27
      %p111 = scmp.eq.s32.totalorder %s110, 0
      %s113 = sadd.s32 %s112, 1
      %s114 = scalar_select %p111, %s112, %s113
      %p117 = pneg %p111
      %p118 = scmp.eq.s32.totalorder %s12, 17
      %p119 = por %p117, %p118
      %p120 = scmp.ne.s32.totalorder %s112, %s115
      %p121 = scmp.eq.s32.totalorder %s12, 0
      %p122 = por %p120, %p121
      %p123 = scmp.ne.s32.totalorder %s112, %s115
      %p124 = scmp.eq.s32.totalorder %s17, 17
      %p125 = por %p123, %p124
      %p126 = scmp.ne.s32.totalorder %s115, %s116
      %p127 = scmp.eq.s32.totalorder %s17, 0
      %p128 = por %p126, %p127
      %p129 = scmp.ne.s32.totalorder %s115, %s116
      %p130 = scmp.eq.s32.totalorder %s18, 17
      %p131 = por %p129, %p130
      %p133 = scmp.ne.s32.totalorder %s116, %s132
      %p134 = scmp.eq.s32.totalorder %s18, 0
      %p135 = por %p133, %p134
      %s137 = sadd.s32 %s136, 1
      %p140 = scmp.eq.s32.totalorder %s12, 17
      %p141 = scmp.ne.s32.totalorder %s136, %s138
      %p142 = scmp.eq.s32.totalorder %s12, 0
      %p143 = por %p141, %p142
      %p144 = scmp.ne.s32.totalorder %s136, %s138
      %p145 = scmp.eq.s32.totalorder %s17, 17
      %p146 = por %p144, %p145
      %p147 = scmp.ne.s32.totalorder %s138, %s139
      %p148 = scmp.eq.s32.totalorder %s17, 0
      %p149 = por %p147, %p148
      %p150 = scmp.ne.s32.totalorder %s138, %s139
      %p151 = scmp.eq.s32.totalorder %s18, 17
      %p152 = por %p150, %p151
      %p154 = scmp.ne.s32.totalorder %s139, %s153
      %p155 = scmp.eq.s32.totalorder %s18, 0
      %p156 = por %p154, %p155
      %s157 = ssub.s32 %s19, %s31
      %p158 = scmp.eq.s32.totalorder %s157, 0
      %s160 = sadd.s32 %s159, 1
      %s161 = scalar_select %p158, %s159, %s160
      %p164 = pneg %p158
      %p165 = scmp.eq.s32.totalorder %s12, 17
      %p166 = por %p164, %p165
      %p167 = scmp.ne.s32.totalorder %s159, %s162
      %p168 = scmp.eq.s32.totalorder %s12, 0
      %p169 = por %p167, %p168
      %p170 = scmp.ne.s32.totalorder %s159, %s162
      %p171 = scmp.eq.s32.totalorder %s17, 17
      %p172 = por %p170, %p171
      %p173 = scmp.ne.s32.totalorder %s162, %s163
      %p174 = scmp.eq.s32.totalorder %s17, 0
      %p175 = por %p173, %p174
      %p176 = scmp.ne.s32.totalorder %s162, %s163
      %p177 = scmp.eq.s32.totalorder %s18, 17
      %p178 = por %p176, %p177
      %p180 = scmp.ne.s32.totalorder %s163, %s179
      %p181 = scmp.eq.s32.totalorder %s18, 0
      %p182 = por %p180, %p181
      %p183 = scmp.le.s32.totalorder 1, %s12
      %p184 = scmp.lt.s32.totalorder %s12, 19
      %p185 = pnand %p183, %p184
      %p186 = pneg %p185
      // Predicated region
      $region9: #{xception_a_forward.4} parent=5 // pred_check
        _
      $region10: #{xception_a_forward.4} parent=5 // pred_check_branch
        %188 = sbr.rel (%p185) target = $region12
      $region11: #{xception_a_forward.4} parent=5 // pred_region
        %s189 = ssub.s32 %s12, 1
        // Predicated region
        $region13: #{xception_a_forward.4} parent=11 // pred_check
          %p190 = pneg %p149
        $region14: #{xception_a_forward.4} parent=11 // pred_check_branch
          %192 = sbr.rel (%p190) target = $region16
        $region15: #{xception_a_forward.4} parent=11 // pred_region
          %194 = vsyncadd [#allocation5], 0
          %s196 = sshll.u32 %s4, 4
          %s197 = int_to_ptr.vmem [resolvable:$true] %s196
          %199 = dma.vmem_to_smem %s197, 16, [#allocation4], [#allocation5]
        $region16: #{xception_a_forward.4} parent=11 // pred_fallthru
          _
      $region12: #{xception_a_forward.4} parent=5 // pred_fallthru
        _
      %p200 = scmp.lt.s32.totalorder %s12, 18
      // Predicated region
      $region17: #{xception_a_forward.4} parent=5 // pred_check
        %p201 = pneg %p200
      $region18: #{xception_a_forward.4} parent=5 // pred_check_branch
        %203 = sbr.rel (%p201) target = $region20
      $region19: #{xception_a_forward.4} parent=5 // pred_region
        // Predicated region
        $region21: #{xception_a_forward.4} parent=19 // pred_check
          %p204 = pneg %p44
        $region22: #{xception_a_forward.4} parent=19 // pred_check_branch
          %206 = sbr.rel (%p204) target = $region24
        $region23: #{xception_a_forward.4} parent=19 // pred_region
          %p207 = scmp.lt.s32.totalorder %s19, 1
          %s208 = scalar_select %p207, %s19, 1
          %s209 = smul.addr %s208, 8
          %s210 = smul.addr %s209, 4
          %s211 = scalar_lea.vmem %s0, %s210
        $region24: #{xception_a_forward.4} parent=19 // pred_fallthru
          _
        // Predicated region
        $region25: #{xception_a_forward.4} parent=19 // pred_check
          %p212 = pneg %p70
        $region26: #{xception_a_forward.4} parent=19 // pred_check_branch
          %214 = sbr.rel (%p212) target = $region28
        $region27: #{xception_a_forward.4} parent=19 // pred_region
          %p215 = scmp.lt.s32.totalorder %s20, 8
          %s216 = scalar_select %p215, %s20, 8
          %s217 = smul.addr %s216, 4
          %s218 = smul.addr %s217, 8
          %s219 = scalar_lea.vmem %s1, %s218
        $region28: #{xception_a_forward.4} parent=19 // pred_fallthru
          _
        // Predicated region
        $region29: #{xception_a_forward.4} parent=19 // pred_check
          %p220 = pneg %p96
        $region30: #{xception_a_forward.4} parent=19 // pred_check_branch
          %222 = sbr.rel (%p220) target = $region32
        $region31: #{xception_a_forward.4} parent=19 // pred_region
          %p223 = scmp.lt.s32.totalorder %s20, 8
          %s224 = scalar_select %p223, %s20, 8
          %s225 = smul.addr %s224, 32
          %s226 = smul.addr %s225, 4
          %s227 = scalar_lea.vmem %s2, %s226
        $region32: #{xception_a_forward.4} parent=19 // pred_fallthru
          _
        // Predicated region
        $region33: #{xception_a_forward.4} parent=19 // pred_check
          %p228 = pneg %p122
        $region34: #{xception_a_forward.4} parent=19 // pred_check_branch
          %230 = sbr.rel (%p228) target = $region36
        $region35: #{xception_a_forward.4} parent=19 // pred_region
          %p231 = scmp.lt.s32.totalorder %s20, 8
          %s232 = scalar_select %p231, %s20, 8
          %s233 = smul.addr %s232, 2
          %s234 = scalar_lea.vmem %s3, %s233
        $region36: #{xception_a_forward.4} parent=19 // pred_fallthru
          _
      $region20: #{xception_a_forward.4} parent=5 // pred_fallthru
        _
      %p235 = scmp.le.s32.totalorder 1, %s12
      %p236 = scmp.lt.s32.totalorder %s12, 19
      %p237 = pnand %p235, %p236
      %p238 = pneg %p237
      // Predicated region
      $region37: #{xception_a_forward.4} parent=5 // pred_check
        _
      $region38: #{xception_a_forward.4} parent=5 // pred_check_branch
        %240 = sbr.rel (%p237) target = $region40
      $region39: #{xception_a_forward.4} parent=5 // pred_region
        %s241 = ssub.s32 %s12, 1
        // Predicated region
        $region41: #{xception_a_forward.4} parent=39 // pred_check
          %p242 = pneg %p149
        $region42: #{xception_a_forward.4} parent=39 // pred_check_branch
          %244 = sbr.rel (%p242) target = $region44
        $region43: #{xception_a_forward.4} parent=39 // pred_region
          %246 = dma.done [#allocation5], 16
        $region44: #{xception_a_forward.4} parent=39 // pred_fallthru
          _
        %247 = sfence
        %p248 = scmp.lt.s32.totalorder %s21, 1
        %s249 = scalar_select %p248, %s21, 1
        %s250 = smul.addr %s249, 8
        %s251 = smul.addr %s250, 4
        %s252 = scalar_lea.vmem %s0, %s251
        %p253 = pneg %p50
        %p254 = pneg %p47
        %p255 = scmp.lt.s32.totalorder %s22, 8
        %s256 = scalar_select %p255, %s22, 8
        %s257 = smul.addr %s256, 4
        %s258 = smul.addr %s257, 8
        %s259 = scalar_lea.vmem %s1, %s258
        %p260 = pneg %p76
        %p261 = pneg %p73
        %p262 = scmp.lt.s32.totalorder %s22, 8
        %s263 = scalar_select %p262, %s22, 8
        %s264 = smul.addr %s263, 32
        %s265 = smul.addr %s264, 4
        %s266 = scalar_lea.vmem %s2, %s265
        %p267 = pneg %p102
        %p268 = pneg %p99
        %p269 = scmp.lt.s32.totalorder %s22, 8
        %s270 = scalar_select %p269, %s22, 8
        %s271 = smul.addr %s270, 2
        %s272 = scalar_lea.vmem %s3, %s271
        %p273 = pneg %p128
        %p274 = pneg %p125
        %p275 = pneg %p149
        %p276 = pneg %p146
        %p277 = pneg %p175
        %p278 = pneg %p172
        %p279 = scmp.lt.s32.totalorder %s21, 1
        %s280 = scalar_select %p279, %s21, 1
        %s281 = smul.addr %s280, 8
        %s282 = smul.addr %s281, 4
        %s283 = scalar_lea.vmem %s5, %s282
        %p284 = scmp.lt.s32.totalorder %s21, 1
        %s285 = scalar_select %p284, %s21, 1
        %s286 = smul.addr %s285, 8
        %s287 = smul.addr %s286, 4
        %s288 = scalar_lea.vmem %s0, %s287
        %p289 = scmp.lt.s32.totalorder %s22, 8
        %s290 = scalar_select %p289, %s22, 8
        %s291 = smul.addr %s290, 4
        %s292 = smul.addr %s291, 8
        %s293 = scalar_lea.vmem %s1, %s292
        %p294 = scmp.lt.s32.totalorder %s22, 8
        %s295 = scalar_select %p294, %s22, 8
        %s296 = smul.addr %s295, 32
        %s297 = smul.addr %s296, 4
        %s298 = scalar_lea.vmem %s2, %s297
        %p299 = scmp.lt.s32.totalorder %s22, 8
        %s300 = scalar_select %p299, %s22, 8
        %s301 = smul.addr %s300, 2
        %s302 = scalar_lea.vmem %s3, %s301
        %p303 = scmp.lt.s32.totalorder %s21, 1
        %s304 = scalar_select %p303, %s21, 1
        %s305 = smul.addr %s304, 8
        %s306 = smul.addr %s305, 4
        %s307 = scalar_lea.vmem %s5, %s306
        %p309 = scmp.eq.s32.totalorder %s22, 0
        // Predicated region
        $region45: #{xception_a_forward.4} parent=39 // pred_check
          %p310 = pneg %p309
        $region46: #{xception_a_forward.4} parent=39 // pred_check_branch
          %312 = sbr.rel (%p310) target = $region48
        $region47: #{xception_a_forward.4} parent=39 // pred_region
          %313 = vst [vmem:[#allocation2] sm:$0xf] 0
          %314 = vst [vmem:[#allocation2 + $0x4] sm:$0xf] 0
          %s315 = scalar_lea.vmem [#allocation2], 72
          %316 = vst [vmem:[%s315] sm:$0xf] 0
          %317 = vst [vmem:[%s315 + $0x4] sm:$0xf] 0
          %vm318 = vcmask 1040384
          %vm319 = vsmask.f32 256
          %vm320 = vmand %vm318, %vm319
          %v321 = vld [vmem:[#allocation2] sm:$0x1]
          %v322 = vsel %vm320, 0, %v321
          %323 = vst [vmem:[#allocation2] sm:$0x1] %v322
          %v324 = vld [vmem:[#allocation2 + $0x8] sm:$0x1]
          %v325 = vsel %vm320, 0, %v324
          %326 = vst [vmem:[#allocation2 + $0x8] sm:$0x1] %v325
          %v327 = vld [vmem:[#allocation2 + $0x10] sm:$0x1]
          %v328 = vsel %vm320, 0, %v327
          %329 = vst [vmem:[#allocation2 + $0x10] sm:$0x1] %v328
          %v330 = vld [vmem:[#allocation2 + $0x18] sm:$0x1]
          %v331 = vsel %vm320, 0, %v330
          %332 = vst [vmem:[#allocation2 + $0x18] sm:$0x1] %v331
          %v333 = vld [vmem:[#allocation2 + $0x20] sm:$0x1]
          %v334 = vsel %vm320, 0, %v333
          %335 = vst [vmem:[#allocation2 + $0x20] sm:$0x1] %v334
          %v336 = vld [vmem:[#allocation2 + $0x28] sm:$0x1]
          %v337 = vsel %vm320, 0, %v336
          %338 = vst [vmem:[#allocation2 + $0x28] sm:$0x1] %v337
          %v339 = vld [vmem:[#allocation2 + $0x30] sm:$0x1]
          %v340 = vsel %vm320, 0, %v339
          %341 = vst [vmem:[#allocation2 + $0x30] sm:$0x1] %v340
          %v342 = vld [vmem:[#allocation2 + $0x38] sm:$0x1]
          %v343 = vsel %vm320, 0, %v342
          %344 = vst [vmem:[#allocation2 + $0x38] sm:$0x1] %v343
          %v345 = vld [vmem:[#allocation2 + $0x40] sm:$0x1]
          %v346 = vsel %vm320, 0, %v345
          %347 = vst [vmem:[#allocation2 + $0x40] sm:$0x1] %v346
          %v348 = vld [vmem:[#allocation2 + $0x48] sm:$0x1]
          %v349 = vsel %vm320, 0, %v348
          %350 = vst [vmem:[#allocation2 + $0x48] sm:$0x1] %v349
          %vm351 = vsmask.f32 7938
          %vm352 = vmand %vm318, %vm351
          %v353 = vld [vmem:[#allocation2 + $0x4] sm:$0x1]
          %v354 = vsel %vm352, 0, %v353
          %355 = vst [vmem:[#allocation2 + $0x4] sm:$0x1] %v354
          %v356 = vld [vmem:[#allocation2 + $0xc] sm:$0x1]
          %v357 = vsel %vm352, 0, %v356
          %358 = vst [vmem:[#allocation2 + $0xc] sm:$0x1] %v357
          %v359 = vld [vmem:[#allocation2 + $0x14] sm:$0x1]
          %v360 = vsel %vm352, 0, %v359
          %361 = vst [vmem:[#allocation2 + $0x14] sm:$0x1] %v360
          %v362 = vld [vmem:[#allocation2 + $0x1c] sm:$0x1]
          %v363 = vsel %vm352, 0, %v362
          %364 = vst [vmem:[#allocation2 + $0x1c] sm:$0x1] %v363
          %v365 = vld [vmem:[#allocation2 + $0x24] sm:$0x1]
          %v366 = vsel %vm352, 0, %v365
          %367 = vst [vmem:[#allocation2 + $0x24] sm:$0x1] %v366
          %v368 = vld [vmem:[#allocation2 + $0x2c] sm:$0x1]
          %v369 = vsel %vm352, 0, %v368
          %370 = vst [vmem:[#allocation2 + $0x2c] sm:$0x1] %v369
          %v371 = vld [vmem:[#allocation2 + $0x34] sm:$0x1]
          %v372 = vsel %vm352, 0, %v371
          %373 = vst [vmem:[#allocation2 + $0x34] sm:$0x1] %v372
          %v374 = vld [vmem:[#allocation2 + $0x3c] sm:$0x1]
          %v375 = vsel %vm352, 0, %v374
          %376 = vst [vmem:[#allocation2 + $0x3c] sm:$0x1] %v375
          %v377 = vld [vmem:[#allocation2 + $0x44] sm:$0x1]
          %v378 = vsel %vm352, 0, %v377
          %379 = vst [vmem:[#allocation2 + $0x44] sm:$0x1] %v378
          %v380 = vld [vmem:[#allocation2 + $0x4c] sm:$0x1]
          %v381 = vsel %vm352, 0, %v380
          %382 = vst [vmem:[#allocation2 + $0x4c] sm:$0x1] %v381
          %383 = vst [vmem:[#allocation3] sm:$0xf] 0
          %384 = vst [vmem:[#allocation3 + $0x4] sm:$0xf] 0
          %s385 = scalar_lea.vmem [#allocation3], 72
          %386 = vst [vmem:[%s385] sm:$0xf] 0
          %387 = vst [vmem:[%s385 + $0x4] sm:$0xf] 0
          %v388 = vld [vmem:[#allocation3] sm:$0x1]
          %v389 = vsel %vm320, 0, %v388
          %390 = vst [vmem:[#allocation3] sm:$0x1] %v389
          %v391 = vld [vmem:[#allocation3 + $0x8] sm:$0x1]
          %v392 = vsel %vm320, 0, %v391
          %393 = vst [vmem:[#allocation3 + $0x8] sm:$0x1] %v392
          %v394 = vld [vmem:[#allocation3 + $0x10] sm:$0x1]
          %v395 = vsel %vm320, 0, %v394
          %396 = vst [vmem:[#allocation3 + $0x10] sm:$0x1] %v395
          %v397 = vld [vmem:[#allocation3 + $0x18] sm:$0x1]
          %v398 = vsel %vm320, 0, %v397
          %399 = vst [vmem:[#allocation3 + $0x18] sm:$0x1] %v398
          %v400 = vld [vmem:[#allocation3 + $0x20] sm:$0x1]
          %v401 = vsel %vm320, 0, %v400
          %402 = vst [vmem:[#allocation3 + $0x20] sm:$0x1] %v401
          %v403 = vld [vmem:[#allocation3 + $0x28] sm:$0x1]
          %v404 = vsel %vm320, 0, %v403
          %405 = vst [vmem:[#allocation3 + $0x28] sm:$0x1] %v404
          %v406 = vld [vmem:[#allocation3 + $0x30] sm:$0x1]
          %v407 = vsel %vm320, 0, %v406
          %408 = vst [vmem:[#allocation3 + $0x30] sm:$0x1] %v407
          %v409 = vld [vmem:[#allocation3 + $0x38] sm:$0x1]
          %v410 = vsel %vm320, 0, %v409
          %411 = vst [vmem:[#allocation3 + $0x38] sm:$0x1] %v410
          %v412 = vld [vmem:[#allocation3 + $0x40] sm:$0x1]
          %v413 = vsel %vm320, 0, %v412
          %414 = vst [vmem:[#allocation3 + $0x40] sm:$0x1] %v413
          %v415 = vld [vmem:[#allocation3 + $0x48] sm:$0x1]
          %v416 = vsel %vm320, 0, %v415
          %417 = vst [vmem:[#allocation3 + $0x48] sm:$0x1] %v416
          %v418 = vld [vmem:[#allocation3 + $0x4] sm:$0x1]
          %v419 = vsel %vm352, 0, %v418
          %420 = vst [vmem:[#allocation3 + $0x4] sm:$0x1] %v419
          %v421 = vld [vmem:[#allocation3 + $0xc] sm:$0x1]
          %v422 = vsel %vm352, 0, %v421
          %423 = vst [vmem:[#allocation3 + $0xc] sm:$0x1] %v422
          %v424 = vld [vmem:[#allocation3 + $0x14] sm:$0x1]
          %v425 = vsel %vm352, 0, %v424
          %426 = vst [vmem:[#allocation3 + $0x14] sm:$0x1] %v425
          %v427 = vld [vmem:[#allocation3 + $0x1c] sm:$0x1]
          %v428 = vsel %vm352, 0, %v427
          %429 = vst [vmem:[#allocation3 + $0x1c] sm:$0x1] %v428
          %v430 = vld [vmem:[#allocation3 + $0x24] sm:$0x1]
          %v431 = vsel %vm352, 0, %v430
          %432 = vst [vmem:[#allocation3 + $0x24] sm:$0x1] %v431
          %v433 = vld [vmem:[#allocation3 + $0x2c] sm:$0x1]
          %v434 = vsel %vm352, 0, %v433
          %435 = vst [vmem:[#allocation3 + $0x2c] sm:$0x1] %v434
          %v436 = vld [vmem:[#allocation3 + $0x34] sm:$0x1]
          %v437 = vsel %vm352, 0, %v436
          %438 = vst [vmem:[#allocation3 + $0x34] sm:$0x1] %v437
          %v439 = vld [vmem:[#allocation3 + $0x3c] sm:$0x1]
          %v440 = vsel %vm352, 0, %v439
          %441 = vst [vmem:[#allocation3 + $0x3c] sm:$0x1] %v440
          %v442 = vld [vmem:[#allocation3 + $0x44] sm:$0x1]
          %v443 = vsel %vm352, 0, %v442
          %444 = vst [vmem:[#allocation3 + $0x44] sm:$0x1] %v443
          %v445 = vld [vmem:[#allocation3 + $0x4c] sm:$0x1]
          %v446 = vsel %vm352, 0, %v445
          %447 = vst [vmem:[#allocation3 + $0x4c] sm:$0x1] %v446
          %v448 = vld [vmem:[%s288] sm:$0xf]
          %v449 = vld [vmem:[%s288 + $0x4] sm:$0xf]
          %v450 = vld [vmem:[%s288 + $0x8] sm:$0xf]
          %v451 = vld [vmem:[%s288 + $0xc] sm:$0xf]
          %v452 = vld [vmem:[%s288 + $0x10] sm:$0xf]
          %v453 = vld [vmem:[%s288 + $0x14] sm:$0xf]
          %v454 = vld [vmem:[%s288 + $0x18] sm:$0xf]
          %v455 = vld [vmem:[%s288 + $0x1c] sm:$0xf]
          %v457 = vshrl.u32 %v448, 16
          %v459 = vrot.slane %v457, 7
          %v460 = vshll.u32 %v448, 16
          %v462 = vor.u32 %v459, %v460
          %v463 = vrot.slane %v459, 4
          %v465 = vshrl.u32 %v449, 16
          %v467 = vrot.slane %v465, 7
          %v468 = vshll.u32 %v449, 16
          %v470 = vor.u32 %v467, %v468
          %v471 = vrot.slane %v467, 4
          %v473 = vshrl.u32 %v450, 16
          %v475 = vrot.slane %v473, 7
          %v476 = vshll.u32 %v450, 16
          %v478 = vor.u32 %v475, %v476
          %v479 = vrot.slane %v475, 4
          %v481 = vshrl.u32 %v451, 16
          %v483 = vrot.slane %v481, 7
          %v484 = vshll.u32 %v451, 16
          %v486 = vor.u32 %v483, %v484
          %v487 = vrot.slane %v483, 4
          %v489 = vshrl.u32 %v452, 16
          %v491 = vrot.slane %v489, 7
          %v492 = vshll.u32 %v452, 16
          %v494 = vor.u32 %v491, %v492
          %v495 = vrot.slane %v491, 4
          %v497 = vshrl.u32 %v453, 16
          %v499 = vrot.slane %v497, 7
          %v500 = vshll.u32 %v453, 16
          %v502 = vor.u32 %v499, %v500
          %v503 = vrot.slane %v499, 4
          %v505 = vshrl.u32 %v454, 16
          %v507 = vrot.slane %v505, 7
          %v508 = vshll.u32 %v454, 16
          %v510 = vor.u32 %v507, %v508
          %v511 = vrot.slane %v507, 4
          %v513 = vshrl.u32 %v455, 16
          %v515 = vrot.slane %v513, 7
          %v516 = vshll.u32 %v455, 16
          %v518 = vor.u32 %v515, %v516
          %v519 = vrot.slane %v515, 4
          %s536 = scalar_lea.vmem [#allocation2], 8
          %vm537 = vcmask 1043456
          %vm538 = vmand %vm537, %vm351
          %v539 = vld [vmem:[%s536] sm:$0xf]
          %v540 = vsel %vm538, %v462, %v539
          %541 = vst [vmem:[%s536] sm:$0xf] %v540
          %v542 = vld [vmem:[%s536 + $0x4] sm:$0x1]
          %v543 = vsel %vm320, %v463, %v542
          %544 = vst [vmem:[%s536 + $0x4] sm:$0x1] %v543
          %v545 = vld [vmem:[%s536 + $0x8] sm:$0xf]
          %v546 = vsel %vm538, %v470, %v545
          %547 = vst [vmem:[%s536 + $0x8] sm:$0xf] %v546
          %v548 = vld [vmem:[%s536 + $0xc] sm:$0x1]
          %v549 = vsel %vm320, %v471, %v548
          %550 = vst [vmem:[%s536 + $0xc] sm:$0x1] %v549
          %v551 = vld [vmem:[%s536 + $0x10] sm:$0xf]
          %v552 = vsel %vm538, %v478, %v551
          %553 = vst [vmem:[%s536 + $0x10] sm:$0xf] %v552
          %v554 = vld [vmem:[%s536 + $0x14] sm:$0x1]
          %v555 = vsel %vm320, %v479, %v554
          %556 = vst [vmem:[%s536 + $0x14] sm:$0x1] %v555
          %v557 = vld [vmem:[%s536 + $0x18] sm:$0xf]
          %v558 = vsel %vm538, %v486, %v557
          %559 = vst [vmem:[%s536 + $0x18] sm:$0xf] %v558
          %v560 = vld [vmem:[%s536 + $0x1c] sm:$0x1]
          %v561 = vsel %vm320, %v487, %v560
          %562 = vst [vmem:[%s536 + $0x1c] sm:$0x1] %v561
          %v563 = vld [vmem:[%s536 + $0x20] sm:$0xf]
          %v564 = vsel %vm538, %v494, %v563
          %565 = vst [vmem:[%s536 + $0x20] sm:$0xf] %v564
          %v566 = vld [vmem:[%s536 + $0x24] sm:$0x1]
          %v567 = vsel %vm320, %v495, %v566
          %568 = vst [vmem:[%s536 + $0x24] sm:$0x1] %v567
          %v569 = vld [vmem:[%s536 + $0x28] sm:$0xf]
          %v570 = vsel %vm538, %v502, %v569
          %571 = vst [vmem:[%s536 + $0x28] sm:$0xf] %v570
          %v572 = vld [vmem:[%s536 + $0x2c] sm:$0x1]
          %v573 = vsel %vm320, %v503, %v572
          %574 = vst [vmem:[%s536 + $0x2c] sm:$0x1] %v573
          %v575 = vld [vmem:[%s536 + $0x30] sm:$0xf]
          %v576 = vsel %vm538, %v510, %v575
          %577 = vst [vmem:[%s536 + $0x30] sm:$0xf] %v576
          %v578 = vld [vmem:[%s536 + $0x34] sm:$0x1]
          %v579 = vsel %vm320, %v511, %v578
          %580 = vst [vmem:[%s536 + $0x34] sm:$0x1] %v579
          %v581 = vld [vmem:[%s536 + $0x38] sm:$0xf]
          %v582 = vsel %vm538, %v518, %v581
          %583 = vst [vmem:[%s536 + $0x38] sm:$0xf] %v582
          %v584 = vld [vmem:[%s536 + $0x3c] sm:$0x1]
          %v585 = vsel %vm320, %v519, %v584
          %586 = vst [vmem:[%s536 + $0x3c] sm:$0x1] %v585
        $region48: #{xception_a_forward.4} parent=39 // pred_fallthru
          _
        %v587 = vld [vmem:[%s293] sm:$0xff]
        %v588 = vld [vmem:[%s293 + $0x8] sm:$0x1]
        %v589 = vld [vmem:[#allocation2] sm:$0xf]
        %v590 = vld [vmem:[#allocation2 + $0x8] sm:$0xf]
        %v591 = vld [vmem:[#allocation2 + $0x10] sm:$0xf]
        %v592 = vld [vmem:[#allocation2 + $0x18] sm:$0xf]
        %v593 = vld [vmem:[#allocation2 + $0x20] sm:$0xf]
        %v594 = vld [vmem:[#allocation2 + $0x28] sm:$0xf]
        %v595 = vld [vmem:[#allocation2 + $0x30] sm:$0xf]
        %v596 = vld [vmem:[#allocation2 + $0x38] sm:$0xf]
        %v597 = vld [vmem:[#allocation2 + $0x40] sm:$0xf]
        %v598 = vld [vmem:[#allocation2 + $0x48] sm:$0xf]
        %v599 = vunpack.c.l.bf16 %v589
        %v600 = vunpack.c.l.bf16 %v590
        %v601 = vunpack.c.l.bf16 %v591
        %v602 = vunpack.c.l.bf16 %v592
        %v603 = vunpack.c.l.bf16 %v593
        %v604 = vunpack.c.l.bf16 %v594
        %v605 = vunpack.c.l.bf16 %v595
        %v606 = vunpack.c.l.bf16 %v596
        %v607 = vunpack.c.l.bf16 %v597
        %v608 = vunpack.c.l.bf16 %v598
        %v609 = vperm.slane %v587, 0
        %v610 = vmul.f32 %v599, %v609
        %v611 = vmul.f32 %v600, %v609
        %v612 = vmul.f32 %v601, %v609
        %v613 = vmul.f32 %v602, %v609
        %v614 = vmul.f32 %v603, %v609
        %v615 = vmul.f32 %v604, %v609
        %v616 = vmul.f32 %v605, %v609
        %v617 = vmul.f32 %v606, %v609
        %v618 = vadd.f32 %v610, 0.0
        %v619 = vadd.f32 %v611, 0.0
        %v620 = vadd.f32 %v612, 0.0
        %v621 = vadd.f32 %v613, 0.0
        %v622 = vadd.f32 %v614, 0.0
        %v623 = vadd.f32 %v615, 0.0
        %v624 = vadd.f32 %v616, 0.0
        %v625 = vadd.f32 %v617, 0.0
        %v626 = vperm.slane %v587, 3
        %v627 = vmul.f32 %v600, %v626
        %v628 = vmul.f32 %v601, %v626
        %v629 = vmul.f32 %v602, %v626
        %v630 = vmul.f32 %v603, %v626
        %v631 = vmul.f32 %v604, %v626
        %v632 = vmul.f32 %v605, %v626
        %v633 = vmul.f32 %v606, %v626
        %v634 = vmul.f32 %v607, %v626
        %v635 = vadd.f32 %v618, %v627
        %v636 = vadd.f32 %v619, %v628
        %v637 = vadd.f32 %v620, %v629
        %v638 = vadd.f32 %v621, %v630
        %v639 = vadd.f32 %v622, %v631
        %v640 = vadd.f32 %v623, %v632
        %v641 = vadd.f32 %v624, %v633
        %v642 = vadd.f32 %v625, %v634
        %v643 = vperm.slane %v587, 6
        %v644 = vmul.f32 %v601, %v643
        %v645 = vmul.f32 %v602, %v643
        %v646 = vmul.f32 %v603, %v643
        %v647 = vmul.f32 %v604, %v643
        %v648 = vmul.f32 %v605, %v643
        %v649 = vmul.f32 %v606, %v643
        %v650 = vmul.f32 %v607, %v643
        %v651 = vmul.f32 %v608, %v643
        %v652 = vadd.f32 %v635, %v644
        %v653 = vadd.f32 %v636, %v645
        %v654 = vadd.f32 %v637, %v646
        %v655 = vadd.f32 %v638, %v647
        %v656 = vadd.f32 %v639, %v648
        %v657 = vadd.f32 %v640, %v649
        %v658 = vadd.f32 %v641, %v650
        %v659 = vadd.f32 %v642, %v651
        %v660 = vld [vmem:[#allocation2] sm:$0xf]
        %v661 = vld [vmem:[#allocation2 + $0x4] sm:$0x1]
        %v662 = vld [vmem:[#allocation2 + $0x8] sm:$0xf]
        %v663 = vld [vmem:[#allocation2 + $0xc] sm:$0x1]
        %v664 = vld [vmem:[#allocation2 + $0x10] sm:$0xf]
        %v665 = vld [vmem:[#allocation2 + $0x14] sm:$0x1]
        %v666 = vld [vmem:[#allocation2 + $0x18] sm:$0xf]
        %v667 = vld [vmem:[#allocation2 + $0x1c] sm:$0x1]
        %v668 = vld [vmem:[#allocation2 + $0x20] sm:$0xf]
        %v669 = vld [vmem:[#allocation2 + $0x24] sm:$0x1]
        %v670 = vld [vmem:[#allocation2 + $0x28] sm:$0xf]
        %v671 = vld [vmem:[#allocation2 + $0x2c] sm:$0x1]
        %v672 = vld [vmem:[#allocation2 + $0x30] sm:$0xf]
        %v673 = vld [vmem:[#allocation2 + $0x34] sm:$0x1]
        %v674 = vld [vmem:[#allocation2 + $0x38] sm:$0xf]
        %v675 = vld [vmem:[#allocation2 + $0x3c] sm:$0x1]
        %v676 = vld [vmem:[#allocation2 + $0x40] sm:$0xf]
        %v677 = vld [vmem:[#allocation2 + $0x44] sm:$0x1]
        %v678 = vld [vmem:[#allocation2 + $0x48] sm:$0xf]
        %v679 = vld [vmem:[#allocation2 + $0x4c] sm:$0x1]
        %v680 = vunpack.c.l.bf16 %v660
        %v681 = vunpack.c.l.bf16 %v661
        %v682 = vunpack.c.l.bf16 %v662
        %v683 = vunpack.c.l.bf16 %v663
        %v684 = vunpack.c.l.bf16 %v664
        %v685 = vunpack.c.l.bf16 %v665
        %v686 = vunpack.c.l.bf16 %v666
        %v687 = vunpack.c.l.bf16 %v667
        %v688 = vunpack.c.l.bf16 %v668
        %v689 = vunpack.c.l.bf16 %v669
        %v690 = vunpack.c.l.bf16 %v670
        %v691 = vunpack.c.l.bf16 %v671
        %v692 = vunpack.c.l.bf16 %v672
        %v693 = vunpack.c.l.bf16 %v673
        %v694 = vunpack.c.l.bf16 %v674
        %v695 = vunpack.c.l.bf16 %v675
        %v696 = vunpack.c.l.bf16 %v676
        %v697 = vunpack.c.l.bf16 %v677
        %v698 = vunpack.c.l.bf16 %v678
        %v699 = vunpack.c.l.bf16 %v679
        %v700 = vperm.slane %v587, 1
        %v701 = vmul.f32 %v680, %v700
        %v702 = vmul.f32 %v681, %v700
        %v703 = vmul.f32 %v682, %v700
        %v704 = vmul.f32 %v683, %v700
        %v705 = vmul.f32 %v684, %v700
        %v706 = vmul.f32 %v685, %v700
        %v707 = vmul.f32 %v686, %v700
        %v708 = vmul.f32 %v687, %v700
        %v709 = vmul.f32 %v688, %v700
        %v710 = vmul.f32 %v689, %v700
        %v711 = vmul.f32 %v690, %v700
        %v712 = vmul.f32 %v691, %v700
        %v713 = vmul.f32 %v692, %v700
        %v714 = vmul.f32 %v693, %v700
        %v715 = vmul.f32 %v694, %v700
        %v716 = vmul.f32 %v695, %v700
        %vm733 = vcmask 1046528
        %v734 = vrot.slane %v701, 1
        %v735 = vrot.slane %v702, 1
        %v736 = vsel %vm733, %v734, %v735
        %v737 = vrot.slane %v703, 1
        %v738 = vrot.slane %v704, 1
        %v739 = vsel %vm733, %v737, %v738
        %v740 = vrot.slane %v705, 1
        %v741 = vrot.slane %v706, 1
        %v742 = vsel %vm733, %v740, %v741
        %v743 = vrot.slane %v707, 1
        %v744 = vrot.slane %v708, 1
        %v745 = vsel %vm733, %v743, %v744
        %v746 = vrot.slane %v709, 1
        %v747 = vrot.slane %v710, 1
        %v748 = vsel %vm733, %v746, %v747
        %v749 = vrot.slane %v711, 1
        %v750 = vrot.slane %v712, 1
        %v751 = vsel %vm733, %v749, %v750
        %v752 = vrot.slane %v713, 1
        %v753 = vrot.slane %v714, 1
        %v754 = vsel %vm733, %v752, %v753
        %v755 = vrot.slane %v715, 1
        %v756 = vrot.slane %v716, 1
        %v757 = vsel %vm733, %v755, %v756
        %v766 = vadd.f32 %v652, %v736
        %v767 = vadd.f32 %v653, %v739
        %v768 = vadd.f32 %v654, %v742
        %v769 = vadd.f32 %v655, %v745
        %v770 = vadd.f32 %v656, %v748
        %v771 = vadd.f32 %v657, %v751
        %v772 = vadd.f32 %v658, %v754
        %v773 = vadd.f32 %v659, %v757
        %v774 = vperm.slane %v587, 4
        %v775 = vmul.f32 %v682, %v774
        %v776 = vmul.f32 %v683, %v774
        %v777 = vmul.f32 %v684, %v774
        %v778 = vmul.f32 %v685, %v774
        %v779 = vmul.f32 %v686, %v774
        %v780 = vmul.f32 %v687, %v774
        %v781 = vmul.f32 %v688, %v774
        %v782 = vmul.f32 %v689, %v774
        %v783 = vmul.f32 %v690, %v774
        %v784 = vmul.f32 %v691, %v774
        %v785 = vmul.f32 %v692, %v774
        %v786 = vmul.f32 %v693, %v774
        %v787 = vmul.f32 %v694, %v774
        %v788 = vmul.f32 %v695, %v774
        %v789 = vmul.f32 %v696, %v774
        %v790 = vmul.f32 %v697, %v774
        %v807 = vrot.slane %v775, 1
        %v808 = vrot.slane %v776, 1
        %v809 = vsel %vm733, %v807, %v808
        %v810 = vrot.slane %v777, 1
        %v811 = vrot.slane %v778, 1
        %v812 = vsel %vm733, %v810, %v811
        %v813 = vrot.slane %v779, 1
        %v814 = vrot.slane %v780, 1
        %v815 = vsel %vm733, %v813, %v814
        %v816 = vrot.slane %v781, 1
        %v817 = vrot.slane %v782, 1
        %v818 = vsel %vm733, %v816, %v817
        %v819 = vrot.slane %v783, 1
        %v820 = vrot.slane %v784, 1
        %v821 = vsel %vm733, %v819, %v820
        %v822 = vrot.slane %v785, 1
        %v823 = vrot.slane %v786, 1
        %v824 = vsel %vm733, %v822, %v823
        %v825 = vrot.slane %v787, 1
        %v826 = vrot.slane %v788, 1
        %v827 = vsel %vm733, %v825, %v826
        %v828 = vrot.slane %v789, 1
        %v829 = vrot.slane %v790, 1
        %v830 = vsel %vm733, %v828, %v829
        %v839 = vadd.f32 %v766, %v809
        %v840 = vadd.f32 %v767, %v812
        %v841 = vadd.f32 %v768, %v815
        %v842 = vadd.f32 %v769, %v818
        %v843 = vadd.f32 %v770, %v821
        %v844 = vadd.f32 %v771, %v824
        %v845 = vadd.f32 %v772, %v827
        %v846 = vadd.f32 %v773, %v830
        %v847 = vperm.slane %v587, 7
        %v848 = vmul.f32 %v684, %v847
        %v849 = vmul.f32 %v685, %v847
        %v850 = vmul.f32 %v686, %v847
        %v851 = vmul.f32 %v687, %v847
        %v852 = vmul.f32 %v688, %v847
        %v853 = vmul.f32 %v689, %v847
        %v854 = vmul.f32 %v690, %v847
        %v855 = vmul.f32 %v691, %v847
        %v856 = vmul.f32 %v692, %v847
        %v857 = vmul.f32 %v693, %v847
        %v858 = vmul.f32 %v694, %v847
        %v859 = vmul.f32 %v695, %v847
        %v860 = vmul.f32 %v696, %v847
        %v861 = vmul.f32 %v697, %v847
        %v862 = vmul.f32 %v698, %v847
        %v863 = vmul.f32 %v699, %v847
        %v880 = vrot.slane %v848, 1
        %v881 = vrot.slane %v849, 1
        %v882 = vsel %vm733, %v880, %v881
        %v883 = vrot.slane %v850, 1
        %v884 = vrot.slane %v851, 1
        %v885 = vsel %vm733, %v883, %v884
        %v886 = vrot.slane %v852, 1
        %v887 = vrot.slane %v853, 1
        %v888 = vsel %vm733, %v886, %v887
        %v889 = vrot.slane %v854, 1
        %v890 = vrot.slane %v855, 1
        %v891 = vsel %vm733, %v889, %v890
        %v892 = vrot.slane %v856, 1
        %v893 = vrot.slane %v857, 1
        %v894 = vsel %vm733, %v892, %v893
        %v895 = vrot.slane %v858, 1
        %v896 = vrot.slane %v859, 1
        %v897 = vsel %vm733, %v895, %v896
        %v898 = vrot.slane %v860, 1
        %v899 = vrot.slane %v861, 1
        %v900 = vsel %vm733, %v898, %v899
        %v901 = vrot.slane %v862, 1
        %v902 = vrot.slane %v863, 1
        %v903 = vsel %vm733, %v901, %v902
        %v912 = vadd.f32 %v839, %v882
        %v913 = vadd.f32 %v840, %v885
        %v914 = vadd.f32 %v841, %v888
        %v915 = vadd.f32 %v842, %v891
        %v916 = vadd.f32 %v843, %v894
        %v917 = vadd.f32 %v844, %v897
        %v918 = vadd.f32 %v845, %v900
        %v919 = vadd.f32 %v846, %v903
        %v920 = vld [vmem:[#allocation2] sm:$0xe]
        %v921 = vld [vmem:[#allocation2 + $0x8] sm:$0xe]
        %v922 = vld [vmem:[#allocation2 + $0x10] sm:$0xe]
        %v923 = vld [vmem:[#allocation2 + $0x18] sm:$0xe]
        %v924 = vld [vmem:[#allocation2 + $0x20] sm:$0xe]
        %v925 = vld [vmem:[#allocation2 + $0x28] sm:$0xe]
        %v926 = vld [vmem:[#allocation2 + $0x30] sm:$0xe]
        %v927 = vld [vmem:[#allocation2 + $0x38] sm:$0xe]
        %v928 = vld [vmem:[#allocation2 + $0x40] sm:$0xe]
        %v929 = vld [vmem:[#allocation2 + $0x48] sm:$0xe]
        %v930 = vunpack.c.l.bf16 %v920
        %v931 = vunpack.c.l.bf16 %v921
        %v932 = vunpack.c.l.bf16 %v922
        %v933 = vunpack.c.l.bf16 %v923
        %v934 = vunpack.c.l.bf16 %v924
        %v935 = vunpack.c.l.bf16 %v925
        %v936 = vunpack.c.l.bf16 %v926
        %v937 = vunpack.c.l.bf16 %v927
        %v938 = vunpack.c.l.bf16 %v928
        %v939 = vunpack.c.l.bf16 %v929
        %v940 = vperm.slane %v587, 2
        %v941 = vmul.f32 %v930, %v940
        %v942 = vmul.f32 %v681, %v940
        %v943 = vmul.f32 %v931, %v940
        %v944 = vmul.f32 %v683, %v940
        %v945 = vmul.f32 %v932, %v940
        %v946 = vmul.f32 %v685, %v940
        %v947 = vmul.f32 %v933, %v940
        %v948 = vmul.f32 %v687, %v940
        %v949 = vmul.f32 %v934, %v940
        %v950 = vmul.f32 %v689, %v940
        %v951 = vmul.f32 %v935, %v940
        %v952 = vmul.f32 %v691, %v940
        %v953 = vmul.f32 %v936, %v940
        %v954 = vmul.f32 %v693, %v940
        %v955 = vmul.f32 %v937, %v940
        %v956 = vmul.f32 %v695, %v940
        %vm973 = vcmask 1045504
        %v974 = vrot.slane %v941, 2
        %v975 = vrot.slane %v942, 2
        %v976 = vsel %vm973, %v974, %v975
        %v977 = vrot.slane %v943, 2
        %v978 = vrot.slane %v944, 2
        %v979 = vsel %vm973, %v977, %v978
        %v980 = vrot.slane %v945, 2
        %v981 = vrot.slane %v946, 2
        %v982 = vsel %vm973, %v980, %v981
        %v983 = vrot.slane %v947, 2
        %v984 = vrot.slane %v948, 2
        %v985 = vsel %vm973, %v983, %v984
        %v986 = vrot.slane %v949, 2
        %v987 = vrot.slane %v950, 2
        %v988 = vsel %vm973, %v986, %v987
        %v989 = vrot.slane %v951, 2
        %v990 = vrot.slane %v952, 2
        %v991 = vsel %vm973, %v989, %v990
        %v992 = vrot.slane %v953, 2
        %v993 = vrot.slane %v954, 2
        %v994 = vsel %vm973, %v992, %v993
        %v995 = vrot.slane %v955, 2
        %v996 = vrot.slane %v956, 2
        %v997 = vsel %vm973, %v995, %v996
        %v1006 = vadd.f32 %v912, %v976
        %v1007 = vadd.f32 %v913, %v979
        %v1008 = vadd.f32 %v914, %v982
        %v1009 = vadd.f32 %v915, %v985
        %v1010 = vadd.f32 %v916, %v988
        %v1011 = vadd.f32 %v917, %v991
        %v1012 = vadd.f32 %v918, %v994
        %v1013 = vadd.f32 %v919, %v997
        %v1014 = vperm.slane %v587, 5
        %v1015 = vmul.f32 %v931, %v1014
        %v1016 = vmul.f32 %v683, %v1014
        %v1017 = vmul.f32 %v932, %v1014
        %v1018 = vmul.f32 %v685, %v1014
        %v1019 = vmul.f32 %v933, %v1014
        %v1020 = vmul.f32 %v687, %v1014
        %v1021 = vmul.f32 %v934, %v1014
        %v1022 = vmul.f32 %v689, %v1014
        %v1023 = vmul.f32 %v935, %v1014
        %v1024 = vmul.f32 %v691, %v1014
        %v1025 = vmul.f32 %v936, %v1014
        %v1026 = vmul.f32 %v693, %v1014
        %v1027 = vmul.f32 %v937, %v1014
        %v1028 = vmul.f32 %v695, %v1014
        %v1029 = vmul.f32 %v938, %v1014
        %v1030 = vmul.f32 %v697, %v1014
        %v1047 = vrot.slane %v1015, 2
        %v1048 = vrot.slane %v1016, 2
        %v1049 = vsel %vm973, %v1047, %v1048
        %v1050 = vrot.slane %v1017, 2
        %v1051 = vrot.slane %v1018, 2
        %v1052 = vsel %vm973, %v1050, %v1051
        %v1053 = vrot.slane %v1019, 2
        %v1054 = vrot.slane %v1020, 2
        %v1055 = vsel %vm973, %v1053, %v1054
        %v1056 = vrot.slane %v1021, 2
        %v1057 = vrot.slane %v1022, 2
        %v1058 = vsel %vm973, %v1056, %v1057
        %v1059 = vrot.slane %v1023, 2
        %v1060 = vrot.slane %v1024, 2
        %v1061 = vsel %vm973, %v1059, %v1060
        %v1062 = vrot.slane %v1025, 2
        %v1063 = vrot.slane %v1026, 2
        %v1064 = vsel %vm973, %v1062, %v1063
        %v1065 = vrot.slane %v1027, 2
        %v1066 = vrot.slane %v1028, 2
        %v1067 = vsel %vm973, %v1065, %v1066
        %v1068 = vrot.slane %v1029, 2
        %v1069 = vrot.slane %v1030, 2
        %v1070 = vsel %vm973, %v1068, %v1069
        %v1079 = vadd.f32 %v1006, %v1049
        %v1080 = vadd.f32 %v1007, %v1052
        %v1081 = vadd.f32 %v1008, %v1055
        %v1082 = vadd.f32 %v1009, %v1058
        %v1083 = vadd.f32 %v1010, %v1061
        %v1084 = vadd.f32 %v1011, %v1064
        %v1085 = vadd.f32 %v1012, %v1067
        %v1086 = vadd.f32 %v1013, %v1070
        %v1087 = vperm.slane %v588, 0
        %v1088 = vmul.f32 %v932, %v1087
        %v1089 = vmul.f32 %v685, %v1087
        %v1090 = vmul.f32 %v933, %v1087
        %v1091 = vmul.f32 %v687, %v1087
        %v1092 = vmul.f32 %v934, %v1087
        %v1093 = vmul.f32 %v689, %v1087
        %v1094 = vmul.f32 %v935, %v1087
        %v1095 = vmul.f32 %v691, %v1087
        %v1096 = vmul.f32 %v936, %v1087
        %v1097 = vmul.f32 %v693, %v1087
        %v1098 = vmul.f32 %v937, %v1087
        %v1099 = vmul.f32 %v695, %v1087
        %v1100 = vmul.f32 %v938, %v1087
        %v1101 = vmul.f32 %v697, %v1087
        %v1102 = vmul.f32 %v939, %v1087
        %v1103 = vmul.f32 %v699, %v1087
        %v1120 = vrot.slane %v1088, 2
        %v1121 = vrot.slane %v1089, 2
        %v1122 = vsel %vm973, %v1120, %v1121
        %v1123 = vrot.slane %v1090, 2
        %v1124 = vrot.slane %v1091, 2
        %v1125 = vsel %vm973, %v1123, %v1124
        %v1126 = vrot.slane %v1092, 2
        %v1127 = vrot.slane %v1093, 2
        %v1128 = vsel %vm973, %v1126, %v1127
        %v1129 = vrot.slane %v1094, 2
        %v1130 = vrot.slane %v1095, 2
        %v1131 = vsel %vm973, %v1129, %v1130
        %v1132 = vrot.slane %v1096, 2
        %v1133 = vrot.slane %v1097, 2
        %v1134 = vsel %vm973, %v1132, %v1133
        %v1135 = vrot.slane %v1098, 2
        %v1136 = vrot.slane %v1099, 2
        %v1137 = vsel %vm973, %v1135, %v1136
        %v1138 = vrot.slane %v1100, 2
        %v1139 = vrot.slane %v1101, 2
        %v1140 = vsel %vm973, %v1138, %v1139
        %v1141 = vrot.slane %v1102, 2
        %v1142 = vrot.slane %v1103, 2
        %v1143 = vsel %vm973, %v1141, %v1142
        %v1152 = vadd.f32 %v1079, %v1122
        %v1153 = vadd.f32 %v1080, %v1125
        %v1154 = vadd.f32 %v1081, %v1128
        %v1155 = vadd.f32 %v1082, %v1131
        %v1156 = vadd.f32 %v1083, %v1134
        %v1157 = vadd.f32 %v1084, %v1137
        %v1158 = vadd.f32 %v1085, %v1140
        %v1159 = vadd.f32 %v1086, %v1143
        %v1160 = vpack.c.bf16 %v1153, %v1152
        %v1161 = vpack.c.bf16 %v1155, %v1154
        %v1162 = vpack.c.bf16 %v1157, %v1156
        %v1163 = vpack.c.bf16 %v1159, %v1158
        %v1164 = vld [vmem:[%s298] sm:$0xf]
        %v1165 = vld [vmem:[%s298 + $0x4] sm:$0xf]
        %v1166 = vld [vmem:[%s298 + $0x8] sm:$0xf]
        %v1167 = vld [vmem:[%s298 + $0xc] sm:$0xf]
        %v1168 = vld [vmem:[%s298 + $0x10] sm:$0xf]
        %v1169 = vld [vmem:[%s298 + $0x14] sm:$0xf]
        %v1170 = vld [vmem:[%s298 + $0x18] sm:$0xf]
        %v1171 = vld [vmem:[%s298 + $0x1c] sm:$0xf]
        %v1172 = vld [vmem:[%s298 + $0x20] sm:$0xf]
        %v1173 = vld [vmem:[%s298 + $0x24] sm:$0xf]
        %v1174 = vld [vmem:[%s298 + $0x28] sm:$0xf]
        %v1175 = vld [vmem:[%s298 + $0x2c] sm:$0xf]
        %v1176 = vld [vmem:[%s298 + $0x30] sm:$0xf]
        %v1177 = vld [vmem:[%s298 + $0x34] sm:$0xf]
        %v1178 = vld [vmem:[%s298 + $0x38] sm:$0xf]
        %v1179 = vld [vmem:[%s298 + $0x3c] sm:$0xf]
        %v1180 = vld [vmem:[%s302] sm:$0x1]
        %v1182 = vperm.slane %v1180, 0
        %v1200 = vunpack.c.l.b16 %v1164
        %v1201 = vunpack.c.l.b16 %v1165
        %v1202 = vunpack.c.l.b16 %v1166
        %v1203 = vunpack.c.l.b16 %v1167
        %v1204 = vunpack.c.l.b16 %v1168
        %v1205 = vunpack.c.l.b16 %v1169
        %v1206 = vunpack.c.l.b16 %v1170
        %v1207 = vunpack.c.l.b16 %v1171
        %v1208 = vunpack.c.l.b16 %v1172
        %v1209 = vunpack.c.l.b16 %v1173
        %v1210 = vunpack.c.l.b16 %v1174
        %v1211 = vunpack.c.l.b16 %v1175
        %v1212 = vunpack.c.l.b16 %v1176
        %v1213 = vunpack.c.l.b16 %v1177
        %v1214 = vunpack.c.l.b16 %v1178
        %v1215 = vunpack.c.l.b16 %v1179
        %v1216 = vpack.c.b16 %v1201, %v1200
        %v1217 = vpack.c.b16 %v1203, %v1202
        %v1218 = vpack.c.b16 %v1205, %v1204
        %v1219 = vpack.c.b16 %v1207, %v1206
        %v1220 = vpack.c.b16 %v1209, %v1208
        %v1221 = vpack.c.b16 %v1211, %v1210
        %v1222 = vpack.c.b16 %v1213, %v1212
        %v1223 = vpack.c.b16 %v1215, %v1214
        %1232 = vmatpush.bf16.msra.mxu0 %v1223
        %1233 = vmatpush.bf16.msra.mxu0 %v1222
        %1234 = vmatpush.bf16.msra.mxu0 %v1221
        %1235 = vmatpush.bf16.msra.mxu0 %v1220
        %1236 = vmatpush.bf16.msra.mxu0 %v1219
        %1237 = vmatpush.bf16.msra.mxu0 %v1218
        %1238 = vmatpush.bf16.msra.mxu0 %v1217
        %1239 = vmatpush.bf16.msra.mxu0 %v1216
        %1240 = vmatmul.bf16.gmra.mxu0 %v1160
        %v1241 = vpop.f32.mrf.mxu0
        %v1242 = vadd.f32 %v1182, %v1241
        %v1243 = vpop.f32.mrf.mxu0
        %v1244 = vadd.f32 %v1182, %v1243
        %1245 = vmatmul.bf16.gmra.mxu0 %v1161
        %v1246 = vpop.f32.mrf.mxu0
        %v1247 = vadd.f32 %v1182, %v1246
        %v1248 = vpop.f32.mrf.mxu0
        %v1249 = vadd.f32 %v1182, %v1248
        %1250 = vmatmul.bf16.gmra.mxu0 %v1162
        %v1251 = vpop.f32.mrf.mxu0
        %v1252 = vadd.f32 %v1182, %v1251
        %v1253 = vpop.f32.mrf.mxu0
        %v1254 = vadd.f32 %v1182, %v1253
        %1255 = vmatmul.bf16.gmra.mxu0 %v1163
        %v1256 = vpop.f32.mrf.mxu0
        %v1257 = vadd.f32 %v1182, %v1256
        %v1258 = vpop.f32.mrf.mxu0
        %v1259 = vadd.f32 %v1182, %v1258
        %1260 = vdwg.mxu0
        %s1261 = smul.u32 %s22, 2
        %s1262 = sld [smem:[#allocation4 + %s1261]]
        %vm1263 = vcmp.ge.f32.partialorder %v1242, 0.0
        %vm1264 = vcmp.ge.f32.partialorder %v1244, 0.0
        %vm1265 = vcmp.ge.f32.partialorder %v1247, 0.0
        %vm1266 = vcmp.ge.f32.partialorder %v1249, 0.0
        %vm1267 = vcmp.ge.f32.partialorder %v1252, 0.0
        %vm1268 = vcmp.ge.f32.partialorder %v1254, 0.0
        %vm1269 = vcmp.ge.f32.partialorder %v1257, 0.0
        %vm1270 = vcmp.ge.f32.partialorder %v1259, 0.0
        %v1271 = vstv %s1262
        %v1272 = vmul.f32 %v1271, %v1242
        %v1273 = vmul.f32 %v1271, %v1244
        %v1274 = vmul.f32 %v1271, %v1247
        %v1275 = vmul.f32 %v1271, %v1249
        %v1276 = vmul.f32 %v1271, %v1252
        %v1277 = vmul.f32 %v1271, %v1254
        %v1278 = vmul.f32 %v1271, %v1257
        %v1279 = vmul.f32 %v1271, %v1259
        %v1280 = vsel %vm1263, %v1242, %v1272
        %v1281 = vsel %vm1264, %v1244, %v1273
        %v1282 = vsel %vm1265, %v1247, %v1274
        %v1283 = vsel %vm1266, %v1249, %v1275
        %v1284 = vsel %vm1267, %v1252, %v1276
        %v1285 = vsel %vm1268, %v1254, %v1277
        %v1286 = vsel %vm1269, %v1257, %v1278
        %v1287 = vsel %vm1270, %v1259, %v1279
        %v1288 = vpack.c.bf16 %v1280, %v1280
        %v1289 = vpack.c.bf16 %v1281, %v1281
        %v1290 = vpack.c.bf16 %v1282, %v1282
        %v1291 = vpack.c.bf16 %v1283, %v1283
        %v1292 = vpack.c.bf16 %v1284, %v1284
        %v1293 = vpack.c.bf16 %v1285, %v1285
        %v1294 = vpack.c.bf16 %v1286, %v1286
        %v1295 = vpack.c.bf16 %v1287, %v1287
        %v1297 = vshrl.u32 %v1288, 16
        %v1299 = vrot.slane %v1297, 7
        %v1300 = vshll.u32 %v1288, 16
        %v1302 = vor.u32 %v1299, %v1300
        %v1303 = vrot.slane %v1299, 4
        %v1305 = vshrl.u32 %v1289, 16
        %v1307 = vrot.slane %v1305, 7
        %v1308 = vshll.u32 %v1289, 16
        %v1310 = vor.u32 %v1307, %v1308
        %v1311 = vrot.slane %v1307, 4
        %v1313 = vshrl.u32 %v1290, 16
        %v1315 = vrot.slane %v1313, 7
        %v1316 = vshll.u32 %v1290, 16
        %v1318 = vor.u32 %v1315, %v1316
        %v1319 = vrot.slane %v1315, 4
        %v1321 = vshrl.u32 %v1291, 16
        %v1323 = vrot.slane %v1321, 7
        %v1324 = vshll.u32 %v1291, 16
        %v1326 = vor.u32 %v1323, %v1324
        %v1327 = vrot.slane %v1323, 4
        %v1329 = vshrl.u32 %v1292, 16
        %v1331 = vrot.slane %v1329, 7
        %v1332 = vshll.u32 %v1292, 16
        %v1334 = vor.u32 %v1331, %v1332
        %v1335 = vrot.slane %v1331, 4
        %v1337 = vshrl.u32 %v1293, 16
        %v1339 = vrot.slane %v1337, 7
        %v1340 = vshll.u32 %v1293, 16
        %v1342 = vor.u32 %v1339, %v1340
        %v1343 = vrot.slane %v1339, 4
        %v1345 = vshrl.u32 %v1294, 16
        %v1347 = vrot.slane %v1345, 7
        %v1348 = vshll.u32 %v1294, 16
        %v1350 = vor.u32 %v1347, %v1348
        %v1351 = vrot.slane %v1347, 4
        %v1353 = vshrl.u32 %v1295, 16
        %v1355 = vrot.slane %v1353, 7
        %v1356 = vshll.u32 %v1295, 16
        %v1358 = vor.u32 %v1355, %v1356
        %v1359 = vrot.slane %v1355, 4
        %s1376 = scalar_lea.vmem [#allocation3], 8
        %vm1377 = vcmask 1043456
        %vm1378 = vsmask.f32 7938
        %vm1379 = vmand %vm1377, %vm1378
        %v1380 = vld [vmem:[%s1376] sm:$0xf]
        %v1381 = vsel %vm1379, %v1302, %v1380
        %1382 = vst [vmem:[%s1376] sm:$0xf] %v1381
        %vm1383 = vcmask 1040384
        %vm1384 = vsmask.f32 256
        %vm1385 = vmand %vm1383, %vm1384
        %v1386 = vld [vmem:[%s1376 + $0x4] sm:$0x1]
        %v1387 = vsel %vm1385, %v1303, %v1386
        %1388 = vst [vmem:[%s1376 + $0x4] sm:$0x1] %v1387
        %v1389 = vld [vmem:[%s1376 + $0x8] sm:$0xf]
        %v1390 = vsel %vm1379, %v1310, %v1389
        %1391 = vst [vmem:[%s1376 + $0x8] sm:$0xf] %v1390
        %v1392 = vld [vmem:[%s1376 + $0xc] sm:$0x1]
        %v1393 = vsel %vm1385, %v1311, %v1392
        %1394 = vst [vmem:[%s1376 + $0xc] sm:$0x1] %v1393
        %v1395 = vld [vmem:[%s1376 + $0x10] sm:$0xf]
        %v1396 = vsel %vm1379, %v1318, %v1395
        %1397 = vst [vmem:[%s1376 + $0x10] sm:$0xf] %v1396
        %v1398 = vld [vmem:[%s1376 + $0x14] sm:$0x1]
        %v1399 = vsel %vm1385, %v1319, %v1398
        %1400 = vst [vmem:[%s1376 + $0x14] sm:$0x1] %v1399
        %v1401 = vld [vmem:[%s1376 + $0x18] sm:$0xf]
        %v1402 = vsel %vm1379, %v1326, %v1401
        %1403 = vst [vmem:[%s1376 + $0x18] sm:$0xf] %v1402
        %v1404 = vld [vmem:[%s1376 + $0x1c] sm:$0x1]
        %v1405 = vsel %vm1385, %v1327, %v1404
        %1406 = vst [vmem:[%s1376 + $0x1c] sm:$0x1] %v1405
        %v1407 = vld [vmem:[%s1376 + $0x20] sm:$0xf]
        %v1408 = vsel %vm1379, %v1334, %v1407
        %1409 = vst [vmem:[%s1376 + $0x20] sm:$0xf] %v1408
        %v1410 = vld [vmem:[%s1376 + $0x24] sm:$0x1]
        %v1411 = vsel %vm1385, %v1335, %v1410
        %1412 = vst [vmem:[%s1376 + $0x24] sm:$0x1] %v1411
        %v1413 = vld [vmem:[%s1376 + $0x28] sm:$0xf]
        %v1414 = vsel %vm1379, %v1342, %v1413
        %1415 = vst [vmem:[%s1376 + $0x28] sm:$0xf] %v1414
        %v1416 = vld [vmem:[%s1376 + $0x2c] sm:$0x1]
        %v1417 = vsel %vm1385, %v1343, %v1416
        %1418 = vst [vmem:[%s1376 + $0x2c] sm:$0x1] %v1417
        %v1419 = vld [vmem:[%s1376 + $0x30] sm:$0xf]
        %v1420 = vsel %vm1379, %v1350, %v1419
        %1421 = vst [vmem:[%s1376 + $0x30] sm:$0xf] %v1420
        %v1422 = vld [vmem:[%s1376 + $0x34] sm:$0x1]
        %v1423 = vsel %vm1385, %v1351, %v1422
        %1424 = vst [vmem:[%s1376 + $0x34] sm:$0x1] %v1423
        %v1425 = vld [vmem:[%s1376 + $0x38] sm:$0xf]
        %v1426 = vsel %vm1379, %v1358, %v1425
        %1427 = vst [vmem:[%s1376 + $0x38] sm:$0xf] %v1426
        %v1428 = vld [vmem:[%s1376 + $0x3c] sm:$0x1]
        %v1429 = vsel %vm1385, %v1359, %v1428
        %1430 = vst [vmem:[%s1376 + $0x3c] sm:$0x1] %v1429
        %s1431 = scalar_lea.vmem %s293, 16
        %v1432 = vld [vmem:[%s1431] sm:$0xff]
        %v1433 = vld [vmem:[%s1431 + $0x8] sm:$0x1]
        %v1434 = vld [vmem:[#allocation3] sm:$0xf]
        %v1435 = vld [vmem:[#allocation3 + $0x8] sm:$0xf]
        %v1436 = vld [vmem:[#allocation3 + $0x10] sm:$0xf]
        %v1437 = vld [vmem:[#allocation3 + $0x18] sm:$0xf]
        %v1438 = vld [vmem:[#allocation3 + $0x20] sm:$0xf]
        %v1439 = vld [vmem:[#allocation3 + $0x28] sm:$0xf]
        %v1440 = vld [vmem:[#allocation3 + $0x30] sm:$0xf]
        %v1441 = vld [vmem:[#allocation3 + $0x38] sm:$0xf]
        %v1442 = vld [vmem:[#allocation3 + $0x40] sm:$0xf]
        %v1443 = vld [vmem:[#allocation3 + $0x48] sm:$0xf]
        %v1444 = vunpack.c.l.bf16 %v1434
        %v1445 = vunpack.c.l.bf16 %v1435
        %v1446 = vunpack.c.l.bf16 %v1436
        %v1447 = vunpack.c.l.bf16 %v1437
        %v1448 = vunpack.c.l.bf16 %v1438
        %v1449 = vunpack.c.l.bf16 %v1439
        %v1450 = vunpack.c.l.bf16 %v1440
        %v1451 = vunpack.c.l.bf16 %v1441
        %v1452 = vunpack.c.l.bf16 %v1442
        %v1453 = vunpack.c.l.bf16 %v1443
        %v1454 = vperm.slane %v1432, 0
        %v1455 = vmul.f32 %v1444, %v1454
        %v1456 = vmul.f32 %v1445, %v1454
        %v1457 = vmul.f32 %v1446, %v1454
        %v1458 = vmul.f32 %v1447, %v1454
        %v1459 = vmul.f32 %v1448, %v1454
        %v1460 = vmul.f32 %v1449, %v1454
        %v1461 = vmul.f32 %v1450, %v1454
        %v1462 = vmul.f32 %v1451, %v1454
        %v1463 = vadd.f32 %v1455, 0.0
        %v1464 = vadd.f32 %v1456, 0.0
        %v1465 = vadd.f32 %v1457, 0.0
        %v1466 = vadd.f32 %v1458, 0.0
        %v1467 = vadd.f32 %v1459, 0.0
        %v1468 = vadd.f32 %v1460, 0.0
        %v1469 = vadd.f32 %v1461, 0.0
        %v1470 = vadd.f32 %v1462, 0.0
        %v1471 = vperm.slane %v1432, 3
        %v1472 = vmul.f32 %v1445, %v1471
        %v1473 = vmul.f32 %v1446, %v1471
        %v1474 = vmul.f32 %v1447, %v1471
        %v1475 = vmul.f32 %v1448, %v1471
        %v1476 = vmul.f32 %v1449, %v1471
        %v1477 = vmul.f32 %v1450, %v1471
        %v1478 = vmul.f32 %v1451, %v1471
        %v1479 = vmul.f32 %v1452, %v1471
        %v1480 = vadd.f32 %v1463, %v1472
        %v1481 = vadd.f32 %v1464, %v1473
        %v1482 = vadd.f32 %v1465, %v1474
        %v1483 = vadd.f32 %v1466, %v1475
        %v1484 = vadd.f32 %v1467, %v1476
        %v1485 = vadd.f32 %v1468, %v1477
        %v1486 = vadd.f32 %v1469, %v1478
        %v1487 = vadd.f32 %v1470, %v1479
        %v1488 = vperm.slane %v1432, 6
        %v1489 = vmul.f32 %v1446, %v1488
        %v1490 = vmul.f32 %v1447, %v1488
        %v1491 = vmul.f32 %v1448, %v1488
        %v1492 = vmul.f32 %v1449, %v1488
        %v1493 = vmul.f32 %v1450, %v1488
        %v1494 = vmul.f32 %v1451, %v1488
        %v1495 = vmul.f32 %v1452, %v1488
        %v1496 = vmul.f32 %v1453, %v1488
        %v1497 = vadd.f32 %v1480, %v1489
        %v1498 = vadd.f32 %v1481, %v1490
        %v1499 = vadd.f32 %v1482, %v1491
        %v1500 = vadd.f32 %v1483, %v1492
        %v1501 = vadd.f32 %v1484, %v1493
        %v1502 = vadd.f32 %v1485, %v1494
        %v1503 = vadd.f32 %v1486, %v1495
        %v1504 = vadd.f32 %v1487, %v1496
        %v1505 = vld [vmem:[#allocation3] sm:$0xf]
        %v1506 = vld [vmem:[#allocation3 + $0x4] sm:$0x1]
        %v1507 = vld [vmem:[#allocation3 + $0x8] sm:$0xf]
        %v1508 = vld [vmem:[#allocation3 + $0xc] sm:$0x1]
        %v1509 = vld [vmem:[#allocation3 + $0x10] sm:$0xf]
        %v1510 = vld [vmem:[#allocation3 + $0x14] sm:$0x1]
        %v1511 = vld [vmem:[#allocation3 + $0x18] sm:$0xf]
        %v1512 = vld [vmem:[#allocation3 + $0x1c] sm:$0x1]
        %v1513 = vld [vmem:[#allocation3 + $0x20] sm:$0xf]
        %v1514 = vld [vmem:[#allocation3 + $0x24] sm:$0x1]
        %v1515 = vld [vmem:[#allocation3 + $0x28] sm:$0xf]
        %v1516 = vld [vmem:[#allocation3 + $0x2c] sm:$0x1]
        %v1517 = vld [vmem:[#allocation3 + $0x30] sm:$0xf]
        %v1518 = vld [vmem:[#allocation3 + $0x34] sm:$0x1]
        %v1519 = vld [vmem:[#allocation3 + $0x38] sm:$0xf]
        %v1520 = vld [vmem:[#allocation3 + $0x3c] sm:$0x1]
        %v1521 = vld [vmem:[#allocation3 + $0x40] sm:$0xf]
        %v1522 = vld [vmem:[#allocation3 + $0x44] sm:$0x1]
        %v1523 = vld [vmem:[#allocation3 + $0x48] sm:$0xf]
        %v1524 = vld [vmem:[#allocation3 + $0x4c] sm:$0x1]
        %v1525 = vunpack.c.l.bf16 %v1505
        %v1526 = vunpack.c.l.bf16 %v1506
        %v1527 = vunpack.c.l.bf16 %v1507
        %v1528 = vunpack.c.l.bf16 %v1508
        %v1529 = vunpack.c.l.bf16 %v1509
        %v1530 = vunpack.c.l.bf16 %v1510
        %v1531 = vunpack.c.l.bf16 %v1511
        %v1532 = vunpack.c.l.bf16 %v1512
        %v1533 = vunpack.c.l.bf16 %v1513
        %v1534 = vunpack.c.l.bf16 %v1514
        %v1535 = vunpack.c.l.bf16 %v1515
        %v1536 = vunpack.c.l.bf16 %v1516
        %v1537 = vunpack.c.l.bf16 %v1517
        %v1538 = vunpack.c.l.bf16 %v1518
        %v1539 = vunpack.c.l.bf16 %v1519
        %v1540 = vunpack.c.l.bf16 %v1520
        %v1541 = vunpack.c.l.bf16 %v1521
        %v1542 = vunpack.c.l.bf16 %v1522
        %v1543 = vunpack.c.l.bf16 %v1523
        %v1544 = vunpack.c.l.bf16 %v1524
        %v1545 = vperm.slane %v1432, 1
        %v1546 = vmul.f32 %v1525, %v1545
        %v1547 = vmul.f32 %v1526, %v1545
        %v1548 = vmul.f32 %v1527, %v1545
        %v1549 = vmul.f32 %v1528, %v1545
        %v1550 = vmul.f32 %v1529, %v1545
        %v1551 = vmul.f32 %v1530, %v1545
        %v1552 = vmul.f32 %v1531, %v1545
        %v1553 = vmul.f32 %v1532, %v1545
        %v1554 = vmul.f32 %v1533, %v1545
        %v1555 = vmul.f32 %v1534, %v1545
        %v1556 = vmul.f32 %v1535, %v1545
        %v1557 = vmul.f32 %v1536, %v1545
        %v1558 = vmul.f32 %v1537, %v1545
        %v1559 = vmul.f32 %v1538, %v1545
        %v1560 = vmul.f32 %v1539, %v1545
        %v1561 = vmul.f32 %v1540, %v1545
        %v1578 = vrot.slane %v1546, 1
        %v1579 = vrot.slane %v1547, 1
        %v1580 = vsel %vm733, %v1578, %v1579
        %v1581 = vrot.slane %v1548, 1
        %v1582 = vrot.slane %v1549, 1
        %v1583 = vsel %vm733, %v1581, %v1582
        %v1584 = vrot.slane %v1550, 1
        %v1585 = vrot.slane %v1551, 1
        %v1586 = vsel %vm733, %v1584, %v1585
        %v1587 = vrot.slane %v1552, 1
        %v1588 = vrot.slane %v1553, 1
        %v1589 = vsel %vm733, %v1587, %v1588
        %v1590 = vrot.slane %v1554, 1
        %v1591 = vrot.slane %v1555, 1
        %v1592 = vsel %vm733, %v1590, %v1591
        %v1593 = vrot.slane %v1556, 1
        %v1594 = vrot.slane %v1557, 1
        %v1595 = vsel %vm733, %v1593, %v1594
        %v1596 = vrot.slane %v1558, 1
        %v1597 = vrot.slane %v1559, 1
        %v1598 = vsel %vm733, %v1596, %v1597
        %v1599 = vrot.slane %v1560, 1
        %v1600 = vrot.slane %v1561, 1
        %v1601 = vsel %vm733, %v1599, %v1600
        %v1610 = vadd.f32 %v1497, %v1580
        %v1611 = vadd.f32 %v1498, %v1583
        %v1612 = vadd.f32 %v1499, %v1586
        %v1613 = vadd.f32 %v1500, %v1589
        %v1614 = vadd.f32 %v1501, %v1592
        %v1615 = vadd.f32 %v1502, %v1595
        %v1616 = vadd.f32 %v1503, %v1598
        %v1617 = vadd.f32 %v1504, %v1601
        %v1618 = vperm.slane %v1432, 4
        %v1619 = vmul.f32 %v1527, %v1618
        %v1620 = vmul.f32 %v1528, %v1618
        %v1621 = vmul.f32 %v1529, %v1618
        %v1622 = vmul.f32 %v1530, %v1618
        %v1623 = vmul.f32 %v1531, %v1618
        %v1624 = vmul.f32 %v1532, %v1618
        %v1625 = vmul.f32 %v1533, %v1618
        %v1626 = vmul.f32 %v1534, %v1618
        %v1627 = vmul.f32 %v1535, %v1618
        %v1628 = vmul.f32 %v1536, %v1618
        %v1629 = vmul.f32 %v1537, %v1618
        %v1630 = vmul.f32 %v1538, %v1618
        %v1631 = vmul.f32 %v1539, %v1618
        %v1632 = vmul.f32 %v1540, %v1618
        %v1633 = vmul.f32 %v1541, %v1618
        %v1634 = vmul.f32 %v1542, %v1618
        %v1651 = vrot.slane %v1619, 1
        %v1652 = vrot.slane %v1620, 1
        %v1653 = vsel %vm733, %v1651, %v1652
        %v1654 = vrot.slane %v1621, 1
        %v1655 = vrot.slane %v1622, 1
        %v1656 = vsel %vm733, %v1654, %v1655
        %v1657 = vrot.slane %v1623, 1
        %v1658 = vrot.slane %v1624, 1
        %v1659 = vsel %vm733, %v1657, %v1658
        %v1660 = vrot.slane %v1625, 1
        %v1661 = vrot.slane %v1626, 1
        %v1662 = vsel %vm733, %v1660, %v1661
        %v1663 = vrot.slane %v1627, 1
        %v1664 = vrot.slane %v1628, 1
        %v1665 = vsel %vm733, %v1663, %v1664
        %v1666 = vrot.slane %v1629, 1
        %v1667 = vrot.slane %v1630, 1
        %v1668 = vsel %vm733, %v1666, %v1667
        %v1669 = vrot.slane %v1631, 1
        %v1670 = vrot.slane %v1632, 1
        %v1671 = vsel %vm733, %v1669, %v1670
        %v1672 = vrot.slane %v1633, 1
        %v1673 = vrot.slane %v1634, 1
        %v1674 = vsel %vm733, %v1672, %v1673
        %v1683 = vadd.f32 %v1610, %v1653
        %v1684 = vadd.f32 %v1611, %v1656
        %v1685 = vadd.f32 %v1612, %v1659
        %v1686 = vadd.f32 %v1613, %v1662
        %v1687 = vadd.f32 %v1614, %v1665
        %v1688 = vadd.f32 %v1615, %v1668
        %v1689 = vadd.f32 %v1616, %v1671
        %v1690 = vadd.f32 %v1617, %v1674
        %v1691 = vperm.slane %v1432, 7
        %v1692 = vmul.f32 %v1529, %v1691
        %v1693 = vmul.f32 %v1530, %v1691
        %v1694 = vmul.f32 %v1531, %v1691
        %v1695 = vmul.f32 %v1532, %v1691
        %v1696 = vmul.f32 %v1533, %v1691
        %v1697 = vmul.f32 %v1534, %v1691
        %v1698 = vmul.f32 %v1535, %v1691
        %v1699 = vmul.f32 %v1536, %v1691
        %v1700 = vmul.f32 %v1537, %v1691
        %v1701 = vmul.f32 %v1538, %v1691
        %v1702 = vmul.f32 %v1539, %v1691
        %v1703 = vmul.f32 %v1540, %v1691
        %v1704 = vmul.f32 %v1541, %v1691
        %v1705 = vmul.f32 %v1542, %v1691
        %v1706 = vmul.f32 %v1543, %v1691
        %v1707 = vmul.f32 %v1544, %v1691
        %v1724 = vrot.slane %v1692, 1
        %v1725 = vrot.slane %v1693, 1
        %v1726 = vsel %vm733, %v1724, %v1725
        %v1727 = vrot.slane %v1694, 1
        %v1728 = vrot.slane %v1695, 1
        %v1729 = vsel %vm733, %v1727, %v1728
        %v1730 = vrot.slane %v1696, 1
        %v1731 = vrot.slane %v1697, 1
        %v1732 = vsel %vm733, %v1730, %v1731
        %v1733 = vrot.slane %v1698, 1
        %v1734 = vrot.slane %v1699, 1
        %v1735 = vsel %vm733, %v1733, %v1734
        %v1736 = vrot.slane %v1700, 1
        %v1737 = vrot.slane %v1701, 1
        %v1738 = vsel %vm733, %v1736, %v1737
        %v1739 = vrot.slane %v1702, 1
        %v1740 = vrot.slane %v1703, 1
        %v1741 = vsel %vm733, %v1739, %v1740
        %v1742 = vrot.slane %v1704, 1
        %v1743 = vrot.slane %v1705, 1
        %v1744 = vsel %vm733, %v1742, %v1743
        %v1745 = vrot.slane %v1706, 1
        %v1746 = vrot.slane %v1707, 1
        %v1747 = vsel %vm733, %v1745, %v1746
        %v1756 = vadd.f32 %v1683, %v1726
        %v1757 = vadd.f32 %v1684, %v1729
        %v1758 = vadd.f32 %v1685, %v1732
        %v1759 = vadd.f32 %v1686, %v1735
        %v1760 = vadd.f32 %v1687, %v1738
        %v1761 = vadd.f32 %v1688, %v1741
        %v1762 = vadd.f32 %v1689, %v1744
        %v1763 = vadd.f32 %v1690, %v1747
        %v1764 = vld [vmem:[#allocation3] sm:$0xe]
        %v1765 = vld [vmem:[#allocation3 + $0x8] sm:$0xe]
        %v1766 = vld [vmem:[#allocation3 + $0x10] sm:$0xe]
        %v1767 = vld [vmem:[#allocation3 + $0x18] sm:$0xe]
        %v1768 = vld [vmem:[#allocation3 + $0x20] sm:$0xe]
        %v1769 = vld [vmem:[#allocation3 + $0x28] sm:$0xe]
        %v1770 = vld [vmem:[#allocation3 + $0x30] sm:$0xe]
        %v1771 = vld [vmem:[#allocation3 + $0x38] sm:$0xe]
        %v1772 = vld [vmem:[#allocation3 + $0x40] sm:$0xe]
        %v1773 = vld [vmem:[#allocation3 + $0x48] sm:$0xe]
        %v1774 = vunpack.c.l.bf16 %v1764
        %v1775 = vunpack.c.l.bf16 %v1765
        %v1776 = vunpack.c.l.bf16 %v1766
        %v1777 = vunpack.c.l.bf16 %v1767
        %v1778 = vunpack.c.l.bf16 %v1768
        %v1779 = vunpack.c.l.bf16 %v1769
        %v1780 = vunpack.c.l.bf16 %v1770
        %v1781 = vunpack.c.l.bf16 %v1771
        %v1782 = vunpack.c.l.bf16 %v1772
        %v1783 = vunpack.c.l.bf16 %v1773
        %v1784 = vperm.slane %v1432, 2
        %v1785 = vmul.f32 %v1774, %v1784
        %v1786 = vmul.f32 %v1526, %v1784
        %v1787 = vmul.f32 %v1775, %v1784
        %v1788 = vmul.f32 %v1528, %v1784
        %v1789 = vmul.f32 %v1776, %v1784
        %v1790 = vmul.f32 %v1530, %v1784
        %v1791 = vmul.f32 %v1777, %v1784
        %v1792 = vmul.f32 %v1532, %v1784
        %v1793 = vmul.f32 %v1778, %v1784
        %v1794 = vmul.f32 %v1534, %v1784
        %v1795 = vmul.f32 %v1779, %v1784
        %v1796 = vmul.f32 %v1536, %v1784
        %v1797 = vmul.f32 %v1780, %v1784
        %v1798 = vmul.f32 %v1538, %v1784
        %v1799 = vmul.f32 %v1781, %v1784
        %v1800 = vmul.f32 %v1540, %v1784
        %v1817 = vrot.slane %v1785, 2
        %v1818 = vrot.slane %v1786, 2
        %v1819 = vsel %vm973, %v1817, %v1818
        %v1820 = vrot.slane %v1787, 2
        %v1821 = vrot.slane %v1788, 2
        %v1822 = vsel %vm973, %v1820, %v1821
        %v1823 = vrot.slane %v1789, 2
        %v1824 = vrot.slane %v1790, 2
        %v1825 = vsel %vm973, %v1823, %v1824
        %v1826 = vrot.slane %v1791, 2
        %v1827 = vrot.slane %v1792, 2
        %v1828 = vsel %vm973, %v1826, %v1827
        %v1829 = vrot.slane %v1793, 2
        %v1830 = vrot.slane %v1794, 2
        %v1831 = vsel %vm973, %v1829, %v1830
        %v1832 = vrot.slane %v1795, 2
        %v1833 = vrot.slane %v1796, 2
        %v1834 = vsel %vm973, %v1832, %v1833
        %v1835 = vrot.slane %v1797, 2
        %v1836 = vrot.slane %v1798, 2
        %v1837 = vsel %vm973, %v1835, %v1836
        %v1838 = vrot.slane %v1799, 2
        %v1839 = vrot.slane %v1800, 2
        %v1840 = vsel %vm973, %v1838, %v1839
        %v1849 = vadd.f32 %v1756, %v1819
        %v1850 = vadd.f32 %v1757, %v1822
        %v1851 = vadd.f32 %v1758, %v1825
        %v1852 = vadd.f32 %v1759, %v1828
        %v1853 = vadd.f32 %v1760, %v1831
        %v1854 = vadd.f32 %v1761, %v1834
        %v1855 = vadd.f32 %v1762, %v1837
        %v1856 = vadd.f32 %v1763, %v1840
        %v1857 = vperm.slane %v1432, 5
        %v1858 = vmul.f32 %v1775, %v1857
        %v1859 = vmul.f32 %v1528, %v1857
        %v1860 = vmul.f32 %v1776, %v1857
        %v1861 = vmul.f32 %v1530, %v1857
        %v1862 = vmul.f32 %v1777, %v1857
        %v1863 = vmul.f32 %v1532, %v1857
        %v1864 = vmul.f32 %v1778, %v1857
        %v1865 = vmul.f32 %v1534, %v1857
        %v1866 = vmul.f32 %v1779, %v1857
        %v1867 = vmul.f32 %v1536, %v1857
        %v1868 = vmul.f32 %v1780, %v1857
        %v1869 = vmul.f32 %v1538, %v1857
        %v1870 = vmul.f32 %v1781, %v1857
        %v1871 = vmul.f32 %v1540, %v1857
        %v1872 = vmul.f32 %v1782, %v1857
        %v1873 = vmul.f32 %v1542, %v1857
        %v1890 = vrot.slane %v1858, 2
        %v1891 = vrot.slane %v1859, 2
        %v1892 = vsel %vm973, %v1890, %v1891
        %v1893 = vrot.slane %v1860, 2
        %v1894 = vrot.slane %v1861, 2
        %v1895 = vsel %vm973, %v1893, %v1894
        %v1896 = vrot.slane %v1862, 2
        %v1897 = vrot.slane %v1863, 2
        %v1898 = vsel %vm973, %v1896, %v1897
        %v1899 = vrot.slane %v1864, 2
        %v1900 = vrot.slane %v1865, 2
        %v1901 = vsel %vm973, %v1899, %v1900
        %v1902 = vrot.slane %v1866, 2
        %v1903 = vrot.slane %v1867, 2
        %v1904 = vsel %vm973, %v1902, %v1903
        %v1905 = vrot.slane %v1868, 2
        %v1906 = vrot.slane %v1869, 2
        %v1907 = vsel %vm973, %v1905, %v1906
        %v1908 = vrot.slane %v1870, 2
        %v1909 = vrot.slane %v1871, 2
        %v1910 = vsel %vm973, %v1908, %v1909
        %v1911 = vrot.slane %v1872, 2
        %v1912 = vrot.slane %v1873, 2
        %v1913 = vsel %vm973, %v1911, %v1912
        %v1922 = vadd.f32 %v1849, %v1892
        %v1923 = vadd.f32 %v1850, %v1895
        %v1924 = vadd.f32 %v1851, %v1898
        %v1925 = vadd.f32 %v1852, %v1901
        %v1926 = vadd.f32 %v1853, %v1904
        %v1927 = vadd.f32 %v1854, %v1907
        %v1928 = vadd.f32 %v1855, %v1910
        %v1929 = vadd.f32 %v1856, %v1913
        %v1930 = vperm.slane %v1433, 0
        %v1931 = vmul.f32 %v1776, %v1930
        %v1932 = vmul.f32 %v1530, %v1930
        %v1933 = vmul.f32 %v1777, %v1930
        %v1934 = vmul.f32 %v1532, %v1930
        %v1935 = vmul.f32 %v1778, %v1930
        %v1936 = vmul.f32 %v1534, %v1930
        %v1937 = vmul.f32 %v1779, %v1930
        %v1938 = vmul.f32 %v1536, %v1930
        %v1939 = vmul.f32 %v1780, %v1930
        %v1940 = vmul.f32 %v1538, %v1930
        %v1941 = vmul.f32 %v1781, %v1930
        %v1942 = vmul.f32 %v1540, %v1930
        %v1943 = vmul.f32 %v1782, %v1930
        %v1944 = vmul.f32 %v1542, %v1930
        %v1945 = vmul.f32 %v1783, %v1930
        %v1946 = vmul.f32 %v1544, %v1930
        %v1963 = vrot.slane %v1931, 2
        %v1964 = vrot.slane %v1932, 2
        %v1965 = vsel %vm973, %v1963, %v1964
        %v1966 = vrot.slane %v1933, 2
        %v1967 = vrot.slane %v1934, 2
        %v1968 = vsel %vm973, %v1966, %v1967
        %v1969 = vrot.slane %v1935, 2
        %v1970 = vrot.slane %v1936, 2
        %v1971 = vsel %vm973, %v1969, %v1970
        %v1972 = vrot.slane %v1937, 2
        %v1973 = vrot.slane %v1938, 2
        %v1974 = vsel %vm973, %v1972, %v1973
        %v1975 = vrot.slane %v1939, 2
        %v1976 = vrot.slane %v1940, 2
        %v1977 = vsel %vm973, %v1975, %v1976
        %v1978 = vrot.slane %v1941, 2
        %v1979 = vrot.slane %v1942, 2
        %v1980 = vsel %vm973, %v1978, %v1979
        %v1981 = vrot.slane %v1943, 2
        %v1982 = vrot.slane %v1944, 2
        %v1983 = vsel %vm973, %v1981, %v1982
        %v1984 = vrot.slane %v1945, 2
        %v1985 = vrot.slane %v1946, 2
        %v1986 = vsel %vm973, %v1984, %v1985
        %v1995 = vadd.f32 %v1922, %v1965
        %v1996 = vadd.f32 %v1923, %v1968
        %v1997 = vadd.f32 %v1924, %v1971
        %v1998 = vadd.f32 %v1925, %v1974
        %v1999 = vadd.f32 %v1926, %v1977
        %v2000 = vadd.f32 %v1927, %v1980
        %v2001 = vadd.f32 %v1928, %v1983
        %v2002 = vadd.f32 %v1929, %v1986
        %v2003 = vpack.c.bf16 %v1996, %v1995
        %v2004 = vpack.c.bf16 %v1998, %v1997
        %v2005 = vpack.c.bf16 %v2000, %v1999
        %v2006 = vpack.c.bf16 %v2002, %v2001
        %s2007 = scalar_lea.vmem %s298, 64
        %v2008 = vld [vmem:[%s2007] sm:$0xf]
        %v2009 = vld [vmem:[%s2007 + $0x4] sm:$0xf]
        %v2010 = vld [vmem:[%s2007 + $0x8] sm:$0xf]
        %v2011 = vld [vmem:[%s2007 + $0xc] sm:$0xf]
        %v2012 = vld [vmem:[%s2007 + $0x10] sm:$0xf]
        %v2013 = vld [vmem:[%s2007 + $0x14] sm:$0xf]
        %v2014 = vld [vmem:[%s2007 + $0x18] sm:$0xf]
        %v2015 = vld [vmem:[%s2007 + $0x1c] sm:$0xf]
        %v2016 = vld [vmem:[%s2007 + $0x20] sm:$0xf]
        %v2017 = vld [vmem:[%s2007 + $0x24] sm:$0xf]
        %v2018 = vld [vmem:[%s2007 + $0x28] sm:$0xf]
        %v2019 = vld [vmem:[%s2007 + $0x2c] sm:$0xf]
        %v2020 = vld [vmem:[%s2007 + $0x30] sm:$0xf]
        %v2021 = vld [vmem:[%s2007 + $0x34] sm:$0xf]
        %v2022 = vld [vmem:[%s2007 + $0x38] sm:$0xf]
        %v2023 = vld [vmem:[%s2007 + $0x3c] sm:$0xf]
        %s2024 = scalar_lea.vmem %s302, 1
        %v2025 = vld [vmem:[%s2024] sm:$0x1]
        %v2027 = vperm.slane %v2025, 0
        %v2045 = vunpack.c.l.b16 %v2008
        %v2046 = vunpack.c.l.b16 %v2009
        %v2047 = vunpack.c.l.b16 %v2010
        %v2048 = vunpack.c.l.b16 %v2011
        %v2049 = vunpack.c.l.b16 %v2012
        %v2050 = vunpack.c.l.b16 %v2013
        %v2051 = vunpack.c.l.b16 %v2014
        %v2052 = vunpack.c.l.b16 %v2015
        %v2053 = vunpack.c.l.b16 %v2016
        %v2054 = vunpack.c.l.b16 %v2017
        %v2055 = vunpack.c.l.b16 %v2018
        %v2056 = vunpack.c.l.b16 %v2019
        %v2057 = vunpack.c.l.b16 %v2020
        %v2058 = vunpack.c.l.b16 %v2021
        %v2059 = vunpack.c.l.b16 %v2022
        %v2060 = vunpack.c.l.b16 %v2023
        %v2061 = vpack.c.b16 %v2046, %v2045
        %v2062 = vpack.c.b16 %v2048, %v2047
        %v2063 = vpack.c.b16 %v2050, %v2049
        %v2064 = vpack.c.b16 %v2052, %v2051
        %v2065 = vpack.c.b16 %v2054, %v2053
        %v2066 = vpack.c.b16 %v2056, %v2055
        %v2067 = vpack.c.b16 %v2058, %v2057
        %v2068 = vpack.c.b16 %v2060, %v2059
        %2077 = vmatpush.bf16.msra.mxu0 %v2068
        %2078 = vmatpush.bf16.msra.mxu0 %v2067
        %2079 = vmatpush.bf16.msra.mxu0 %v2066
        %2080 = vmatpush.bf16.msra.mxu0 %v2065
        %2081 = vmatpush.bf16.msra.mxu0 %v2064
        %2082 = vmatpush.bf16.msra.mxu0 %v2063
        %2083 = vmatpush.bf16.msra.mxu0 %v2062
        %2084 = vmatpush.bf16.msra.mxu0 %v2061
        %2085 = vmatmul.bf16.gmra.mxu0 %v2003
        %v2086 = vpop.f32.mrf.mxu0
        %v2087 = vadd.f32 %v2027, %v2086
        %v2088 = vpop.f32.mrf.mxu0
        %v2089 = vadd.f32 %v2027, %v2088
        %2090 = vmatmul.bf16.gmra.mxu0 %v2004
        %v2091 = vpop.f32.mrf.mxu0
        %v2092 = vadd.f32 %v2027, %v2091
        %v2093 = vpop.f32.mrf.mxu0
        %v2094 = vadd.f32 %v2027, %v2093
        %2095 = vmatmul.bf16.gmra.mxu0 %v2005
        %v2096 = vpop.f32.mrf.mxu0
        %v2097 = vadd.f32 %v2027, %v2096
        %v2098 = vpop.f32.mrf.mxu0
        %v2099 = vadd.f32 %v2027, %v2098
        %2100 = vmatmul.bf16.gmra.mxu0 %v2006
        %v2101 = vpop.f32.mrf.mxu0
        %v2102 = vadd.f32 %v2027, %v2101
        %v2103 = vpop.f32.mrf.mxu0
        %v2104 = vadd.f32 %v2027, %v2103
        %2105 = vdwg.mxu0
        %s2106 = sadd.s32 %s1261, 1
        %s2107 = sld [smem:[#allocation4 + %s2106]]
        %vm2108 = vcmp.ge.f32.partialorder %v2087, 0.0
        %vm2109 = vcmp.ge.f32.partialorder %v2089, 0.0
        %vm2110 = vcmp.ge.f32.partialorder %v2092, 0.0
        %vm2111 = vcmp.ge.f32.partialorder %v2094, 0.0
        %vm2112 = vcmp.ge.f32.partialorder %v2097, 0.0
        %vm2113 = vcmp.ge.f32.partialorder %v2099, 0.0
        %vm2114 = vcmp.ge.f32.partialorder %v2102, 0.0
        %vm2115 = vcmp.ge.f32.partialorder %v2104, 0.0
        %v2116 = vstv %s2107
        %v2117 = vmul.f32 %v2116, %v2087
        %v2118 = vmul.f32 %v2116, %v2089
        %v2119 = vmul.f32 %v2116, %v2092
        %v2120 = vmul.f32 %v2116, %v2094
        %v2121 = vmul.f32 %v2116, %v2097
        %v2122 = vmul.f32 %v2116, %v2099
        %v2123 = vmul.f32 %v2116, %v2102
        %v2124 = vmul.f32 %v2116, %v2104
        %v2125 = vsel %vm2108, %v2087, %v2117
        %v2126 = vsel %vm2109, %v2089, %v2118
        %v2127 = vsel %vm2110, %v2092, %v2119
        %v2128 = vsel %vm2111, %v2094, %v2120
        %v2129 = vsel %vm2112, %v2097, %v2121
        %v2130 = vsel %vm2113, %v2099, %v2122
        %v2131 = vsel %vm2114, %v2102, %v2123
        %v2132 = vsel %vm2115, %v2104, %v2124
        %s2133 = sadd.s32 %s22, 1
        %p2134 = scmp.lt.s32.totalorder %s2133, 9
        // Predicated region
        $region49: #{xception_a_forward.4} parent=39 // pred_check
          %p2135 = pneg %p2134
        $region50: #{xception_a_forward.4} parent=39 // pred_check_branch
          %2137 = sbr.rel (%p2135) target = $region52
        $region51: #{xception_a_forward.4} parent=39 // pred_region
          %v2138 = vpack.c.bf16 %v2125, %v2125
          %v2139 = vpack.c.bf16 %v2126, %v2126
          %v2140 = vpack.c.bf16 %v2127, %v2127
          %v2141 = vpack.c.bf16 %v2128, %v2128
          %v2142 = vpack.c.bf16 %v2129, %v2129
          %v2143 = vpack.c.bf16 %v2130, %v2130
          %v2144 = vpack.c.bf16 %v2131, %v2131
          %v2145 = vpack.c.bf16 %v2132, %v2132
          %v2147 = vshrl.u32 %v2138, 16
          %v2149 = vrot.slane %v2147, 7
          %v2150 = vshll.u32 %v2138, 16
          %v2152 = vor.u32 %v2149, %v2150
          %v2153 = vrot.slane %v2149, 4
          %v2155 = vshrl.u32 %v2139, 16
          %v2157 = vrot.slane %v2155, 7
          %v2158 = vshll.u32 %v2139, 16
          %v2160 = vor.u32 %v2157, %v2158
          %v2161 = vrot.slane %v2157, 4
          %v2163 = vshrl.u32 %v2140, 16
          %v2165 = vrot.slane %v2163, 7
          %v2166 = vshll.u32 %v2140, 16
          %v2168 = vor.u32 %v2165, %v2166
          %v2169 = vrot.slane %v2165, 4
          %v2171 = vshrl.u32 %v2141, 16
          %v2173 = vrot.slane %v2171, 7
          %v2174 = vshll.u32 %v2141, 16
          %v2176 = vor.u32 %v2173, %v2174
          %v2177 = vrot.slane %v2173, 4
          %v2179 = vshrl.u32 %v2142, 16
          %v2181 = vrot.slane %v2179, 7
          %v2182 = vshll.u32 %v2142, 16
          %v2184 = vor.u32 %v2181, %v2182
          %v2185 = vrot.slane %v2181, 4
          %v2187 = vshrl.u32 %v2143, 16
          %v2189 = vrot.slane %v2187, 7
          %v2190 = vshll.u32 %v2143, 16
          %v2192 = vor.u32 %v2189, %v2190
          %v2193 = vrot.slane %v2189, 4
          %v2195 = vshrl.u32 %v2144, 16
          %v2197 = vrot.slane %v2195, 7
          %v2198 = vshll.u32 %v2144, 16
          %v2200 = vor.u32 %v2197, %v2198
          %v2201 = vrot.slane %v2197, 4
          %v2203 = vshrl.u32 %v2145, 16
          %v2205 = vrot.slane %v2203, 7
          %v2206 = vshll.u32 %v2145, 16
          %v2208 = vor.u32 %v2205, %v2206
          %v2209 = vrot.slane %v2205, 4
          %s2226 = scalar_lea.vmem [#allocation2], 8
          %v2227 = vld [vmem:[%s2226] sm:$0xf]
          %v2228 = vsel %vm1379, %v2152, %v2227
          %2229 = vst [vmem:[%s2226] sm:$0xf] %v2228
          %v2230 = vld [vmem:[%s2226 + $0x4] sm:$0x1]
          %v2231 = vsel %vm1385, %v2153, %v2230
          %2232 = vst [vmem:[%s2226 + $0x4] sm:$0x1] %v2231
          %v2233 = vld [vmem:[%s2226 + $0x8] sm:$0xf]
          %v2234 = vsel %vm1379, %v2160, %v2233
          %2235 = vst [vmem:[%s2226 + $0x8] sm:$0xf] %v2234
          %v2236 = vld [vmem:[%s2226 + $0xc] sm:$0x1]
          %v2237 = vsel %vm1385, %v2161, %v2236
          %2238 = vst [vmem:[%s2226 + $0xc] sm:$0x1] %v2237
          %v2239 = vld [vmem:[%s2226 + $0x10] sm:$0xf]
          %v2240 = vsel %vm1379, %v2168, %v2239
          %2241 = vst [vmem:[%s2226 + $0x10] sm:$0xf] %v2240
          %v2242 = vld [vmem:[%s2226 + $0x14] sm:$0x1]
          %v2243 = vsel %vm1385, %v2169, %v2242
          %2244 = vst [vmem:[%s2226 + $0x14] sm:$0x1] %v2243
          %v2245 = vld [vmem:[%s2226 + $0x18] sm:$0xf]
          %v2246 = vsel %vm1379, %v2176, %v2245
          %2247 = vst [vmem:[%s2226 + $0x18] sm:$0xf] %v2246
          %v2248 = vld [vmem:[%s2226 + $0x1c] sm:$0x1]
          %v2249 = vsel %vm1385, %v2177, %v2248
          %2250 = vst [vmem:[%s2226 + $0x1c] sm:$0x1] %v2249
          %v2251 = vld [vmem:[%s2226 + $0x20] sm:$0xf]
          %v2252 = vsel %vm1379, %v2184, %v2251
          %2253 = vst [vmem:[%s2226 + $0x20] sm:$0xf] %v2252
          %v2254 = vld [vmem:[%s2226 + $0x24] sm:$0x1]
          %v2255 = vsel %vm1385, %v2185, %v2254
          %2256 = vst [vmem:[%s2226 + $0x24] sm:$0x1] %v2255
          %v2257 = vld [vmem:[%s2226 + $0x28] sm:$0xf]
          %v2258 = vsel %vm1379, %v2192, %v2257
          %2259 = vst [vmem:[%s2226 + $0x28] sm:$0xf] %v2258
          %v2260 = vld [vmem:[%s2226 + $0x2c] sm:$0x1]
          %v2261 = vsel %vm1385, %v2193, %v2260
          %2262 = vst [vmem:[%s2226 + $0x2c] sm:$0x1] %v2261
          %v2263 = vld [vmem:[%s2226 + $0x30] sm:$0xf]
          %v2264 = vsel %vm1379, %v2200, %v2263
          %2265 = vst [vmem:[%s2226 + $0x30] sm:$0xf] %v2264
          %v2266 = vld [vmem:[%s2226 + $0x34] sm:$0x1]
          %v2267 = vsel %vm1385, %v2201, %v2266
          %2268 = vst [vmem:[%s2226 + $0x34] sm:$0x1] %v2267
          %v2269 = vld [vmem:[%s2226 + $0x38] sm:$0xf]
          %v2270 = vsel %vm1379, %v2208, %v2269
          %2271 = vst [vmem:[%s2226 + $0x38] sm:$0xf] %v2270
          %v2272 = vld [vmem:[%s2226 + $0x3c] sm:$0x1]
          %v2273 = vsel %vm1385, %v2209, %v2272
          %2274 = vst [vmem:[%s2226 + $0x3c] sm:$0x1] %v2273
        $region52: #{xception_a_forward.4} parent=39 // pred_fallthru
          _
        %p2275 = scmp.eq.s32.totalorder %s22, 8
        // Predicated region
        $region53: #{xception_a_forward.4} parent=39 // pred_check
          %p2276 = pneg %p2275
        $region54: #{xception_a_forward.4} parent=39 // pred_check_branch
          %2278 = sbr.rel (%p2276) target = $region56
        $region55: #{xception_a_forward.4} parent=39 // pred_region
          %v2279 = vpack.c.bf16 %v2125, %v2125
          %v2280 = vpack.c.bf16 %v2126, %v2126
          %v2281 = vpack.c.bf16 %v2127, %v2127
          %v2282 = vpack.c.bf16 %v2128, %v2128
          %v2283 = vpack.c.bf16 %v2129, %v2129
          %v2284 = vpack.c.bf16 %v2130, %v2130
          %v2285 = vpack.c.bf16 %v2131, %v2131
          %v2286 = vpack.c.bf16 %v2132, %v2132
          %2287 = vst [vmem:[%s307] sm:$0xf] %v2279
          %2288 = vst [vmem:[%s307 + $0x4] sm:$0xf] %v2280
          %2289 = vst [vmem:[%s307 + $0x8] sm:$0xf] %v2281
          %2290 = vst [vmem:[%s307 + $0xc] sm:$0xf] %v2282
          %2291 = vst [vmem:[%s307 + $0x10] sm:$0xf] %v2283
          %2292 = vst [vmem:[%s307 + $0x14] sm:$0xf] %v2284
          %2293 = vst [vmem:[%s307 + $0x18] sm:$0xf] %v2285
          %2294 = vst [vmem:[%s307 + $0x1c] sm:$0xf] %v2286
        $region56: #{xception_a_forward.4} parent=39 // pred_fallthru
          _
        %p2295 = scmp.lt.s32.totalorder %s21, 1
        %s2296 = scalar_select %p2295, %s21, 1
        %s2297 = smul.addr %s2296, 8
        %s2298 = smul.addr %s2297, 4
        %s2299 = scalar_lea.vmem %s5, %s2298
        // Predicated region
        $region57: #{xception_a_forward.4} parent=39 // pred_check
          %p2300 = pneg %p172
        $region58: #{xception_a_forward.4} parent=39 // pred_check_branch
          %2302 = sbr.rel (%p2300) target = $region60
        $region59: #{xception_a_forward.4} parent=39 // pred_region
          _
        $region60: #{xception_a_forward.4} parent=39 // pred_fallthru
          _
      $region40: #{xception_a_forward.4} parent=5 // pred_fallthru
        _
      %p2303 = scmp.le.s32.totalorder 2, %s12
      // Predicated region
      $region61: #{xception_a_forward.4} parent=5 // pred_check
        %p2304 = pneg %p2303
      $region62: #{xception_a_forward.4} parent=5 // pred_check_branch
        %2306 = sbr.rel (%p2304) target = $region64
      $region63: #{xception_a_forward.4} parent=5 // pred_region
        %s2307 = ssub.s32 %s12, 2
        // Predicated region
        $region65: #{xception_a_forward.4} parent=63 // pred_check
          %p2308 = pneg %p178
        $region66: #{xception_a_forward.4} parent=63 // pred_check_branch
          %2310 = sbr.rel (%p2308) target = $region68
        $region67: #{xception_a_forward.4} parent=63 // pred_region
          %p2311 = scmp.lt.s32.totalorder %s23, 1
          %s2312 = scalar_select %p2311, %s23, 1
          %s2313 = smul.addr %s2312, 8
          %s2314 = smul.addr %s2313, 4
          %s2315 = scalar_lea.vmem %s5, %s2314
        $region68: #{xception_a_forward.4} parent=63 // pred_fallthru
          _
      $region64: #{xception_a_forward.4} parent=5 // pred_fallthru
        _
    $region6: #{xception_a_forward.4} parent=1 // loop_footer
      %s16 = sadd.s32 1, %s12
    $region7: #{xception_a_forward.4} parent=1 // loop_footer_branch
      %11 = sbr.rel target = $region3
    $region8: #{xception_a_forward.4} parent=1 // loop_exit
      _
    %2316 = vsyncpa [#allocation5], 1
    %s2317 = scalar_lea.sflag [#allocation5], 1
    %2318 = vsyncpa %s2317, 1

// kernel: xception_a_forward.5
$region0: #{xception_a_forward.5}
  #allocation0 [shape = 'u32[]', space=smem, size = 0x4, offset = 0x4, fixed_abs, tag = 'smem constant byte address 0x4 - core index']
  #allocation1 [shape = 'u32[72,128]{1,0:T(1,128)}', space=vmem, size = 0x9000, scoped, tag = 'internal scratch']
  #allocation2 [shape = 'bf16[1,10,16,192]{3,2,1,0:T(8,128)(2,1)}', space=vmem, size = 0x14000, scoped, tag = 'scratch operand']
  #allocation3 [shape = 'bf16[1,10,16,192]{3,2,1,0:T(8,128)(2,1)}', space=vmem, size = 0x14000, scoped, tag = 'scratch operand']
  %s0 = inlined_call_operand.vmem [shape: bf16[2,8,8,128], index: 0, kind: input, shape index: {}]
  %s1 = inlined_call_operand.vmem [shape: f32[6,2,9,192], index: 1, kind: input, shape index: {}]
  %s2 = inlined_call_operand.vmem [shape: bf16[6,2,192,192], index: 2, kind: input, shape index: {}]
  %s3 = inlined_call_operand.vmem [shape: f32[6,2,1,192], index: 3, kind: input, shape index: {}]
  %s4 = inlined_call_operand.vmem [shape: f32[12], index: 4, kind: input, shape index: {}]
  %s5 = inlined_call_operand.hbm [shape: bf16[192,1000], index: 5, kind: input, shape index: {}]
  %s6 = inlined_call_operand.vmem [shape: bf16[1000,192], index: 6, kind: input, shape index: {}]
  %s7 = inlined_call_operand.vmem [shape: f32[1,192], index: 7, kind: input, shape index: {}]
  %s8 = inlined_call_operand.vmem [shape: f32[2], index: 8, kind: input, shape index: {}]
  %s9 = inlined_call_operand.hbm [shape: f32[2,8,8,192], index: 9, kind: output, shape index: {}]
  %s10 = sld [smem:[#allocation0]]
  $region93: #{xception_a_forward.5} parent=0
    _
  %s12 = ssub.s32 1, %s10
  %s13 = scalar_select 0, %s12, %s10
  $region1: #{xception_a_forward.5} parent=0
    #allocation4 [shape = 'u8[512]{0}', space=smem, size = 0x200, scoped, tag = 'input window, operand 4, single buffered']
    #allocation5 [shape = 's32[2]{0}', space=sflag, size = 0x8, scoped, tag = 'scoped memory for xception_a_forward.5']
    #allocation6 [shape = 's32[2]{0}', space=sflag, size = 0x8, scoped, tag = 'scoped memory for xception_a_forward.5']
    #allocation7 [shape = 's32[2]{0}', space=sflag, size = 0x8, scoped, tag = 'scoped memory for xception_a_forward.5']
    #allocation8 [shape = 'u8[393216]{0}', space=vmem, size = 0x60000, scoped, tag = 'input window, operand 5, single buffered']
    #allocation9 [shape = 'u8[512]{0}', space=smem, size = 0x200, scoped, tag = 'input window, operand 8, single buffered']
    #allocation10 [shape = 's32[1]{0}', space=sflag, size = 0x4, scoped, tag = 'scoped memory for xception_a_forward.5']
    #allocation11 [shape = 'u8[131072]{0}', space=vmem, size = 0x20000, scoped, tag = 'output window, operand 0']
    %14 = vsyncpa [#allocation7], 0
    %15 = vsyncpa [#allocation5], 0
    %16 = vsyncpa [#allocation10], 0
    %17 = vsyncpa [#allocation6], 0
    %s18 = scalar_lea.sflag [#allocation6], 1
    %19 = vsyncpa %s18, 0
    loop: start=0, step=1, limit=14
    $region2: #{xception_a_forward.5} parent=1 // loop_pre_header
      _
    $region3: #{xception_a_forward.5} parent=1 // loop_header
      %s21 = sphi 0, %s25
      %p22 = scmp.ge.s32.totalorder %s21, 14
      %s28 = sphi 0, %s40
      %s29 = sphi 0, %s36
      %s30 = sphi 0, %s28
      %s31 = sphi 0, %s29
      %s32 = sphi 0, %s30
      %s33 = sphi 0, %s31
      %s43 = sphi 0, %s45
      %s46 = sphi 0, %s43
      %s47 = sphi 0, %s46
      %s63 = sphi 0, %s47
      %s69 = sphi 0, %s71
      %s72 = sphi 0, %s69
      %s73 = sphi 0, %s72
      %s89 = sphi 0, %s73
      %s95 = sphi 0, %s97
      %s98 = sphi 0, %s95
      %s99 = sphi 0, %s98
      %s115 = sphi 0, %s99
      %s121 = sphi 0, %s123
      %s124 = sphi 0, %s121
      %s125 = sphi 0, %s124
      %s141 = sphi 0, %s125
      %s145 = sphi 0, %s145
      %s147 = sphi 0, %s145
      %s148 = sphi 0, %s147
      %s162 = sphi 0, %s148
      %s166 = sphi 0, %s166
      %s168 = sphi 0, %s166
      %s169 = sphi 0, %s168
      %s183 = sphi 0, %s169
      %s187 = sphi 0, %s187
      %s189 = sphi 0, %s187
      %s190 = sphi 0, %s189
      %s204 = sphi 0, %s190
      %s208 = sphi 0, %s208
      %s210 = sphi 0, %s208
      %s211 = sphi 0, %s210
      %s225 = sphi 0, %s211
      %s229 = sphi 0, %s229
      %s231 = sphi 0, %s229
      %s232 = sphi 0, %s231
      %s246 = sphi 0, %s232
      %s252 = sphi 0, %s254
      %s255 = sphi 0, %s252
      %s256 = sphi 0, %s255
      %s272 = sphi 0, %s256
    $region4: #{xception_a_forward.5} parent=1 // loop_header_branch
      %24 = sbr.rel (%p22) target = $region8
    $region5: #{xception_a_forward.5} parent=1 // loop_body
      %s26 = ssub.s32 %s21, 1
      %s27 = ssub.s32 %s21, 2
      %s34 = sadd.s32 1, %s29
      %p35 = scmp.ge.s32.totalorder %s34, 6
      %s36 = scalar_select %p35, 0, %s34
      %s37 = sadd.s32 1, %s28
      %s38 = scalar_select %p35, %s37, %s28
      %p39 = scmp.ge.s32.totalorder %s38, 2
      %s40 = scalar_select %p39, 0, %s38
      %s41 = ssub.s32 %s28, %s40
      %p42 = scmp.eq.s32.totalorder %s41, 0
      %s44 = sadd.s32 %s43, 1
      %s45 = scalar_select %p42, %s43, %s44
      %p48 = pneg %p42
      %p49 = scmp.eq.s32.totalorder %s21, 11
      %p50 = por %p48, %p49
      %p51 = scmp.ne.s32.totalorder %s43, %s46
      %p52 = scmp.eq.s32.totalorder %s21, 0
      %p53 = por %p51, %p52
      %p54 = scmp.ne.s32.totalorder %s43, %s46
      %p55 = scmp.eq.s32.totalorder %s26, 11
      %p56 = por %p54, %p55
      %p57 = scmp.ne.s32.totalorder %s46, %s47
      %p58 = scmp.eq.s32.totalorder %s26, 0
      %p59 = por %p57, %p58
      %p60 = scmp.ne.s32.totalorder %s46, %s47
      %p61 = scmp.eq.s32.totalorder %s27, 11
      %p62 = por %p60, %p61
      %p64 = scmp.ne.s32.totalorder %s47, %s63
      %p65 = scmp.eq.s32.totalorder %s27, 0
      %p66 = por %p64, %p65
      %s67 = ssub.s32 %s29, %s36
      %p68 = scmp.eq.s32.totalorder %s67, 0
      %s70 = sadd.s32 %s69, 1
      %s71 = scalar_select %p68, %s69, %s70
      %p74 = pneg %p68
      %p75 = scmp.eq.s32.totalorder %s21, 11
      %p76 = por %p74, %p75
      %p77 = scmp.ne.s32.totalorder %s69, %s72
      %p78 = scmp.eq.s32.totalorder %s21, 0
      %p79 = por %p77, %p78
      %p80 = scmp.ne.s32.totalorder %s69, %s72
      %p81 = scmp.eq.s32.totalorder %s26, 11
      %p82 = por %p80, %p81
      %p83 = scmp.ne.s32.totalorder %s72, %s73
      %p84 = scmp.eq.s32.totalorder %s26, 0
      %p85 = por %p83, %p84
      %p86 = scmp.ne.s32.totalorder %s72, %s73
      %p87 = scmp.eq.s32.totalorder %s27, 11
      %p88 = por %p86, %p87
      %p90 = scmp.ne.s32.totalorder %s73, %s89
      %p91 = scmp.eq.s32.totalorder %s27, 0
      %p92 = por %p90, %p91
      %s93 = ssub.s32 %s29, %s36
      %p94 = scmp.eq.s32.totalorder %s93, 0
      %s96 = sadd.s32 %s95, 1
      %s97 = scalar_select %p94, %s95, %s96
      %p100 = pneg %p94
      %p101 = scmp.eq.s32.totalorder %s21, 11
      %p102 = por %p100, %p101
      %p103 = scmp.ne.s32.totalorder %s95, %s98
      %p104 = scmp.eq.s32.totalorder %s21, 0
      %p105 = por %p103, %p104
      %p106 = scmp.ne.s32.totalorder %s95, %s98
      %p107 = scmp.eq.s32.totalorder %s26, 11
      %p108 = por %p106, %p107
      %p109 = scmp.ne.s32.totalorder %s98, %s99
      %p110 = scmp.eq.s32.totalorder %s26, 0
      %p111 = por %p109, %p110
      %p112 = scmp.ne.s32.totalorder %s98, %s99
      %p113 = scmp.eq.s32.totalorder %s27, 11
      %p114 = por %p112, %p113
      %p116 = scmp.ne.s32.totalorder %s99, %s115
      %p117 = scmp.eq.s32.totalorder %s27, 0
      %p118 = por %p116, %p117
      %s119 = ssub.s32 %s29, %s36
      %p120 = scmp.eq.s32.totalorder %s119, 0
      %s122 = sadd.s32 %s121, 1
      %s123 = scalar_select %p120, %s121, %s122
      %p126 = pneg %p120
      %p127 = scmp.eq.s32.totalorder %s21, 11
      %p128 = por %p126, %p127
      %p129 = scmp.ne.s32.totalorder %s121, %s124
      %p130 = scmp.eq.s32.totalorder %s21, 0
      %p131 = por %p129, %p130
      %p132 = scmp.ne.s32.totalorder %s121, %s124
      %p133 = scmp.eq.s32.totalorder %s26, 11
      %p134 = por %p132, %p133
      %p135 = scmp.ne.s32.totalorder %s124, %s125
      %p136 = scmp.eq.s32.totalorder %s26, 0
      %p137 = por %p135, %p136
      %p138 = scmp.ne.s32.totalorder %s124, %s125
      %p139 = scmp.eq.s32.totalorder %s27, 11
      %p140 = por %p138, %p139
      %p142 = scmp.ne.s32.totalorder %s125, %s141
      %p143 = scmp.eq.s32.totalorder %s27, 0
      %p144 = por %p142, %p143
      %s146 = sadd.s32 %s145, 1
      %p149 = scmp.eq.s32.totalorder %s21, 11
      %p150 = scmp.ne.s32.totalorder %s145, %s147
      %p151 = scmp.eq.s32.totalorder %s21, 0
      %p152 = por %p150, %p151
      %p153 = scmp.ne.s32.totalorder %s145, %s147
      %p154 = scmp.eq.s32.totalorder %s26, 11
      %p155 = por %p153, %p154
      %p156 = scmp.ne.s32.totalorder %s147, %s148
      %p157 = scmp.eq.s32.totalorder %s26, 0
      %p158 = por %p156, %p157
      %p159 = scmp.ne.s32.totalorder %s147, %s148
      %p160 = scmp.eq.s32.totalorder %s27, 11
      %p161 = por %p159, %p160
      %p163 = scmp.ne.s32.totalorder %s148, %s162
      %p164 = scmp.eq.s32.totalorder %s27, 0
      %p165 = por %p163, %p164
      %s167 = sadd.s32 %s166, 1
      %p170 = scmp.eq.s32.totalorder %s21, 11
      %p171 = scmp.ne.s32.totalorder %s166, %s168
      %p172 = scmp.eq.s32.totalorder %s21, 0
      %p173 = por %p171, %p172
      %p174 = scmp.ne.s32.totalorder %s166, %s168
      %p175 = scmp.eq.s32.totalorder %s26, 11
      %p176 = por %p174, %p175
      %p177 = scmp.ne.s32.totalorder %s168, %s169
      %p178 = scmp.eq.s32.totalorder %s26, 0
      %p179 = por %p177, %p178
      %p180 = scmp.ne.s32.totalorder %s168, %s169
      %p181 = scmp.eq.s32.totalorder %s27, 11
      %p182 = por %p180, %p181
      %p184 = scmp.ne.s32.totalorder %s169, %s183
      %p185 = scmp.eq.s32.totalorder %s27, 0
      %p186 = por %p184, %p185
      %s188 = sadd.s32 %s187, 1
      %p191 = scmp.eq.s32.totalorder %s21, 11
      %p192 = scmp.ne.s32.totalorder %s187, %s189
      %p193 = scmp.eq.s32.totalorder %s21, 0
      %p194 = por %p192, %p193
      %p195 = scmp.ne.s32.totalorder %s187, %s189
      %p196 = scmp.eq.s32.totalorder %s26, 11
      %p197 = por %p195, %p196
      %p198 = scmp.ne.s32.totalorder %s189, %s190
      %p199 = scmp.eq.s32.totalorder %s26, 0
      %p200 = por %p198, %p199
      %p201 = scmp.ne.s32.totalorder %s189, %s190
      %p202 = scmp.eq.s32.totalorder %s27, 11
      %p203 = por %p201, %p202
      %p205 = scmp.ne.s32.totalorder %s190, %s204
      %p206 = scmp.eq.s32.totalorder %s27, 0
      %p207 = por %p205, %p206
      %s209 = sadd.s32 %s208, 1
      %p212 = scmp.eq.s32.totalorder %s21, 11
      %p213 = scmp.ne.s32.totalorder %s208, %s210
      %p214 = scmp.eq.s32.totalorder %s21, 0
      %p215 = por %p213, %p214
      %p216 = scmp.ne.s32.totalorder %s208, %s210
      %p217 = scmp.eq.s32.totalorder %s26, 11
      %p218 = por %p216, %p217
      %p219 = scmp.ne.s32.totalorder %s210, %s211
      %p220 = scmp.eq.s32.totalorder %s26, 0
      %p221 = por %p219, %p220
      %p222 = scmp.ne.s32.totalorder %s210, %s211
      %p223 = scmp.eq.s32.totalorder %s27, 11
      %p224 = por %p222, %p223
      %p226 = scmp.ne.s32.totalorder %s211, %s225
      %p227 = scmp.eq.s32.totalorder %s27, 0
      %p228 = por %p226, %p227
      %s230 = sadd.s32 %s229, 1
      %p233 = scmp.eq.s32.totalorder %s21, 11
      %p234 = scmp.ne.s32.totalorder %s229, %s231
      %p235 = scmp.eq.s32.totalorder %s21, 0
      %p236 = por %p234, %p235
      %p237 = scmp.ne.s32.totalorder %s229, %s231
      %p238 = scmp.eq.s32.totalorder %s26, 11
      %p239 = por %p237, %p238
      %p240 = scmp.ne.s32.totalorder %s231, %s232
      %p241 = scmp.eq.s32.totalorder %s26, 0
      %p242 = por %p240, %p241
      %p243 = scmp.ne.s32.totalorder %s231, %s232
      %p244 = scmp.eq.s32.totalorder %s27, 11
      %p245 = por %p243, %p244
      %p247 = scmp.ne.s32.totalorder %s232, %s246
      %p248 = scmp.eq.s32.totalorder %s27, 0
      %p249 = por %p247, %p248
      %s250 = ssub.s32 %s28, %s40
      %p251 = scmp.eq.s32.totalorder %s250, 0
      %s253 = sadd.s32 %s252, 1
      %s254 = scalar_select %p251, %s252, %s253
      %p257 = pneg %p251
      %p258 = scmp.eq.s32.totalorder %s21, 11
      %p259 = por %p257, %p258
      %p260 = scmp.ne.s32.totalorder %s252, %s255
      %p261 = scmp.eq.s32.totalorder %s21, 0
      %p262 = por %p260, %p261
      %p263 = scmp.ne.s32.totalorder %s252, %s255
      %p264 = scmp.eq.s32.totalorder %s26, 11
      %p265 = por %p263, %p264
      %p266 = scmp.ne.s32.totalorder %s255, %s256
      %p267 = scmp.eq.s32.totalorder %s26, 0
      %p268 = por %p266, %p267
      %p269 = scmp.ne.s32.totalorder %s255, %s256
      %p270 = scmp.eq.s32.totalorder %s27, 11
      %p271 = por %p269, %p270
      %p273 = scmp.ne.s32.totalorder %s256, %s272
      %p274 = scmp.eq.s32.totalorder %s27, 0
      %p275 = por %p273, %p274
      %p276 = scmp.le.s32.totalorder 1, %s21
      %p277 = scmp.lt.s32.totalorder %s21, 13
      %p278 = pnand %p276, %p277
      %p279 = pneg %p278
      // Predicated region
      $region9: #{xception_a_forward.5} parent=5 // pred_check
        _
      $region10: #{xception_a_forward.5} parent=5 // pred_check_branch
        %281 = sbr.rel (%p278) target = $region12
      $region11: #{xception_a_forward.5} parent=5 // pred_region
        %s282 = ssub.s32 %s21, 1
        // Predicated region
        $region13: #{xception_a_forward.5} parent=11 // pred_check
          %p283 = pneg %p158
        $region14: #{xception_a_forward.5} parent=11 // pred_check_branch
          %285 = sbr.rel (%p283) target = $region16
        $region15: #{xception_a_forward.5} parent=11 // pred_region
          %287 = vsyncadd [#allocation7], 0
          %s289 = sshll.u32 %s4, 4
          %s290 = int_to_ptr.vmem [resolvable:$true] %s289
          %292 = dma.vmem_to_smem %s290, 16, [#allocation4], [#allocation7]
        $region16: #{xception_a_forward.5} parent=11 // pred_fallthru
          _
        // Predicated region
        $region17: #{xception_a_forward.5} parent=11 // pred_check
          %p293 = pneg %p179
        $region18: #{xception_a_forward.5} parent=11 // pred_check_branch
          %295 = sbr.rel (%p293) target = $region20
        $region19: #{xception_a_forward.5} parent=11 // pred_region
          %297 = vsyncadd [#allocation5], 0
          %s298 = sshll.u32 %s5, 4
          %s299 = int_to_ptr.hbm [resolvable:$true] %s298
          %s300 = sshll.u32 [#allocation8], 4
          %s301 = int_to_ptr.vmem [resolvable:$true] %s300
          %306 = dma.hbm_to_vmem [thread:$0]  %s299, 12288, %s301, [#allocation5], 512, 512, 32
        $region20: #{xception_a_forward.5} parent=11 // pred_fallthru
          _
        // Predicated region
        $region21: #{xception_a_forward.5} parent=11 // pred_check
          %p307 = pneg %p200
        $region22: #{xception_a_forward.5} parent=11 // pred_check_branch
          %309 = sbr.rel (%p307) target = $region24
        $region23: #{xception_a_forward.5} parent=11 // pred_region
          _
        $region24: #{xception_a_forward.5} parent=11 // pred_fallthru
          _
        // Predicated region
        $region25: #{xception_a_forward.5} parent=11 // pred_check
          %p310 = pneg %p221
        $region26: #{xception_a_forward.5} parent=11 // pred_check_branch
          %312 = sbr.rel (%p310) target = $region28
        $region27: #{xception_a_forward.5} parent=11 // pred_region
          _
        $region28: #{xception_a_forward.5} parent=11 // pred_fallthru
          _
        // Predicated region
        $region29: #{xception_a_forward.5} parent=11 // pred_check
          %p313 = pneg %p242
        $region30: #{xception_a_forward.5} parent=11 // pred_check_branch
          %315 = sbr.rel (%p313) target = $region32
        $region31: #{xception_a_forward.5} parent=11 // pred_region
          %317 = vsyncadd [#allocation10], 0
          %s319 = sshll.u32 %s8, 4
          %s320 = int_to_ptr.vmem [resolvable:$true] %s319
          %322 = dma.vmem_to_smem %s320, 16, [#allocation9], [#allocation10]
        $region32: #{xception_a_forward.5} parent=11 // pred_fallthru
          _
      $region12: #{xception_a_forward.5} parent=5 // pred_fallthru
        _
      %p323 = scmp.lt.s32.totalorder %s21, 12
      // Predicated region
      $region33: #{xception_a_forward.5} parent=5 // pred_check
        %p324 = pneg %p323
      $region34: #{xception_a_forward.5} parent=5 // pred_check_branch
        %326 = sbr.rel (%p324) target = $region36
      $region35: #{xception_a_forward.5} parent=5 // pred_region
        // Predicated region
        $region37: #{xception_a_forward.5} parent=35 // pred_check
          %p327 = pneg %p53
        $region38: #{xception_a_forward.5} parent=35 // pred_check_branch
          %329 = sbr.rel (%p327) target = $region40
        $region39: #{xception_a_forward.5} parent=35 // pred_region
          %p330 = scmp.lt.s32.totalorder %s28, 1
          %s331 = scalar_select %p330, %s28, 1
          %s332 = smul.addr %s331, 8
          %s333 = smul.addr %s332, 4
          %s334 = scalar_lea.vmem %s0, %s333
        $region40: #{xception_a_forward.5} parent=35 // pred_fallthru
          _
        // Predicated region
        $region41: #{xception_a_forward.5} parent=35 // pred_check
          %p335 = pneg %p79
        $region42: #{xception_a_forward.5} parent=35 // pred_check_branch
          %337 = sbr.rel (%p335) target = $region44
        $region43: #{xception_a_forward.5} parent=35 // pred_region
          %p338 = scmp.lt.s32.totalorder %s29, 5
          %s339 = scalar_select %p338, %s29, 5
          %s340 = smul.addr %s339, 8
          %s341 = smul.addr %s340, 8
          %s342 = scalar_lea.vmem %s1, %s341
        $region44: #{xception_a_forward.5} parent=35 // pred_fallthru
          _
        // Predicated region
        $region45: #{xception_a_forward.5} parent=35 // pred_check
          %p343 = pneg %p105
        $region46: #{xception_a_forward.5} parent=35 // pred_check_branch
          %345 = sbr.rel (%p343) target = $region48
        $region47: #{xception_a_forward.5} parent=35 // pred_region
          %p346 = scmp.lt.s32.totalorder %s29, 5
          %s347 = scalar_select %p346, %s29, 5
          %s348 = smul.addr %s347, 96
          %s349 = smul.addr %s348, 4
          %s350 = scalar_lea.vmem %s2, %s349
        $region48: #{xception_a_forward.5} parent=35 // pred_fallthru
          _
        // Predicated region
        $region49: #{xception_a_forward.5} parent=35 // pred_check
          %p351 = pneg %p131
        $region50: #{xception_a_forward.5} parent=35 // pred_check_branch
          %353 = sbr.rel (%p351) target = $region52
        $region51: #{xception_a_forward.5} parent=35 // pred_region
          %p354 = scmp.lt.s32.totalorder %s29, 5
          %s355 = scalar_select %p354, %s29, 5
          %s356 = smul.addr %s355, 4
          %s357 = scalar_lea.vmem %s3, %s356
        $region52: #{xception_a_forward.5} parent=35 // pred_fallthru
          _
      $region36: #{xception_a_forward.5} parent=5 // pred_fallthru
        _
      %p358 = scmp.le.s32.totalorder 1, %s21
      %p359 = scmp.lt.s32.totalorder %s21, 13
      %p360 = pnand %p358, %p359
      %p361 = pneg %p360
      // Predicated region
      $region53: #{xception_a_forward.5} parent=5 // pred_check
        _
      $region54: #{xception_a_forward.5} parent=5 // pred_check_branch
        %363 = sbr.rel (%p360) target = $region56
      $region55: #{xception_a_forward.5} parent=5 // pred_region
        %s364 = ssub.s32 %s21, 1
        // Predicated region
        $region57: #{xception_a_forward.5} parent=55 // pred_check
          %p365 = pneg %p158
        $region58: #{xception_a_forward.5} parent=55 // pred_check_branch
          %367 = sbr.rel (%p365) target = $region60
        $region59: #{xception_a_forward.5} parent=55 // pred_region
          %369 = dma.done [#allocation7], 16
        $region60: #{xception_a_forward.5} parent=55 // pred_fallthru
          _
        // Predicated region
        $region61: #{xception_a_forward.5} parent=55 // pred_check
          %p370 = pneg %p179
        $region62: #{xception_a_forward.5} parent=55 // pred_check_branch
          %372 = sbr.rel (%p370) target = $region64
        $region63: #{xception_a_forward.5} parent=55 // pred_region
          %374 = dma.done [#allocation5], 12288
        $region64: #{xception_a_forward.5} parent=55 // pred_fallthru
          _
        // Predicated region
        $region65: #{xception_a_forward.5} parent=55 // pred_check
          %p375 = pneg %p242
        $region66: #{xception_a_forward.5} parent=55 // pred_check_branch
          %377 = sbr.rel (%p375) target = $region68
        $region67: #{xception_a_forward.5} parent=55 // pred_region
          %379 = dma.done [#allocation10], 16
        $region68: #{xception_a_forward.5} parent=55 // pred_fallthru
          _
        %380 = sfence
        %p381 = scmp.lt.s32.totalorder %s30, 1
        %s382 = scalar_select %p381, %s30, 1
        %s383 = smul.addr %s382, 8
        %s384 = smul.addr %s383, 4
        %s385 = scalar_lea.vmem %s0, %s384
        %p386 = pneg %p59
        %p387 = pneg %p56
        %p388 = scmp.lt.s32.totalorder %s31, 5
        %s389 = scalar_select %p388, %s31, 5
        %s390 = smul.addr %s389, 8
        %s391 = smul.addr %s390, 8
        %s392 = scalar_lea.vmem %s1, %s391
        %p393 = pneg %p85
        %p394 = pneg %p82
        %p395 = scmp.lt.s32.totalorder %s31, 5
        %s396 = scalar_select %p395, %s31, 5
        %s397 = smul.addr %s396, 96
        %s398 = smul.addr %s397, 4
        %s399 = scalar_lea.vmem %s2, %s398
        %p400 = pneg %p111
        %p401 = pneg %p108
        %p402 = scmp.lt.s32.totalorder %s31, 5
        %s403 = scalar_select %p402, %s31, 5
        %s404 = smul.addr %s403, 4
        %s405 = scalar_lea.vmem %s3, %s404
        %p406 = pneg %p137
        %p407 = pneg %p134
        %p408 = pneg %p158
        %p409 = pneg %p155
        %p410 = pneg %p179
        %p411 = pneg %p176
        %p412 = pneg %p200
        %p413 = pneg %p197
        %p414 = pneg %p221
        %p415 = pneg %p218
        %p416 = pneg %p242
        %p417 = pneg %p239
        %p418 = pneg %p268
        %p419 = pneg %p265
        %s420 = sand.u32 %s255, 1
        %s421 = scalar_lea.sflag [#allocation6], %s420
        %s422 = sand.u32 %s255, 1
        %s423 = smul.addr %s422, 128
        %s424 = scalar_lea.vmem [#allocation11], %s423
        %p425 = scmp.lt.s32.totalorder %s30, 1
        %s426 = scalar_select %p425, %s30, 1
        %s427 = smul.addr %s426, 8
        %s428 = smul.addr %s427, 4
        %s429 = scalar_lea.vmem %s0, %s428
        %p430 = scmp.lt.s32.totalorder %s31, 5
        %s431 = scalar_select %p430, %s31, 5
        %s432 = smul.addr %s431, 8
        %s433 = smul.addr %s432, 8
        %s434 = scalar_lea.vmem %s1, %s433
        %p435 = scmp.lt.s32.totalorder %s31, 5
        %s436 = scalar_select %p435, %s31, 5
        %s437 = smul.addr %s436, 96
        %s438 = smul.addr %s437, 4
        %s439 = scalar_lea.vmem %s2, %s438
        %p440 = scmp.lt.s32.totalorder %s31, 5
        %s441 = scalar_select %p440, %s31, 5
        %s442 = smul.addr %s441, 4
        %s443 = scalar_lea.vmem %s3, %s442
        %p445 = scmp.eq.s32.totalorder %s31, 0
        // Predicated region
        $region69: #{xception_a_forward.5} parent=55 // pred_check
          %p446 = pneg %p445
        $region70: #{xception_a_forward.5} parent=55 // pred_check_branch
          %448 = sbr.rel (%p446) target = $region72
        $region71: #{xception_a_forward.5} parent=55 // pred_region
          %vm449 = vcmask 1043456
          %vm450 = vcmask 523268
          %vm451 = vmor %vm450, %vm449
          %452 = vst.msk [vmem:[#allocation2] sm:$0xff] %vm451, 0
          %453 = vst.msk [vmem:[#allocation2 + $0x8] sm:$0xff] %vm451, 0
          %s454 = scalar_lea.vmem [#allocation2], 144
          %455 = vst.msk [vmem:[%s454] sm:$0xff] %vm451, 0
          %456 = vst.msk [vmem:[%s454 + $0x8] sm:$0xff] %vm451, 0
          %vm457 = vcmask 1040384
          %vm458 = vsmask.f32 256
          %vm459 = vmand %vm457, %vm458
          %vm460 = vcmask 520196
          %vm461 = vsmask.f32 4352
          %vm462 = vmand %vm460, %vm461
          %vm463 = vmor %vm462, %vm459
          %v464 = vld [vmem:[#allocation2] sm:$0x11]
          %v465 = vsel %vm463, 0, %v464
          %466 = vst [vmem:[#allocation2] sm:$0x11] %v465
          %v467 = vld [vmem:[#allocation2 + $0x10] sm:$0x11]
          %v468 = vsel %vm463, 0, %v467
          %469 = vst [vmem:[#allocation2 + $0x10] sm:$0x11] %v468
          %v470 = vld [vmem:[#allocation2 + $0x20] sm:$0x11]
          %v471 = vsel %vm463, 0, %v470
          %472 = vst [vmem:[#allocation2 + $0x20] sm:$0x11] %v471
          %v473 = vld [vmem:[#allocation2 + $0x30] sm:$0x11]
          %v474 = vsel %vm463, 0, %v473
          %475 = vst [vmem:[#allocation2 + $0x30] sm:$0x11] %v474
          %v476 = vld [vmem:[#allocation2 + $0x40] sm:$0x11]
          %v477 = vsel %vm463, 0, %v476
          %478 = vst [vmem:[#allocation2 + $0x40] sm:$0x11] %v477
          %v479 = vld [vmem:[#allocation2 + $0x50] sm:$0x11]
          %v480 = vsel %vm463, 0, %v479
          %481 = vst [vmem:[#allocation2 + $0x50] sm:$0x11] %v480
          %v482 = vld [vmem:[#allocation2 + $0x60] sm:$0x11]
          %v483 = vsel %vm463, 0, %v482
          %484 = vst [vmem:[#allocation2 + $0x60] sm:$0x11] %v483
          %v485 = vld [vmem:[#allocation2 + $0x70] sm:$0x11]
          %v486 = vsel %vm463, 0, %v485
          %487 = vst [vmem:[#allocation2 + $0x70] sm:$0x11] %v486
          %v488 = vld [vmem:[#allocation2 + $0x80] sm:$0x11]
          %v489 = vsel %vm463, 0, %v488
          %490 = vst [vmem:[#allocation2 + $0x80] sm:$0x11] %v489
          %v491 = vld [vmem:[#allocation2 + $0x90] sm:$0x11]
          %v492 = vsel %vm463, 0, %v491
          %493 = vst [vmem:[#allocation2 + $0x90] sm:$0x11] %v492
          %vm494 = vsmask.f32 7938
          %vm495 = vmand %vm457, %vm494
          %vm496 = vsmask.f32 7954
          %vm497 = vmand %vm460, %vm496
          %vm498 = vmor %vm497, %vm495
          %v499 = vld [vmem:[#allocation2 + $0x8] sm:$0x11]
          %v500 = vsel %vm498, 0, %v499
          %501 = vst [vmem:[#allocation2 + $0x8] sm:$0x11] %v500
          %v502 = vld [vmem:[#allocation2 + $0x18] sm:$0x11]
          %v503 = vsel %vm498, 0, %v502
          %504 = vst [vmem:[#allocation2 + $0x18] sm:$0x11] %v503
          %v505 = vld [vmem:[#allocation2 + $0x28] sm:$0x11]
          %v506 = vsel %vm498, 0, %v505
          %507 = vst [vmem:[#allocation2 + $0x28] sm:$0x11] %v506
          %v508 = vld [vmem:[#allocation2 + $0x38] sm:$0x11]
          %v509 = vsel %vm498, 0, %v508
          %510 = vst [vmem:[#allocation2 + $0x38] sm:$0x11] %v509
          %v511 = vld [vmem:[#allocation2 + $0x48] sm:$0x11]
          %v512 = vsel %vm498, 0, %v511
          %513 = vst [vmem:[#allocation2 + $0x48] sm:$0x11] %v512
          %v514 = vld [vmem:[#allocation2 + $0x58] sm:$0x11]
          %v515 = vsel %vm498, 0, %v514
          %516 = vst [vmem:[#allocation2 + $0x58] sm:$0x11] %v515
          %v517 = vld [vmem:[#allocation2 + $0x68] sm:$0x11]
          %v518 = vsel %vm498, 0, %v517
          %519 = vst [vmem:[#allocation2 + $0x68] sm:$0x11] %v518
          %v520 = vld [vmem:[#allocation2 + $0x78] sm:$0x11]
          %v521 = vsel %vm498, 0, %v520
          %522 = vst [vmem:[#allocation2 + $0x78] sm:$0x11] %v521
          %v523 = vld [vmem:[#allocation2 + $0x88] sm:$0x11]
          %v524 = vsel %vm498, 0, %v523
          %525 = vst [vmem:[#allocation2 + $0x88] sm:$0x11] %v524
          %v526 = vld [vmem:[#allocation2 + $0x98] sm:$0x11]
          %v527 = vsel %vm498, 0, %v526
          %528 = vst [vmem:[#allocation2 + $0x98] sm:$0x11] %v527
          %529 = vst.msk [vmem:[#allocation3] sm:$0xff] %vm451, 0
          %530 = vst.msk [vmem:[#allocation3 + $0x8] sm:$0xff] %vm451, 0
          %s531 = scalar_lea.vmem [#allocation3], 144
          %532 = vst.msk [vmem:[%s531] sm:$0xff] %vm451, 0
          %533 = vst.msk [vmem:[%s531 + $0x8] sm:$0xff] %vm451, 0
          %v534 = vld [vmem:[#allocation3] sm:$0x11]
          %v535 = vsel %vm463, 0, %v534
          %536 = vst [vmem:[#allocation3] sm:$0x11] %v535
          %v537 = vld [vmem:[#allocation3 + $0x10] sm:$0x11]
          %v538 = vsel %vm463, 0, %v537
          %539 = vst [vmem:[#allocation3 + $0x10] sm:$0x11] %v538
          %v540 = vld [vmem:[#allocation3 + $0x20] sm:$0x11]
          %v541 = vsel %vm463, 0, %v540
          %542 = vst [vmem:[#allocation3 + $0x20] sm:$0x11] %v541
          %v543 = vld [vmem:[#allocation3 + $0x30] sm:$0x11]
          %v544 = vsel %vm463, 0, %v543
          %545 = vst [vmem:[#allocation3 + $0x30] sm:$0x11] %v544
          %v546 = vld [vmem:[#allocation3 + $0x40] sm:$0x11]
          %v547 = vsel %vm463, 0, %v546
          %548 = vst [vmem:[#allocation3 + $0x40] sm:$0x11] %v547
          %v549 = vld [vmem:[#allocation3 + $0x50] sm:$0x11]
          %v550 = vsel %vm463, 0, %v549
          %551 = vst [vmem:[#allocation3 + $0x50] sm:$0x11] %v550
          %v552 = vld [vmem:[#allocation3 + $0x60] sm:$0x11]
          %v553 = vsel %vm463, 0, %v552
          %554 = vst [vmem:[#allocation3 + $0x60] sm:$0x11] %v553
          %v555 = vld [vmem:[#allocation3 + $0x70] sm:$0x11]
          %v556 = vsel %vm463, 0, %v555
          %557 = vst [vmem:[#allocation3 + $0x70] sm:$0x11] %v556
          %v558 = vld [vmem:[#allocation3 + $0x80] sm:$0x11]
          %v559 = vsel %vm463, 0, %v558
          %560 = vst [vmem:[#allocation3 + $0x80] sm:$0x11] %v559
          %v561 = vld [vmem:[#allocation3 + $0x90] sm:$0x11]
          %v562 = vsel %vm463, 0, %v561
          %563 = vst [vmem:[#allocation3 + $0x90] sm:$0x11] %v562
          %v564 = vld [vmem:[#allocation3 + $0x8] sm:$0x11]
          %v565 = vsel %vm498, 0, %v564
          %566 = vst [vmem:[#allocation3 + $0x8] sm:$0x11] %v565
          %v567 = vld [vmem:[#allocation3 + $0x18] sm:$0x11]
          %v568 = vsel %vm498, 0, %v567
          %569 = vst [vmem:[#allocation3 + $0x18] sm:$0x11] %v568
          %v570 = vld [vmem:[#allocation3 + $0x28] sm:$0x11]
          %v571 = vsel %vm498, 0, %v570
          %572 = vst [vmem:[#allocation3 + $0x28] sm:$0x11] %v571
          %v573 = vld [vmem:[#allocation3 + $0x38] sm:$0x11]
          %v574 = vsel %vm498, 0, %v573
          %575 = vst [vmem:[#allocation3 + $0x38] sm:$0x11] %v574
          %v576 = vld [vmem:[#allocation3 + $0x48] sm:$0x11]
          %v577 = vsel %vm498, 0, %v576
          %578 = vst [vmem:[#allocation3 + $0x48] sm:$0x11] %v577
          %v579 = vld [vmem:[#allocation3 + $0x58] sm:$0x11]
          %v580 = vsel %vm498, 0, %v579
          %581 = vst [vmem:[#allocation3 + $0x58] sm:$0x11] %v580
          %v582 = vld [vmem:[#allocation3 + $0x68] sm:$0x11]
          %v583 = vsel %vm498, 0, %v582
          %584 = vst [vmem:[#allocation3 + $0x68] sm:$0x11] %v583
          %v585 = vld [vmem:[#allocation3 + $0x78] sm:$0x11]
          %v586 = vsel %vm498, 0, %v585
          %587 = vst [vmem:[#allocation3 + $0x78] sm:$0x11] %v586
          %v588 = vld [vmem:[#allocation3 + $0x88] sm:$0x11]
          %v589 = vsel %vm498, 0, %v588
          %590 = vst [vmem:[#allocation3 + $0x88] sm:$0x11] %v589
          %v591 = vld [vmem:[#allocation3 + $0x98] sm:$0x11]
          %v592 = vsel %vm498, 0, %v591
          %593 = vst [vmem:[#allocation3 + $0x98] sm:$0x11] %v592
          %v594 = vld [vmem:[%s429] sm:$0xf]
          %v595 = vld [vmem:[%s429 + $0x4] sm:$0xf]
          %v596 = vld [vmem:[%s429 + $0x8] sm:$0xf]
          %v597 = vld [vmem:[%s429 + $0xc] sm:$0xf]
          %v598 = vld [vmem:[%s429 + $0x10] sm:$0xf]
          %v599 = vld [vmem:[%s429 + $0x14] sm:$0xf]
          %v600 = vld [vmem:[%s429 + $0x18] sm:$0xf]
          %v601 = vld [vmem:[%s429 + $0x1c] sm:$0xf]
          %v603 = vshrl.u32 %v594, 16
          %v605 = vrot.slane %v603, 7
          %v606 = vshll.u32 %v594, 16
          %v608 = vor.u32 %v605, %v606
          %v609 = vrot.slane %v605, 4
          %v611 = vshrl.u32 %v595, 16
          %v613 = vrot.slane %v611, 7
          %v614 = vshll.u32 %v595, 16
          %v616 = vor.u32 %v613, %v614
          %v617 = vrot.slane %v613, 4
          %v619 = vshrl.u32 %v596, 16
          %v621 = vrot.slane %v619, 7
          %v622 = vshll.u32 %v596, 16
          %v624 = vor.u32 %v621, %v622
          %v625 = vrot.slane %v621, 4
          %v627 = vshrl.u32 %v597, 16
          %v629 = vrot.slane %v627, 7
          %v630 = vshll.u32 %v597, 16
          %v632 = vor.u32 %v629, %v630
          %v633 = vrot.slane %v629, 4
          %v635 = vshrl.u32 %v598, 16
          %v637 = vrot.slane %v635, 7
          %v638 = vshll.u32 %v598, 16
          %v640 = vor.u32 %v637, %v638
          %v641 = vrot.slane %v637, 4
          %v643 = vshrl.u32 %v599, 16
          %v645 = vrot.slane %v643, 7
          %v646 = vshll.u32 %v599, 16
          %v648 = vor.u32 %v645, %v646
          %v649 = vrot.slane %v645, 4
          %v651 = vshrl.u32 %v600, 16
          %v653 = vrot.slane %v651, 7
          %v654 = vshll.u32 %v600, 16
          %v656 = vor.u32 %v653, %v654
          %v657 = vrot.slane %v653, 4
          %v659 = vshrl.u32 %v601, 16
          %v661 = vrot.slane %v659, 7
          %v662 = vshll.u32 %v601, 16
          %v664 = vor.u32 %v661, %v662
          %v665 = vrot.slane %v661, 4
          %s682 = scalar_lea.vmem [#allocation2], 16
          %vm683 = vcmask 1043456
          %vm684 = vmand %vm683, %vm494
          %v685 = vld [vmem:[%s682] sm:$0xf]
          %v686 = vsel %vm684, %v608, %v685
          %687 = vst [vmem:[%s682] sm:$0xf] %v686
          %v688 = vld [vmem:[%s682 + $0x8] sm:$0x1]
          %v689 = vsel %vm459, %v609, %v688
          %690 = vst [vmem:[%s682 + $0x8] sm:$0x1] %v689
          %v691 = vld [vmem:[%s682 + $0x10] sm:$0xf]
          %v692 = vsel %vm684, %v616, %v691
          %693 = vst [vmem:[%s682 + $0x10] sm:$0xf] %v692
          %v694 = vld [vmem:[%s682 + $0x18] sm:$0x1]
          %v695 = vsel %vm459, %v617, %v694
          %696 = vst [vmem:[%s682 + $0x18] sm:$0x1] %v695
          %v697 = vld [vmem:[%s682 + $0x20] sm:$0xf]
          %v698 = vsel %vm684, %v624, %v697
          %699 = vst [vmem:[%s682 + $0x20] sm:$0xf] %v698
          %v700 = vld [vmem:[%s682 + $0x28] sm:$0x1]
          %v701 = vsel %vm459, %v625, %v700
          %702 = vst [vmem:[%s682 + $0x28] sm:$0x1] %v701
          %v703 = vld [vmem:[%s682 + $0x30] sm:$0xf]
          %v704 = vsel %vm684, %v632, %v703
          %705 = vst [vmem:[%s682 + $0x30] sm:$0xf] %v704
          %v706 = vld [vmem:[%s682 + $0x38] sm:$0x1]
          %v707 = vsel %vm459, %v633, %v706
          %708 = vst [vmem:[%s682 + $0x38] sm:$0x1] %v707
          %v709 = vld [vmem:[%s682 + $0x40] sm:$0xf]
          %v710 = vsel %vm684, %v640, %v709
          %711 = vst [vmem:[%s682 + $0x40] sm:$0xf] %v710
          %v712 = vld [vmem:[%s682 + $0x48] sm:$0x1]
          %v713 = vsel %vm459, %v641, %v712
          %714 = vst [vmem:[%s682 + $0x48] sm:$0x1] %v713
          %v715 = vld [vmem:[%s682 + $0x50] sm:$0xf]
          %v716 = vsel %vm684, %v648, %v715
          %717 = vst [vmem:[%s682 + $0x50] sm:$0xf] %v716
          %v718 = vld [vmem:[%s682 + $0x58] sm:$0x1]
          %v719 = vsel %vm459, %v649, %v718
          %720 = vst [vmem:[%s682 + $0x58] sm:$0x1] %v719
          %v721 = vld [vmem:[%s682 + $0x60] sm:$0xf]
          %v722 = vsel %vm684, %v656, %v721
          %723 = vst [vmem:[%s682 + $0x60] sm:$0xf] %v722
          %v724 = vld [vmem:[%s682 + $0x68] sm:$0x1]
          %v725 = vsel %vm459, %v657, %v724
          %726 = vst [vmem:[%s682 + $0x68] sm:$0x1] %v725
          %v727 = vld [vmem:[%s682 + $0x70] sm:$0xf]
          %v728 = vsel %vm684, %v664, %v727
          %729 = vst [vmem:[%s682 + $0x70] sm:$0xf] %v728
          %v730 = vld [vmem:[%s682 + $0x78] sm:$0x1]
          %v731 = vsel %vm459, %v665, %v730
          %732 = vst [vmem:[%s682 + $0x78] sm:$0x1] %v731
          %vm733 = vcmask 519168
          %vm734 = vmand %vm733, %vm494
          %v735 = vld [vmem:[%s682 + $0x4] sm:$0xf]
          %v736 = vsel %vm734, 0, %v735
          %737 = vst [vmem:[%s682 + $0x4] sm:$0xf] %v736
          %vm738 = vcmask 516096
          %vm739 = vmand %vm738, %vm458
          %v740 = vld [vmem:[%s682 + $0xc] sm:$0x1]
          %v741 = vsel %vm739, 0, %v740
          %742 = vst [vmem:[%s682 + $0xc] sm:$0x1] %v741
          %v743 = vld [vmem:[%s682 + $0x14] sm:$0xf]
          %v744 = vsel %vm734, 0, %v743
          %745 = vst [vmem:[%s682 + $0x14] sm:$0xf] %v744
          %v746 = vld [vmem:[%s682 + $0x1c] sm:$0x1]
          %v747 = vsel %vm739, 0, %v746
          %748 = vst [vmem:[%s682 + $0x1c] sm:$0x1] %v747
          %v749 = vld [vmem:[%s682 + $0x24] sm:$0xf]
          %v750 = vsel %vm734, 0, %v749
          %751 = vst [vmem:[%s682 + $0x24] sm:$0xf] %v750
          %v752 = vld [vmem:[%s682 + $0x2c] sm:$0x1]
          %v753 = vsel %vm739, 0, %v752
          %754 = vst [vmem:[%s682 + $0x2c] sm:$0x1] %v753
          %v755 = vld [vmem:[%s682 + $0x34] sm:$0xf]
          %v756 = vsel %vm734, 0, %v755
          %757 = vst [vmem:[%s682 + $0x34] sm:$0xf] %v756
          %v758 = vld [vmem:[%s682 + $0x3c] sm:$0x1]
          %v759 = vsel %vm739, 0, %v758
          %760 = vst [vmem:[%s682 + $0x3c] sm:$0x1] %v759
          %v761 = vld [vmem:[%s682 + $0x44] sm:$0xf]
          %v762 = vsel %vm734, 0, %v761
          %763 = vst [vmem:[%s682 + $0x44] sm:$0xf] %v762
          %v764 = vld [vmem:[%s682 + $0x4c] sm:$0x1]
          %v765 = vsel %vm739, 0, %v764
          %766 = vst [vmem:[%s682 + $0x4c] sm:$0x1] %v765
          %v767 = vld [vmem:[%s682 + $0x54] sm:$0xf]
          %v768 = vsel %vm734, 0, %v767
          %769 = vst [vmem:[%s682 + $0x54] sm:$0xf] %v768
          %v770 = vld [vmem:[%s682 + $0x5c] sm:$0x1]
          %v771 = vsel %vm739, 0, %v770
          %772 = vst [vmem:[%s682 + $0x5c] sm:$0x1] %v771
          %v773 = vld [vmem:[%s682 + $0x64] sm:$0xf]
          %v774 = vsel %vm734, 0, %v773
          %775 = vst [vmem:[%s682 + $0x64] sm:$0xf] %v774
          %v776 = vld [vmem:[%s682 + $0x6c] sm:$0x1]
          %v777 = vsel %vm739, 0, %v776
          %778 = vst [vmem:[%s682 + $0x6c] sm:$0x1] %v777
          %v779 = vld [vmem:[%s682 + $0x74] sm:$0xf]
          %v780 = vsel %vm734, 0, %v779
          %781 = vst [vmem:[%s682 + $0x74] sm:$0xf] %v780
          %v782 = vld [vmem:[%s682 + $0x7c] sm:$0x1]
          %v783 = vsel %vm739, 0, %v782
          %784 = vst [vmem:[%s682 + $0x7c] sm:$0x1] %v783
        $region72: #{xception_a_forward.5} parent=55 // pred_fallthru
          _
        %v785 = vld [vmem:[%s434] sm:$0xff]
        %v786 = vld [vmem:[%s434 + $0x8] sm:$0xff]
        %v787 = vld [vmem:[%s434 + $0x10] sm:$0x1]
        %v788 = vld [vmem:[%s434 + $0x18] sm:$0x1]
        %v789 = vld [vmem:[#allocation2] sm:$0xff]
        %v790 = vld [vmem:[#allocation2 + $0x10] sm:$0xff]
        %v791 = vld [vmem:[#allocation2 + $0x20] sm:$0xff]
        %v792 = vld [vmem:[#allocation2 + $0x30] sm:$0xff]
        %v793 = vld [vmem:[#allocation2 + $0x40] sm:$0xff]
        %v794 = vld [vmem:[#allocation2 + $0x50] sm:$0xff]
        %v795 = vld [vmem:[#allocation2 + $0x60] sm:$0xff]
        %v796 = vld [vmem:[#allocation2 + $0x70] sm:$0xff]
        %v797 = vld [vmem:[#allocation2 + $0x80] sm:$0xff]
        %v798 = vld [vmem:[#allocation2 + $0x90] sm:$0xff]
        %v799 = vunpack.c.l.bf16 %v789
        %v800 = vunpack.c.h.bf16 %v789
        %v801 = vunpack.c.l.bf16 %v790
        %v802 = vunpack.c.h.bf16 %v790
        %v803 = vunpack.c.l.bf16 %v791
        %v804 = vunpack.c.h.bf16 %v791
        %v805 = vunpack.c.l.bf16 %v792
        %v806 = vunpack.c.h.bf16 %v792
        %v807 = vunpack.c.l.bf16 %v793
        %v808 = vunpack.c.h.bf16 %v793
        %v809 = vunpack.c.l.bf16 %v794
        %v810 = vunpack.c.h.bf16 %v794
        %v811 = vunpack.c.l.bf16 %v795
        %v812 = vunpack.c.h.bf16 %v795
        %v813 = vunpack.c.l.bf16 %v796
        %v814 = vunpack.c.h.bf16 %v796
        %v815 = vunpack.c.l.bf16 %v797
        %v816 = vunpack.c.h.bf16 %v797
        %v817 = vunpack.c.l.bf16 %v798
        %v818 = vunpack.c.h.bf16 %v798
        %v819 = vperm.slane %v785, 0
        %v820 = vperm.slane %v786, 0
        %v821 = vmul.f32 %v799, %v819
        %v822 = vmul.f32 %v800, %v820
        %v823 = vmul.f32 %v801, %v819
        %v824 = vmul.f32 %v802, %v820
        %v825 = vmul.f32 %v803, %v819
        %v826 = vmul.f32 %v804, %v820
        %v827 = vmul.f32 %v805, %v819
        %v828 = vmul.f32 %v806, %v820
        %v829 = vmul.f32 %v807, %v819
        %v830 = vmul.f32 %v808, %v820
        %v831 = vmul.f32 %v809, %v819
        %v832 = vmul.f32 %v810, %v820
        %v833 = vmul.f32 %v811, %v819
        %v834 = vmul.f32 %v812, %v820
        %v835 = vmul.f32 %v813, %v819
        %v836 = vmul.f32 %v814, %v820
        %v837 = vadd.f32 %v821, 0.0
        %v838 = vadd.f32 %v822, 0.0
        %v839 = vadd.f32 %v823, 0.0
        %v840 = vadd.f32 %v824, 0.0
        %v841 = vadd.f32 %v825, 0.0
        %v842 = vadd.f32 %v826, 0.0
        %v843 = vadd.f32 %v827, 0.0
        %v844 = vadd.f32 %v828, 0.0
        %v845 = vadd.f32 %v829, 0.0
        %v846 = vadd.f32 %v830, 0.0
        %v847 = vadd.f32 %v831, 0.0
        %v848 = vadd.f32 %v832, 0.0
        %v849 = vadd.f32 %v833, 0.0
        %v850 = vadd.f32 %v834, 0.0
        %v851 = vadd.f32 %v835, 0.0
        %v852 = vadd.f32 %v836, 0.0
        %v853 = vperm.slane %v785, 3
        %v854 = vperm.slane %v786, 3
        %v855 = vmul.f32 %v801, %v853
        %v856 = vmul.f32 %v802, %v854
        %v857 = vmul.f32 %v803, %v853
        %v858 = vmul.f32 %v804, %v854
        %v859 = vmul.f32 %v805, %v853
        %v860 = vmul.f32 %v806, %v854
        %v861 = vmul.f32 %v807, %v853
        %v862 = vmul.f32 %v808, %v854
        %v863 = vmul.f32 %v809, %v853
        %v864 = vmul.f32 %v810, %v854
        %v865 = vmul.f32 %v811, %v853
        %v866 = vmul.f32 %v812, %v854
        %v867 = vmul.f32 %v813, %v853
        %v868 = vmul.f32 %v814, %v854
        %v869 = vmul.f32 %v815, %v853
        %v870 = vmul.f32 %v816, %v854
        %v871 = vadd.f32 %v837, %v855
        %v872 = vadd.f32 %v838, %v856
        %v873 = vadd.f32 %v839, %v857
        %v874 = vadd.f32 %v840, %v858
        %v875 = vadd.f32 %v841, %v859
        %v876 = vadd.f32 %v842, %v860
        %v877 = vadd.f32 %v843, %v861
        %v878 = vadd.f32 %v844, %v862
        %v879 = vadd.f32 %v845, %v863
        %v880 = vadd.f32 %v846, %v864
        %v881 = vadd.f32 %v847, %v865
        %v882 = vadd.f32 %v848, %v866
        %v883 = vadd.f32 %v849, %v867
        %v884 = vadd.f32 %v850, %v868
        %v885 = vadd.f32 %v851, %v869
        %v886 = vadd.f32 %v852, %v870
        %v887 = vperm.slane %v785, 6
        %v888 = vperm.slane %v786, 6
        %v889 = vmul.f32 %v803, %v887
        %v890 = vmul.f32 %v804, %v888
        %v891 = vmul.f32 %v805, %v887
        %v892 = vmul.f32 %v806, %v888
        %v893 = vmul.f32 %v807, %v887
        %v894 = vmul.f32 %v808, %v888
        %v895 = vmul.f32 %v809, %v887
        %v896 = vmul.f32 %v810, %v888
        %v897 = vmul.f32 %v811, %v887
        %v898 = vmul.f32 %v812, %v888
        %v899 = vmul.f32 %v813, %v887
        %v900 = vmul.f32 %v814, %v888
        %v901 = vmul.f32 %v815, %v887
        %v902 = vmul.f32 %v816, %v888
        %v903 = vmul.f32 %v817, %v887
        %v904 = vmul.f32 %v818, %v888
        %v905 = vadd.f32 %v871, %v889
        %v906 = vadd.f32 %v872, %v890
        %v907 = vadd.f32 %v873, %v891
        %v908 = vadd.f32 %v874, %v892
        %v909 = vadd.f32 %v875, %v893
        %v910 = vadd.f32 %v876, %v894
        %v911 = vadd.f32 %v877, %v895
        %v912 = vadd.f32 %v878, %v896
        %v913 = vadd.f32 %v879, %v897
        %v914 = vadd.f32 %v880, %v898
        %v915 = vadd.f32 %v881, %v899
        %v916 = vadd.f32 %v882, %v900
        %v917 = vadd.f32 %v883, %v901
        %v918 = vadd.f32 %v884, %v902
        %v919 = vadd.f32 %v885, %v903
        %v920 = vadd.f32 %v886, %v904
        %v921 = vld [vmem:[#allocation2 + $0x8] sm:$0x11]
        %v922 = vld [vmem:[#allocation2 + $0x18] sm:$0x11]
        %v923 = vld [vmem:[#allocation2 + $0x28] sm:$0x11]
        %v924 = vld [vmem:[#allocation2 + $0x38] sm:$0x11]
        %v925 = vld [vmem:[#allocation2 + $0x48] sm:$0x11]
        %v926 = vld [vmem:[#allocation2 + $0x58] sm:$0x11]
        %v927 = vld [vmem:[#allocation2 + $0x68] sm:$0x11]
        %v928 = vld [vmem:[#allocation2 + $0x78] sm:$0x11]
        %v929 = vld [vmem:[#allocation2 + $0x88] sm:$0x11]
        %v930 = vld [vmem:[#allocation2 + $0x98] sm:$0x11]
        %v931 = vunpack.c.l.bf16 %v921
        %v932 = vunpack.c.h.bf16 %v921
        %v933 = vunpack.c.l.bf16 %v922
        %v934 = vunpack.c.h.bf16 %v922
        %v935 = vunpack.c.l.bf16 %v923
        %v936 = vunpack.c.h.bf16 %v923
        %v937 = vunpack.c.l.bf16 %v924
        %v938 = vunpack.c.h.bf16 %v924
        %v939 = vunpack.c.l.bf16 %v925
        %v940 = vunpack.c.h.bf16 %v925
        %v941 = vunpack.c.l.bf16 %v926
        %v942 = vunpack.c.h.bf16 %v926
        %v943 = vunpack.c.l.bf16 %v927
        %v944 = vunpack.c.h.bf16 %v927
        %v945 = vunpack.c.l.bf16 %v928
        %v946 = vunpack.c.h.bf16 %v928
        %v947 = vunpack.c.l.bf16 %v929
        %v948 = vunpack.c.h.bf16 %v929
        %v949 = vunpack.c.l.bf16 %v930
        %v950 = vunpack.c.h.bf16 %v930
        %v951 = vperm.slane %v785, 1
        %v952 = vperm.slane %v786, 1
        %v953 = vmul.f32 %v799, %v951
        %v954 = vmul.f32 %v800, %v952
        %v955 = vmul.f32 %v931, %v951
        %v956 = vmul.f32 %v932, %v952
        %v957 = vmul.f32 %v801, %v951
        %v958 = vmul.f32 %v802, %v952
        %v959 = vmul.f32 %v933, %v951
        %v960 = vmul.f32 %v934, %v952
        %v961 = vmul.f32 %v803, %v951
        %v962 = vmul.f32 %v804, %v952
        %v963 = vmul.f32 %v935, %v951
        %v964 = vmul.f32 %v936, %v952
        %v965 = vmul.f32 %v805, %v951
        %v966 = vmul.f32 %v806, %v952
        %v967 = vmul.f32 %v937, %v951
        %v968 = vmul.f32 %v938, %v952
        %v969 = vmul.f32 %v807, %v951
        %v970 = vmul.f32 %v808, %v952
        %v971 = vmul.f32 %v939, %v951
        %v972 = vmul.f32 %v940, %v952
        %v973 = vmul.f32 %v809, %v951
        %v974 = vmul.f32 %v810, %v952
        %v975 = vmul.f32 %v941, %v951
        %v976 = vmul.f32 %v942, %v952
        %v977 = vmul.f32 %v811, %v951
        %v978 = vmul.f32 %v812, %v952
        %v979 = vmul.f32 %v943, %v951
        %v980 = vmul.f32 %v944, %v952
        %v981 = vmul.f32 %v813, %v951
        %v982 = vmul.f32 %v814, %v952
        %v983 = vmul.f32 %v945, %v951
        %v984 = vmul.f32 %v946, %v952
        %vm1017 = vcmask 1046528
        %v1018 = vrot.slane %v953, 1
        %v1019 = vrot.slane %v955, 1
        %v1020 = vsel %vm1017, %v1018, %v1019
        %v1021 = vrot.slane %v954, 1
        %v1022 = vrot.slane %v956, 1
        %v1023 = vsel %vm1017, %v1021, %v1022
        %v1024 = vrot.slane %v957, 1
        %v1025 = vrot.slane %v959, 1
        %v1026 = vsel %vm1017, %v1024, %v1025
        %v1027 = vrot.slane %v958, 1
        %v1028 = vrot.slane %v960, 1
        %v1029 = vsel %vm1017, %v1027, %v1028
        %v1030 = vrot.slane %v961, 1
        %v1031 = vrot.slane %v963, 1
        %v1032 = vsel %vm1017, %v1030, %v1031
        %v1033 = vrot.slane %v962, 1
        %v1034 = vrot.slane %v964, 1
        %v1035 = vsel %vm1017, %v1033, %v1034
        %v1036 = vrot.slane %v965, 1
        %v1037 = vrot.slane %v967, 1
        %v1038 = vsel %vm1017, %v1036, %v1037
        %v1039 = vrot.slane %v966, 1
        %v1040 = vrot.slane %v968, 1
        %v1041 = vsel %vm1017, %v1039, %v1040
        %v1042 = vrot.slane %v969, 1
        %v1043 = vrot.slane %v971, 1
        %v1044 = vsel %vm1017, %v1042, %v1043
        %v1045 = vrot.slane %v970, 1
        %v1046 = vrot.slane %v972, 1
        %v1047 = vsel %vm1017, %v1045, %v1046
        %v1048 = vrot.slane %v973, 1
        %v1049 = vrot.slane %v975, 1
        %v1050 = vsel %vm1017, %v1048, %v1049
        %v1051 = vrot.slane %v974, 1
        %v1052 = vrot.slane %v976, 1
        %v1053 = vsel %vm1017, %v1051, %v1052
        %v1054 = vrot.slane %v977, 1
        %v1055 = vrot.slane %v979, 1
        %v1056 = vsel %vm1017, %v1054, %v1055
        %v1057 = vrot.slane %v978, 1
        %v1058 = vrot.slane %v980, 1
        %v1059 = vsel %vm1017, %v1057, %v1058
        %v1060 = vrot.slane %v981, 1
        %v1061 = vrot.slane %v983, 1
        %v1062 = vsel %vm1017, %v1060, %v1061
        %v1063 = vrot.slane %v982, 1
        %v1064 = vrot.slane %v984, 1
        %v1065 = vsel %vm1017, %v1063, %v1064
        %v1082 = vadd.f32 %v905, %v1020
        %v1083 = vadd.f32 %v906, %v1023
        %v1084 = vadd.f32 %v907, %v1026
        %v1085 = vadd.f32 %v908, %v1029
        %v1086 = vadd.f32 %v909, %v1032
        %v1087 = vadd.f32 %v910, %v1035
        %v1088 = vadd.f32 %v911, %v1038
        %v1089 = vadd.f32 %v912, %v1041
        %v1090 = vadd.f32 %v913, %v1044
        %v1091 = vadd.f32 %v914, %v1047
        %v1092 = vadd.f32 %v915, %v1050
        %v1093 = vadd.f32 %v916, %v1053
        %v1094 = vadd.f32 %v917, %v1056
        %v1095 = vadd.f32 %v918, %v1059
        %v1096 = vadd.f32 %v919, %v1062
        %v1097 = vadd.f32 %v920, %v1065
        %v1098 = vperm.slane %v785, 4
        %v1099 = vperm.slane %v786, 4
        %v1100 = vmul.f32 %v801, %v1098
        %v1101 = vmul.f32 %v802, %v1099
        %v1102 = vmul.f32 %v933, %v1098
        %v1103 = vmul.f32 %v934, %v1099
        %v1104 = vmul.f32 %v803, %v1098
        %v1105 = vmul.f32 %v804, %v1099
        %v1106 = vmul.f32 %v935, %v1098
        %v1107 = vmul.f32 %v936, %v1099
        %v1108 = vmul.f32 %v805, %v1098
        %v1109 = vmul.f32 %v806, %v1099
        %v1110 = vmul.f32 %v937, %v1098
        %v1111 = vmul.f32 %v938, %v1099
        %v1112 = vmul.f32 %v807, %v1098
        %v1113 = vmul.f32 %v808, %v1099
        %v1114 = vmul.f32 %v939, %v1098
        %v1115 = vmul.f32 %v940, %v1099
        %v1116 = vmul.f32 %v809, %v1098
        %v1117 = vmul.f32 %v810, %v1099
        %v1118 = vmul.f32 %v941, %v1098
        %v1119 = vmul.f32 %v942, %v1099
        %v1120 = vmul.f32 %v811, %v1098
        %v1121 = vmul.f32 %v812, %v1099
        %v1122 = vmul.f32 %v943, %v1098
        %v1123 = vmul.f32 %v944, %v1099
        %v1124 = vmul.f32 %v813, %v1098
        %v1125 = vmul.f32 %v814, %v1099
        %v1126 = vmul.f32 %v945, %v1098
        %v1127 = vmul.f32 %v946, %v1099
        %v1128 = vmul.f32 %v815, %v1098
        %v1129 = vmul.f32 %v816, %v1099
        %v1130 = vmul.f32 %v947, %v1098
        %v1131 = vmul.f32 %v948, %v1099
        %v1164 = vrot.slane %v1100, 1
        %v1165 = vrot.slane %v1102, 1
        %v1166 = vsel %vm1017, %v1164, %v1165
        %v1167 = vrot.slane %v1101, 1
        %v1168 = vrot.slane %v1103, 1
        %v1169 = vsel %vm1017, %v1167, %v1168
        %v1170 = vrot.slane %v1104, 1
        %v1171 = vrot.slane %v1106, 1
        %v1172 = vsel %vm1017, %v1170, %v1171
        %v1173 = vrot.slane %v1105, 1
        %v1174 = vrot.slane %v1107, 1
        %v1175 = vsel %vm1017, %v1173, %v1174
        %v1176 = vrot.slane %v1108, 1
        %v1177 = vrot.slane %v1110, 1
        %v1178 = vsel %vm1017, %v1176, %v1177
        %v1179 = vrot.slane %v1109, 1
        %v1180 = vrot.slane %v1111, 1
        %v1181 = vsel %vm1017, %v1179, %v1180
        %v1182 = vrot.slane %v1112, 1
        %v1183 = vrot.slane %v1114, 1
        %v1184 = vsel %vm1017, %v1182, %v1183
        %v1185 = vrot.slane %v1113, 1
        %v1186 = vrot.slane %v1115, 1
        %v1187 = vsel %vm1017, %v1185, %v1186
        %v1188 = vrot.slane %v1116, 1
        %v1189 = vrot.slane %v1118, 1
        %v1190 = vsel %vm1017, %v1188, %v1189
        %v1191 = vrot.slane %v1117, 1
        %v1192 = vrot.slane %v1119, 1
        %v1193 = vsel %vm1017, %v1191, %v1192
        %v1194 = vrot.slane %v1120, 1
        %v1195 = vrot.slane %v1122, 1
        %v1196 = vsel %vm1017, %v1194, %v1195
        %v1197 = vrot.slane %v1121, 1
        %v1198 = vrot.slane %v1123, 1
        %v1199 = vsel %vm1017, %v1197, %v1198
        %v1200 = vrot.slane %v1124, 1
        %v1201 = vrot.slane %v1126, 1
        %v1202 = vsel %vm1017, %v1200, %v1201
        %v1203 = vrot.slane %v1125, 1
        %v1204 = vrot.slane %v1127, 1
        %v1205 = vsel %vm1017, %v1203, %v1204
        %v1206 = vrot.slane %v1128, 1
        %v1207 = vrot.slane %v1130, 1
        %v1208 = vsel %vm1017, %v1206, %v1207
        %v1209 = vrot.slane %v1129, 1
        %v1210 = vrot.slane %v1131, 1
        %v1211 = vsel %vm1017, %v1209, %v1210
        %v1228 = vadd.f32 %v1082, %v1166
        %v1229 = vadd.f32 %v1083, %v1169
        %v1230 = vadd.f32 %v1084, %v1172
        %v1231 = vadd.f32 %v1085, %v1175
        %v1232 = vadd.f32 %v1086, %v1178
        %v1233 = vadd.f32 %v1087, %v1181
        %v1234 = vadd.f32 %v1088, %v1184
        %v1235 = vadd.f32 %v1089, %v1187
        %v1236 = vadd.f32 %v1090, %v1190
        %v1237 = vadd.f32 %v1091, %v1193
        %v1238 = vadd.f32 %v1092, %v1196
        %v1239 = vadd.f32 %v1093, %v1199
        %v1240 = vadd.f32 %v1094, %v1202
        %v1241 = vadd.f32 %v1095, %v1205
        %v1242 = vadd.f32 %v1096, %v1208
        %v1243 = vadd.f32 %v1097, %v1211
        %v1244 = vperm.slane %v785, 7
        %v1245 = vperm.slane %v786, 7
        %v1246 = vmul.f32 %v803, %v1244
        %v1247 = vmul.f32 %v804, %v1245
        %v1248 = vmul.f32 %v935, %v1244
        %v1249 = vmul.f32 %v936, %v1245
        %v1250 = vmul.f32 %v805, %v1244
        %v1251 = vmul.f32 %v806, %v1245
        %v1252 = vmul.f32 %v937, %v1244
        %v1253 = vmul.f32 %v938, %v1245
        %v1254 = vmul.f32 %v807, %v1244
        %v1255 = vmul.f32 %v808, %v1245
        %v1256 = vmul.f32 %v939, %v1244
        %v1257 = vmul.f32 %v940, %v1245
        %v1258 = vmul.f32 %v809, %v1244
        %v1259 = vmul.f32 %v810, %v1245
        %v1260 = vmul.f32 %v941, %v1244
        %v1261 = vmul.f32 %v942, %v1245
        %v1262 = vmul.f32 %v811, %v1244
        %v1263 = vmul.f32 %v812, %v1245
        %v1264 = vmul.f32 %v943, %v1244
        %v1265 = vmul.f32 %v944, %v1245
        %v1266 = vmul.f32 %v813, %v1244
        %v1267 = vmul.f32 %v814, %v1245
        %v1268 = vmul.f32 %v945, %v1244
        %v1269 = vmul.f32 %v946, %v1245
        %v1270 = vmul.f32 %v815, %v1244
        %v1271 = vmul.f32 %v816, %v1245
        %v1272 = vmul.f32 %v947, %v1244
        %v1273 = vmul.f32 %v948, %v1245
        %v1274 = vmul.f32 %v817, %v1244
        %v1275 = vmul.f32 %v818, %v1245
        %v1276 = vmul.f32 %v949, %v1244
        %v1277 = vmul.f32 %v950, %v1245
        %v1310 = vrot.slane %v1246, 1
        %v1311 = vrot.slane %v1248, 1
        %v1312 = vsel %vm1017, %v1310, %v1311
        %v1313 = vrot.slane %v1247, 1
        %v1314 = vrot.slane %v1249, 1
        %v1315 = vsel %vm1017, %v1313, %v1314
        %v1316 = vrot.slane %v1250, 1
        %v1317 = vrot.slane %v1252, 1
        %v1318 = vsel %vm1017, %v1316, %v1317
        %v1319 = vrot.slane %v1251, 1
        %v1320 = vrot.slane %v1253, 1
        %v1321 = vsel %vm1017, %v1319, %v1320
        %v1322 = vrot.slane %v1254, 1
        %v1323 = vrot.slane %v1256, 1
        %v1324 = vsel %vm1017, %v1322, %v1323
        %v1325 = vrot.slane %v1255, 1
        %v1326 = vrot.slane %v1257, 1
        %v1327 = vsel %vm1017, %v1325, %v1326
        %v1328 = vrot.slane %v1258, 1
        %v1329 = vrot.slane %v1260, 1
        %v1330 = vsel %vm1017, %v1328, %v1329
        %v1331 = vrot.slane %v1259, 1
        %v1332 = vrot.slane %v1261, 1
        %v1333 = vsel %vm1017, %v1331, %v1332
        %v1334 = vrot.slane %v1262, 1
        %v1335 = vrot.slane %v1264, 1
        %v1336 = vsel %vm1017, %v1334, %v1335
        %v1337 = vrot.slane %v1263, 1
        %v1338 = vrot.slane %v1265, 1
        %v1339 = vsel %vm1017, %v1337, %v1338
        %v1340 = vrot.slane %v1266, 1
        %v1341 = vrot.slane %v1268, 1
        %v1342 = vsel %vm1017, %v1340, %v1341
        %v1343 = vrot.slane %v1267, 1
        %v1344 = vrot.slane %v1269, 1
        %v1345 = vsel %vm1017, %v1343, %v1344
        %v1346 = vrot.slane %v1270, 1
        %v1347 = vrot.slane %v1272, 1
        %v1348 = vsel %vm1017, %v1346, %v1347
        %v1349 = vrot.slane %v1271, 1
        %v1350 = vrot.slane %v1273, 1
        %v1351 = vsel %vm1017, %v1349, %v1350
        %v1352 = vrot.slane %v1274, 1
        %v1353 = vrot.slane %v1276, 1
        %v1354 = vsel %vm1017, %v1352, %v1353
        %v1355 = vrot.slane %v1275, 1
        %v1356 = vrot.slane %v1277, 1
        %v1357 = vsel %vm1017, %v1355, %v1356
        %v1374 = vadd.f32 %v1228, %v1312
        %v1375 = vadd.f32 %v1229, %v1315
        %v1376 = vadd.f32 %v1230, %v1318
        %v1377 = vadd.f32 %v1231, %v1321
        %v1378 = vadd.f32 %v1232, %v1324
        %v1379 = vadd.f32 %v1233, %v1327
        %v1380 = vadd.f32 %v1234, %v1330
        %v1381 = vadd.f32 %v1235, %v1333
        %v1382 = vadd.f32 %v1236, %v1336
        %v1383 = vadd.f32 %v1237, %v1339
        %v1384 = vadd.f32 %v1238, %v1342
        %v1385 = vadd.f32 %v1239, %v1345
        %v1386 = vadd.f32 %v1240, %v1348
        %v1387 = vadd.f32 %v1241, %v1351
        %v1388 = vadd.f32 %v1242, %v1354
        %v1389 = vadd.f32 %v1243, %v1357
        %v1390 = vld [vmem:[#allocation2] sm:$0xee]
        %v1391 = vld [vmem:[#allocation2 + $0x10] sm:$0xee]
        %v1392 = vld [vmem:[#allocation2 + $0x20] sm:$0xee]
        %v1393 = vld [vmem:[#allocation2 + $0x30] sm:$0xee]
        %v1394 = vld [vmem:[#allocation2 + $0x40] sm:$0xee]
        %v1395 = vld [vmem:[#allocation2 + $0x50] sm:$0xee]
        %v1396 = vld [vmem:[#allocation2 + $0x60] sm:$0xee]
        %v1397 = vld [vmem:[#allocation2 + $0x70] sm:$0xee]
        %v1398 = vld [vmem:[#allocation2 + $0x80] sm:$0xee]
        %v1399 = vld [vmem:[#allocation2 + $0x90] sm:$0xee]
        %v1400 = vunpack.c.l.bf16 %v1390
        %v1401 = vunpack.c.h.bf16 %v1390
        %v1402 = vunpack.c.l.bf16 %v1391
        %v1403 = vunpack.c.h.bf16 %v1391
        %v1404 = vunpack.c.l.bf16 %v1392
        %v1405 = vunpack.c.h.bf16 %v1392
        %v1406 = vunpack.c.l.bf16 %v1393
        %v1407 = vunpack.c.h.bf16 %v1393
        %v1408 = vunpack.c.l.bf16 %v1394
        %v1409 = vunpack.c.h.bf16 %v1394
        %v1410 = vunpack.c.l.bf16 %v1395
        %v1411 = vunpack.c.h.bf16 %v1395
        %v1412 = vunpack.c.l.bf16 %v1396
        %v1413 = vunpack.c.h.bf16 %v1396
        %v1414 = vunpack.c.l.bf16 %v1397
        %v1415 = vunpack.c.h.bf16 %v1397
        %v1416 = vunpack.c.l.bf16 %v1398
        %v1417 = vunpack.c.h.bf16 %v1398
        %v1418 = vunpack.c.l.bf16 %v1399
        %v1419 = vunpack.c.h.bf16 %v1399
        %v1420 = vperm.slane %v785, 2
        %v1421 = vperm.slane %v786, 2
        %v1422 = vmul.f32 %v1400, %v1420
        %v1423 = vmul.f32 %v1401, %v1421
        %v1424 = vmul.f32 %v931, %v1420
        %v1425 = vmul.f32 %v932, %v1421
        %v1426 = vmul.f32 %v1402, %v1420
        %v1427 = vmul.f32 %v1403, %v1421
        %v1428 = vmul.f32 %v933, %v1420
        %v1429 = vmul.f32 %v934, %v1421
        %v1430 = vmul.f32 %v1404, %v1420
        %v1431 = vmul.f32 %v1405, %v1421
        %v1432 = vmul.f32 %v935, %v1420
        %v1433 = vmul.f32 %v936, %v1421
        %v1434 = vmul.f32 %v1406, %v1420
        %v1435 = vmul.f32 %v1407, %v1421
        %v1436 = vmul.f32 %v937, %v1420
        %v1437 = vmul.f32 %v938, %v1421
        %v1438 = vmul.f32 %v1408, %v1420
        %v1439 = vmul.f32 %v1409, %v1421
        %v1440 = vmul.f32 %v939, %v1420
        %v1441 = vmul.f32 %v940, %v1421
        %v1442 = vmul.f32 %v1410, %v1420
        %v1443 = vmul.f32 %v1411, %v1421
        %v1444 = vmul.f32 %v941, %v1420
        %v1445 = vmul.f32 %v942, %v1421
        %v1446 = vmul.f32 %v1412, %v1420
        %v1447 = vmul.f32 %v1413, %v1421
        %v1448 = vmul.f32 %v943, %v1420
        %v1449 = vmul.f32 %v944, %v1421
        %v1450 = vmul.f32 %v1414, %v1420
        %v1451 = vmul.f32 %v1415, %v1421
        %v1452 = vmul.f32 %v945, %v1420
        %v1453 = vmul.f32 %v946, %v1421
        %vm1486 = vcmask 1045504
        %v1487 = vrot.slane %v1422, 2
        %v1488 = vrot.slane %v1424, 2
        %v1489 = vsel %vm1486, %v1487, %v1488
        %v1490 = vrot.slane %v1423, 2
        %v1491 = vrot.slane %v1425, 2
        %v1492 = vsel %vm1486, %v1490, %v1491
        %v1493 = vrot.slane %v1426, 2
        %v1494 = vrot.slane %v1428, 2
        %v1495 = vsel %vm1486, %v1493, %v1494
        %v1496 = vrot.slane %v1427, 2
        %v1497 = vrot.slane %v1429, 2
        %v1498 = vsel %vm1486, %v1496, %v1497
        %v1499 = vrot.slane %v1430, 2
        %v1500 = vrot.slane %v1432, 2
        %v1501 = vsel %vm1486, %v1499, %v1500
        %v1502 = vrot.slane %v1431, 2
        %v1503 = vrot.slane %v1433, 2
        %v1504 = vsel %vm1486, %v1502, %v1503
        %v1505 = vrot.slane %v1434, 2
        %v1506 = vrot.slane %v1436, 2
        %v1507 = vsel %vm1486, %v1505, %v1506
        %v1508 = vrot.slane %v1435, 2
        %v1509 = vrot.slane %v1437, 2
        %v1510 = vsel %vm1486, %v1508, %v1509
        %v1511 = vrot.slane %v1438, 2
        %v1512 = vrot.slane %v1440, 2
        %v1513 = vsel %vm1486, %v1511, %v1512
        %v1514 = vrot.slane %v1439, 2
        %v1515 = vrot.slane %v1441, 2
        %v1516 = vsel %vm1486, %v1514, %v1515
        %v1517 = vrot.slane %v1442, 2
        %v1518 = vrot.slane %v1444, 2
        %v1519 = vsel %vm1486, %v1517, %v1518
        %v1520 = vrot.slane %v1443, 2
        %v1521 = vrot.slane %v1445, 2
        %v1522 = vsel %vm1486, %v1520, %v1521
        %v1523 = vrot.slane %v1446, 2
        %v1524 = vrot.slane %v1448, 2
        %v1525 = vsel %vm1486, %v1523, %v1524
        %v1526 = vrot.slane %v1447, 2
        %v1527 = vrot.slane %v1449, 2
        %v1528 = vsel %vm1486, %v1526, %v1527
        %v1529 = vrot.slane %v1450, 2
        %v1530 = vrot.slane %v1452, 2
        %v1531 = vsel %vm1486, %v1529, %v1530
        %v1532 = vrot.slane %v1451, 2
        %v1533 = vrot.slane %v1453, 2
        %v1534 = vsel %vm1486, %v1532, %v1533
        %v1551 = vadd.f32 %v1374, %v1489
        %v1552 = vadd.f32 %v1375, %v1492
        %v1553 = vadd.f32 %v1376, %v1495
        %v1554 = vadd.f32 %v1377, %v1498
        %v1555 = vadd.f32 %v1378, %v1501
        %v1556 = vadd.f32 %v1379, %v1504
        %v1557 = vadd.f32 %v1380, %v1507
        %v1558 = vadd.f32 %v1381, %v1510
        %v1559 = vadd.f32 %v1382, %v1513
        %v1560 = vadd.f32 %v1383, %v1516
        %v1561 = vadd.f32 %v1384, %v1519
        %v1562 = vadd.f32 %v1385, %v1522
        %v1563 = vadd.f32 %v1386, %v1525
        %v1564 = vadd.f32 %v1387, %v1528
        %v1565 = vadd.f32 %v1388, %v1531
        %v1566 = vadd.f32 %v1389, %v1534
        %v1567 = vperm.slane %v785, 5
        %v1568 = vperm.slane %v786, 5
        %v1569 = vmul.f32 %v1402, %v1567
        %v1570 = vmul.f32 %v1403, %v1568
        %v1571 = vmul.f32 %v933, %v1567
        %v1572 = vmul.f32 %v934, %v1568
        %v1573 = vmul.f32 %v1404, %v1567
        %v1574 = vmul.f32 %v1405, %v1568
        %v1575 = vmul.f32 %v935, %v1567
        %v1576 = vmul.f32 %v936, %v1568
        %v1577 = vmul.f32 %v1406, %v1567
        %v1578 = vmul.f32 %v1407, %v1568
        %v1579 = vmul.f32 %v937, %v1567
        %v1580 = vmul.f32 %v938, %v1568
        %v1581 = vmul.f32 %v1408, %v1567
        %v1582 = vmul.f32 %v1409, %v1568
        %v1583 = vmul.f32 %v939, %v1567
        %v1584 = vmul.f32 %v940, %v1568
        %v1585 = vmul.f32 %v1410, %v1567
        %v1586 = vmul.f32 %v1411, %v1568
        %v1587 = vmul.f32 %v941, %v1567
        %v1588 = vmul.f32 %v942, %v1568
        %v1589 = vmul.f32 %v1412, %v1567
        %v1590 = vmul.f32 %v1413, %v1568
        %v1591 = vmul.f32 %v943, %v1567
        %v1592 = vmul.f32 %v944, %v1568
        %v1593 = vmul.f32 %v1414, %v1567
        %v1594 = vmul.f32 %v1415, %v1568
        %v1595 = vmul.f32 %v945, %v1567
        %v1596 = vmul.f32 %v946, %v1568
        %v1597 = vmul.f32 %v1416, %v1567
        %v1598 = vmul.f32 %v1417, %v1568
        %v1599 = vmul.f32 %v947, %v1567
        %v1600 = vmul.f32 %v948, %v1568
        %v1633 = vrot.slane %v1569, 2
        %v1634 = vrot.slane %v1571, 2
        %v1635 = vsel %vm1486, %v1633, %v1634
        %v1636 = vrot.slane %v1570, 2
        %v1637 = vrot.slane %v1572, 2
        %v1638 = vsel %vm1486, %v1636, %v1637
        %v1639 = vrot.slane %v1573, 2
        %v1640 = vrot.slane %v1575, 2
        %v1641 = vsel %vm1486, %v1639, %v1640
        %v1642 = vrot.slane %v1574, 2
        %v1643 = vrot.slane %v1576, 2
        %v1644 = vsel %vm1486, %v1642, %v1643
        %v1645 = vrot.slane %v1577, 2
        %v1646 = vrot.slane %v1579, 2
        %v1647 = vsel %vm1486, %v1645, %v1646
        %v1648 = vrot.slane %v1578, 2
        %v1649 = vrot.slane %v1580, 2
        %v1650 = vsel %vm1486, %v1648, %v1649
        %v1651 = vrot.slane %v1581, 2
        %v1652 = vrot.slane %v1583, 2
        %v1653 = vsel %vm1486, %v1651, %v1652
        %v1654 = vrot.slane %v1582, 2
        %v1655 = vrot.slane %v1584, 2
        %v1656 = vsel %vm1486, %v1654, %v1655
        %v1657 = vrot.slane %v1585, 2
        %v1658 = vrot.slane %v1587, 2
        %v1659 = vsel %vm1486, %v1657, %v1658
        %v1660 = vrot.slane %v1586, 2
        %v1661 = vrot.slane %v1588, 2
        %v1662 = vsel %vm1486, %v1660, %v1661
        %v1663 = vrot.slane %v1589, 2
        %v1664 = vrot.slane %v1591, 2
        %v1665 = vsel %vm1486, %v1663, %v1664
        %v1666 = vrot.slane %v1590, 2
        %v1667 = vrot.slane %v1592, 2
        %v1668 = vsel %vm1486, %v1666, %v1667
        %v1669 = vrot.slane %v1593, 2
        %v1670 = vrot.slane %v1595, 2
        %v1671 = vsel %vm1486, %v1669, %v1670
        %v1672 = vrot.slane %v1594, 2
        %v1673 = vrot.slane %v1596, 2
        %v1674 = vsel %vm1486, %v1672, %v1673
        %v1675 = vrot.slane %v1597, 2
        %v1676 = vrot.slane %v1599, 2
        %v1677 = vsel %vm1486, %v1675, %v1676
        %v1678 = vrot.slane %v1598, 2
        %v1679 = vrot.slane %v1600, 2
        %v1680 = vsel %vm1486, %v1678, %v1679
        %v1697 = vadd.f32 %v1551, %v1635
        %v1698 = vadd.f32 %v1552, %v1638
        %v1699 = vadd.f32 %v1553, %v1641
        %v1700 = vadd.f32 %v1554, %v1644
        %v1701 = vadd.f32 %v1555, %v1647
        %v1702 = vadd.f32 %v1556, %v1650
        %v1703 = vadd.f32 %v1557, %v1653
        %v1704 = vadd.f32 %v1558, %v1656
        %v1705 = vadd.f32 %v1559, %v1659
        %v1706 = vadd.f32 %v1560, %v1662
        %v1707 = vadd.f32 %v1561, %v1665
        %v1708 = vadd.f32 %v1562, %v1668
        %v1709 = vadd.f32 %v1563, %v1671
        %v1710 = vadd.f32 %v1564, %v1674
        %v1711 = vadd.f32 %v1565, %v1677
        %v1712 = vadd.f32 %v1566, %v1680
        %v1713 = vperm.slane %v787, 0
        %v1714 = vperm.slane %v788, 0
        %v1715 = vmul.f32 %v1404, %v1713
        %v1716 = vmul.f32 %v1405, %v1714
        %v1717 = vmul.f32 %v935, %v1713
        %v1718 = vmul.f32 %v936, %v1714
        %v1719 = vmul.f32 %v1406, %v1713
        %v1720 = vmul.f32 %v1407, %v1714
        %v1721 = vmul.f32 %v937, %v1713
        %v1722 = vmul.f32 %v938, %v1714
        %v1723 = vmul.f32 %v1408, %v1713
        %v1724 = vmul.f32 %v1409, %v1714
        %v1725 = vmul.f32 %v939, %v1713
        %v1726 = vmul.f32 %v940, %v1714
        %v1727 = vmul.f32 %v1410, %v1713
        %v1728 = vmul.f32 %v1411, %v1714
        %v1729 = vmul.f32 %v941, %v1713
        %v1730 = vmul.f32 %v942, %v1714
        %v1731 = vmul.f32 %v1412, %v1713
        %v1732 = vmul.f32 %v1413, %v1714
        %v1733 = vmul.f32 %v943, %v1713
        %v1734 = vmul.f32 %v944, %v1714
        %v1735 = vmul.f32 %v1414, %v1713
        %v1736 = vmul.f32 %v1415, %v1714
        %v1737 = vmul.f32 %v945, %v1713
        %v1738 = vmul.f32 %v946, %v1714
        %v1739 = vmul.f32 %v1416, %v1713
        %v1740 = vmul.f32 %v1417, %v1714
        %v1741 = vmul.f32 %v947, %v1713
        %v1742 = vmul.f32 %v948, %v1714
        %v1743 = vmul.f32 %v1418, %v1713
        %v1744 = vmul.f32 %v1419, %v1714
        %v1745 = vmul.f32 %v949, %v1713
        %v1746 = vmul.f32 %v950, %v1714
        %v1779 = vrot.slane %v1715, 2
        %v1780 = vrot.slane %v1717, 2
        %v1781 = vsel %vm1486, %v1779, %v1780
        %v1782 = vrot.slane %v1716, 2
        %v1783 = vrot.slane %v1718, 2
        %v1784 = vsel %vm1486, %v1782, %v1783
        %v1785 = vrot.slane %v1719, 2
        %v1786 = vrot.slane %v1721, 2
        %v1787 = vsel %vm1486, %v1785, %v1786
        %v1788 = vrot.slane %v1720, 2
        %v1789 = vrot.slane %v1722, 2
        %v1790 = vsel %vm1486, %v1788, %v1789
        %v1791 = vrot.slane %v1723, 2
        %v1792 = vrot.slane %v1725, 2
        %v1793 = vsel %vm1486, %v1791, %v1792
        %v1794 = vrot.slane %v1724, 2
        %v1795 = vrot.slane %v1726, 2
        %v1796 = vsel %vm1486, %v1794, %v1795
        %v1797 = vrot.slane %v1727, 2
        %v1798 = vrot.slane %v1729, 2
        %v1799 = vsel %vm1486, %v1797, %v1798
        %v1800 = vrot.slane %v1728, 2
        %v1801 = vrot.slane %v1730, 2
        %v1802 = vsel %vm1486, %v1800, %v1801
        %v1803 = vrot.slane %v1731, 2
        %v1804 = vrot.slane %v1733, 2
        %v1805 = vsel %vm1486, %v1803, %v1804
        %v1806 = vrot.slane %v1732, 2
        %v1807 = vrot.slane %v1734, 2
        %v1808 = vsel %vm1486, %v1806, %v1807
        %v1809 = vrot.slane %v1735, 2
        %v1810 = vrot.slane %v1737, 2
        %v1811 = vsel %vm1486, %v1809, %v1810
        %v1812 = vrot.slane %v1736, 2
        %v1813 = vrot.slane %v1738, 2
        %v1814 = vsel %vm1486, %v1812, %v1813
        %v1815 = vrot.slane %v1739, 2
        %v1816 = vrot.slane %v1741, 2
        %v1817 = vsel %vm1486, %v1815, %v1816
        %v1818 = vrot.slane %v1740, 2
        %v1819 = vrot.slane %v1742, 2
        %v1820 = vsel %vm1486, %v1818, %v1819
        %v1821 = vrot.slane %v1743, 2
        %v1822 = vrot.slane %v1745, 2
        %v1823 = vsel %vm1486, %v1821, %v1822
        %v1824 = vrot.slane %v1744, 2
        %v1825 = vrot.slane %v1746, 2
        %v1826 = vsel %vm1486, %v1824, %v1825
        %v1843 = vadd.f32 %v1697, %v1781
        %v1844 = vadd.f32 %v1698, %v1784
        %v1845 = vadd.f32 %v1699, %v1787
        %v1846 = vadd.f32 %v1700, %v1790
        %v1847 = vadd.f32 %v1701, %v1793
        %v1848 = vadd.f32 %v1702, %v1796
        %v1849 = vadd.f32 %v1703, %v1799
        %v1850 = vadd.f32 %v1704, %v1802
        %v1851 = vadd.f32 %v1705, %v1805
        %v1852 = vadd.f32 %v1706, %v1808
        %v1853 = vadd.f32 %v1707, %v1811
        %v1854 = vadd.f32 %v1708, %v1814
        %v1855 = vadd.f32 %v1709, %v1817
        %v1856 = vadd.f32 %v1710, %v1820
        %v1857 = vadd.f32 %v1711, %v1823
        %v1858 = vadd.f32 %v1712, %v1826
        %v1859 = vpack.c.bf16 %v1845, %v1843
        %v1860 = vpack.c.bf16 %v1846, %v1844
        %v1861 = vpack.c.bf16 %v1849, %v1847
        %v1862 = vpack.c.bf16 %v1850, %v1848
        %v1863 = vpack.c.bf16 %v1853, %v1851
        %v1864 = vpack.c.bf16 %v1854, %v1852
        %v1865 = vpack.c.bf16 %v1857, %v1855
        %v1866 = vpack.c.bf16 %v1858, %v1856
        %v1867 = vld [vmem:[%s439] sm:$0xff]
        %v1868 = vld [vmem:[%s439 + $0x8] sm:$0xff]
        %v1869 = vld [vmem:[%s439 + $0x10] sm:$0xff]
        %v1870 = vld [vmem:[%s439 + $0x18] sm:$0xff]
        %v1871 = vld [vmem:[%s439 + $0x20] sm:$0xff]
        %v1872 = vld [vmem:[%s439 + $0x28] sm:$0xff]
        %v1873 = vld [vmem:[%s439 + $0x30] sm:$0xff]
        %v1874 = vld [vmem:[%s439 + $0x38] sm:$0xff]
        %v1875 = vld [vmem:[%s439 + $0x40] sm:$0xff]
        %v1876 = vld [vmem:[%s439 + $0x48] sm:$0xff]
        %v1877 = vld [vmem:[%s439 + $0x50] sm:$0xff]
        %v1878 = vld [vmem:[%s439 + $0x58] sm:$0xff]
        %v1879 = vld [vmem:[%s439 + $0x60] sm:$0xff]
        %v1880 = vld [vmem:[%s439 + $0x68] sm:$0xff]
        %v1881 = vld [vmem:[%s439 + $0x70] sm:$0xff]
        %v1882 = vld [vmem:[%s439 + $0x78] sm:$0xff]
        %v1883 = vld [vmem:[%s439 + $0x80] sm:$0xff]
        %v1884 = vld [vmem:[%s439 + $0x88] sm:$0xff]
        %v1885 = vld [vmem:[%s439 + $0x90] sm:$0xff]
        %v1886 = vld [vmem:[%s439 + $0x98] sm:$0xff]
        %v1887 = vld [vmem:[%s439 + $0xa0] sm:$0xff]
        %v1888 = vld [vmem:[%s439 + $0xa8] sm:$0xff]
        %v1889 = vld [vmem:[%s439 + $0xb0] sm:$0xff]
        %v1890 = vld [vmem:[%s439 + $0xb8] sm:$0xff]
        %v1891 = vld [vmem:[%s443] sm:$0x3]
        %v1893 = vperm.slane %v1891, 0
        %v1894 = vperm.slane %v1891, 1
        %v1921 = vunpack.c.l.b16 %v1867
        %v1922 = vunpack.c.h.b16 %v1867
        %v1923 = vunpack.c.l.b16 %v1868
        %v1924 = vunpack.c.h.b16 %v1868
        %v1925 = vunpack.c.l.b16 %v1869
        %v1926 = vunpack.c.h.b16 %v1869
        %v1927 = vunpack.c.l.b16 %v1870
        %v1928 = vunpack.c.h.b16 %v1870
        %v1929 = vunpack.c.l.b16 %v1871
        %v1930 = vunpack.c.h.b16 %v1871
        %v1931 = vunpack.c.l.b16 %v1872
        %v1932 = vunpack.c.h.b16 %v1872
        %v1933 = vunpack.c.l.b16 %v1873
        %v1934 = vunpack.c.h.b16 %v1873
        %v1935 = vunpack.c.l.b16 %v1874
        %v1936 = vunpack.c.h.b16 %v1874
        %v1937 = vunpack.c.l.b16 %v1875
        %v1938 = vunpack.c.h.b16 %v1875
        %v1939 = vunpack.c.l.b16 %v1876
        %v1940 = vunpack.c.h.b16 %v1876
        %v1941 = vunpack.c.l.b16 %v1877
        %v1942 = vunpack.c.h.b16 %v1877
        %v1943 = vunpack.c.l.b16 %v1878
        %v1944 = vunpack.c.h.b16 %v1878
        %v1945 = vunpack.c.l.b16 %v1879
        %v1946 = vunpack.c.h.b16 %v1879
        %v1947 = vunpack.c.l.b16 %v1880
        %v1948 = vunpack.c.h.b16 %v1880
        %v1949 = vunpack.c.l.b16 %v1881
        %v1950 = vunpack.c.h.b16 %v1881
        %v1951 = vunpack.c.l.b16 %v1882
        %v1952 = vunpack.c.h.b16 %v1882
        %v1953 = vunpack.c.l.b16 %v1883
        %v1954 = vunpack.c.h.b16 %v1883
        %v1955 = vunpack.c.l.b16 %v1884
        %v1956 = vunpack.c.h.b16 %v1884
        %v1957 = vunpack.c.l.b16 %v1885
        %v1958 = vunpack.c.h.b16 %v1885
        %v1959 = vunpack.c.l.b16 %v1886
        %v1960 = vunpack.c.h.b16 %v1886
        %v1961 = vunpack.c.l.b16 %v1887
        %v1962 = vunpack.c.h.b16 %v1887
        %v1963 = vunpack.c.l.b16 %v1888
        %v1964 = vunpack.c.h.b16 %v1888
        %v1965 = vunpack.c.l.b16 %v1889
        %v1966 = vunpack.c.h.b16 %v1889
        %v1967 = vunpack.c.l.b16 %v1890
        %v1968 = vunpack.c.h.b16 %v1890
        %v1969 = vpack.c.b16 %v1923, %v1921
        %v1970 = vpack.c.b16 %v1924, %v1922
        %v1971 = vpack.c.b16 %v1927, %v1925
        %v1972 = vpack.c.b16 %v1928, %v1926
        %v1973 = vpack.c.b16 %v1931, %v1929
        %v1974 = vpack.c.b16 %v1932, %v1930
        %v1975 = vpack.c.b16 %v1935, %v1933
        %v1976 = vpack.c.b16 %v1936, %v1934
        %v1977 = vpack.c.b16 %v1939, %v1937
        %v1978 = vpack.c.b16 %v1940, %v1938
        %v1979 = vpack.c.b16 %v1943, %v1941
        %v1980 = vpack.c.b16 %v1944, %v1942
        %v1981 = vpack.c.b16 %v1947, %v1945
        %v1982 = vpack.c.b16 %v1948, %v1946
        %v1983 = vpack.c.b16 %v1951, %v1949
        %v1984 = vpack.c.b16 %v1952, %v1950
        %v1985 = vpack.c.b16 %v1955, %v1953
        %v1986 = vpack.c.b16 %v1956, %v1954
        %v1987 = vpack.c.b16 %v1959, %v1957
        %v1988 = vpack.c.b16 %v1960, %v1958
        %v1989 = vpack.c.b16 %v1963, %v1961
        %v1990 = vpack.c.b16 %v1964, %v1962
        %v1991 = vpack.c.b16 %v1967, %v1965
        %v1992 = vpack.c.b16 %v1968, %v1966
        %vm2017 = vcmask 523264
        %v2019 = vsel %vm2017, %v1860, 0
        %v2022 = vsel %vm2017, %v1862, 0
        %v2025 = vsel %vm2017, %v1864, 0
        %v2028 = vsel %vm2017, %v1866, 0
        %2030 = vmatpush.bf16.msra.mxu0 %v1983
        %2031 = vmatpush.bf16.msra.mxu0 %v1981
        %2032 = vmatpush.bf16.msra.mxu0 %v1979
        %2033 = vmatpush.bf16.msra.mxu0 %v1977
        %2034 = vmatpush.bf16.msra.mxu0 %v1975
        %2035 = vmatpush.bf16.msra.mxu0 %v1973
        %2036 = vmatpush.bf16.msra.mxu0 %v1971
        %2037 = vmatpush.bf16.msra.mxu0 %v1969
        %2038 = vmatmul.bf16.gmra.mxu0 %v1859
        %v2039 = vpop.f32.mrf.mxu0
        %v2040 = vadd.f32 %v1893, %v2039
        %v2041 = vpop.f32.mrf.mxu0
        %v2042 = vadd.f32 %v1893, %v2041
        %2043 = vmatmul.bf16.gmra.mxu0 %v1861
        %v2044 = vpop.f32.mrf.mxu0
        %v2045 = vadd.f32 %v1893, %v2044
        %v2046 = vpop.f32.mrf.mxu0
        %v2047 = vadd.f32 %v1893, %v2046
        %2048 = vmatmul.bf16.gmra.mxu0 %v1863
        %v2049 = vpop.f32.mrf.mxu0
        %v2050 = vadd.f32 %v1893, %v2049
        %v2051 = vpop.f32.mrf.mxu0
        %v2052 = vadd.f32 %v1893, %v2051
        %2053 = vmatmul.bf16.gmra.mxu0 %v1865
        %v2054 = vpop.f32.mrf.mxu0
        %v2055 = vadd.f32 %v1893, %v2054
        %v2056 = vpop.f32.mrf.mxu0
        %v2057 = vadd.f32 %v1893, %v2056
        %2058 = vdwg.mxu0
        %2059 = vmatpush.bf16.msra.mxu0 0
        %2060 = vmatpush.bf16.msra.mxu0 0
        %2061 = vmatpush.bf16.msra.mxu0 0
        %2062 = vmatpush.bf16.msra.mxu0 0
        %2063 = vmatpush.bf16.msra.mxu0 %v1991
        %2064 = vmatpush.bf16.msra.mxu0 %v1989
        %2065 = vmatpush.bf16.msra.mxu0 %v1987
        %2066 = vmatpush.bf16.msra.mxu0 %v1985
        %2067 = vmatmul.bf16.gmra.mxu0 %v2019
        %v2068 = vpop.f32.mrf.mxu0
        %v2069 = vadd.f32 %v2040, %v2068
        %v2070 = vpop.f32.mrf.mxu0
        %v2071 = vadd.f32 %v2042, %v2070
        %2072 = vmatmul.bf16.gmra.mxu0 %v2022
        %v2073 = vpop.f32.mrf.mxu0
        %v2074 = vadd.f32 %v2045, %v2073
        %v2075 = vpop.f32.mrf.mxu0
        %v2076 = vadd.f32 %v2047, %v2075
        %2077 = vmatmul.bf16.gmra.mxu0 %v2025
        %v2078 = vpop.f32.mrf.mxu0
        %v2079 = vadd.f32 %v2050, %v2078
        %v2080 = vpop.f32.mrf.mxu0
        %v2081 = vadd.f32 %v2052, %v2080
        %2082 = vmatmul.bf16.gmra.mxu0 %v2028
        %v2083 = vpop.f32.mrf.mxu0
        %v2084 = vadd.f32 %v2055, %v2083
        %v2085 = vpop.f32.mrf.mxu0
        %v2086 = vadd.f32 %v2057, %v2085
        %2087 = vdwg.mxu0
        %2088 = vmatpush.bf16.msra.mxu0 %v1984
        %2089 = vmatpush.bf16.msra.mxu0 %v1982
        %2090 = vmatpush.bf16.msra.mxu0 %v1980
        %2091 = vmatpush.bf16.msra.mxu0 %v1978
        %2092 = vmatpush.bf16.msra.mxu0 %v1976
        %2093 = vmatpush.bf16.msra.mxu0 %v1974
        %2094 = vmatpush.bf16.msra.mxu0 %v1972
        %2095 = vmatpush.bf16.msra.mxu0 %v1970
        %2096 = vmatmul.bf16.gmra.mxu0 %v1859
        %v2097 = vpop.f32.mrf.mxu0
        %v2098 = vadd.f32 %v1894, %v2097
        %v2099 = vpop.f32.mrf.mxu0
        %v2100 = vadd.f32 %v1894, %v2099
        %2101 = vmatmul.bf16.gmra.mxu0 %v1861
        %v2102 = vpop.f32.mrf.mxu0
        %v2103 = vadd.f32 %v1894, %v2102
        %v2104 = vpop.f32.mrf.mxu0
        %v2105 = vadd.f32 %v1894, %v2104
        %2106 = vmatmul.bf16.gmra.mxu0 %v1863
        %v2107 = vpop.f32.mrf.mxu0
        %v2108 = vadd.f32 %v1894, %v2107
        %v2109 = vpop.f32.mrf.mxu0
        %v2110 = vadd.f32 %v1894, %v2109
        %2111 = vmatmul.bf16.gmra.mxu0 %v1865
        %v2112 = vpop.f32.mrf.mxu0
        %v2113 = vadd.f32 %v1894, %v2112
        %v2114 = vpop.f32.mrf.mxu0
        %v2115 = vadd.f32 %v1894, %v2114
        %2116 = vdwg.mxu0
        %2117 = vmatpush.bf16.msra.mxu0 0
        %2118 = vmatpush.bf16.msra.mxu0 0
        %2119 = vmatpush.bf16.msra.mxu0 0
        %2120 = vmatpush.bf16.msra.mxu0 0
        %2121 = vmatpush.bf16.msra.mxu0 %v1992
        %2122 = vmatpush.bf16.msra.mxu0 %v1990
        %2123 = vmatpush.bf16.msra.mxu0 %v1988
        %2124 = vmatpush.bf16.msra.mxu0 %v1986
        %2125 = vmatmul.bf16.gmra.mxu0 %v2019
        %v2126 = vpop.f32.mrf.mxu0
        %v2127 = vadd.f32 %v2098, %v2126
        %v2128 = vpop.f32.mrf.mxu0
        %v2129 = vadd.f32 %v2100, %v2128
        %2130 = vmatmul.bf16.gmra.mxu0 %v2022
        %v2131 = vpop.f32.mrf.mxu0
        %v2132 = vadd.f32 %v2103, %v2131
        %v2133 = vpop.f32.mrf.mxu0
        %v2134 = vadd.f32 %v2105, %v2133
        %2135 = vmatmul.bf16.gmra.mxu0 %v2025
        %v2136 = vpop.f32.mrf.mxu0
        %v2137 = vadd.f32 %v2108, %v2136
        %v2138 = vpop.f32.mrf.mxu0
        %v2139 = vadd.f32 %v2110, %v2138
        %2140 = vmatmul.bf16.gmra.mxu0 %v2028
        %v2141 = vpop.f32.mrf.mxu0
        %v2142 = vadd.f32 %v2113, %v2141
        %v2143 = vpop.f32.mrf.mxu0
        %v2144 = vadd.f32 %v2115, %v2143
        %2145 = vdwg.mxu0
        %s2146 = smul.u32 %s31, 2
        %s2147 = sld [smem:[#allocation4 + %s2146]]
        %vm2148 = vcmp.ge.f32.partialorder %v2069, 0.0
        %vm2149 = vcmp.ge.f32.partialorder %v2127, 0.0
        %vm2150 = vcmp.ge.f32.partialorder %v2071, 0.0
        %vm2151 = vcmp.ge.f32.partialorder %v2129, 0.0
        %vm2152 = vcmp.ge.f32.partialorder %v2074, 0.0
        %vm2153 = vcmp.ge.f32.partialorder %v2132, 0.0
        %vm2154 = vcmp.ge.f32.partialorder %v2076, 0.0
        %vm2155 = vcmp.ge.f32.partialorder %v2134, 0.0
        %vm2156 = vcmp.ge.f32.partialorder %v2079, 0.0
        %vm2157 = vcmp.ge.f32.partialorder %v2137, 0.0
        %vm2158 = vcmp.ge.f32.partialorder %v2081, 0.0
        %vm2159 = vcmp.ge.f32.partialorder %v2139, 0.0
        %vm2160 = vcmp.ge.f32.partialorder %v2084, 0.0
        %vm2161 = vcmp.ge.f32.partialorder %v2142, 0.0
        %vm2162 = vcmp.ge.f32.partialorder %v2086, 0.0
        %vm2163 = vcmp.ge.f32.partialorder %v2144, 0.0
        %v2164 = vstv %s2147
        %v2165 = vmul.f32 %v2164, %v2069
        %v2166 = vmul.f32 %v2164, %v2127
        %v2167 = vmul.f32 %v2164, %v2071
        %v2168 = vmul.f32 %v2164, %v2129
        %v2169 = vmul.f32 %v2164, %v2074
        %v2170 = vmul.f32 %v2164, %v2132
        %v2171 = vmul.f32 %v2164, %v2076
        %v2172 = vmul.f32 %v2164, %v2134
        %v2173 = vmul.f32 %v2164, %v2079
        %v2174 = vmul.f32 %v2164, %v2137
        %v2175 = vmul.f32 %v2164, %v2081
        %v2176 = vmul.f32 %v2164, %v2139
        %v2177 = vmul.f32 %v2164, %v2084
        %v2178 = vmul.f32 %v2164, %v2142
        %v2179 = vmul.f32 %v2164, %v2086
        %v2180 = vmul.f32 %v2164, %v2144
        %v2181 = vsel %vm2148, %v2069, %v2165
        %v2182 = vsel %vm2149, %v2127, %v2166
        %v2183 = vsel %vm2150, %v2071, %v2167
        %v2184 = vsel %vm2151, %v2129, %v2168
        %v2185 = vsel %vm2152, %v2074, %v2169
        %v2186 = vsel %vm2153, %v2132, %v2170
        %v2187 = vsel %vm2154, %v2076, %v2171
        %v2188 = vsel %vm2155, %v2134, %v2172
        %v2189 = vsel %vm2156, %v2079, %v2173
        %v2190 = vsel %vm2157, %v2137, %v2174
        %v2191 = vsel %vm2158, %v2081, %v2175
        %v2192 = vsel %vm2159, %v2139, %v2176
        %v2193 = vsel %vm2160, %v2084, %v2177
        %v2194 = vsel %vm2161, %v2142, %v2178
        %v2195 = vsel %vm2162, %v2086, %v2179
        %v2196 = vsel %vm2163, %v2144, %v2180
        %v2197 = vpack.c.bf16 %v2182, %v2181
        %v2198 = vpack.c.bf16 %v2184, %v2183
        %v2199 = vpack.c.bf16 %v2186, %v2185
        %v2200 = vpack.c.bf16 %v2188, %v2187
        %v2201 = vpack.c.bf16 %v2190, %v2189
        %v2202 = vpack.c.bf16 %v2192, %v2191
        %v2203 = vpack.c.bf16 %v2194, %v2193
        %v2204 = vpack.c.bf16 %v2196, %v2195
        %v2206 = vshrl.u32 %v2197, 16
        %v2208 = vrot.slane %v2206, 7
        %v2209 = vshll.u32 %v2197, 16
        %v2211 = vor.u32 %v2208, %v2209
        %v2212 = vrot.slane %v2208, 4
        %v2214 = vshrl.u32 %v2198, 16
        %v2216 = vrot.slane %v2214, 7
        %v2217 = vshll.u32 %v2198, 16
        %v2219 = vor.u32 %v2216, %v2217
        %v2220 = vrot.slane %v2216, 4
        %v2222 = vshrl.u32 %v2199, 16
        %v2224 = vrot.slane %v2222, 7
        %v2225 = vshll.u32 %v2199, 16
        %v2227 = vor.u32 %v2224, %v2225
        %v2228 = vrot.slane %v2224, 4
        %v2230 = vshrl.u32 %v2200, 16
        %v2232 = vrot.slane %v2230, 7
        %v2233 = vshll.u32 %v2200, 16
        %v2235 = vor.u32 %v2232, %v2233
        %v2236 = vrot.slane %v2232, 4
        %v2238 = vshrl.u32 %v2201, 16
        %v2240 = vrot.slane %v2238, 7
        %v2241 = vshll.u32 %v2201, 16
        %v2243 = vor.u32 %v2240, %v2241
        %v2244 = vrot.slane %v2240, 4
        %v2246 = vshrl.u32 %v2202, 16
        %v2248 = vrot.slane %v2246, 7
        %v2249 = vshll.u32 %v2202, 16
        %v2251 = vor.u32 %v2248, %v2249
        %v2252 = vrot.slane %v2248, 4
        %v2254 = vshrl.u32 %v2203, 16
        %v2256 = vrot.slane %v2254, 7
        %v2257 = vshll.u32 %v2203, 16
        %v2259 = vor.u32 %v2256, %v2257
        %v2260 = vrot.slane %v2256, 4
        %v2262 = vshrl.u32 %v2204, 16
        %v2264 = vrot.slane %v2262, 7
        %v2265 = vshll.u32 %v2204, 16
        %v2267 = vor.u32 %v2264, %v2265
        %v2268 = vrot.slane %v2264, 4
        %s2285 = scalar_lea.vmem [#allocation3], 16
        %vm2286 = vcmask 1043456
        %vm2287 = vsmask.f32 7938
        %vm2288 = vmand %vm2286, %vm2287
        %vm2289 = vcmask 523268
        %vm2290 = vsmask.f32 7954
        %vm2291 = vmand %vm2289, %vm2290
        %vm2292 = vmor %vm2291, %vm2288
        %v2293 = vld [vmem:[%s2285] sm:$0xff]
        %v2294 = vsel %vm2292, %v2211, %v2293
        %2295 = vst [vmem:[%s2285] sm:$0xff] %v2294
        %vm2296 = vcmask 1040384
        %vm2297 = vsmask.f32 256
        %vm2298 = vmand %vm2296, %vm2297
        %vm2299 = vcmask 520196
        %vm2300 = vsmask.f32 4352
        %vm2301 = vmand %vm2299, %vm2300
        %vm2302 = vmor %vm2301, %vm2298
        %v2303 = vld [vmem:[%s2285 + $0x8] sm:$0x11]
        %v2304 = vsel %vm2302, %v2212, %v2303
        %2305 = vst [vmem:[%s2285 + $0x8] sm:$0x11] %v2304
        %v2306 = vld [vmem:[%s2285 + $0x10] sm:$0xff]
        %v2307 = vsel %vm2292, %v2219, %v2306
        %2308 = vst [vmem:[%s2285 + $0x10] sm:$0xff] %v2307
        %v2309 = vld [vmem:[%s2285 + $0x18] sm:$0x11]
        %v2310 = vsel %vm2302, %v2220, %v2309
        %2311 = vst [vmem:[%s2285 + $0x18] sm:$0x11] %v2310
        %v2312 = vld [vmem:[%s2285 + $0x20] sm:$0xff]
        %v2313 = vsel %vm2292, %v2227, %v2312
        %2314 = vst [vmem:[%s2285 + $0x20] sm:$0xff] %v2313
        %v2315 = vld [vmem:[%s2285 + $0x28] sm:$0x11]
        %v2316 = vsel %vm2302, %v2228, %v2315
        %2317 = vst [vmem:[%s2285 + $0x28] sm:$0x11] %v2316
        %v2318 = vld [vmem:[%s2285 + $0x30] sm:$0xff]
        %v2319 = vsel %vm2292, %v2235, %v2318
        %2320 = vst [vmem:[%s2285 + $0x30] sm:$0xff] %v2319
        %v2321 = vld [vmem:[%s2285 + $0x38] sm:$0x11]
        %v2322 = vsel %vm2302, %v2236, %v2321
        %2323 = vst [vmem:[%s2285 + $0x38] sm:$0x11] %v2322
        %v2324 = vld [vmem:[%s2285 + $0x40] sm:$0xff]
        %v2325 = vsel %vm2292, %v2243, %v2324
        %2326 = vst [vmem:[%s2285 + $0x40] sm:$0xff] %v2325
        %v2327 = vld [vmem:[%s2285 + $0x48] sm:$0x11]
        %v2328 = vsel %vm2302, %v2244, %v2327
        %2329 = vst [vmem:[%s2285 + $0x48] sm:$0x11] %v2328
        %v2330 = vld [vmem:[%s2285 + $0x50] sm:$0xff]
        %v2331 = vsel %vm2292, %v2251, %v2330
        %2332 = vst [vmem:[%s2285 + $0x50] sm:$0xff] %v2331
        %v2333 = vld [vmem:[%s2285 + $0x58] sm:$0x11]
        %v2334 = vsel %vm2302, %v2252, %v2333
        %2335 = vst [vmem:[%s2285 + $0x58] sm:$0x11] %v2334
        %v2336 = vld [vmem:[%s2285 + $0x60] sm:$0xff]
        %v2337 = vsel %vm2292, %v2259, %v2336
        %2338 = vst [vmem:[%s2285 + $0x60] sm:$0xff] %v2337
        %v2339 = vld [vmem:[%s2285 + $0x68] sm:$0x11]
        %v2340 = vsel %vm2302, %v2260, %v2339
        %2341 = vst [vmem:[%s2285 + $0x68] sm:$0x11] %v2340
        %v2342 = vld [vmem:[%s2285 + $0x70] sm:$0xff]
        %v2343 = vsel %vm2292, %v2267, %v2342
        %2344 = vst [vmem:[%s2285 + $0x70] sm:$0xff] %v2343
        %v2345 = vld [vmem:[%s2285 + $0x78] sm:$0x11]
        %v2346 = vsel %vm2302, %v2268, %v2345
        %2347 = vst [vmem:[%s2285 + $0x78] sm:$0x11] %v2346
        %s2348 = scalar_lea.vmem %s434, 32
        %v2349 = vld [vmem:[%s2348] sm:$0xff]
        %v2350 = vld [vmem:[%s2348 + $0x8] sm:$0xff]
        %v2351 = vld [vmem:[%s2348 + $0x10] sm:$0x1]
        %v2352 = vld [vmem:[%s2348 + $0x18] sm:$0x1]
        %v2353 = vld [vmem:[#allocation3] sm:$0xff]
        %v2354 = vld [vmem:[#allocation3 + $0x10] sm:$0xff]
        %v2355 = vld [vmem:[#allocation3 + $0x20] sm:$0xff]
        %v2356 = vld [vmem:[#allocation3 + $0x30] sm:$0xff]
        %v2357 = vld [vmem:[#allocation3 + $0x40] sm:$0xff]
        %v2358 = vld [vmem:[#allocation3 + $0x50] sm:$0xff]
        %v2359 = vld [vmem:[#allocation3 + $0x60] sm:$0xff]
        %v2360 = vld [vmem:[#allocation3 + $0x70] sm:$0xff]
        %v2361 = vld [vmem:[#allocation3 + $0x80] sm:$0xff]
        %v2362 = vld [vmem:[#allocation3 + $0x90] sm:$0xff]
        %v2363 = vunpack.c.l.bf16 %v2353
        %v2364 = vunpack.c.h.bf16 %v2353
        %v2365 = vunpack.c.l.bf16 %v2354
        %v2366 = vunpack.c.h.bf16 %v2354
        %v2367 = vunpack.c.l.bf16 %v2355
        %v2368 = vunpack.c.h.bf16 %v2355
        %v2369 = vunpack.c.l.bf16 %v2356
        %v2370 = vunpack.c.h.bf16 %v2356
        %v2371 = vunpack.c.l.bf16 %v2357
        %v2372 = vunpack.c.h.bf16 %v2357
        %v2373 = vunpack.c.l.bf16 %v2358
        %v2374 = vunpack.c.h.bf16 %v2358
        %v2375 = vunpack.c.l.bf16 %v2359
        %v2376 = vunpack.c.h.bf16 %v2359
        %v2377 = vunpack.c.l.bf16 %v2360
        %v2378 = vunpack.c.h.bf16 %v2360
        %v2379 = vunpack.c.l.bf16 %v2361
        %v2380 = vunpack.c.h.bf16 %v2361
        %v2381 = vunpack.c.l.bf16 %v2362
        %v2382 = vunpack.c.h.bf16 %v2362
        %v2383 = vperm.slane %v2349, 0
        %v2384 = vperm.slane %v2350, 0
        %v2385 = vmul.f32 %v2363, %v2383
        %v2386 = vmul.f32 %v2364, %v2384
        %v2387 = vmul.f32 %v2365, %v2383
        %v2388 = vmul.f32 %v2366, %v2384
        %v2389 = vmul.f32 %v2367, %v2383
        %v2390 = vmul.f32 %v2368, %v2384
        %v2391 = vmul.f32 %v2369, %v2383
        %v2392 = vmul.f32 %v2370, %v2384
        %v2393 = vmul.f32 %v2371, %v2383
        %v2394 = vmul.f32 %v2372, %v2384
        %v2395 = vmul.f32 %v2373, %v2383
        %v2396 = vmul.f32 %v2374, %v2384
        %v2397 = vmul.f32 %v2375, %v2383
        %v2398 = vmul.f32 %v2376, %v2384
        %v2399 = vmul.f32 %v2377, %v2383
        %v2400 = vmul.f32 %v2378, %v2384
        %v2401 = vadd.f32 %v2385, 0.0
        %v2402 = vadd.f32 %v2386, 0.0
        %v2403 = vadd.f32 %v2387, 0.0
        %v2404 = vadd.f32 %v2388, 0.0
        %v2405 = vadd.f32 %v2389, 0.0
        %v2406 = vadd.f32 %v2390, 0.0
        %v2407 = vadd.f32 %v2391, 0.0
        %v2408 = vadd.f32 %v2392, 0.0
        %v2409 = vadd.f32 %v2393, 0.0
        %v2410 = vadd.f32 %v2394, 0.0
        %v2411 = vadd.f32 %v2395, 0.0
        %v2412 = vadd.f32 %v2396, 0.0
        %v2413 = vadd.f32 %v2397, 0.0
        %v2414 = vadd.f32 %v2398, 0.0
        %v2415 = vadd.f32 %v2399, 0.0
        %v2416 = vadd.f32 %v2400, 0.0
        %v2417 = vperm.slane %v2349, 3
        %v2418 = vperm.slane %v2350, 3
        %v2419 = vmul.f32 %v2365, %v2417
        %v2420 = vmul.f32 %v2366, %v2418
        %v2421 = vmul.f32 %v2367, %v2417
        %v2422 = vmul.f32 %v2368, %v2418
        %v2423 = vmul.f32 %v2369, %v2417
        %v2424 = vmul.f32 %v2370, %v2418
        %v2425 = vmul.f32 %v2371, %v2417
        %v2426 = vmul.f32 %v2372, %v2418
        %v2427 = vmul.f32 %v2373, %v2417
        %v2428 = vmul.f32 %v2374, %v2418
        %v2429 = vmul.f32 %v2375, %v2417
        %v2430 = vmul.f32 %v2376, %v2418
        %v2431 = vmul.f32 %v2377, %v2417
        %v2432 = vmul.f32 %v2378, %v2418
        %v2433 = vmul.f32 %v2379, %v2417
        %v2434 = vmul.f32 %v2380, %v2418
        %v2435 = vadd.f32 %v2401, %v2419
        %v2436 = vadd.f32 %v2402, %v2420
        %v2437 = vadd.f32 %v2403, %v2421
        %v2438 = vadd.f32 %v2404, %v2422
        %v2439 = vadd.f32 %v2405, %v2423
        %v2440 = vadd.f32 %v2406, %v2424
        %v2441 = vadd.f32 %v2407, %v2425
        %v2442 = vadd.f32 %v2408, %v2426
        %v2443 = vadd.f32 %v2409, %v2427
        %v2444 = vadd.f32 %v2410, %v2428
        %v2445 = vadd.f32 %v2411, %v2429
        %v2446 = vadd.f32 %v2412, %v2430
        %v2447 = vadd.f32 %v2413, %v2431
        %v2448 = vadd.f32 %v2414, %v2432
        %v2449 = vadd.f32 %v2415, %v2433
        %v2450 = vadd.f32 %v2416, %v2434
        %v2451 = vperm.slane %v2349, 6
        %v2452 = vperm.slane %v2350, 6
        %v2453 = vmul.f32 %v2367, %v2451
        %v2454 = vmul.f32 %v2368, %v2452
        %v2455 = vmul.f32 %v2369, %v2451
        %v2456 = vmul.f32 %v2370, %v2452
        %v2457 = vmul.f32 %v2371, %v2451
        %v2458 = vmul.f32 %v2372, %v2452
        %v2459 = vmul.f32 %v2373, %v2451
        %v2460 = vmul.f32 %v2374, %v2452
        %v2461 = vmul.f32 %v2375, %v2451
        %v2462 = vmul.f32 %v2376, %v2452
        %v2463 = vmul.f32 %v2377, %v2451
        %v2464 = vmul.f32 %v2378, %v2452
        %v2465 = vmul.f32 %v2379, %v2451
        %v2466 = vmul.f32 %v2380, %v2452
        %v2467 = vmul.f32 %v2381, %v2451
        %v2468 = vmul.f32 %v2382, %v2452
        %v2469 = vadd.f32 %v2435, %v2453
        %v2470 = vadd.f32 %v2436, %v2454
        %v2471 = vadd.f32 %v2437, %v2455
        %v2472 = vadd.f32 %v2438, %v2456
        %v2473 = vadd.f32 %v2439, %v2457
        %v2474 = vadd.f32 %v2440, %v2458
        %v2475 = vadd.f32 %v2441, %v2459
        %v2476 = vadd.f32 %v2442, %v2460
        %v2477 = vadd.f32 %v2443, %v2461
        %v2478 = vadd.f32 %v2444, %v2462
        %v2479 = vadd.f32 %v2445, %v2463
        %v2480 = vadd.f32 %v2446, %v2464
        %v2481 = vadd.f32 %v2447, %v2465
        %v2482 = vadd.f32 %v2448, %v2466
        %v2483 = vadd.f32 %v2449, %v2467
        %v2484 = vadd.f32 %v2450, %v2468
        %v2485 = vld [vmem:[#allocation3 + $0x8] sm:$0x11]
        %v2486 = vld [vmem:[#allocation3 + $0x18] sm:$0x11]
        %v2487 = vld [vmem:[#allocation3 + $0x28] sm:$0x11]
        %v2488 = vld [vmem:[#allocation3 + $0x38] sm:$0x11]
        %v2489 = vld [vmem:[#allocation3 + $0x48] sm:$0x11]
        %v2490 = vld [vmem:[#allocation3 + $0x58] sm:$0x11]
        %v2491 = vld [vmem:[#allocation3 + $0x68] sm:$0x11]
        %v2492 = vld [vmem:[#allocation3 + $0x78] sm:$0x11]
        %v2493 = vld [vmem:[#allocation3 + $0x88] sm:$0x11]
        %v2494 = vld [vmem:[#allocation3 + $0x98] sm:$0x11]
        %v2495 = vunpack.c.l.bf16 %v2485
        %v2496 = vunpack.c.h.bf16 %v2485
        %v2497 = vunpack.c.l.bf16 %v2486
        %v2498 = vunpack.c.h.bf16 %v2486
        %v2499 = vunpack.c.l.bf16 %v2487
        %v2500 = vunpack.c.h.bf16 %v2487
        %v2501 = vunpack.c.l.bf16 %v2488
        %v2502 = vunpack.c.h.bf16 %v2488
        %v2503 = vunpack.c.l.bf16 %v2489
        %v2504 = vunpack.c.h.bf16 %v2489
        %v2505 = vunpack.c.l.bf16 %v2490
        %v2506 = vunpack.c.h.bf16 %v2490
        %v2507 = vunpack.c.l.bf16 %v2491
        %v2508 = vunpack.c.h.bf16 %v2491
        %v2509 = vunpack.c.l.bf16 %v2492
        %v2510 = vunpack.c.h.bf16 %v2492
        %v2511 = vunpack.c.l.bf16 %v2493
        %v2512 = vunpack.c.h.bf16 %v2493
        %v2513 = vunpack.c.l.bf16 %v2494
        %v2514 = vunpack.c.h.bf16 %v2494
        %v2515 = vperm.slane %v2349, 1
        %v2516 = vperm.slane %v2350, 1
        %v2517 = vmul.f32 %v2363, %v2515
        %v2518 = vmul.f32 %v2364, %v2516
        %v2519 = vmul.f32 %v2495, %v2515
        %v2520 = vmul.f32 %v2496, %v2516
        %v2521 = vmul.f32 %v2365, %v2515
        %v2522 = vmul.f32 %v2366, %v2516
        %v2523 = vmul.f32 %v2497, %v2515
        %v2524 = vmul.f32 %v2498, %v2516
        %v2525 = vmul.f32 %v2367, %v2515
        %v2526 = vmul.f32 %v2368, %v2516
        %v2527 = vmul.f32 %v2499, %v2515
        %v2528 = vmul.f32 %v2500, %v2516
        %v2529 = vmul.f32 %v2369, %v2515
        %v2530 = vmul.f32 %v2370, %v2516
        %v2531 = vmul.f32 %v2501, %v2515
        %v2532 = vmul.f32 %v2502, %v2516
        %v2533 = vmul.f32 %v2371, %v2515
        %v2534 = vmul.f32 %v2372, %v2516
        %v2535 = vmul.f32 %v2503, %v2515
        %v2536 = vmul.f32 %v2504, %v2516
        %v2537 = vmul.f32 %v2373, %v2515
        %v2538 = vmul.f32 %v2374, %v2516
        %v2539 = vmul.f32 %v2505, %v2515
        %v2540 = vmul.f32 %v2506, %v2516
        %v2541 = vmul.f32 %v2375, %v2515
        %v2542 = vmul.f32 %v2376, %v2516
        %v2543 = vmul.f32 %v2507, %v2515
        %v2544 = vmul.f32 %v2508, %v2516
        %v2545 = vmul.f32 %v2377, %v2515
        %v2546 = vmul.f32 %v2378, %v2516
        %v2547 = vmul.f32 %v2509, %v2515
        %v2548 = vmul.f32 %v2510, %v2516
        %v2581 = vrot.slane %v2517, 1
        %v2582 = vrot.slane %v2519, 1
        %v2583 = vsel %vm1017, %v2581, %v2582
        %v2584 = vrot.slane %v2518, 1
        %v2585 = vrot.slane %v2520, 1
        %v2586 = vsel %vm1017, %v2584, %v2585
        %v2587 = vrot.slane %v2521, 1
        %v2588 = vrot.slane %v2523, 1
        %v2589 = vsel %vm1017, %v2587, %v2588
        %v2590 = vrot.slane %v2522, 1
        %v2591 = vrot.slane %v2524, 1
        %v2592 = vsel %vm1017, %v2590, %v2591
        %v2593 = vrot.slane %v2525, 1
        %v2594 = vrot.slane %v2527, 1
        %v2595 = vsel %vm1017, %v2593, %v2594
        %v2596 = vrot.slane %v2526, 1
        %v2597 = vrot.slane %v2528, 1
        %v2598 = vsel %vm1017, %v2596, %v2597
        %v2599 = vrot.slane %v2529, 1
        %v2600 = vrot.slane %v2531, 1
        %v2601 = vsel %vm1017, %v2599, %v2600
        %v2602 = vrot.slane %v2530, 1
        %v2603 = vrot.slane %v2532, 1
        %v2604 = vsel %vm1017, %v2602, %v2603
        %v2605 = vrot.slane %v2533, 1
        %v2606 = vrot.slane %v2535, 1
        %v2607 = vsel %vm1017, %v2605, %v2606
        %v2608 = vrot.slane %v2534, 1
        %v2609 = vrot.slane %v2536, 1
        %v2610 = vsel %vm1017, %v2608, %v2609
        %v2611 = vrot.slane %v2537, 1
        %v2612 = vrot.slane %v2539, 1
        %v2613 = vsel %vm1017, %v2611, %v2612
        %v2614 = vrot.slane %v2538, 1
        %v2615 = vrot.slane %v2540, 1
        %v2616 = vsel %vm1017, %v2614, %v2615
        %v2617 = vrot.slane %v2541, 1
        %v2618 = vrot.slane %v2543, 1
        %v2619 = vsel %vm1017, %v2617, %v2618
        %v2620 = vrot.slane %v2542, 1
        %v2621 = vrot.slane %v2544, 1
        %v2622 = vsel %vm1017, %v2620, %v2621
        %v2623 = vrot.slane %v2545, 1
        %v2624 = vrot.slane %v2547, 1
        %v2625 = vsel %vm1017, %v2623, %v2624
        %v2626 = vrot.slane %v2546, 1
        %v2627 = vrot.slane %v2548, 1
        %v2628 = vsel %vm1017, %v2626, %v2627
        %v2645 = vadd.f32 %v2469, %v2583
        %v2646 = vadd.f32 %v2470, %v2586
        %v2647 = vadd.f32 %v2471, %v2589
        %v2648 = vadd.f32 %v2472, %v2592
        %v2649 = vadd.f32 %v2473, %v2595
        %v2650 = vadd.f32 %v2474, %v2598
        %v2651 = vadd.f32 %v2475, %v2601
        %v2652 = vadd.f32 %v2476, %v2604
        %v2653 = vadd.f32 %v2477, %v2607
        %v2654 = vadd.f32 %v2478, %v2610
        %v2655 = vadd.f32 %v2479, %v2613
        %v2656 = vadd.f32 %v2480, %v2616
        %v2657 = vadd.f32 %v2481, %v2619
        %v2658 = vadd.f32 %v2482, %v2622
        %v2659 = vadd.f32 %v2483, %v2625
        %v2660 = vadd.f32 %v2484, %v2628
        %v2661 = vperm.slane %v2349, 4
        %v2662 = vperm.slane %v2350, 4
        %v2663 = vmul.f32 %v2365, %v2661
        %v2664 = vmul.f32 %v2366, %v2662
        %v2665 = vmul.f32 %v2497, %v2661
        %v2666 = vmul.f32 %v2498, %v2662
        %v2667 = vmul.f32 %v2367, %v2661
        %v2668 = vmul.f32 %v2368, %v2662
        %v2669 = vmul.f32 %v2499, %v2661
        %v2670 = vmul.f32 %v2500, %v2662
        %v2671 = vmul.f32 %v2369, %v2661
        %v2672 = vmul.f32 %v2370, %v2662
        %v2673 = vmul.f32 %v2501, %v2661
        %v2674 = vmul.f32 %v2502, %v2662
        %v2675 = vmul.f32 %v2371, %v2661
        %v2676 = vmul.f32 %v2372, %v2662
        %v2677 = vmul.f32 %v2503, %v2661
        %v2678 = vmul.f32 %v2504, %v2662
        %v2679 = vmul.f32 %v2373, %v2661
        %v2680 = vmul.f32 %v2374, %v2662
        %v2681 = vmul.f32 %v2505, %v2661
        %v2682 = vmul.f32 %v2506, %v2662
        %v2683 = vmul.f32 %v2375, %v2661
        %v2684 = vmul.f32 %v2376, %v2662
        %v2685 = vmul.f32 %v2507, %v2661
        %v2686 = vmul.f32 %v2508, %v2662
        %v2687 = vmul.f32 %v2377, %v2661
        %v2688 = vmul.f32 %v2378, %v2662
        %v2689 = vmul.f32 %v2509, %v2661
        %v2690 = vmul.f32 %v2510, %v2662
        %v2691 = vmul.f32 %v2379, %v2661
        %v2692 = vmul.f32 %v2380, %v2662
        %v2693 = vmul.f32 %v2511, %v2661
        %v2694 = vmul.f32 %v2512, %v2662
        %v2727 = vrot.slane %v2663, 1
        %v2728 = vrot.slane %v2665, 1
        %v2729 = vsel %vm1017, %v2727, %v2728
        %v2730 = vrot.slane %v2664, 1
        %v2731 = vrot.slane %v2666, 1
        %v2732 = vsel %vm1017, %v2730, %v2731
        %v2733 = vrot.slane %v2667, 1
        %v2734 = vrot.slane %v2669, 1
        %v2735 = vsel %vm1017, %v2733, %v2734
        %v2736 = vrot.slane %v2668, 1
        %v2737 = vrot.slane %v2670, 1
        %v2738 = vsel %vm1017, %v2736, %v2737
        %v2739 = vrot.slane %v2671, 1
        %v2740 = vrot.slane %v2673, 1
        %v2741 = vsel %vm1017, %v2739, %v2740
        %v2742 = vrot.slane %v2672, 1
        %v2743 = vrot.slane %v2674, 1
        %v2744 = vsel %vm1017, %v2742, %v2743
        %v2745 = vrot.slane %v2675, 1
        %v2746 = vrot.slane %v2677, 1
        %v2747 = vsel %vm1017, %v2745, %v2746
        %v2748 = vrot.slane %v2676, 1
        %v2749 = vrot.slane %v2678, 1
        %v2750 = vsel %vm1017, %v2748, %v2749
        %v2751 = vrot.slane %v2679, 1
        %v2752 = vrot.slane %v2681, 1
        %v2753 = vsel %vm1017, %v2751, %v2752
        %v2754 = vrot.slane %v2680, 1
        %v2755 = vrot.slane %v2682, 1
        %v2756 = vsel %vm1017, %v2754, %v2755
        %v2757 = vrot.slane %v2683, 1
        %v2758 = vrot.slane %v2685, 1
        %v2759 = vsel %vm1017, %v2757, %v2758
        %v2760 = vrot.slane %v2684, 1
        %v2761 = vrot.slane %v2686, 1
        %v2762 = vsel %vm1017, %v2760, %v2761
        %v2763 = vrot.slane %v2687, 1
        %v2764 = vrot.slane %v2689, 1
        %v2765 = vsel %vm1017, %v2763, %v2764
        %v2766 = vrot.slane %v2688, 1
        %v2767 = vrot.slane %v2690, 1
        %v2768 = vsel %vm1017, %v2766, %v2767
        %v2769 = vrot.slane %v2691, 1
        %v2770 = vrot.slane %v2693, 1
        %v2771 = vsel %vm1017, %v2769, %v2770
        %v2772 = vrot.slane %v2692, 1
        %v2773 = vrot.slane %v2694, 1
        %v2774 = vsel %vm1017, %v2772, %v2773
        %v2791 = vadd.f32 %v2645, %v2729
        %v2792 = vadd.f32 %v2646, %v2732
        %v2793 = vadd.f32 %v2647, %v2735
        %v2794 = vadd.f32 %v2648, %v2738
        %v2795 = vadd.f32 %v2649, %v2741
        %v2796 = vadd.f32 %v2650, %v2744
        %v2797 = vadd.f32 %v2651, %v2747
        %v2798 = vadd.f32 %v2652, %v2750
        %v2799 = vadd.f32 %v2653, %v2753
        %v2800 = vadd.f32 %v2654, %v2756
        %v2801 = vadd.f32 %v2655, %v2759
        %v2802 = vadd.f32 %v2656, %v2762
        %v2803 = vadd.f32 %v2657, %v2765
        %v2804 = vadd.f32 %v2658, %v2768
        %v2805 = vadd.f32 %v2659, %v2771
        %v2806 = vadd.f32 %v2660, %v2774
        %v2807 = vperm.slane %v2349, 7
        %v2808 = vperm.slane %v2350, 7
        %v2809 = vmul.f32 %v2367, %v2807
        %v2810 = vmul.f32 %v2368, %v2808
        %v2811 = vmul.f32 %v2499, %v2807
        %v2812 = vmul.f32 %v2500, %v2808
        %v2813 = vmul.f32 %v2369, %v2807
        %v2814 = vmul.f32 %v2370, %v2808
        %v2815 = vmul.f32 %v2501, %v2807
        %v2816 = vmul.f32 %v2502, %v2808
        %v2817 = vmul.f32 %v2371, %v2807
        %v2818 = vmul.f32 %v2372, %v2808
        %v2819 = vmul.f32 %v2503, %v2807
        %v2820 = vmul.f32 %v2504, %v2808
        %v2821 = vmul.f32 %v2373, %v2807
        %v2822 = vmul.f32 %v2374, %v2808
        %v2823 = vmul.f32 %v2505, %v2807
        %v2824 = vmul.f32 %v2506, %v2808
        %v2825 = vmul.f32 %v2375, %v2807
        %v2826 = vmul.f32 %v2376, %v2808
        %v2827 = vmul.f32 %v2507, %v2807
        %v2828 = vmul.f32 %v2508, %v2808
        %v2829 = vmul.f32 %v2377, %v2807
        %v2830 = vmul.f32 %v2378, %v2808
        %v2831 = vmul.f32 %v2509, %v2807
        %v2832 = vmul.f32 %v2510, %v2808
        %v2833 = vmul.f32 %v2379, %v2807
        %v2834 = vmul.f32 %v2380, %v2808
        %v2835 = vmul.f32 %v2511, %v2807
        %v2836 = vmul.f32 %v2512, %v2808
        %v2837 = vmul.f32 %v2381, %v2807
        %v2838 = vmul.f32 %v2382, %v2808
        %v2839 = vmul.f32 %v2513, %v2807
        %v2840 = vmul.f32 %v2514, %v2808
        %v2873 = vrot.slane %v2809, 1
        %v2874 = vrot.slane %v2811, 1
        %v2875 = vsel %vm1017, %v2873, %v2874
        %v2876 = vrot.slane %v2810, 1
        %v2877 = vrot.slane %v2812, 1
        %v2878 = vsel %vm1017, %v2876, %v2877
        %v2879 = vrot.slane %v2813, 1
        %v2880 = vrot.slane %v2815, 1
        %v2881 = vsel %vm1017, %v2879, %v2880
        %v2882 = vrot.slane %v2814, 1
        %v2883 = vrot.slane %v2816, 1
        %v2884 = vsel %vm1017, %v2882, %v2883
        %v2885 = vrot.slane %v2817, 1
        %v2886 = vrot.slane %v2819, 1
        %v2887 = vsel %vm1017, %v2885, %v2886
        %v2888 = vrot.slane %v2818, 1
        %v2889 = vrot.slane %v2820, 1
        %v2890 = vsel %vm1017, %v2888, %v2889
        %v2891 = vrot.slane %v2821, 1
        %v2892 = vrot.slane %v2823, 1
        %v2893 = vsel %vm1017, %v2891, %v2892
        %v2894 = vrot.slane %v2822, 1
        %v2895 = vrot.slane %v2824, 1
        %v2896 = vsel %vm1017, %v2894, %v2895
        %v2897 = vrot.slane %v2825, 1
        %v2898 = vrot.slane %v2827, 1
        %v2899 = vsel %vm1017, %v2897, %v2898
        %v2900 = vrot.slane %v2826, 1
        %v2901 = vrot.slane %v2828, 1
        %v2902 = vsel %vm1017, %v2900, %v2901
        %v2903 = vrot.slane %v2829, 1
        %v2904 = vrot.slane %v2831, 1
        %v2905 = vsel %vm1017, %v2903, %v2904
        %v2906 = vrot.slane %v2830, 1
        %v2907 = vrot.slane %v2832, 1
        %v2908 = vsel %vm1017, %v2906, %v2907
        %v2909 = vrot.slane %v2833, 1
        %v2910 = vrot.slane %v2835, 1
        %v2911 = vsel %vm1017, %v2909, %v2910
        %v2912 = vrot.slane %v2834, 1
        %v2913 = vrot.slane %v2836, 1
        %v2914 = vsel %vm1017, %v2912, %v2913
        %v2915 = vrot.slane %v2837, 1
        %v2916 = vrot.slane %v2839, 1
        %v2917 = vsel %vm1017, %v2915, %v2916
        %v2918 = vrot.slane %v2838, 1
        %v2919 = vrot.slane %v2840, 1
        %v2920 = vsel %vm1017, %v2918, %v2919
        %v2937 = vadd.f32 %v2791, %v2875
        %v2938 = vadd.f32 %v2792, %v2878
        %v2939 = vadd.f32 %v2793, %v2881
        %v2940 = vadd.f32 %v2794, %v2884
        %v2941 = vadd.f32 %v2795, %v2887
        %v2942 = vadd.f32 %v2796, %v2890
        %v2943 = vadd.f32 %v2797, %v2893
        %v2944 = vadd.f32 %v2798, %v2896
        %v2945 = vadd.f32 %v2799, %v2899
        %v2946 = vadd.f32 %v2800, %v2902
        %v2947 = vadd.f32 %v2801, %v2905
        %v2948 = vadd.f32 %v2802, %v2908
        %v2949 = vadd.f32 %v2803, %v2911
        %v2950 = vadd.f32 %v2804, %v2914
        %v2951 = vadd.f32 %v2805, %v2917
        %v2952 = vadd.f32 %v2806, %v2920
        %v2953 = vld [vmem:[#allocation3] sm:$0xee]
        %v2954 = vld [vmem:[#allocation3 + $0x10] sm:$0xee]
        %v2955 = vld [vmem:[#allocation3 + $0x20] sm:$0xee]
        %v2956 = vld [vmem:[#allocation3 + $0x30] sm:$0xee]
        %v2957 = vld [vmem:[#allocation3 + $0x40] sm:$0xee]
        %v2958 = vld [vmem:[#allocation3 + $0x50] sm:$0xee]
        %v2959 = vld [vmem:[#allocation3 + $0x60] sm:$0xee]
        %v2960 = vld [vmem:[#allocation3 + $0x70] sm:$0xee]
        %v2961 = vld [vmem:[#allocation3 + $0x80] sm:$0xee]
        %v2962 = vld [vmem:[#allocation3 + $0x90] sm:$0xee]
        %v2963 = vunpack.c.l.bf16 %v2953
        %v2964 = vunpack.c.h.bf16 %v2953
        %v2965 = vunpack.c.l.bf16 %v2954
        %v2966 = vunpack.c.h.bf16 %v2954
        %v2967 = vunpack.c.l.bf16 %v2955
        %v2968 = vunpack.c.h.bf16 %v2955
        %v2969 = vunpack.c.l.bf16 %v2956
        %v2970 = vunpack.c.h.bf16 %v2956
        %v2971 = vunpack.c.l.bf16 %v2957
        %v2972 = vunpack.c.h.bf16 %v2957
        %v2973 = vunpack.c.l.bf16 %v2958
        %v2974 = vunpack.c.h.bf16 %v2958
        %v2975 = vunpack.c.l.bf16 %v2959
        %v2976 = vunpack.c.h.bf16 %v2959
        %v2977 = vunpack.c.l.bf16 %v2960
        %v2978 = vunpack.c.h.bf16 %v2960
        %v2979 = vunpack.c.l.bf16 %v2961
        %v2980 = vunpack.c.h.bf16 %v2961
        %v2981 = vunpack.c.l.bf16 %v2962
        %v2982 = vunpack.c.h.bf16 %v2962
        %v2983 = vperm.slane %v2349, 2
        %v2984 = vperm.slane %v2350, 2
        %v2985 = vmul.f32 %v2963, %v2983
        %v2986 = vmul.f32 %v2964, %v2984
        %v2987 = vmul.f32 %v2495, %v2983
        %v2988 = vmul.f32 %v2496, %v2984
        %v2989 = vmul.f32 %v2965, %v2983
        %v2990 = vmul.f32 %v2966, %v2984
        %v2991 = vmul.f32 %v2497, %v2983
        %v2992 = vmul.f32 %v2498, %v2984
        %v2993 = vmul.f32 %v2967, %v2983
        %v2994 = vmul.f32 %v2968, %v2984
        %v2995 = vmul.f32 %v2499, %v2983
        %v2996 = vmul.f32 %v2500, %v2984
        %v2997 = vmul.f32 %v2969, %v2983
        %v2998 = vmul.f32 %v2970, %v2984
        %v2999 = vmul.f32 %v2501, %v2983
        %v3000 = vmul.f32 %v2502, %v2984
        %v3001 = vmul.f32 %v2971, %v2983
        %v3002 = vmul.f32 %v2972, %v2984
        %v3003 = vmul.f32 %v2503, %v2983
        %v3004 = vmul.f32 %v2504, %v2984
        %v3005 = vmul.f32 %v2973, %v2983
        %v3006 = vmul.f32 %v2974, %v2984
        %v3007 = vmul.f32 %v2505, %v2983
        %v3008 = vmul.f32 %v2506, %v2984
        %v3009 = vmul.f32 %v2975, %v2983
        %v3010 = vmul.f32 %v2976, %v2984
        %v3011 = vmul.f32 %v2507, %v2983
        %v3012 = vmul.f32 %v2508, %v2984
        %v3013 = vmul.f32 %v2977, %v2983
        %v3014 = vmul.f32 %v2978, %v2984
        %v3015 = vmul.f32 %v2509, %v2983
        %v3016 = vmul.f32 %v2510, %v2984
        %v3049 = vrot.slane %v2985, 2
        %v3050 = vrot.slane %v2987, 2
        %v3051 = vsel %vm1486, %v3049, %v3050
        %v3052 = vrot.slane %v2986, 2
        %v3053 = vrot.slane %v2988, 2
        %v3054 = vsel %vm1486, %v3052, %v3053
        %v3055 = vrot.slane %v2989, 2
        %v3056 = vrot.slane %v2991, 2
        %v3057 = vsel %vm1486, %v3055, %v3056
        %v3058 = vrot.slane %v2990, 2
        %v3059 = vrot.slane %v2992, 2
        %v3060 = vsel %vm1486, %v3058, %v3059
        %v3061 = vrot.slane %v2993, 2
        %v3062 = vrot.slane %v2995, 2
        %v3063 = vsel %vm1486, %v3061, %v3062
        %v3064 = vrot.slane %v2994, 2
        %v3065 = vrot.slane %v2996, 2
        %v3066 = vsel %vm1486, %v3064, %v3065
        %v3067 = vrot.slane %v2997, 2
        %v3068 = vrot.slane %v2999, 2
        %v3069 = vsel %vm1486, %v3067, %v3068
        %v3070 = vrot.slane %v2998, 2
        %v3071 = vrot.slane %v3000, 2
        %v3072 = vsel %vm1486, %v3070, %v3071
        %v3073 = vrot.slane %v3001, 2
        %v3074 = vrot.slane %v3003, 2
        %v3075 = vsel %vm1486, %v3073, %v3074
        %v3076 = vrot.slane %v3002, 2
        %v3077 = vrot.slane %v3004, 2
        %v3078 = vsel %vm1486, %v3076, %v3077
        %v3079 = vrot.slane %v3005, 2
        %v3080 = vrot.slane %v3007, 2
        %v3081 = vsel %vm1486, %v3079, %v3080
        %v3082 = vrot.slane %v3006, 2
        %v3083 = vrot.slane %v3008, 2
        %v3084 = vsel %vm1486, %v3082, %v3083
        %v3085 = vrot.slane %v3009, 2
        %v3086 = vrot.slane %v3011, 2
        %v3087 = vsel %vm1486, %v3085, %v3086
        %v3088 = vrot.slane %v3010, 2
        %v3089 = vrot.slane %v3012, 2
        %v3090 = vsel %vm1486, %v3088, %v3089
        %v3091 = vrot.slane %v3013, 2
        %v3092 = vrot.slane %v3015, 2
        %v3093 = vsel %vm1486, %v3091, %v3092
        %v3094 = vrot.slane %v3014, 2
        %v3095 = vrot.slane %v3016, 2
        %v3096 = vsel %vm1486, %v3094, %v3095
        %v3113 = vadd.f32 %v2937, %v3051
        %v3114 = vadd.f32 %v2938, %v3054
        %v3115 = vadd.f32 %v2939, %v3057
        %v3116 = vadd.f32 %v2940, %v3060
        %v3117 = vadd.f32 %v2941, %v3063
        %v3118 = vadd.f32 %v2942, %v3066
        %v3119 = vadd.f32 %v2943, %v3069
        %v3120 = vadd.f32 %v2944, %v3072
        %v3121 = vadd.f32 %v2945, %v3075
        %v3122 = vadd.f32 %v2946, %v3078
        %v3123 = vadd.f32 %v2947, %v3081
        %v3124 = vadd.f32 %v2948, %v3084
        %v3125 = vadd.f32 %v2949, %v3087
        %v3126 = vadd.f32 %v2950, %v3090
        %v3127 = vadd.f32 %v2951, %v3093
        %v3128 = vadd.f32 %v2952, %v3096
        %v3129 = vperm.slane %v2349, 5
        %v3130 = vperm.slane %v2350, 5
        %v3131 = vmul.f32 %v2965, %v3129
        %v3132 = vmul.f32 %v2966, %v3130
        %v3133 = vmul.f32 %v2497, %v3129
        %v3134 = vmul.f32 %v2498, %v3130
        %v3135 = vmul.f32 %v2967, %v3129
        %v3136 = vmul.f32 %v2968, %v3130
        %v3137 = vmul.f32 %v2499, %v3129
        %v3138 = vmul.f32 %v2500, %v3130
        %v3139 = vmul.f32 %v2969, %v3129
        %v3140 = vmul.f32 %v2970, %v3130
        %v3141 = vmul.f32 %v2501, %v3129
        %v3142 = vmul.f32 %v2502, %v3130
        %v3143 = vmul.f32 %v2971, %v3129
        %v3144 = vmul.f32 %v2972, %v3130
        %v3145 = vmul.f32 %v2503, %v3129
        %v3146 = vmul.f32 %v2504, %v3130
        %v3147 = vmul.f32 %v2973, %v3129
        %v3148 = vmul.f32 %v2974, %v3130
        %v3149 = vmul.f32 %v2505, %v3129
        %v3150 = vmul.f32 %v2506, %v3130
        %v3151 = vmul.f32 %v2975, %v3129
        %v3152 = vmul.f32 %v2976, %v3130
        %v3153 = vmul.f32 %v2507, %v3129
        %v3154 = vmul.f32 %v2508, %v3130
        %v3155 = vmul.f32 %v2977, %v3129
        %v3156 = vmul.f32 %v2978, %v3130
        %v3157 = vmul.f32 %v2509, %v3129
        %v3158 = vmul.f32 %v2510, %v3130
        %v3159 = vmul.f32 %v2979, %v3129
        %v3160 = vmul.f32 %v2980, %v3130
        %v3161 = vmul.f32 %v2511, %v3129
        %v3162 = vmul.f32 %v2512, %v3130
        %v3195 = vrot.slane %v3131, 2
        %v3196 = vrot.slane %v3133, 2
        %v3197 = vsel %vm1486, %v3195, %v3196
        %v3198 = vrot.slane %v3132, 2
        %v3199 = vrot.slane %v3134, 2
        %v3200 = vsel %vm1486, %v3198, %v3199
        %v3201 = vrot.slane %v3135, 2
        %v3202 = vrot.slane %v3137, 2
        %v3203 = vsel %vm1486, %v3201, %v3202
        %v3204 = vrot.slane %v3136, 2
        %v3205 = vrot.slane %v3138, 2
        %v3206 = vsel %vm1486, %v3204, %v3205
        %v3207 = vrot.slane %v3139, 2
        %v3208 = vrot.slane %v3141, 2
        %v3209 = vsel %vm1486, %v3207, %v3208
        %v3210 = vrot.slane %v3140, 2
        %v3211 = vrot.slane %v3142, 2
        %v3212 = vsel %vm1486, %v3210, %v3211
        %v3213 = vrot.slane %v3143, 2
        %v3214 = vrot.slane %v3145, 2
        %v3215 = vsel %vm1486, %v3213, %v3214
        %v3216 = vrot.slane %v3144, 2
        %v3217 = vrot.slane %v3146, 2
        %v3218 = vsel %vm1486, %v3216, %v3217
        %v3219 = vrot.slane %v3147, 2
        %v3220 = vrot.slane %v3149, 2
        %v3221 = vsel %vm1486, %v3219, %v3220
        %v3222 = vrot.slane %v3148, 2
        %v3223 = vrot.slane %v3150, 2
        %v3224 = vsel %vm1486, %v3222, %v3223
        %v3225 = vrot.slane %v3151, 2
        %v3226 = vrot.slane %v3153, 2
        %v3227 = vsel %vm1486, %v3225, %v3226
        %v3228 = vrot.slane %v3152, 2
        %v3229 = vrot.slane %v3154, 2
        %v3230 = vsel %vm1486, %v3228, %v3229
        %v3231 = vrot.slane %v3155, 2
        %v3232 = vrot.slane %v3157, 2
        %v3233 = vsel %vm1486, %v3231, %v3232
        %v3234 = vrot.slane %v3156, 2
        %v3235 = vrot.slane %v3158, 2
        %v3236 = vsel %vm1486, %v3234, %v3235
        %v3237 = vrot.slane %v3159, 2
        %v3238 = vrot.slane %v3161, 2
        %v3239 = vsel %vm1486, %v3237, %v3238
        %v3240 = vrot.slane %v3160, 2
        %v3241 = vrot.slane %v3162, 2
        %v3242 = vsel %vm1486, %v3240, %v3241
        %v3259 = vadd.f32 %v3113, %v3197
        %v3260 = vadd.f32 %v3114, %v3200
        %v3261 = vadd.f32 %v3115, %v3203
        %v3262 = vadd.f32 %v3116, %v3206
        %v3263 = vadd.f32 %v3117, %v3209
        %v3264 = vadd.f32 %v3118, %v3212
        %v3265 = vadd.f32 %v3119, %v3215
        %v3266 = vadd.f32 %v3120, %v3218
        %v3267 = vadd.f32 %v3121, %v3221
        %v3268 = vadd.f32 %v3122, %v3224
        %v3269 = vadd.f32 %v3123, %v3227
        %v3270 = vadd.f32 %v3124, %v3230
        %v3271 = vadd.f32 %v3125, %v3233
        %v3272 = vadd.f32 %v3126, %v3236
        %v3273 = vadd.f32 %v3127, %v3239
        %v3274 = vadd.f32 %v3128, %v3242
        %v3275 = vperm.slane %v2351, 0
        %v3276 = vperm.slane %v2352, 0
        %v3277 = vmul.f32 %v2967, %v3275
        %v3278 = vmul.f32 %v2968, %v3276
        %v3279 = vmul.f32 %v2499, %v3275
        %v3280 = vmul.f32 %v2500, %v3276
        %v3281 = vmul.f32 %v2969, %v3275
        %v3282 = vmul.f32 %v2970, %v3276
        %v3283 = vmul.f32 %v2501, %v3275
        %v3284 = vmul.f32 %v2502, %v3276
        %v3285 = vmul.f32 %v2971, %v3275
        %v3286 = vmul.f32 %v2972, %v3276
        %v3287 = vmul.f32 %v2503, %v3275
        %v3288 = vmul.f32 %v2504, %v3276
        %v3289 = vmul.f32 %v2973, %v3275
        %v3290 = vmul.f32 %v2974, %v3276
        %v3291 = vmul.f32 %v2505, %v3275
        %v3292 = vmul.f32 %v2506, %v3276
        %v3293 = vmul.f32 %v2975, %v3275
        %v3294 = vmul.f32 %v2976, %v3276
        %v3295 = vmul.f32 %v2507, %v3275
        %v3296 = vmul.f32 %v2508, %v3276
        %v3297 = vmul.f32 %v2977, %v3275
        %v3298 = vmul.f32 %v2978, %v3276
        %v3299 = vmul.f32 %v2509, %v3275
        %v3300 = vmul.f32 %v2510, %v3276
        %v3301 = vmul.f32 %v2979, %v3275
        %v3302 = vmul.f32 %v2980, %v3276
        %v3303 = vmul.f32 %v2511, %v3275
        %v3304 = vmul.f32 %v2512, %v3276
        %v3305 = vmul.f32 %v2981, %v3275
        %v3306 = vmul.f32 %v2982, %v3276
        %v3307 = vmul.f32 %v2513, %v3275
        %v3308 = vmul.f32 %v2514, %v3276
        %v3341 = vrot.slane %v3277, 2
        %v3342 = vrot.slane %v3279, 2
        %v3343 = vsel %vm1486, %v3341, %v3342
        %v3344 = vrot.slane %v3278, 2
        %v3345 = vrot.slane %v3280, 2
        %v3346 = vsel %vm1486, %v3344, %v3345
        %v3347 = vrot.slane %v3281, 2
        %v3348 = vrot.slane %v3283, 2
        %v3349 = vsel %vm1486, %v3347, %v3348
        %v3350 = vrot.slane %v3282, 2
        %v3351 = vrot.slane %v3284, 2
        %v3352 = vsel %vm1486, %v3350, %v3351
        %v3353 = vrot.slane %v3285, 2
        %v3354 = vrot.slane %v3287, 2
        %v3355 = vsel %vm1486, %v3353, %v3354
        %v3356 = vrot.slane %v3286, 2
        %v3357 = vrot.slane %v3288, 2
        %v3358 = vsel %vm1486, %v3356, %v3357
        %v3359 = vrot.slane %v3289, 2
        %v3360 = vrot.slane %v3291, 2
        %v3361 = vsel %vm1486, %v3359, %v3360
        %v3362 = vrot.slane %v3290, 2
        %v3363 = vrot.slane %v3292, 2
        %v3364 = vsel %vm1486, %v3362, %v3363
        %v3365 = vrot.slane %v3293, 2
        %v3366 = vrot.slane %v3295, 2
        %v3367 = vsel %vm1486, %v3365, %v3366
        %v3368 = vrot.slane %v3294, 2
        %v3369 = vrot.slane %v3296, 2
        %v3370 = vsel %vm1486, %v3368, %v3369
        %v3371 = vrot.slane %v3297, 2
        %v3372 = vrot.slane %v3299, 2
        %v3373 = vsel %vm1486, %v3371, %v3372
        %v3374 = vrot.slane %v3298, 2
        %v3375 = vrot.slane %v3300, 2
        %v3376 = vsel %vm1486, %v3374, %v3375
        %v3377 = vrot.slane %v3301, 2
        %v3378 = vrot.slane %v3303, 2
        %v3379 = vsel %vm1486, %v3377, %v3378
        %v3380 = vrot.slane %v3302, 2
        %v3381 = vrot.slane %v3304, 2
        %v3382 = vsel %vm1486, %v3380, %v3381
        %v3383 = vrot.slane %v3305, 2
        %v3384 = vrot.slane %v3307, 2
        %v3385 = vsel %vm1486, %v3383, %v3384
        %v3386 = vrot.slane %v3306, 2
        %v3387 = vrot.slane %v3308, 2
        %v3388 = vsel %vm1486, %v3386, %v3387
        %v3405 = vadd.f32 %v3259, %v3343
        %v3406 = vadd.f32 %v3260, %v3346
        %v3407 = vadd.f32 %v3261, %v3349
        %v3408 = vadd.f32 %v3262, %v3352
        %v3409 = vadd.f32 %v3263, %v3355
        %v3410 = vadd.f32 %v3264, %v3358
        %v3411 = vadd.f32 %v3265, %v3361
        %v3412 = vadd.f32 %v3266, %v3364
        %v3413 = vadd.f32 %v3267, %v3367
        %v3414 = vadd.f32 %v3268, %v3370
        %v3415 = vadd.f32 %v3269, %v3373
        %v3416 = vadd.f32 %v3270, %v3376
        %v3417 = vadd.f32 %v3271, %v3379
        %v3418 = vadd.f32 %v3272, %v3382
        %v3419 = vadd.f32 %v3273, %v3385
        %v3420 = vadd.f32 %v3274, %v3388
        %v3421 = vpack.c.bf16 %v3407, %v3405
        %v3422 = vpack.c.bf16 %v3408, %v3406
        %v3423 = vpack.c.bf16 %v3411, %v3409
        %v3424 = vpack.c.bf16 %v3412, %v3410
        %v3425 = vpack.c.bf16 %v3415, %v3413
        %v3426 = vpack.c.bf16 %v3416, %v3414
        %v3427 = vpack.c.bf16 %v3419, %v3417
        %v3428 = vpack.c.bf16 %v3420, %v3418
        %s3429 = scalar_lea.vmem %s439, 192
        %v3430 = vld [vmem:[%s3429] sm:$0xff]
        %v3431 = vld [vmem:[%s3429 + $0x8] sm:$0xff]
        %v3432 = vld [vmem:[%s3429 + $0x10] sm:$0xff]
        %v3433 = vld [vmem:[%s3429 + $0x18] sm:$0xff]
        %v3434 = vld [vmem:[%s3429 + $0x20] sm:$0xff]
        %v3435 = vld [vmem:[%s3429 + $0x28] sm:$0xff]
        %v3436 = vld [vmem:[%s3429 + $0x30] sm:$0xff]
        %v3437 = vld [vmem:[%s3429 + $0x38] sm:$0xff]
        %v3438 = vld [vmem:[%s3429 + $0x40] sm:$0xff]
        %v3439 = vld [vmem:[%s3429 + $0x48] sm:$0xff]
        %v3440 = vld [vmem:[%s3429 + $0x50] sm:$0xff]
        %v3441 = vld [vmem:[%s3429 + $0x58] sm:$0xff]
        %v3442 = vld [vmem:[%s3429 + $0x60] sm:$0xff]
        %v3443 = vld [vmem:[%s3429 + $0x68] sm:$0xff]
        %v3444 = vld [vmem:[%s3429 + $0x70] sm:$0xff]
        %v3445 = vld [vmem:[%s3429 + $0x78] sm:$0xff]
        %v3446 = vld [vmem:[%s3429 + $0x80] sm:$0xff]
        %v3447 = vld [vmem:[%s3429 + $0x88] sm:$0xff]
        %v3448 = vld [vmem:[%s3429 + $0x90] sm:$0xff]
        %v3449 = vld [vmem:[%s3429 + $0x98] sm:$0xff]
        %v3450 = vld [vmem:[%s3429 + $0xa0] sm:$0xff]
        %v3451 = vld [vmem:[%s3429 + $0xa8] sm:$0xff]
        %v3452 = vld [vmem:[%s3429 + $0xb0] sm:$0xff]
        %v3453 = vld [vmem:[%s3429 + $0xb8] sm:$0xff]
        %s3454 = scalar_lea.vmem %s443, 2
        %v3455 = vld [vmem:[%s3454] sm:$0x3]
        %v3457 = vperm.slane %v3455, 0
        %v3458 = vperm.slane %v3455, 1
        %v3485 = vunpack.c.l.b16 %v3430
        %v3486 = vunpack.c.h.b16 %v3430
        %v3487 = vunpack.c.l.b16 %v3431
        %v3488 = vunpack.c.h.b16 %v3431
        %v3489 = vunpack.c.l.b16 %v3432
        %v3490 = vunpack.c.h.b16 %v3432
        %v3491 = vunpack.c.l.b16 %v3433
        %v3492 = vunpack.c.h.b16 %v3433
        %v3493 = vunpack.c.l.b16 %v3434
        %v3494 = vunpack.c.h.b16 %v3434
        %v3495 = vunpack.c.l.b16 %v3435
        %v3496 = vunpack.c.h.b16 %v3435
        %v3497 = vunpack.c.l.b16 %v3436
        %v3498 = vunpack.c.h.b16 %v3436
        %v3499 = vunpack.c.l.b16 %v3437
        %v3500 = vunpack.c.h.b16 %v3437
        %v3501 = vunpack.c.l.b16 %v3438
        %v3502 = vunpack.c.h.b16 %v3438
        %v3503 = vunpack.c.l.b16 %v3439
        %v3504 = vunpack.c.h.b16 %v3439
        %v3505 = vunpack.c.l.b16 %v3440
        %v3506 = vunpack.c.h.b16 %v3440
        %v3507 = vunpack.c.l.b16 %v3441
        %v3508 = vunpack.c.h.b16 %v3441
        %v3509 = vunpack.c.l.b16 %v3442
        %v3510 = vunpack.c.h.b16 %v3442
        %v3511 = vunpack.c.l.b16 %v3443
        %v3512 = vunpack.c.h.b16 %v3443
        %v3513 = vunpack.c.l.b16 %v3444
        %v3514 = vunpack.c.h.b16 %v3444
        %v3515 = vunpack.c.l.b16 %v3445
        %v3516 = vunpack.c.h.b16 %v3445
        %v3517 = vunpack.c.l.b16 %v3446
        %v3518 = vunpack.c.h.b16 %v3446
        %v3519 = vunpack.c.l.b16 %v3447
        %v3520 = vunpack.c.h.b16 %v3447
        %v3521 = vunpack.c.l.b16 %v3448
        %v3522 = vunpack.c.h.b16 %v3448
        %v3523 = vunpack.c.l.b16 %v3449
        %v3524 = vunpack.c.h.b16 %v3449
        %v3525 = vunpack.c.l.b16 %v3450
        %v3526 = vunpack.c.h.b16 %v3450
        %v3527 = vunpack.c.l.b16 %v3451
        %v3528 = vunpack.c.h.b16 %v3451
        %v3529 = vunpack.c.l.b16 %v3452
        %v3530 = vunpack.c.h.b16 %v3452
        %v3531 = vunpack.c.l.b16 %v3453
        %v3532 = vunpack.c.h.b16 %v3453
        %v3533 = vpack.c.b16 %v3487, %v3485
        %v3534 = vpack.c.b16 %v3488, %v3486
        %v3535 = vpack.c.b16 %v3491, %v3489
        %v3536 = vpack.c.b16 %v3492, %v3490
        %v3537 = vpack.c.b16 %v3495, %v3493
        %v3538 = vpack.c.b16 %v3496, %v3494
        %v3539 = vpack.c.b16 %v3499, %v3497
        %v3540 = vpack.c.b16 %v3500, %v3498
        %v3541 = vpack.c.b16 %v3503, %v3501
        %v3542 = vpack.c.b16 %v3504, %v3502
        %v3543 = vpack.c.b16 %v3507, %v3505
        %v3544 = vpack.c.b16 %v3508, %v3506
        %v3545 = vpack.c.b16 %v3511, %v3509
        %v3546 = vpack.c.b16 %v3512, %v3510
        %v3547 = vpack.c.b16 %v3515, %v3513
        %v3548 = vpack.c.b16 %v3516, %v3514
        %v3549 = vpack.c.b16 %v3519, %v3517
        %v3550 = vpack.c.b16 %v3520, %v3518
        %v3551 = vpack.c.b16 %v3523, %v3521
        %v3552 = vpack.c.b16 %v3524, %v3522
        %v3553 = vpack.c.b16 %v3527, %v3525
        %v3554 = vpack.c.b16 %v3528, %v3526
        %v3555 = vpack.c.b16 %v3531, %v3529
        %v3556 = vpack.c.b16 %v3532, %v3530
        %v3582 = vsel %vm2017, %v3422, 0
        %v3585 = vsel %vm2017, %v3424, 0
        %v3588 = vsel %vm2017, %v3426, 0
        %v3591 = vsel %vm2017, %v3428, 0
        %3593 = vmatpush.bf16.msra.mxu0 %v3547
        %3594 = vmatpush.bf16.msra.mxu0 %v3545
        %3595 = vmatpush.bf16.msra.mxu0 %v3543
        %3596 = vmatpush.bf16.msra.mxu0 %v3541
        %3597 = vmatpush.bf16.msra.mxu0 %v3539
        %3598 = vmatpush.bf16.msra.mxu0 %v3537
        %3599 = vmatpush.bf16.msra.mxu0 %v3535
        %3600 = vmatpush.bf16.msra.mxu0 %v3533
        %3601 = vmatmul.bf16.gmra.mxu0 %v3421
        %v3602 = vpop.f32.mrf.mxu0
        %v3603 = vadd.f32 %v3457, %v3602
        %v3604 = vpop.f32.mrf.mxu0
        %v3605 = vadd.f32 %v3457, %v3604
        %3606 = vmatmul.bf16.gmra.mxu0 %v3423
        %v3607 = vpop.f32.mrf.mxu0
        %v3608 = vadd.f32 %v3457, %v3607
        %v3609 = vpop.f32.mrf.mxu0
        %v3610 = vadd.f32 %v3457, %v3609
        %3611 = vmatmul.bf16.gmra.mxu0 %v3425
        %v3612 = vpop.f32.mrf.mxu0
        %v3613 = vadd.f32 %v3457, %v3612
        %v3614 = vpop.f32.mrf.mxu0
        %v3615 = vadd.f32 %v3457, %v3614
        %3616 = vmatmul.bf16.gmra.mxu0 %v3427
        %v3617 = vpop.f32.mrf.mxu0
        %v3618 = vadd.f32 %v3457, %v3617
        %v3619 = vpop.f32.mrf.mxu0
        %v3620 = vadd.f32 %v3457, %v3619
        %3621 = vdwg.mxu0
        %3622 = vmatpush.bf16.msra.mxu0 0
        %3623 = vmatpush.bf16.msra.mxu0 0
        %3624 = vmatpush.bf16.msra.mxu0 0
        %3625 = vmatpush.bf16.msra.mxu0 0
        %3626 = vmatpush.bf16.msra.mxu0 %v3555
        %3627 = vmatpush.bf16.msra.mxu0 %v3553
        %3628 = vmatpush.bf16.msra.mxu0 %v3551
        %3629 = vmatpush.bf16.msra.mxu0 %v3549
        %3630 = vmatmul.bf16.gmra.mxu0 %v3582
        %v3631 = vpop.f32.mrf.mxu0
        %v3632 = vadd.f32 %v3603, %v3631
        %v3633 = vpop.f32.mrf.mxu0
        %v3634 = vadd.f32 %v3605, %v3633
        %3635 = vmatmul.bf16.gmra.mxu0 %v3585
        %v3636 = vpop.f32.mrf.mxu0
        %v3637 = vadd.f32 %v3608, %v3636
        %v3638 = vpop.f32.mrf.mxu0
        %v3639 = vadd.f32 %v3610, %v3638
        %3640 = vmatmul.bf16.gmra.mxu0 %v3588
        %v3641 = vpop.f32.mrf.mxu0
        %v3642 = vadd.f32 %v3613, %v3641
        %v3643 = vpop.f32.mrf.mxu0
        %v3644 = vadd.f32 %v3615, %v3643
        %3645 = vmatmul.bf16.gmra.mxu0 %v3591
        %v3646 = vpop.f32.mrf.mxu0
        %v3647 = vadd.f32 %v3618, %v3646
        %v3648 = vpop.f32.mrf.mxu0
        %v3649 = vadd.f32 %v3620, %v3648
        %3650 = vdwg.mxu0
        %3651 = vmatpush.bf16.msra.mxu0 %v3548
        %3652 = vmatpush.bf16.msra.mxu0 %v3546
        %3653 = vmatpush.bf16.msra.mxu0 %v3544
        %3654 = vmatpush.bf16.msra.mxu0 %v3542
        %3655 = vmatpush.bf16.msra.mxu0 %v3540
        %3656 = vmatpush.bf16.msra.mxu0 %v3538
        %3657 = vmatpush.bf16.msra.mxu0 %v3536
        %3658 = vmatpush.bf16.msra.mxu0 %v3534
        %3659 = vmatmul.bf16.gmra.mxu0 %v3421
        %v3660 = vpop.f32.mrf.mxu0
        %v3661 = vadd.f32 %v3458, %v3660
        %v3662 = vpop.f32.mrf.mxu0
        %v3663 = vadd.f32 %v3458, %v3662
        %3664 = vmatmul.bf16.gmra.mxu0 %v3423
        %v3665 = vpop.f32.mrf.mxu0
        %v3666 = vadd.f32 %v3458, %v3665
        %v3667 = vpop.f32.mrf.mxu0
        %v3668 = vadd.f32 %v3458, %v3667
        %3669 = vmatmul.bf16.gmra.mxu0 %v3425
        %v3670 = vpop.f32.mrf.mxu0
        %v3671 = vadd.f32 %v3458, %v3670
        %v3672 = vpop.f32.mrf.mxu0
        %v3673 = vadd.f32 %v3458, %v3672
        %3674 = vmatmul.bf16.gmra.mxu0 %v3427
        %v3675 = vpop.f32.mrf.mxu0
        %v3676 = vadd.f32 %v3458, %v3675
        %v3677 = vpop.f32.mrf.mxu0
        %v3678 = vadd.f32 %v3458, %v3677
        %3679 = vdwg.mxu0
        %3680 = vmatpush.bf16.msra.mxu0 0
        %3681 = vmatpush.bf16.msra.mxu0 0
        %3682 = vmatpush.bf16.msra.mxu0 0
        %3683 = vmatpush.bf16.msra.mxu0 0
        %3684 = vmatpush.bf16.msra.mxu0 %v3556
        %3685 = vmatpush.bf16.msra.mxu0 %v3554
        %3686 = vmatpush.bf16.msra.mxu0 %v3552
        %3687 = vmatpush.bf16.msra.mxu0 %v3550
        %3688 = vmatmul.bf16.gmra.mxu0 %v3582
        %v3689 = vpop.f32.mrf.mxu0
        %v3690 = vadd.f32 %v3661, %v3689
        %v3691 = vpop.f32.mrf.mxu0
        %v3692 = vadd.f32 %v3663, %v3691
        %3693 = vmatmul.bf16.gmra.mxu0 %v3585
        %v3694 = vpop.f32.mrf.mxu0
        %v3695 = vadd.f32 %v3666, %v3694
        %v3696 = vpop.f32.mrf.mxu0
        %v3697 = vadd.f32 %v3668, %v3696
        %3698 = vmatmul.bf16.gmra.mxu0 %v3588
        %v3699 = vpop.f32.mrf.mxu0
        %v3700 = vadd.f32 %v3671, %v3699
        %v3701 = vpop.f32.mrf.mxu0
        %v3702 = vadd.f32 %v3673, %v3701
        %3703 = vmatmul.bf16.gmra.mxu0 %v3591
        %v3704 = vpop.f32.mrf.mxu0
        %v3705 = vadd.f32 %v3676, %v3704
        %v3706 = vpop.f32.mrf.mxu0
        %v3707 = vadd.f32 %v3678, %v3706
        %3708 = vdwg.mxu0
        %s3709 = sadd.s32 %s2146, 1
        %s3710 = sld [smem:[#allocation4 + %s3709]]
        %vm3711 = vcmp.ge.f32.partialorder %v3632, 0.0
        %vm3712 = vcmp.ge.f32.partialorder %v3690, 0.0
        %vm3713 = vcmp.ge.f32.partialorder %v3634, 0.0
        %vm3714 = vcmp.ge.f32.partialorder %v3692, 0.0
        %vm3715 = vcmp.ge.f32.partialorder %v3637, 0.0
        %vm3716 = vcmp.ge.f32.partialorder %v3695, 0.0
        %vm3717 = vcmp.ge.f32.partialorder %v3639, 0.0
        %vm3718 = vcmp.ge.f32.partialorder %v3697, 0.0
        %vm3719 = vcmp.ge.f32.partialorder %v3642, 0.0
        %vm3720 = vcmp.ge.f32.partialorder %v3700, 0.0
        %vm3721 = vcmp.ge.f32.partialorder %v3644, 0.0
        %vm3722 = vcmp.ge.f32.partialorder %v3702, 0.0
        %vm3723 = vcmp.ge.f32.partialorder %v3647, 0.0
        %vm3724 = vcmp.ge.f32.partialorder %v3705, 0.0
        %vm3725 = vcmp.ge.f32.partialorder %v3649, 0.0
        %vm3726 = vcmp.ge.f32.partialorder %v3707, 0.0
        %v3727 = vstv %s3710
        %v3728 = vmul.f32 %v3727, %v3632
        %v3729 = vmul.f32 %v3727, %v3690
        %v3730 = vmul.f32 %v3727, %v3634
        %v3731 = vmul.f32 %v3727, %v3692
        %v3732 = vmul.f32 %v3727, %v3637
        %v3733 = vmul.f32 %v3727, %v3695
        %v3734 = vmul.f32 %v3727, %v3639
        %v3735 = vmul.f32 %v3727, %v3697
        %v3736 = vmul.f32 %v3727, %v3642
        %v3737 = vmul.f32 %v3727, %v3700
        %v3738 = vmul.f32 %v3727, %v3644
        %v3739 = vmul.f32 %v3727, %v3702
        %v3740 = vmul.f32 %v3727, %v3647
        %v3741 = vmul.f32 %v3727, %v3705
        %v3742 = vmul.f32 %v3727, %v3649
        %v3743 = vmul.f32 %v3727, %v3707
        %v3744 = vsel %vm3711, %v3632, %v3728
        %v3745 = vsel %vm3712, %v3690, %v3729
        %v3746 = vsel %vm3713, %v3634, %v3730
        %v3747 = vsel %vm3714, %v3692, %v3731
        %v3748 = vsel %vm3715, %v3637, %v3732
        %v3749 = vsel %vm3716, %v3695, %v3733
        %v3750 = vsel %vm3717, %v3639, %v3734
        %v3751 = vsel %vm3718, %v3697, %v3735
        %v3752 = vsel %vm3719, %v3642, %v3736
        %v3753 = vsel %vm3720, %v3700, %v3737
        %v3754 = vsel %vm3721, %v3644, %v3738
        %v3755 = vsel %vm3722, %v3702, %v3739
        %v3756 = vsel %vm3723, %v3647, %v3740
        %v3757 = vsel %vm3724, %v3705, %v3741
        %v3758 = vsel %vm3725, %v3649, %v3742
        %v3759 = vsel %vm3726, %v3707, %v3743
        %s3760 = sadd.s32 %s31, 1
        %p3761 = scmp.lt.s32.totalorder %s3760, 6
        // Predicated region
        $region73: #{xception_a_forward.5} parent=55 // pred_check
          %p3762 = pneg %p3761
        $region74: #{xception_a_forward.5} parent=55 // pred_check_branch
          %3764 = sbr.rel (%p3762) target = $region76
        $region75: #{xception_a_forward.5} parent=55 // pred_region
          %v3765 = vpack.c.bf16 %v3745, %v3744
          %v3766 = vpack.c.bf16 %v3747, %v3746
          %v3767 = vpack.c.bf16 %v3749, %v3748
          %v3768 = vpack.c.bf16 %v3751, %v3750
          %v3769 = vpack.c.bf16 %v3753, %v3752
          %v3770 = vpack.c.bf16 %v3755, %v3754
          %v3771 = vpack.c.bf16 %v3757, %v3756
          %v3772 = vpack.c.bf16 %v3759, %v3758
          %v3774 = vshrl.u32 %v3765, 16
          %v3776 = vrot.slane %v3774, 7
          %v3777 = vshll.u32 %v3765, 16
          %v3779 = vor.u32 %v3776, %v3777
          %v3780 = vrot.slane %v3776, 4
          %v3782 = vshrl.u32 %v3766, 16
          %v3784 = vrot.slane %v3782, 7
          %v3785 = vshll.u32 %v3766, 16
          %v3787 = vor.u32 %v3784, %v3785
          %v3788 = vrot.slane %v3784, 4
          %v3790 = vshrl.u32 %v3767, 16
          %v3792 = vrot.slane %v3790, 7
          %v3793 = vshll.u32 %v3767, 16
          %v3795 = vor.u32 %v3792, %v3793
          %v3796 = vrot.slane %v3792, 4
          %v3798 = vshrl.u32 %v3768, 16
          %v3800 = vrot.slane %v3798, 7
          %v3801 = vshll.u32 %v3768, 16
          %v3803 = vor.u32 %v3800, %v3801
          %v3804 = vrot.slane %v3800, 4
          %v3806 = vshrl.u32 %v3769, 16
          %v3808 = vrot.slane %v3806, 7
          %v3809 = vshll.u32 %v3769, 16
          %v3811 = vor.u32 %v3808, %v3809
          %v3812 = vrot.slane %v3808, 4
          %v3814 = vshrl.u32 %v3770, 16
          %v3816 = vrot.slane %v3814, 7
          %v3817 = vshll.u32 %v3770, 16
          %v3819 = vor.u32 %v3816, %v3817
          %v3820 = vrot.slane %v3816, 4
          %v3822 = vshrl.u32 %v3771, 16
          %v3824 = vrot.slane %v3822, 7
          %v3825 = vshll.u32 %v3771, 16
          %v3827 = vor.u32 %v3824, %v3825
          %v3828 = vrot.slane %v3824, 4
          %v3830 = vshrl.u32 %v3772, 16
          %v3832 = vrot.slane %v3830, 7
          %v3833 = vshll.u32 %v3772, 16
          %v3835 = vor.u32 %v3832, %v3833
          %v3836 = vrot.slane %v3832, 4
          %s3853 = scalar_lea.vmem [#allocation2], 16
          %v3854 = vld [vmem:[%s3853] sm:$0xff]
          %v3855 = vsel %vm2292, %v3779, %v3854
          %3856 = vst [vmem:[%s3853] sm:$0xff] %v3855
          %v3857 = vld [vmem:[%s3853 + $0x8] sm:$0x11]
          %v3858 = vsel %vm2302, %v3780, %v3857
          %3859 = vst [vmem:[%s3853 + $0x8] sm:$0x11] %v3858
          %v3860 = vld [vmem:[%s3853 + $0x10] sm:$0xff]
          %v3861 = vsel %vm2292, %v3787, %v3860
          %3862 = vst [vmem:[%s3853 + $0x10] sm:$0xff] %v3861
          %v3863 = vld [vmem:[%s3853 + $0x18] sm:$0x11]
          %v3864 = vsel %vm2302, %v3788, %v3863
          %3865 = vst [vmem:[%s3853 + $0x18] sm:$0x11] %v3864
          %v3866 = vld [vmem:[%s3853 + $0x20] sm:$0xff]
          %v3867 = vsel %vm2292, %v3795, %v3866
          %3868 = vst [vmem:[%s3853 + $0x20] sm:$0xff] %v3867
          %v3869 = vld [vmem:[%s3853 + $0x28] sm:$0x11]
          %v3870 = vsel %vm2302, %v3796, %v3869
          %3871 = vst [vmem:[%s3853 + $0x28] sm:$0x11] %v3870
          %v3872 = vld [vmem:[%s3853 + $0x30] sm:$0xff]
          %v3873 = vsel %vm2292, %v3803, %v3872
          %3874 = vst [vmem:[%s3853 + $0x30] sm:$0xff] %v3873
          %v3875 = vld [vmem:[%s3853 + $0x38] sm:$0x11]
          %v3876 = vsel %vm2302, %v3804, %v3875
          %3877 = vst [vmem:[%s3853 + $0x38] sm:$0x11] %v3876
          %v3878 = vld [vmem:[%s3853 + $0x40] sm:$0xff]
          %v3879 = vsel %vm2292, %v3811, %v3878
          %3880 = vst [vmem:[%s3853 + $0x40] sm:$0xff] %v3879
          %v3881 = vld [vmem:[%s3853 + $0x48] sm:$0x11]
          %v3882 = vsel %vm2302, %v3812, %v3881
          %3883 = vst [vmem:[%s3853 + $0x48] sm:$0x11] %v3882
          %v3884 = vld [vmem:[%s3853 + $0x50] sm:$0xff]
          %v3885 = vsel %vm2292, %v3819, %v3884
          %3886 = vst [vmem:[%s3853 + $0x50] sm:$0xff] %v3885
          %v3887 = vld [vmem:[%s3853 + $0x58] sm:$0x11]
          %v3888 = vsel %vm2302, %v3820, %v3887
          %3889 = vst [vmem:[%s3853 + $0x58] sm:$0x11] %v3888
          %v3890 = vld [vmem:[%s3853 + $0x60] sm:$0xff]
          %v3891 = vsel %vm2292, %v3827, %v3890
          %3892 = vst [vmem:[%s3853 + $0x60] sm:$0xff] %v3891
          %v3893 = vld [vmem:[%s3853 + $0x68] sm:$0x11]
          %v3894 = vsel %vm2302, %v3828, %v3893
          %3895 = vst [vmem:[%s3853 + $0x68] sm:$0x11] %v3894
          %v3896 = vld [vmem:[%s3853 + $0x70] sm:$0xff]
          %v3897 = vsel %vm2292, %v3835, %v3896
          %3898 = vst [vmem:[%s3853 + $0x70] sm:$0xff] %v3897
          %v3899 = vld [vmem:[%s3853 + $0x78] sm:$0x11]
          %v3900 = vsel %vm2302, %v3836, %v3899
          %3901 = vst [vmem:[%s3853 + $0x78] sm:$0x11] %v3900
        $region76: #{xception_a_forward.5} parent=55 // pred_fallthru
          _
        %p3902 = scmp.eq.s32.totalorder %s31, 5
        // Predicated region
        $region77: #{xception_a_forward.5} parent=55 // pred_check
          %p3903 = pneg %p3902
        $region78: #{xception_a_forward.5} parent=55 // pred_check_branch
          %3905 = sbr.rel (%p3903) target = $region80
        $region79: #{xception_a_forward.5} parent=55 // pred_region
          %v3906 = vadd.f32 %v3744, %v3746
          %v3907 = vadd.f32 %v3906, %v3748
          %v3908 = vadd.f32 %v3907, %v3750
          %v3909 = vadd.f32 %v3908, %v3752
          %v3910 = vadd.f32 %v3909, %v3754
          %v3911 = vadd.f32 %v3910, %v3756
          %v3912 = vadd.f32 %v3911, %v3758
          %v3913 = vrot.slane %v3912, 4
          %v3914 = vadd.f32 %v3912, %v3913
          %v3915 = vrot.slane %v3914, 2
          %v3916 = vadd.f32 %v3914, %v3915
          %v3917 = vrot.slane %v3916, 1
          %v3918 = vadd.f32 %v3916, %v3917
          %v3919 = vsel %vm2017, %v3745, 0.0
          %v3920 = vsel %vm2017, %v3747, 0.0
          %v3921 = vadd.f32 %v3919, %v3920
          %v3922 = vsel %vm2017, %v3749, 0.0
          %v3923 = vadd.f32 %v3921, %v3922
          %v3924 = vsel %vm2017, %v3751, 0.0
          %v3925 = vadd.f32 %v3923, %v3924
          %v3926 = vsel %vm2017, %v3753, 0.0
          %v3927 = vadd.f32 %v3925, %v3926
          %v3928 = vsel %vm2017, %v3755, 0.0
          %v3929 = vadd.f32 %v3927, %v3928
          %v3930 = vsel %vm2017, %v3757, 0.0
          %v3931 = vadd.f32 %v3929, %v3930
          %v3932 = vsel %vm2017, %v3759, 0.0
          %v3933 = vadd.f32 %v3931, %v3932
          %v3934 = vrot.slane %v3933, 4
          %v3935 = vadd.f32 %v3933, %v3934
          %v3936 = vrot.slane %v3935, 2
          %v3937 = vadd.f32 %v3935, %v3936
          %v3938 = vrot.slane %v3937, 1
          %v3939 = vadd.f32 %v3937, %v3938
          %v3940 = vrcp.pop 64.0
          %v3941 = vmul.f32 64.0, %v3940
          %v3942 = vsub.f32 1.0, %v3941
          %v3943 = vmul.f32 %v3940, %v3942
          %v3944 = vadd.f32 %v3940, %v3943
          %vm3945 = vweird.f32 %v3940
          %v3946 = vsel %vm3945, %v3940, %v3944
          %v3947 = vmul.f32 %v3918, %v3946
          %v3948 = vmul.f32 %v3939, %v3946
          %v3949 = vpack.c.bf16 %v3947, %v3947
          %v3950 = vpack.c.bf16 %v3948, %v3948
          %v3951 = vld [vmem:[#allocation8] sm:$0xff]
          %v3952 = vld [vmem:[#allocation8 + $0x8] sm:$0xff]
          %v3953 = vld [vmem:[#allocation8 + $0x10] sm:$0xff]
          %v3954 = vld [vmem:[#allocation8 + $0x18] sm:$0xff]
          %v3955 = vld [vmem:[#allocation8 + $0x20] sm:$0xff]
          %v3956 = vld [vmem:[#allocation8 + $0x28] sm:$0xff]
          %v3957 = vld [vmem:[#allocation8 + $0x30] sm:$0xff]
          %v3958 = vld [vmem:[#allocation8 + $0x38] sm:$0xff]
          %v3959 = vld [vmem:[#allocation8 + $0x40] sm:$0xff]
          %v3960 = vld [vmem:[#allocation8 + $0x48] sm:$0xff]
          %v3961 = vld [vmem:[#allocation8 + $0x50] sm:$0xff]
          %v3962 = vld [vmem:[#allocation8 + $0x58] sm:$0xff]
          %v3963 = vld [vmem:[#allocation8 + $0x60] sm:$0xff]
          %v3964 = vld [vmem:[#allocation8 + $0x68] sm:$0xff]
          %v3965 = vld [vmem:[#allocation8 + $0x70] sm:$0xff]
          %v3966 = vld [vmem:[#allocation8 + $0x78] sm:$0xff]
          %v3967 = vld [vmem:[#allocation8 + $0x80] sm:$0xff]
          %v3968 = vld [vmem:[#allocation8 + $0x88] sm:$0xff]
          %v3969 = vld [vmem:[#allocation8 + $0x90] sm:$0xff]
          %v3970 = vld [vmem:[#allocation8 + $0x98] sm:$0xff]
          %v3971 = vld [vmem:[#allocation8 + $0xa0] sm:$0xff]
          %v3972 = vld [vmem:[#allocation8 + $0xa8] sm:$0xff]
          %v3973 = vld [vmem:[#allocation8 + $0xb0] sm:$0xff]
          %v3974 = vld [vmem:[#allocation8 + $0xb8] sm:$0xff]
          %v3975 = vld [vmem:[#allocation8 + $0xc0] sm:$0xff]
          %v3976 = vld [vmem:[#allocation8 + $0xc8] sm:$0xff]
          %v3977 = vld [vmem:[#allocation8 + $0xd0] sm:$0xff]
          %v3978 = vld [vmem:[#allocation8 + $0xd8] sm:$0xff]
          %v3979 = vld [vmem:[#allocation8 + $0xe0] sm:$0xff]
          %v3980 = vld [vmem:[#allocation8 + $0xe8] sm:$0xff]
          %v3981 = vld [vmem:[#allocation8 + $0xf0] sm:$0xff]
          %v3982 = vld [vmem:[#allocation8 + $0xf8] sm:$0xff]
          %v3983 = vld [vmem:[#allocation8 + $0x100] sm:$0xff]
          %v3984 = vld [vmem:[#allocation8 + $0x108] sm:$0xff]
          %v3985 = vld [vmem:[#allocation8 + $0x110] sm:$0xff]
          %v3986 = vld [vmem:[#allocation8 + $0x118] sm:$0xff]
          %v3987 = vld [vmem:[#allocation8 + $0x120] sm:$0xff]
          %v3988 = vld [vmem:[#allocation8 + $0x128] sm:$0xff]
          %v3989 = vld [vmem:[#allocation8 + $0x130] sm:$0xff]
          %v3990 = vld [vmem:[#allocation8 + $0x138] sm:$0xff]
          %v3991 = vld [vmem:[#allocation8 + $0x140] sm:$0xff]
          %v3992 = vld [vmem:[#allocation8 + $0x148] sm:$0xff]
          %v3993 = vld [vmem:[#allocation8 + $0x150] sm:$0xff]
          %v3994 = vld [vmem:[#allocation8 + $0x158] sm:$0xff]
          %v3995 = vld [vmem:[#allocation8 + $0x160] sm:$0xff]
          %v3996 = vld [vmem:[#allocation8 + $0x168] sm:$0xff]
          %v3997 = vld [vmem:[#allocation8 + $0x170] sm:$0xff]
          %v3998 = vld [vmem:[#allocation8 + $0x178] sm:$0xff]
          %v3999 = vld [vmem:[#allocation8 + $0x180] sm:$0xff]
          %v4000 = vld [vmem:[#allocation8 + $0x188] sm:$0xff]
          %v4001 = vld [vmem:[#allocation8 + $0x190] sm:$0xff]
          %v4002 = vld [vmem:[#allocation8 + $0x198] sm:$0xff]
          %v4003 = vld [vmem:[#allocation8 + $0x1a0] sm:$0xff]
          %v4004 = vld [vmem:[#allocation8 + $0x1a8] sm:$0xff]
          %v4005 = vld [vmem:[#allocation8 + $0x1b0] sm:$0xff]
          %v4006 = vld [vmem:[#allocation8 + $0x1b8] sm:$0xff]
          %v4007 = vld [vmem:[#allocation8 + $0x1c0] sm:$0xff]
          %v4008 = vld [vmem:[#allocation8 + $0x1c8] sm:$0xff]
          %v4009 = vld [vmem:[#allocation8 + $0x1d0] sm:$0xff]
          %v4010 = vld [vmem:[#allocation8 + $0x1d8] sm:$0xff]
          %v4011 = vld [vmem:[#allocation8 + $0x1e0] sm:$0xff]
          %v4012 = vld [vmem:[#allocation8 + $0x1e8] sm:$0xff]
          %v4013 = vld [vmem:[#allocation8 + $0x1f0] sm:$0xff]
          %v4014 = vld [vmem:[#allocation8 + $0x1f8] sm:$0xff]
          %v4015 = vld [vmem:[#allocation8 + $0x200] sm:$0xff]
          %v4016 = vld [vmem:[#allocation8 + $0x208] sm:$0xff]
          %v4017 = vld [vmem:[#allocation8 + $0x210] sm:$0xff]
          %v4018 = vld [vmem:[#allocation8 + $0x218] sm:$0xff]
          %v4019 = vld [vmem:[#allocation8 + $0x220] sm:$0xff]
          %v4020 = vld [vmem:[#allocation8 + $0x228] sm:$0xff]
          %v4021 = vld [vmem:[#allocation8 + $0x230] sm:$0xff]
          %v4022 = vld [vmem:[#allocation8 + $0x238] sm:$0xff]
          %v4023 = vld [vmem:[#allocation8 + $0x240] sm:$0xff]
          %v4024 = vld [vmem:[#allocation8 + $0x248] sm:$0xff]
          %v4025 = vld [vmem:[#allocation8 + $0x250] sm:$0xff]
          %v4026 = vld [vmem:[#allocation8 + $0x258] sm:$0xff]
          %v4027 = vld [vmem:[#allocation8 + $0x260] sm:$0xff]
          %v4028 = vld [vmem:[#allocation8 + $0x268] sm:$0xff]
          %v4029 = vld [vmem:[#allocation8 + $0x270] sm:$0xff]
          %v4030 = vld [vmem:[#allocation8 + $0x278] sm:$0xff]
          %v4031 = vld [vmem:[#allocation8 + $0x280] sm:$0xff]
          %v4032 = vld [vmem:[#allocation8 + $0x288] sm:$0xff]
          %v4033 = vld [vmem:[#allocation8 + $0x290] sm:$0xff]
          %v4034 = vld [vmem:[#allocation8 + $0x298] sm:$0xff]
          %v4035 = vld [vmem:[#allocation8 + $0x2a0] sm:$0xff]
          %v4036 = vld [vmem:[#allocation8 + $0x2a8] sm:$0xff]
          %v4037 = vld [vmem:[#allocation8 + $0x2b0] sm:$0xff]
          %v4038 = vld [vmem:[#allocation8 + $0x2b8] sm:$0xff]
          %v4039 = vld [vmem:[#allocation8 + $0x2c0] sm:$0xff]
          %v4040 = vld [vmem:[#allocation8 + $0x2c8] sm:$0xff]
          %v4041 = vld [vmem:[#allocation8 + $0x2d0] sm:$0xff]
          %v4042 = vld [vmem:[#allocation8 + $0x2d8] sm:$0xff]
          %v4043 = vld [vmem:[#allocation8 + $0x2e0] sm:$0xff]
          %v4044 = vld [vmem:[#allocation8 + $0x2e8] sm:$0xff]
          %v4045 = vld [vmem:[#allocation8 + $0x2f0] sm:$0xff]
          %v4046 = vld [vmem:[#allocation8 + $0x2f8] sm:$0xff]
          %v4143 = vunpack.c.l.b16 %v3951
          %v4144 = vunpack.c.h.b16 %v3951
          %v4145 = vunpack.c.l.b16 %v3952
          %v4146 = vunpack.c.h.b16 %v3952
          %v4147 = vunpack.c.l.b16 %v3953
          %v4148 = vunpack.c.h.b16 %v3953
          %v4149 = vunpack.c.l.b16 %v3954
          %v4150 = vunpack.c.h.b16 %v3954
          %v4151 = vunpack.c.l.b16 %v3955
          %v4152 = vunpack.c.h.b16 %v3955
          %v4153 = vunpack.c.l.b16 %v3956
          %v4154 = vunpack.c.h.b16 %v3956
          %v4155 = vunpack.c.l.b16 %v3957
          %v4156 = vunpack.c.h.b16 %v3957
          %v4157 = vunpack.c.l.b16 %v3958
          %v4158 = vunpack.c.h.b16 %v3958
          %v4159 = vunpack.c.l.b16 %v3959
          %v4160 = vunpack.c.h.b16 %v3959
          %v4161 = vunpack.c.l.b16 %v3960
          %v4162 = vunpack.c.h.b16 %v3960
          %v4163 = vunpack.c.l.b16 %v3961
          %v4164 = vunpack.c.h.b16 %v3961
          %v4165 = vunpack.c.l.b16 %v3962
          %v4166 = vunpack.c.h.b16 %v3962
          %v4167 = vunpack.c.l.b16 %v3963
          %v4168 = vunpack.c.h.b16 %v3963
          %v4169 = vunpack.c.l.b16 %v3964
          %v4170 = vunpack.c.h.b16 %v3964
          %v4171 = vunpack.c.l.b16 %v3965
          %v4172 = vunpack.c.h.b16 %v3965
          %v4173 = vunpack.c.l.b16 %v3966
          %v4174 = vunpack.c.h.b16 %v3966
          %v4175 = vunpack.c.l.b16 %v3967
          %v4176 = vunpack.c.h.b16 %v3967
          %v4177 = vunpack.c.l.b16 %v3968
          %v4178 = vunpack.c.h.b16 %v3968
          %v4179 = vunpack.c.l.b16 %v3969
          %v4180 = vunpack.c.h.b16 %v3969
          %v4181 = vunpack.c.l.b16 %v3970
          %v4182 = vunpack.c.h.b16 %v3970
          %v4183 = vunpack.c.l.b16 %v3971
          %v4184 = vunpack.c.h.b16 %v3971
          %v4185 = vunpack.c.l.b16 %v3972
          %v4186 = vunpack.c.h.b16 %v3972
          %v4187 = vunpack.c.l.b16 %v3973
          %v4188 = vunpack.c.h.b16 %v3973
          %v4189 = vunpack.c.l.b16 %v3974
          %v4190 = vunpack.c.h.b16 %v3974
          %v4191 = vunpack.c.l.b16 %v3975
          %v4192 = vunpack.c.h.b16 %v3975
          %v4193 = vunpack.c.l.b16 %v3976
          %v4194 = vunpack.c.h.b16 %v3976
          %v4195 = vunpack.c.l.b16 %v3977
          %v4196 = vunpack.c.h.b16 %v3977
          %v4197 = vunpack.c.l.b16 %v3978
          %v4198 = vunpack.c.h.b16 %v3978
          %v4199 = vunpack.c.l.b16 %v3979
          %v4200 = vunpack.c.h.b16 %v3979
          %v4201 = vunpack.c.l.b16 %v3980
          %v4202 = vunpack.c.h.b16 %v3980
          %v4203 = vunpack.c.l.b16 %v3981
          %v4204 = vunpack.c.h.b16 %v3981
          %v4205 = vunpack.c.l.b16 %v3982
          %v4206 = vunpack.c.h.b16 %v3982
          %v4207 = vunpack.c.l.b16 %v3983
          %v4208 = vunpack.c.h.b16 %v3983
          %v4209 = vunpack.c.l.b16 %v3984
          %v4210 = vunpack.c.h.b16 %v3984
          %v4211 = vunpack.c.l.b16 %v3985
          %v4212 = vunpack.c.h.b16 %v3985
          %v4213 = vunpack.c.l.b16 %v3986
          %v4214 = vunpack.c.h.b16 %v3986
          %v4215 = vunpack.c.l.b16 %v3987
          %v4216 = vunpack.c.h.b16 %v3987
          %v4217 = vunpack.c.l.b16 %v3988
          %v4218 = vunpack.c.h.b16 %v3988
          %v4219 = vunpack.c.l.b16 %v3989
          %v4220 = vunpack.c.h.b16 %v3989
          %v4221 = vunpack.c.l.b16 %v3990
          %v4222 = vunpack.c.h.b16 %v3990
          %v4223 = vunpack.c.l.b16 %v3991
          %v4224 = vunpack.c.h.b16 %v3991
          %v4225 = vunpack.c.l.b16 %v3992
          %v4226 = vunpack.c.h.b16 %v3992
          %v4227 = vunpack.c.l.b16 %v3993
          %v4228 = vunpack.c.h.b16 %v3993
          %v4229 = vunpack.c.l.b16 %v3994
          %v4230 = vunpack.c.h.b16 %v3994
          %v4231 = vunpack.c.l.b16 %v3995
          %v4232 = vunpack.c.h.b16 %v3995
          %v4233 = vunpack.c.l.b16 %v3996
          %v4234 = vunpack.c.h.b16 %v3996
          %v4235 = vunpack.c.l.b16 %v3997
          %v4236 = vunpack.c.h.b16 %v3997
          %v4237 = vunpack.c.l.b16 %v3998
          %v4238 = vunpack.c.h.b16 %v3998
          %v4239 = vunpack.c.l.b16 %v3999
          %v4240 = vunpack.c.h.b16 %v3999
          %v4241 = vunpack.c.l.b16 %v4000
          %v4242 = vunpack.c.h.b16 %v4000
          %v4243 = vunpack.c.l.b16 %v4001
          %v4244 = vunpack.c.h.b16 %v4001
          %v4245 = vunpack.c.l.b16 %v4002
          %v4246 = vunpack.c.h.b16 %v4002
          %v4247 = vunpack.c.l.b16 %v4003
          %v4248 = vunpack.c.h.b16 %v4003
          %v4249 = vunpack.c.l.b16 %v4004
          %v4250 = vunpack.c.h.b16 %v4004
          %v4251 = vunpack.c.l.b16 %v4005
          %v4252 = vunpack.c.h.b16 %v4005
          %v4253 = vunpack.c.l.b16 %v4006
          %v4254 = vunpack.c.h.b16 %v4006
          %v4255 = vunpack.c.l.b16 %v4007
          %v4256 = vunpack.c.h.b16 %v4007
          %v4257 = vunpack.c.l.b16 %v4008
          %v4258 = vunpack.c.h.b16 %v4008
          %v4259 = vunpack.c.l.b16 %v4009
          %v4260 = vunpack.c.h.b16 %v4009
          %v4261 = vunpack.c.l.b16 %v4010
          %v4262 = vunpack.c.h.b16 %v4010
          %v4263 = vunpack.c.l.b16 %v4011
          %v4264 = vunpack.c.h.b16 %v4011
          %v4265 = vunpack.c.l.b16 %v4012
          %v4266 = vunpack.c.h.b16 %v4012
          %v4267 = vunpack.c.l.b16 %v4013
          %v4268 = vunpack.c.h.b16 %v4013
          %v4269 = vunpack.c.l.b16 %v4014
          %v4270 = vunpack.c.h.b16 %v4014
          %v4271 = vunpack.c.l.b16 %v4015
          %v4272 = vunpack.c.h.b16 %v4015
          %v4273 = vunpack.c.l.b16 %v4016
          %v4274 = vunpack.c.h.b16 %v4016
          %v4275 = vunpack.c.l.b16 %v4017
          %v4276 = vunpack.c.h.b16 %v4017
          %v4277 = vunpack.c.l.b16 %v4018
          %v4278 = vunpack.c.h.b16 %v4018
          %v4279 = vunpack.c.l.b16 %v4019
          %v4280 = vunpack.c.h.b16 %v4019
          %v4281 = vunpack.c.l.b16 %v4020
          %v4282 = vunpack.c.h.b16 %v4020
          %v4283 = vunpack.c.l.b16 %v4021
          %v4284 = vunpack.c.h.b16 %v4021
          %v4285 = vunpack.c.l.b16 %v4022
          %v4286 = vunpack.c.h.b16 %v4022
          %v4287 = vunpack.c.l.b16 %v4023
          %v4288 = vunpack.c.h.b16 %v4023
          %v4289 = vunpack.c.l.b16 %v4024
          %v4290 = vunpack.c.h.b16 %v4024
          %v4291 = vunpack.c.l.b16 %v4025
          %v4292 = vunpack.c.h.b16 %v4025
          %v4293 = vunpack.c.l.b16 %v4026
          %v4294 = vunpack.c.h.b16 %v4026
          %v4295 = vunpack.c.l.b16 %v4027
          %v4296 = vunpack.c.h.b16 %v4027
          %v4297 = vunpack.c.l.b16 %v4028
          %v4298 = vunpack.c.h.b16 %v4028
          %v4299 = vunpack.c.l.b16 %v4029
          %v4300 = vunpack.c.h.b16 %v4029
          %v4301 = vunpack.c.l.b16 %v4030
          %v4302 = vunpack.c.h.b16 %v4030
          %v4303 = vunpack.c.l.b16 %v4031
          %v4304 = vunpack.c.h.b16 %v4031
          %v4305 = vunpack.c.l.b16 %v4032
          %v4306 = vunpack.c.h.b16 %v4032
          %v4307 = vunpack.c.l.b16 %v4033
          %v4308 = vunpack.c.h.b16 %v4033
          %v4309 = vunpack.c.l.b16 %v4034
          %v4310 = vunpack.c.h.b16 %v4034
          %v4311 = vunpack.c.l.b16 %v4035
          %v4312 = vunpack.c.h.b16 %v4035
          %v4313 = vunpack.c.l.b16 %v4036
          %v4314 = vunpack.c.h.b16 %v4036
          %v4315 = vunpack.c.l.b16 %v4037
          %v4316 = vunpack.c.h.b16 %v4037
          %v4317 = vunpack.c.l.b16 %v4038
          %v4318 = vunpack.c.h.b16 %v4038
          %v4319 = vunpack.c.l.b16 %v4039
          %v4320 = vunpack.c.h.b16 %v4039
          %v4321 = vunpack.c.l.b16 %v4040
          %v4322 = vunpack.c.h.b16 %v4040
          %v4323 = vunpack.c.l.b16 %v4041
          %v4324 = vunpack.c.h.b16 %v4041
          %v4325 = vunpack.c.l.b16 %v4042
          %v4326 = vunpack.c.h.b16 %v4042
          %v4327 = vunpack.c.l.b16 %v4043
          %v4328 = vunpack.c.h.b16 %v4043
          %v4329 = vunpack.c.l.b16 %v4044
          %v4330 = vunpack.c.h.b16 %v4044
          %v4331 = vunpack.c.l.b16 %v4045
          %v4332 = vunpack.c.h.b16 %v4045
          %v4333 = vunpack.c.l.b16 %v4046
          %v4334 = vunpack.c.h.b16 %v4046
          %v4335 = vpack.c.b16 %v4151, %v4143
          %v4336 = vpack.c.b16 %v4152, %v4144
          %v4337 = vpack.c.b16 %v4153, %v4145
          %v4338 = vpack.c.b16 %v4154, %v4146
          %v4339 = vpack.c.b16 %v4155, %v4147
          %v4340 = vpack.c.b16 %v4156, %v4148
          %v4341 = vpack.c.b16 %v4157, %v4149
          %v4342 = vpack.c.b16 %v4158, %v4150
          %v4343 = vpack.c.b16 %v4167, %v4159
          %v4344 = vpack.c.b16 %v4168, %v4160
          %v4345 = vpack.c.b16 %v4169, %v4161
          %v4346 = vpack.c.b16 %v4170, %v4162
          %v4347 = vpack.c.b16 %v4171, %v4163
          %v4348 = vpack.c.b16 %v4172, %v4164
          %v4349 = vpack.c.b16 %v4173, %v4165
          %v4350 = vpack.c.b16 %v4174, %v4166
          %v4351 = vpack.c.b16 %v4183, %v4175
          %v4352 = vpack.c.b16 %v4184, %v4176
          %v4353 = vpack.c.b16 %v4185, %v4177
          %v4354 = vpack.c.b16 %v4186, %v4178
          %v4355 = vpack.c.b16 %v4187, %v4179
          %v4356 = vpack.c.b16 %v4188, %v4180
          %v4357 = vpack.c.b16 %v4189, %v4181
          %v4358 = vpack.c.b16 %v4190, %v4182
          %v4359 = vpack.c.b16 %v4199, %v4191
          %v4360 = vpack.c.b16 %v4200, %v4192
          %v4361 = vpack.c.b16 %v4201, %v4193
          %v4362 = vpack.c.b16 %v4202, %v4194
          %v4363 = vpack.c.b16 %v4203, %v4195
          %v4364 = vpack.c.b16 %v4204, %v4196
          %v4365 = vpack.c.b16 %v4205, %v4197
          %v4366 = vpack.c.b16 %v4206, %v4198
          %v4367 = vpack.c.b16 %v4215, %v4207
          %v4368 = vpack.c.b16 %v4216, %v4208
          %v4369 = vpack.c.b16 %v4217, %v4209
          %v4370 = vpack.c.b16 %v4218, %v4210
          %v4371 = vpack.c.b16 %v4219, %v4211
          %v4372 = vpack.c.b16 %v4220, %v4212
          %v4373 = vpack.c.b16 %v4221, %v4213
          %v4374 = vpack.c.b16 %v4222, %v4214
          %v4375 = vpack.c.b16 %v4231, %v4223
          %v4376 = vpack.c.b16 %v4232, %v4224
          %v4377 = vpack.c.b16 %v4233, %v4225
          %v4378 = vpack.c.b16 %v4234, %v4226
          %v4379 = vpack.c.b16 %v4235, %v4227
          %v4380 = vpack.c.b16 %v4236, %v4228
          %v4381 = vpack.c.b16 %v4237, %v4229
          %v4382 = vpack.c.b16 %v4238, %v4230
          %v4383 = vpack.c.b16 %v4247, %v4239
          %v4384 = vpack.c.b16 %v4248, %v4240
          %v4385 = vpack.c.b16 %v4249, %v4241
          %v4386 = vpack.c.b16 %v4250, %v4242
          %v4387 = vpack.c.b16 %v4251, %v4243
          %v4388 = vpack.c.b16 %v4252, %v4244
          %v4389 = vpack.c.b16 %v4253, %v4245
          %v4390 = vpack.c.b16 %v4254, %v4246
          %v4391 = vpack.c.b16 %v4263, %v4255
          %v4392 = vpack.c.b16 %v4264, %v4256
          %v4393 = vpack.c.b16 %v4265, %v4257
          %v4394 = vpack.c.b16 %v4266, %v4258
          %v4395 = vpack.c.b16 %v4267, %v4259
          %v4396 = vpack.c.b16 %v4268, %v4260
          %v4397 = vpack.c.b16 %v4269, %v4261
          %v4398 = vpack.c.b16 %v4270, %v4262
          %v4399 = vpack.c.b16 %v4279, %v4271
          %v4400 = vpack.c.b16 %v4280, %v4272
          %v4401 = vpack.c.b16 %v4281, %v4273
          %v4402 = vpack.c.b16 %v4282, %v4274
          %v4403 = vpack.c.b16 %v4283, %v4275
          %v4404 = vpack.c.b16 %v4284, %v4276
          %v4405 = vpack.c.b16 %v4285, %v4277
          %v4406 = vpack.c.b16 %v4286, %v4278
          %v4407 = vpack.c.b16 %v4295, %v4287
          %v4408 = vpack.c.b16 %v4296, %v4288
          %v4409 = vpack.c.b16 %v4297, %v4289
          %v4410 = vpack.c.b16 %v4298, %v4290
          %v4411 = vpack.c.b16 %v4299, %v4291
          %v4412 = vpack.c.b16 %v4300, %v4292
          %v4413 = vpack.c.b16 %v4301, %v4293
          %v4414 = vpack.c.b16 %v4302, %v4294
          %v4415 = vpack.c.b16 %v4311, %v4303
          %v4416 = vpack.c.b16 %v4312, %v4304
          %v4417 = vpack.c.b16 %v4313, %v4305
          %v4418 = vpack.c.b16 %v4314, %v4306
          %v4419 = vpack.c.b16 %v4315, %v4307
          %v4420 = vpack.c.b16 %v4316, %v4308
          %v4421 = vpack.c.b16 %v4317, %v4309
          %v4422 = vpack.c.b16 %v4318, %v4310
          %v4423 = vpack.c.b16 %v4327, %v4319
          %v4424 = vpack.c.b16 %v4328, %v4320
          %v4425 = vpack.c.b16 %v4329, %v4321
          %v4426 = vpack.c.b16 %v4330, %v4322
          %v4427 = vpack.c.b16 %v4331, %v4323
          %v4428 = vpack.c.b16 %v4332, %v4324
          %v4429 = vpack.c.b16 %v4333, %v4325
          %v4430 = vpack.c.b16 %v4334, %v4326
          %v4528 = vsel %vm2017, %v3950, 0
          %4530 = vmatpush.bf16.msra.mxu0 %v4391
          %4531 = vmatpush.bf16.msra.mxu0 %v4383
          %4532 = vmatpush.bf16.msra.mxu0 %v4375
          %4533 = vmatpush.bf16.msra.mxu0 %v4367
          %4534 = vmatpush.bf16.msra.mxu0 %v4359
          %4535 = vmatpush.bf16.msra.mxu0 %v4351
          %4536 = vmatpush.bf16.msra.mxu0 %v4343
          %4537 = vmatpush.bf16.msra.mxu0 %v4335
          %4538 = vmatmul.bf16.gmra.mxu0 %v3949
          %v4539 = vpop.f32.mrf.mxu0
          %v4540 = vadd.f32 0.0, %v4539
          %v4541 = vpop.f32.mrf.mxu0
          %4542 = vdwg.mxu0
          %4543 = vmatpush.bf16.msra.mxu0 0
          %4544 = vmatpush.bf16.msra.mxu0 0
          %4545 = vmatpush.bf16.msra.mxu0 0
          %4546 = vmatpush.bf16.msra.mxu0 0
          %4547 = vmatpush.bf16.msra.mxu0 %v4423
          %4548 = vmatpush.bf16.msra.mxu0 %v4415
          %4549 = vmatpush.bf16.msra.mxu0 %v4407
          %4550 = vmatpush.bf16.msra.mxu0 %v4399
          %4551 = vmatmul.bf16.gmra.mxu0 %v4528
          %v4552 = vpop.f32.mrf.mxu0
          %v4553 = vadd.f32 %v4540, %v4552
          %v4554 = vpop.f32.mrf.mxu0
          %4555 = vdwg.mxu0
          %4556 = vmatpush.bf16.msra.mxu0 %v4392
          %4557 = vmatpush.bf16.msra.mxu0 %v4384
          %4558 = vmatpush.bf16.msra.mxu0 %v4376
          %4559 = vmatpush.bf16.msra.mxu0 %v4368
          %4560 = vmatpush.bf16.msra.mxu0 %v4360
          %4561 = vmatpush.bf16.msra.mxu0 %v4352
          %4562 = vmatpush.bf16.msra.mxu0 %v4344
          %4563 = vmatpush.bf16.msra.mxu0 %v4336
          %4564 = vmatmul.bf16.gmra.mxu0 %v3949
          %v4565 = vpop.f32.mrf.mxu0
          %v4566 = vadd.f32 0.0, %v4565
          %v4567 = vpop.f32.mrf.mxu0
          %4568 = vdwg.mxu0
          %4569 = vmatpush.bf16.msra.mxu0 0
          %4570 = vmatpush.bf16.msra.mxu0 0
          %4571 = vmatpush.bf16.msra.mxu0 0
          %4572 = vmatpush.bf16.msra.mxu0 0
          %4573 = vmatpush.bf16.msra.mxu0 %v4424
          %4574 = vmatpush.bf16.msra.mxu0 %v4416
          %4575 = vmatpush.bf16.msra.mxu0 %v4408
          %4576 = vmatpush.bf16.msra.mxu0 %v4400
          %4577 = vmatmul.bf16.gmra.mxu0 %v4528
          %v4578 = vpop.f32.mrf.mxu0
          %v4579 = vadd.f32 %v4566, %v4578
          %v4580 = vpop.f32.mrf.mxu0
          %4581 = vdwg.mxu0
          %4582 = vmatpush.bf16.msra.mxu0 %v4393
          %4583 = vmatpush.bf16.msra.mxu0 %v4385
          %4584 = vmatpush.bf16.msra.mxu0 %v4377
          %4585 = vmatpush.bf16.msra.mxu0 %v4369
          %4586 = vmatpush.bf16.msra.mxu0 %v4361
          %4587 = vmatpush.bf16.msra.mxu0 %v4353
          %4588 = vmatpush.bf16.msra.mxu0 %v4345
          %4589 = vmatpush.bf16.msra.mxu0 %v4337
          %4590 = vmatmul.bf16.gmra.mxu0 %v3949
          %v4591 = vpop.f32.mrf.mxu0
          %v4592 = vadd.f32 0.0, %v4591
          %v4593 = vpop.f32.mrf.mxu0
          %4594 = vdwg.mxu0
          %4595 = vmatpush.bf16.msra.mxu0 0
          %4596 = vmatpush.bf16.msra.mxu0 0
          %4597 = vmatpush.bf16.msra.mxu0 0
          %4598 = vmatpush.bf16.msra.mxu0 0
          %4599 = vmatpush.bf16.msra.mxu0 %v4425
          %4600 = vmatpush.bf16.msra.mxu0 %v4417
          %4601 = vmatpush.bf16.msra.mxu0 %v4409
          %4602 = vmatpush.bf16.msra.mxu0 %v4401
          %4603 = vmatmul.bf16.gmra.mxu0 %v4528
          %v4604 = vpop.f32.mrf.mxu0
          %v4605 = vadd.f32 %v4592, %v4604
          %v4606 = vpop.f32.mrf.mxu0
          %4607 = vdwg.mxu0
          %4608 = vmatpush.bf16.msra.mxu0 %v4394
          %4609 = vmatpush.bf16.msra.mxu0 %v4386
          %4610 = vmatpush.bf16.msra.mxu0 %v4378
          %4611 = vmatpush.bf16.msra.mxu0 %v4370
          %4612 = vmatpush.bf16.msra.mxu0 %v4362
          %4613 = vmatpush.bf16.msra.mxu0 %v4354
          %4614 = vmatpush.bf16.msra.mxu0 %v4346
          %4615 = vmatpush.bf16.msra.mxu0 %v4338
          %4616 = vmatmul.bf16.gmra.mxu0 %v3949
          %v4617 = vpop.f32.mrf.mxu0
          %v4618 = vadd.f32 0.0, %v4617
          %v4619 = vpop.f32.mrf.mxu0
          %4620 = vdwg.mxu0
          %4621 = vmatpush.bf16.msra.mxu0 0
          %4622 = vmatpush.bf16.msra.mxu0 0
          %4623 = vmatpush.bf16.msra.mxu0 0
          %4624 = vmatpush.bf16.msra.mxu0 0
          %4625 = vmatpush.bf16.msra.mxu0 %v4426
          %4626 = vmatpush.bf16.msra.mxu0 %v4418
          %4627 = vmatpush.bf16.msra.mxu0 %v4410
          %4628 = vmatpush.bf16.msra.mxu0 %v4402
          %4629 = vmatmul.bf16.gmra.mxu0 %v4528
          %v4630 = vpop.f32.mrf.mxu0
          %v4631 = vadd.f32 %v4618, %v4630
          %v4632 = vpop.f32.mrf.mxu0
          %4633 = vdwg.mxu0
          %4634 = vmatpush.bf16.msra.mxu0 %v4395
          %4635 = vmatpush.bf16.msra.mxu0 %v4387
          %4636 = vmatpush.bf16.msra.mxu0 %v4379
          %4637 = vmatpush.bf16.msra.mxu0 %v4371
          %4638 = vmatpush.bf16.msra.mxu0 %v4363
          %4639 = vmatpush.bf16.msra.mxu0 %v4355
          %4640 = vmatpush.bf16.msra.mxu0 %v4347
          %4641 = vmatpush.bf16.msra.mxu0 %v4339
          %4642 = vmatmul.bf16.gmra.mxu0 %v3949
          %v4643 = vpop.f32.mrf.mxu0
          %v4644 = vadd.f32 0.0, %v4643
          %v4645 = vpop.f32.mrf.mxu0
          %4646 = vdwg.mxu0
          %4647 = vmatpush.bf16.msra.mxu0 0
          %4648 = vmatpush.bf16.msra.mxu0 0
          %4649 = vmatpush.bf16.msra.mxu0 0
          %4650 = vmatpush.bf16.msra.mxu0 0
          %4651 = vmatpush.bf16.msra.mxu0 %v4427
          %4652 = vmatpush.bf16.msra.mxu0 %v4419
          %4653 = vmatpush.bf16.msra.mxu0 %v4411
          %4654 = vmatpush.bf16.msra.mxu0 %v4403
          %4655 = vmatmul.bf16.gmra.mxu0 %v4528
          %v4656 = vpop.f32.mrf.mxu0
          %v4657 = vadd.f32 %v4644, %v4656
          %v4658 = vpop.f32.mrf.mxu0
          %4659 = vdwg.mxu0
          %4660 = vmatpush.bf16.msra.mxu0 %v4396
          %4661 = vmatpush.bf16.msra.mxu0 %v4388
          %4662 = vmatpush.bf16.msra.mxu0 %v4380
          %4663 = vmatpush.bf16.msra.mxu0 %v4372
          %4664 = vmatpush.bf16.msra.mxu0 %v4364
          %4665 = vmatpush.bf16.msra.mxu0 %v4356
          %4666 = vmatpush.bf16.msra.mxu0 %v4348
          %4667 = vmatpush.bf16.msra.mxu0 %v4340
          %4668 = vmatmul.bf16.gmra.mxu0 %v3949
          %v4669 = vpop.f32.mrf.mxu0
          %v4670 = vadd.f32 0.0, %v4669
          %v4671 = vpop.f32.mrf.mxu0
          %4672 = vdwg.mxu0
          %4673 = vmatpush.bf16.msra.mxu0 0
          %4674 = vmatpush.bf16.msra.mxu0 0
          %4675 = vmatpush.bf16.msra.mxu0 0
          %4676 = vmatpush.bf16.msra.mxu0 0
          %4677 = vmatpush.bf16.msra.mxu0 %v4428
          %4678 = vmatpush.bf16.msra.mxu0 %v4420
          %4679 = vmatpush.bf16.msra.mxu0 %v4412
          %4680 = vmatpush.bf16.msra.mxu0 %v4404
          %4681 = vmatmul.bf16.gmra.mxu0 %v4528
          %v4682 = vpop.f32.mrf.mxu0
          %v4683 = vadd.f32 %v4670, %v4682
          %v4684 = vpop.f32.mrf.mxu0
          %4685 = vdwg.mxu0
          %4686 = vmatpush.bf16.msra.mxu0 %v4397
          %4687 = vmatpush.bf16.msra.mxu0 %v4389
          %4688 = vmatpush.bf16.msra.mxu0 %v4381
          %4689 = vmatpush.bf16.msra.mxu0 %v4373
          %4690 = vmatpush.bf16.msra.mxu0 %v4365
          %4691 = vmatpush.bf16.msra.mxu0 %v4357
          %4692 = vmatpush.bf16.msra.mxu0 %v4349
          %4693 = vmatpush.bf16.msra.mxu0 %v4341
          %4694 = vmatmul.bf16.gmra.mxu0 %v3949
          %v4695 = vpop.f32.mrf.mxu0
          %v4696 = vadd.f32 0.0, %v4695
          %v4697 = vpop.f32.mrf.mxu0
          %4698 = vdwg.mxu0
          %4699 = vmatpush.bf16.msra.mxu0 0
          %4700 = vmatpush.bf16.msra.mxu0 0
          %4701 = vmatpush.bf16.msra.mxu0 0
          %4702 = vmatpush.bf16.msra.mxu0 0
          %4703 = vmatpush.bf16.msra.mxu0 %v4429
          %4704 = vmatpush.bf16.msra.mxu0 %v4421
          %4705 = vmatpush.bf16.msra.mxu0 %v4413
          %4706 = vmatpush.bf16.msra.mxu0 %v4405
          %4707 = vmatmul.bf16.gmra.mxu0 %v4528
          %v4708 = vpop.f32.mrf.mxu0
          %v4709 = vadd.f32 %v4696, %v4708
          %v4710 = vpop.f32.mrf.mxu0
          %4711 = vdwg.mxu0
          %4712 = vmatpush.bf16.msra.mxu0 %v4398
          %4713 = vmatpush.bf16.msra.mxu0 %v4390
          %4714 = vmatpush.bf16.msra.mxu0 %v4382
          %4715 = vmatpush.bf16.msra.mxu0 %v4374
          %4716 = vmatpush.bf16.msra.mxu0 %v4366
          %4717 = vmatpush.bf16.msra.mxu0 %v4358
          %4718 = vmatpush.bf16.msra.mxu0 %v4350
          %4719 = vmatpush.bf16.msra.mxu0 %v4342
          %4720 = vmatmul.bf16.gmra.mxu0 %v3949
          %v4721 = vpop.f32.mrf.mxu0
          %v4722 = vadd.f32 0.0, %v4721
          %v4723 = vpop.f32.mrf.mxu0
          %4724 = vdwg.mxu0
          %4725 = vmatpush.bf16.msra.mxu0 0
          %4726 = vmatpush.bf16.msra.mxu0 0
          %4727 = vmatpush.bf16.msra.mxu0 0
          %4728 = vmatpush.bf16.msra.mxu0 0
          %4729 = vmatpush.bf16.msra.mxu0 %v4430
          %4730 = vmatpush.bf16.msra.mxu0 %v4422
          %4731 = vmatpush.bf16.msra.mxu0 %v4414
          %4732 = vmatpush.bf16.msra.mxu0 %v4406
          %4733 = vmatmul.bf16.gmra.mxu0 %v4528
          %v4734 = vpop.f32.mrf.mxu0
          %v4735 = vadd.f32 %v4722, %v4734
          %v4736 = vpop.f32.mrf.mxu0
          %4737 = vdwg.mxu0
          %v4738 = vpack.c.bf16 %v4553, %v4553
          %v4739 = vpack.c.bf16 %v4579, %v4579
          %v4740 = vpack.c.bf16 %v4605, %v4605
          %v4741 = vpack.c.bf16 %v4631, %v4631
          %v4742 = vpack.c.bf16 %v4657, %v4657
          %v4743 = vpack.c.bf16 %v4683, %v4683
          %v4744 = vpack.c.bf16 %v4709, %v4709
          %v4745 = vpack.c.bf16 %v4735, %v4735
          %v4746 = vld [vmem:[%s6] sm:$0xff]
          %v4747 = vld [vmem:[%s6 + $0x8] sm:$0xff]
          %v4748 = vld [vmem:[%s6 + $0x10] sm:$0xff]
          %v4749 = vld [vmem:[%s6 + $0x18] sm:$0xff]
          %v4750 = vld [vmem:[%s6 + $0x20] sm:$0xff]
          %v4751 = vld [vmem:[%s6 + $0x28] sm:$0xff]
          %v4752 = vld [vmem:[%s6 + $0x30] sm:$0xff]
          %v4753 = vld [vmem:[%s6 + $0x38] sm:$0xff]
          %v4754 = vld [vmem:[%s6 + $0x40] sm:$0xff]
          %v4755 = vld [vmem:[%s6 + $0x48] sm:$0xff]
          %v4756 = vld [vmem:[%s6 + $0x50] sm:$0xff]
          %v4757 = vld [vmem:[%s6 + $0x58] sm:$0xff]
          %v4758 = vld [vmem:[%s6 + $0x60] sm:$0xff]
          %v4759 = vld [vmem:[%s6 + $0x68] sm:$0xff]
          %v4760 = vld [vmem:[%s6 + $0x70] sm:$0xff]
          %v4761 = vld [vmem:[%s6 + $0x78] sm:$0xff]
          %v4762 = vld [vmem:[%s6 + $0x80] sm:$0xff]
          %v4763 = vld [vmem:[%s6 + $0x88] sm:$0xff]
          %v4764 = vld [vmem:[%s6 + $0x90] sm:$0xff]
          %v4765 = vld [vmem:[%s6 + $0x98] sm:$0xff]
          %v4766 = vld [vmem:[%s6 + $0xa0] sm:$0xff]
          %v4767 = vld [vmem:[%s6 + $0xa8] sm:$0xff]
          %v4768 = vld [vmem:[%s6 + $0xb0] sm:$0xff]
          %v4769 = vld [vmem:[%s6 + $0xb8] sm:$0xff]
          %v4770 = vld [vmem:[%s6 + $0xc0] sm:$0xff]
          %v4771 = vld [vmem:[%s6 + $0xc8] sm:$0xff]
          %v4772 = vld [vmem:[%s6 + $0xd0] sm:$0xff]
          %v4773 = vld [vmem:[%s6 + $0xd8] sm:$0xff]
          %v4774 = vld [vmem:[%s6 + $0xe0] sm:$0xff]
          %v4775 = vld [vmem:[%s6 + $0xe8] sm:$0xff]
          %v4776 = vld [vmem:[%s6 + $0xf0] sm:$0xff]
          %v4777 = vld [vmem:[%s6 + $0xf8] sm:$0xff]
          %v4778 = vld [vmem:[%s6 + $0x100] sm:$0xff]
          %v4779 = vld [vmem:[%s6 + $0x108] sm:$0xff]
          %v4780 = vld [vmem:[%s6 + $0x110] sm:$0xff]
          %v4781 = vld [vmem:[%s6 + $0x118] sm:$0xff]
          %v4782 = vld [vmem:[%s6 + $0x120] sm:$0xff]
          %v4783 = vld [vmem:[%s6 + $0x128] sm:$0xff]
          %v4784 = vld [vmem:[%s6 + $0x130] sm:$0xff]
          %v4785 = vld [vmem:[%s6 + $0x138] sm:$0xff]
          %v4786 = vld [vmem:[%s6 + $0x140] sm:$0xff]
          %v4787 = vld [vmem:[%s6 + $0x148] sm:$0xff]
          %v4788 = vld [vmem:[%s6 + $0x150] sm:$0xff]
          %v4789 = vld [vmem:[%s6 + $0x158] sm:$0xff]
          %v4790 = vld [vmem:[%s6 + $0x160] sm:$0xff]
          %v4791 = vld [vmem:[%s6 + $0x168] sm:$0xff]
          %v4792 = vld [vmem:[%s6 + $0x170] sm:$0xff]
          %v4793 = vld [vmem:[%s6 + $0x178] sm:$0xff]
          %v4794 = vld [vmem:[%s6 + $0x180] sm:$0xff]
          %v4795 = vld [vmem:[%s6 + $0x188] sm:$0xff]
          %v4796 = vld [vmem:[%s6 + $0x190] sm:$0xff]
          %v4797 = vld [vmem:[%s6 + $0x198] sm:$0xff]
          %v4798 = vld [vmem:[%s6 + $0x1a0] sm:$0xff]
          %v4799 = vld [vmem:[%s6 + $0x1a8] sm:$0xff]
          %v4800 = vld [vmem:[%s6 + $0x1b0] sm:$0xff]
          %v4801 = vld [vmem:[%s6 + $0x1b8] sm:$0xff]
          %v4802 = vld [vmem:[%s6 + $0x1c0] sm:$0xff]
          %v4803 = vld [vmem:[%s6 + $0x1c8] sm:$0xff]
          %v4804 = vld [vmem:[%s6 + $0x1d0] sm:$0xff]
          %v4805 = vld [vmem:[%s6 + $0x1d8] sm:$0xff]
          %v4806 = vld [vmem:[%s6 + $0x1e0] sm:$0xff]
          %v4807 = vld [vmem:[%s6 + $0x1e8] sm:$0xff]
          %v4808 = vld [vmem:[%s6 + $0x1f0] sm:$0xff]
          %v4809 = vld [vmem:[%s6 + $0x1f8] sm:$0xff]
          %v4810 = vld [vmem:[%s6 + $0x200] sm:$0xff]
          %v4811 = vld [vmem:[%s6 + $0x208] sm:$0xff]
          %v4812 = vld [vmem:[%s6 + $0x210] sm:$0xff]
          %v4813 = vld [vmem:[%s6 + $0x218] sm:$0xff]
          %v4814 = vld [vmem:[%s6 + $0x220] sm:$0xff]
          %v4815 = vld [vmem:[%s6 + $0x228] sm:$0xff]
          %v4816 = vld [vmem:[%s6 + $0x230] sm:$0xff]
          %v4817 = vld [vmem:[%s6 + $0x238] sm:$0xff]
          %v4818 = vld [vmem:[%s6 + $0x240] sm:$0xff]
          %v4819 = vld [vmem:[%s6 + $0x248] sm:$0xff]
          %v4820 = vld [vmem:[%s6 + $0x250] sm:$0xff]
          %v4821 = vld [vmem:[%s6 + $0x258] sm:$0xff]
          %v4822 = vld [vmem:[%s6 + $0x260] sm:$0xff]
          %v4823 = vld [vmem:[%s6 + $0x268] sm:$0xff]
          %v4824 = vld [vmem:[%s6 + $0x270] sm:$0xff]
          %v4825 = vld [vmem:[%s6 + $0x278] sm:$0xff]
          %v4826 = vld [vmem:[%s6 + $0x280] sm:$0xff]
          %v4827 = vld [vmem:[%s6 + $0x288] sm:$0xff]
          %v4828 = vld [vmem:[%s6 + $0x290] sm:$0xff]
          %v4829 = vld [vmem:[%s6 + $0x298] sm:$0xff]
          %v4830 = vld [vmem:[%s6 + $0x2a0] sm:$0xff]
          %v4831 = vld [vmem:[%s6 + $0x2a8] sm:$0xff]
          %v4832 = vld [vmem:[%s6 + $0x2b0] sm:$0xff]
          %v4833 = vld [vmem:[%s6 + $0x2b8] sm:$0xff]
          %v4834 = vld [vmem:[%s6 + $0x2c0] sm:$0xff]
          %v4835 = vld [vmem:[%s6 + $0x2c8] sm:$0xff]
          %v4836 = vld [vmem:[%s6 + $0x2d0] sm:$0xff]
          %v4837 = vld [vmem:[%s6 + $0x2d8] sm:$0xff]
          %v4838 = vld [vmem:[%s6 + $0x2e0] sm:$0xff]
          %v4839 = vld [vmem:[%s6 + $0x2e8] sm:$0xff]
          %v4840 = vld [vmem:[%s6 + $0x2f0] sm:$0xff]
          %v4841 = vld [vmem:[%s6 + $0x2f8] sm:$0xff]
          %v4842 = vld [vmem:[%s6 + $0x300] sm:$0xff]
          %v4843 = vld [vmem:[%s6 + $0x308] sm:$0xff]
          %v4844 = vld [vmem:[%s6 + $0x310] sm:$0xff]
          %v4845 = vld [vmem:[%s6 + $0x318] sm:$0xff]
          %v4846 = vld [vmem:[%s6 + $0x320] sm:$0xff]
          %v4847 = vld [vmem:[%s6 + $0x328] sm:$0xff]
          %v4848 = vld [vmem:[%s6 + $0x330] sm:$0xff]
          %v4849 = vld [vmem:[%s6 + $0x338] sm:$0xff]
          %v4850 = vld [vmem:[%s6 + $0x340] sm:$0xff]
          %v4851 = vld [vmem:[%s6 + $0x348] sm:$0xff]
          %v4852 = vld [vmem:[%s6 + $0x350] sm:$0xff]
          %v4853 = vld [vmem:[%s6 + $0x358] sm:$0xff]
          %v4854 = vld [vmem:[%s6 + $0x360] sm:$0xff]
          %v4855 = vld [vmem:[%s6 + $0x368] sm:$0xff]
          %v4856 = vld [vmem:[%s6 + $0x370] sm:$0xff]
          %v4857 = vld [vmem:[%s6 + $0x378] sm:$0xff]
          %v4858 = vld [vmem:[%s6 + $0x380] sm:$0xff]
          %v4859 = vld [vmem:[%s6 + $0x388] sm:$0xff]
          %v4860 = vld [vmem:[%s6 + $0x390] sm:$0xff]
          %v4861 = vld [vmem:[%s6 + $0x398] sm:$0xff]
          %v4862 = vld [vmem:[%s6 + $0x3a0] sm:$0xff]
          %v4863 = vld [vmem:[%s6 + $0x3a8] sm:$0xff]
          %v4864 = vld [vmem:[%s6 + $0x3b0] sm:$0xff]
          %v4865 = vld [vmem:[%s6 + $0x3b8] sm:$0xff]
          %v4866 = vld [vmem:[%s6 + $0x3c0] sm:$0xff]
          %v4867 = vld [vmem:[%s6 + $0x3c8] sm:$0xff]
          %v4868 = vld [vmem:[%s6 + $0x3d0] sm:$0xff]
          %v4869 = vld [vmem:[%s6 + $0x3d8] sm:$0xff]
          %v4870 = vld [vmem:[%s6 + $0x3e0] sm:$0xff]
          %v4871 = vld [vmem:[%s7] sm:$0x3]
          %v4997 = vunpack.c.l.b16 %v4746
          %v4998 = vunpack.c.h.b16 %v4746
          %v4999 = vunpack.c.l.b16 %v4747
          %v5000 = vunpack.c.h.b16 %v4747
          %v5001 = vunpack.c.l.b16 %v4748
          %v5002 = vunpack.c.h.b16 %v4748
          %v5003 = vunpack.c.l.b16 %v4749
          %v5004 = vunpack.c.h.b16 %v4749
          %v5005 = vunpack.c.l.b16 %v4750
          %v5006 = vunpack.c.h.b16 %v4750
          %v5007 = vunpack.c.l.b16 %v4751
          %v5008 = vunpack.c.h.b16 %v4751
          %v5009 = vunpack.c.l.b16 %v4752
          %v5010 = vunpack.c.h.b16 %v4752
          %v5011 = vunpack.c.l.b16 %v4753
          %v5012 = vunpack.c.h.b16 %v4753
          %v5013 = vunpack.c.l.b16 %v4754
          %v5014 = vunpack.c.h.b16 %v4754
          %v5015 = vunpack.c.l.b16 %v4755
          %v5016 = vunpack.c.h.b16 %v4755
          %v5017 = vunpack.c.l.b16 %v4756
          %v5018 = vunpack.c.h.b16 %v4756
          %v5019 = vunpack.c.l.b16 %v4757
          %v5020 = vunpack.c.h.b16 %v4757
          %v5021 = vunpack.c.l.b16 %v4758
          %v5022 = vunpack.c.h.b16 %v4758
          %v5023 = vunpack.c.l.b16 %v4759
          %v5024 = vunpack.c.h.b16 %v4759
          %v5025 = vunpack.c.l.b16 %v4760
          %v5026 = vunpack.c.h.b16 %v4760
          %v5027 = vunpack.c.l.b16 %v4761
          %v5028 = vunpack.c.h.b16 %v4761
          %v5029 = vunpack.c.l.b16 %v4762
          %v5030 = vunpack.c.h.b16 %v4762
          %v5031 = vunpack.c.l.b16 %v4763
          %v5032 = vunpack.c.h.b16 %v4763
          %v5033 = vunpack.c.l.b16 %v4764
          %v5034 = vunpack.c.h.b16 %v4764
          %v5035 = vunpack.c.l.b16 %v4765
          %v5036 = vunpack.c.h.b16 %v4765
          %v5037 = vunpack.c.l.b16 %v4766
          %v5038 = vunpack.c.h.b16 %v4766
          %v5039 = vunpack.c.l.b16 %v4767
          %v5040 = vunpack.c.h.b16 %v4767
          %v5041 = vunpack.c.l.b16 %v4768
          %v5042 = vunpack.c.h.b16 %v4768
          %v5043 = vunpack.c.l.b16 %v4769
          %v5044 = vunpack.c.h.b16 %v4769
          %v5045 = vunpack.c.l.b16 %v4770
          %v5046 = vunpack.c.h.b16 %v4770
          %v5047 = vunpack.c.l.b16 %v4771
          %v5048 = vunpack.c.h.b16 %v4771
          %v5049 = vunpack.c.l.b16 %v4772
          %v5050 = vunpack.c.h.b16 %v4772
          %v5051 = vunpack.c.l.b16 %v4773
          %v5052 = vunpack.c.h.b16 %v4773
          %v5053 = vunpack.c.l.b16 %v4774
          %v5054 = vunpack.c.h.b16 %v4774
          %v5055 = vunpack.c.l.b16 %v4775
          %v5056 = vunpack.c.h.b16 %v4775
          %v5057 = vunpack.c.l.b16 %v4776
          %v5058 = vunpack.c.h.b16 %v4776
          %v5059 = vunpack.c.l.b16 %v4777
          %v5060 = vunpack.c.h.b16 %v4777
          %v5061 = vunpack.c.l.b16 %v4778
          %v5062 = vunpack.c.h.b16 %v4778
          %v5063 = vunpack.c.l.b16 %v4779
          %v5064 = vunpack.c.h.b16 %v4779
          %v5065 = vunpack.c.l.b16 %v4780
          %v5066 = vunpack.c.h.b16 %v4780
          %v5067 = vunpack.c.l.b16 %v4781
          %v5068 = vunpack.c.h.b16 %v4781
          %v5069 = vunpack.c.l.b16 %v4782
          %v5070 = vunpack.c.h.b16 %v4782
          %v5071 = vunpack.c.l.b16 %v4783
          %v5072 = vunpack.c.h.b16 %v4783
          %v5073 = vunpack.c.l.b16 %v4784
          %v5074 = vunpack.c.h.b16 %v4784
          %v5075 = vunpack.c.l.b16 %v4785
          %v5076 = vunpack.c.h.b16 %v4785
          %v5077 = vunpack.c.l.b16 %v4786
          %v5078 = vunpack.c.h.b16 %v4786
          %v5079 = vunpack.c.l.b16 %v4787
          %v5080 = vunpack.c.h.b16 %v4787
          %v5081 = vunpack.c.l.b16 %v4788
          %v5082 = vunpack.c.h.b16 %v4788
          %v5083 = vunpack.c.l.b16 %v4789
          %v5084 = vunpack.c.h.b16 %v4789
          %v5085 = vunpack.c.l.b16 %v4790
          %v5086 = vunpack.c.h.b16 %v4790
          %v5087 = vunpack.c.l.b16 %v4791
          %v5088 = vunpack.c.h.b16 %v4791
          %v5089 = vunpack.c.l.b16 %v4792
          %v5090 = vunpack.c.h.b16 %v4792
          %v5091 = vunpack.c.l.b16 %v4793
          %v5092 = vunpack.c.h.b16 %v4793
          %v5093 = vunpack.c.l.b16 %v4794
          %v5094 = vunpack.c.h.b16 %v4794
          %v5095 = vunpack.c.l.b16 %v4795
          %v5096 = vunpack.c.h.b16 %v4795
          %v5097 = vunpack.c.l.b16 %v4796
          %v5098 = vunpack.c.h.b16 %v4796
          %v5099 = vunpack.c.l.b16 %v4797
          %v5100 = vunpack.c.h.b16 %v4797
          %v5101 = vunpack.c.l.b16 %v4798
          %v5102 = vunpack.c.h.b16 %v4798
          %v5103 = vunpack.c.l.b16 %v4799
          %v5104 = vunpack.c.h.b16 %v4799
          %v5105 = vunpack.c.l.b16 %v4800
          %v5106 = vunpack.c.h.b16 %v4800
          %v5107 = vunpack.c.l.b16 %v4801
          %v5108 = vunpack.c.h.b16 %v4801
          %v5109 = vunpack.c.l.b16 %v4802
          %v5110 = vunpack.c.h.b16 %v4802
          %v5111 = vunpack.c.l.b16 %v4803
          %v5112 = vunpack.c.h.b16 %v4803
          %v5113 = vunpack.c.l.b16 %v4804
          %v5114 = vunpack.c.h.b16 %v4804
          %v5115 = vunpack.c.l.b16 %v4805
          %v5116 = vunpack.c.h.b16 %v4805
          %v5117 = vunpack.c.l.b16 %v4806
          %v5118 = vunpack.c.h.b16 %v4806
          %v5119 = vunpack.c.l.b16 %v4807
          %v5120 = vunpack.c.h.b16 %v4807
          %v5121 = vunpack.c.l.b16 %v4808
          %v5122 = vunpack.c.h.b16 %v4808
          %v5123 = vunpack.c.l.b16 %v4809
          %v5124 = vunpack.c.h.b16 %v4809
          %v5125 = vunpack.c.l.b16 %v4810
          %v5126 = vunpack.c.h.b16 %v4810
          %v5127 = vunpack.c.l.b16 %v4811
          %v5128 = vunpack.c.h.b16 %v4811
          %v5129 = vunpack.c.l.b16 %v4812
          %v5130 = vunpack.c.h.b16 %v4812
          %v5131 = vunpack.c.l.b16 %v4813
          %v5132 = vunpack.c.h.b16 %v4813
          %v5133 = vunpack.c.l.b16 %v4814
          %v5134 = vunpack.c.h.b16 %v4814
          %v5135 = vunpack.c.l.b16 %v4815
          %v5136 = vunpack.c.h.b16 %v4815
          %v5137 = vunpack.c.l.b16 %v4816
          %v5138 = vunpack.c.h.b16 %v4816
          %v5139 = vunpack.c.l.b16 %v4817
          %v5140 = vunpack.c.h.b16 %v4817
          %v5141 = vunpack.c.l.b16 %v4818
          %v5142 = vunpack.c.h.b16 %v4818
          %v5143 = vunpack.c.l.b16 %v4819
          %v5144 = vunpack.c.h.b16 %v4819
          %v5145 = vunpack.c.l.b16 %v4820
          %v5146 = vunpack.c.h.b16 %v4820
          %v5147 = vunpack.c.l.b16 %v4821
          %v5148 = vunpack.c.h.b16 %v4821
          %v5149 = vunpack.c.l.b16 %v4822
          %v5150 = vunpack.c.h.b16 %v4822
          %v5151 = vunpack.c.l.b16 %v4823
          %v5152 = vunpack.c.h.b16 %v4823
          %v5153 = vunpack.c.l.b16 %v4824
          %v5154 = vunpack.c.h.b16 %v4824
          %v5155 = vunpack.c.l.b16 %v4825
          %v5156 = vunpack.c.h.b16 %v4825
          %v5157 = vunpack.c.l.b16 %v4826
          %v5158 = vunpack.c.h.b16 %v4826
          %v5159 = vunpack.c.l.b16 %v4827
          %v5160 = vunpack.c.h.b16 %v4827
          %v5161 = vunpack.c.l.b16 %v4828
          %v5162 = vunpack.c.h.b16 %v4828
          %v5163 = vunpack.c.l.b16 %v4829
          %v5164 = vunpack.c.h.b16 %v4829
          %v5165 = vunpack.c.l.b16 %v4830
          %v5166 = vunpack.c.h.b16 %v4830
          %v5167 = vunpack.c.l.b16 %v4831
          %v5168 = vunpack.c.h.b16 %v4831
          %v5169 = vunpack.c.l.b16 %v4832
          %v5170 = vunpack.c.h.b16 %v4832
          %v5171 = vunpack.c.l.b16 %v4833
          %v5172 = vunpack.c.h.b16 %v4833
          %v5173 = vunpack.c.l.b16 %v4834
          %v5174 = vunpack.c.h.b16 %v4834
          %v5175 = vunpack.c.l.b16 %v4835
          %v5176 = vunpack.c.h.b16 %v4835
          %v5177 = vunpack.c.l.b16 %v4836
          %v5178 = vunpack.c.h.b16 %v4836
          %v5179 = vunpack.c.l.b16 %v4837
          %v5180 = vunpack.c.h.b16 %v4837
          %v5181 = vunpack.c.l.b16 %v4838
          %v5182 = vunpack.c.h.b16 %v4838
          %v5183 = vunpack.c.l.b16 %v4839
          %v5184 = vunpack.c.h.b16 %v4839
          %v5185 = vunpack.c.l.b16 %v4840
          %v5186 = vunpack.c.h.b16 %v4840
          %v5187 = vunpack.c.l.b16 %v4841
          %v5188 = vunpack.c.h.b16 %v4841
          %v5189 = vunpack.c.l.b16 %v4842
          %v5190 = vunpack.c.h.b16 %v4842
          %v5191 = vunpack.c.l.b16 %v4843
          %v5192 = vunpack.c.h.b16 %v4843
          %v5193 = vunpack.c.l.b16 %v4844
          %v5194 = vunpack.c.h.b16 %v4844
          %v5195 = vunpack.c.l.b16 %v4845
          %v5196 = vunpack.c.h.b16 %v4845
          %v5197 = vunpack.c.l.b16 %v4846
          %v5198 = vunpack.c.h.b16 %v4846
          %v5199 = vunpack.c.l.b16 %v4847
          %v5200 = vunpack.c.h.b16 %v4847
          %v5201 = vunpack.c.l.b16 %v4848
          %v5202 = vunpack.c.h.b16 %v4848
          %v5203 = vunpack.c.l.b16 %v4849
          %v5204 = vunpack.c.h.b16 %v4849
          %v5205 = vunpack.c.l.b16 %v4850
          %v5206 = vunpack.c.h.b16 %v4850
          %v5207 = vunpack.c.l.b16 %v4851
          %v5208 = vunpack.c.h.b16 %v4851
          %v5209 = vunpack.c.l.b16 %v4852
          %v5210 = vunpack.c.h.b16 %v4852
          %v5211 = vunpack.c.l.b16 %v4853
          %v5212 = vunpack.c.h.b16 %v4853
          %v5213 = vunpack.c.l.b16 %v4854
          %v5214 = vunpack.c.h.b16 %v4854
          %v5215 = vunpack.c.l.b16 %v4855
          %v5216 = vunpack.c.h.b16 %v4855
          %v5217 = vunpack.c.l.b16 %v4856
          %v5218 = vunpack.c.h.b16 %v4856
          %v5219 = vunpack.c.l.b16 %v4857
          %v5220 = vunpack.c.h.b16 %v4857
          %v5221 = vunpack.c.l.b16 %v4858
          %v5222 = vunpack.c.h.b16 %v4858
          %v5223 = vunpack.c.l.b16 %v4859
          %v5224 = vunpack.c.h.b16 %v4859
          %v5225 = vunpack.c.l.b16 %v4860
          %v5226 = vunpack.c.h.b16 %v4860
          %v5227 = vunpack.c.l.b16 %v4861
          %v5228 = vunpack.c.h.b16 %v4861
          %v5229 = vunpack.c.l.b16 %v4862
          %v5230 = vunpack.c.h.b16 %v4862
          %v5231 = vunpack.c.l.b16 %v4863
          %v5232 = vunpack.c.h.b16 %v4863
          %v5233 = vunpack.c.l.b16 %v4864
          %v5234 = vunpack.c.h.b16 %v4864
          %v5235 = vunpack.c.l.b16 %v4865
          %v5236 = vunpack.c.h.b16 %v4865
          %v5237 = vunpack.c.l.b16 %v4866
          %v5238 = vunpack.c.h.b16 %v4866
          %v5239 = vunpack.c.l.b16 %v4867
          %v5240 = vunpack.c.h.b16 %v4867
          %v5241 = vunpack.c.l.b16 %v4868
          %v5242 = vunpack.c.h.b16 %v4868
          %v5243 = vunpack.c.l.b16 %v4869
          %v5244 = vunpack.c.h.b16 %v4869
          %v5245 = vunpack.c.l.b16 %v4870
          %v5246 = vunpack.c.h.b16 %v4870
          %v5247 = vpack.c.b16 %v4999, %v4997
          %v5248 = vpack.c.b16 %v5000, %v4998
          %v5249 = vpack.c.b16 %v5003, %v5001
          %v5250 = vpack.c.b16 %v5004, %v5002
          %v5251 = vpack.c.b16 %v5007, %v5005
          %v5252 = vpack.c.b16 %v5008, %v5006
          %v5253 = vpack.c.b16 %v5011, %v5009
          %v5254 = vpack.c.b16 %v5012, %v5010
          %v5255 = vpack.c.b16 %v5015, %v5013
          %v5256 = vpack.c.b16 %v5016, %v5014
          %v5257 = vpack.c.b16 %v5019, %v5017
          %v5258 = vpack.c.b16 %v5020, %v5018
          %v5259 = vpack.c.b16 %v5023, %v5021
          %v5260 = vpack.c.b16 %v5024, %v5022
          %v5261 = vpack.c.b16 %v5027, %v5025
          %v5262 = vpack.c.b16 %v5028, %v5026
          %v5263 = vpack.c.b16 %v5031, %v5029
          %v5264 = vpack.c.b16 %v5032, %v5030
          %v5265 = vpack.c.b16 %v5035, %v5033
          %v5266 = vpack.c.b16 %v5036, %v5034
          %v5267 = vpack.c.b16 %v5039, %v5037
          %v5268 = vpack.c.b16 %v5040, %v5038
          %v5269 = vpack.c.b16 %v5043, %v5041
          %v5270 = vpack.c.b16 %v5044, %v5042
          %v5271 = vpack.c.b16 %v5047, %v5045
          %v5272 = vpack.c.b16 %v5048, %v5046
          %v5273 = vpack.c.b16 %v5051, %v5049
          %v5274 = vpack.c.b16 %v5052, %v5050
          %v5275 = vpack.c.b16 %v5055, %v5053
          %v5276 = vpack.c.b16 %v5056, %v5054
          %v5277 = vpack.c.b16 %v5059, %v5057
          %v5278 = vpack.c.b16 %v5060, %v5058
          %v5279 = vpack.c.b16 %v5063, %v5061
          %v5280 = vpack.c.b16 %v5064, %v5062
          %v5281 = vpack.c.b16 %v5067, %v5065
          %v5282 = vpack.c.b16 %v5068, %v5066
          %v5283 = vpack.c.b16 %v5071, %v5069
          %v5284 = vpack.c.b16 %v5072, %v5070
          %v5285 = vpack.c.b16 %v5075, %v5073
          %v5286 = vpack.c.b16 %v5076, %v5074
          %v5287 = vpack.c.b16 %v5079, %v5077
          %v5288 = vpack.c.b16 %v5080, %v5078
          %v5289 = vpack.c.b16 %v5083, %v5081
          %v5290 = vpack.c.b16 %v5084, %v5082
          %v5291 = vpack.c.b16 %v5087, %v5085
          %v5292 = vpack.c.b16 %v5088, %v5086
          %v5293 = vpack.c.b16 %v5091, %v5089
          %v5294 = vpack.c.b16 %v5092, %v5090
          %v5295 = vpack.c.b16 %v5095, %v5093
          %v5296 = vpack.c.b16 %v5096, %v5094
          %v5297 = vpack.c.b16 %v5099, %v5097
          %v5298 = vpack.c.b16 %v5100, %v5098
          %v5299 = vpack.c.b16 %v5103, %v5101
          %v5300 = vpack.c.b16 %v5104, %v5102
          %v5301 = vpack.c.b16 %v5107, %v5105
          %v5302 = vpack.c.b16 %v5108, %v5106
          %v5303 = vpack.c.b16 %v5111, %v5109
          %v5304 = vpack.c.b16 %v5112, %v5110
          %v5305 = vpack.c.b16 %v5115, %v5113
          %v5306 = vpack.c.b16 %v5116, %v5114
          %v5307 = vpack.c.b16 %v5119, %v5117
          %v5308 = vpack.c.b16 %v5120, %v5118
          %v5309 = vpack.c.b16 %v5123, %v5121
          %v5310 = vpack.c.b16 %v5124, %v5122
          %v5311 = vpack.c.b16 %v5127, %v5125
          %v5312 = vpack.c.b16 %v5128, %v5126
          %v5313 = vpack.c.b16 %v5131, %v5129
          %v5314 = vpack.c.b16 %v5132, %v5130
          %v5315 = vpack.c.b16 %v5135, %v5133
          %v5316 = vpack.c.b16 %v5136, %v5134
          %v5317 = vpack.c.b16 %v5139, %v5137
          %v5318 = vpack.c.b16 %v5140, %v5138
          %v5319 = vpack.c.b16 %v5143, %v5141
          %v5320 = vpack.c.b16 %v5144, %v5142
          %v5321 = vpack.c.b16 %v5147, %v5145
          %v5322 = vpack.c.b16 %v5148, %v5146
          %v5323 = vpack.c.b16 %v5151, %v5149
          %v5324 = vpack.c.b16 %v5152, %v5150
          %v5325 = vpack.c.b16 %v5155, %v5153
          %v5326 = vpack.c.b16 %v5156, %v5154
          %v5327 = vpack.c.b16 %v5159, %v5157
          %v5328 = vpack.c.b16 %v5160, %v5158
          %v5329 = vpack.c.b16 %v5163, %v5161
          %v5330 = vpack.c.b16 %v5164, %v5162
          %v5331 = vpack.c.b16 %v5167, %v5165
          %v5332 = vpack.c.b16 %v5168, %v5166
          %v5333 = vpack.c.b16 %v5171, %v5169
          %v5334 = vpack.c.b16 %v5172, %v5170
          %v5335 = vpack.c.b16 %v5175, %v5173
          %v5336 = vpack.c.b16 %v5176, %v5174
          %v5337 = vpack.c.b16 %v5179, %v5177
          %v5338 = vpack.c.b16 %v5180, %v5178
          %v5339 = vpack.c.b16 %v5183, %v5181
          %v5340 = vpack.c.b16 %v5184, %v5182
          %v5341 = vpack.c.b16 %v5187, %v5185
          %v5342 = vpack.c.b16 %v5188, %v5186
          %v5343 = vpack.c.b16 %v5191, %v5189
          %v5344 = vpack.c.b16 %v5192, %v5190
          %v5345 = vpack.c.b16 %v5195, %v5193
          %v5346 = vpack.c.b16 %v5196, %v5194
          %v5347 = vpack.c.b16 %v5199, %v5197
          %v5348 = vpack.c.b16 %v5200, %v5198
          %v5349 = vpack.c.b16 %v5203, %v5201
          %v5350 = vpack.c.b16 %v5204, %v5202
          %v5351 = vpack.c.b16 %v5207, %v5205
          %v5352 = vpack.c.b16 %v5208, %v5206
          %v5353 = vpack.c.b16 %v5211, %v5209
          %v5354 = vpack.c.b16 %v5212, %v5210
          %v5355 = vpack.c.b16 %v5215, %v5213
          %v5356 = vpack.c.b16 %v5216, %v5214
          %v5357 = vpack.c.b16 %v5219, %v5217
          %v5358 = vpack.c.b16 %v5220, %v5218
          %v5359 = vpack.c.b16 %v5223, %v5221
          %v5360 = vpack.c.b16 %v5224, %v5222
          %v5361 = vpack.c.b16 %v5227, %v5225
          %v5362 = vpack.c.b16 %v5228, %v5226
          %v5363 = vpack.c.b16 %v5231, %v5229
          %v5364 = vpack.c.b16 %v5232, %v5230
          %v5365 = vpack.c.b16 %v5235, %v5233
          %v5366 = vpack.c.b16 %v5236, %v5234
          %v5367 = vpack.c.b16 %v5239, %v5237
          %v5368 = vpack.c.b16 %v5240, %v5238
          %v5369 = vpack.c.b16 %v5243, %v5241
          %v5370 = vpack.c.b16 %v5244, %v5242
          %v5371 = vpack.c.b16 %v5245, %v5245
          %v5372 = vpack.c.b16 %v5246, %v5246
          %v5498 = vperm.slane %v4871, 0
          %v5499 = vperm.slane %v4871, 1
          %vm5502 = vcmask 850944
          %v5504 = vsel %vm5502, %v4745, 0
          %vm5506 = vcmask 1043456
          %v5508 = vsel %vm5506, %v5371, 0
          %v5511 = vsel %vm5506, %v5372, 0
          %5513 = vmatpush.bf16.msra.mxu0 %v5261
          %5514 = vmatpush.bf16.msra.mxu0 %v5259
          %5515 = vmatpush.bf16.msra.mxu0 %v5257
          %5516 = vmatpush.bf16.msra.mxu0 %v5255
          %5517 = vmatpush.bf16.msra.mxu0 %v5253
          %5518 = vmatpush.bf16.msra.mxu0 %v5251
          %5519 = vmatpush.bf16.msra.mxu0 %v5249
          %5520 = vmatpush.bf16.msra.mxu0 %v5247
          %5521 = vmatmul.bf16.gmra.mxu0 %v4738
          %v5522 = vpop.f32.mrf.mxu0
          %v5523 = vadd.f32 %v5498, %v5522
          %v5524 = vpop.f32.mrf.mxu0
          %5525 = vdwg.mxu0
          %5526 = vmatpush.bf16.msra.mxu0 %v5277
          %5527 = vmatpush.bf16.msra.mxu0 %v5275
          %5528 = vmatpush.bf16.msra.mxu0 %v5273
          %5529 = vmatpush.bf16.msra.mxu0 %v5271
          %5530 = vmatpush.bf16.msra.mxu0 %v5269
          %5531 = vmatpush.bf16.msra.mxu0 %v5267
          %5532 = vmatpush.bf16.msra.mxu0 %v5265
          %5533 = vmatpush.bf16.msra.mxu0 %v5263
          %5534 = vmatmul.bf16.gmra.mxu0 %v4739
          %v5535 = vpop.f32.mrf.mxu0
          %v5536 = vadd.f32 %v5523, %v5535
          %v5537 = vpop.f32.mrf.mxu0
          %5538 = vdwg.mxu0
          %5539 = vmatpush.bf16.msra.mxu0 %v5293
          %5540 = vmatpush.bf16.msra.mxu0 %v5291
          %5541 = vmatpush.bf16.msra.mxu0 %v5289
          %5542 = vmatpush.bf16.msra.mxu0 %v5287
          %5543 = vmatpush.bf16.msra.mxu0 %v5285
          %5544 = vmatpush.bf16.msra.mxu0 %v5283
          %5545 = vmatpush.bf16.msra.mxu0 %v5281
          %5546 = vmatpush.bf16.msra.mxu0 %v5279
          %5547 = vmatmul.bf16.gmra.mxu0 %v4740
          %v5548 = vpop.f32.mrf.mxu0
          %v5549 = vadd.f32 %v5536, %v5548
          %v5550 = vpop.f32.mrf.mxu0
          %5551 = vdwg.mxu0
          %5552 = vmatpush.bf16.msra.mxu0 %v5309
          %5553 = vmatpush.bf16.msra.mxu0 %v5307
          %5554 = vmatpush.bf16.msra.mxu0 %v5305
          %5555 = vmatpush.bf16.msra.mxu0 %v5303
          %5556 = vmatpush.bf16.msra.mxu0 %v5301
          %5557 = vmatpush.bf16.msra.mxu0 %v5299
          %5558 = vmatpush.bf16.msra.mxu0 %v5297
          %5559 = vmatpush.bf16.msra.mxu0 %v5295
          %5560 = vmatmul.bf16.gmra.mxu0 %v4741
          %v5561 = vpop.f32.mrf.mxu0
          %v5562 = vadd.f32 %v5549, %v5561
          %v5563 = vpop.f32.mrf.mxu0
          %5564 = vdwg.mxu0
          %5565 = vmatpush.bf16.msra.mxu0 %v5325
          %5566 = vmatpush.bf16.msra.mxu0 %v5323
          %5567 = vmatpush.bf16.msra.mxu0 %v5321
          %5568 = vmatpush.bf16.msra.mxu0 %v5319
          %5569 = vmatpush.bf16.msra.mxu0 %v5317
          %5570 = vmatpush.bf16.msra.mxu0 %v5315
          %5571 = vmatpush.bf16.msra.mxu0 %v5313
          %5572 = vmatpush.bf16.msra.mxu0 %v5311
          %5573 = vmatmul.bf16.gmra.mxu0 %v4742
          %v5574 = vpop.f32.mrf.mxu0
          %v5575 = vadd.f32 %v5562, %v5574
          %v5576 = vpop.f32.mrf.mxu0
          %5577 = vdwg.mxu0
          %5578 = vmatpush.bf16.msra.mxu0 %v5341
          %5579 = vmatpush.bf16.msra.mxu0 %v5339
          %5580 = vmatpush.bf16.msra.mxu0 %v5337
          %5581 = vmatpush.bf16.msra.mxu0 %v5335
          %5582 = vmatpush.bf16.msra.mxu0 %v5333
          %5583 = vmatpush.bf16.msra.mxu0 %v5331
          %5584 = vmatpush.bf16.msra.mxu0 %v5329
          %5585 = vmatpush.bf16.msra.mxu0 %v5327
          %5586 = vmatmul.bf16.gmra.mxu0 %v4743
          %v5587 = vpop.f32.mrf.mxu0
          %v5588 = vadd.f32 %v5575, %v5587
          %v5589 = vpop.f32.mrf.mxu0
          %5590 = vdwg.mxu0
          %5591 = vmatpush.bf16.msra.mxu0 %v5357
          %5592 = vmatpush.bf16.msra.mxu0 %v5355
          %5593 = vmatpush.bf16.msra.mxu0 %v5353
          %5594 = vmatpush.bf16.msra.mxu0 %v5351
          %5595 = vmatpush.bf16.msra.mxu0 %v5349
          %5596 = vmatpush.bf16.msra.mxu0 %v5347
          %5597 = vmatpush.bf16.msra.mxu0 %v5345
          %5598 = vmatpush.bf16.msra.mxu0 %v5343
          %5599 = vmatmul.bf16.gmra.mxu0 %v4744
          %v5600 = vpop.f32.mrf.mxu0
          %v5601 = vadd.f32 %v5588, %v5600
          %v5602 = vpop.f32.mrf.mxu0
          %5603 = vdwg.mxu0
          %5604 = vmatpush.bf16.msra.mxu0 0
          %5605 = vmatpush.bf16.msra.mxu0 %v5508
          %5606 = vmatpush.bf16.msra.mxu0 %v5369
          %5607 = vmatpush.bf16.msra.mxu0 %v5367
          %5608 = vmatpush.bf16.msra.mxu0 %v5365
          %5609 = vmatpush.bf16.msra.mxu0 %v5363
          %5610 = vmatpush.bf16.msra.mxu0 %v5361
          %5611 = vmatpush.bf16.msra.mxu0 %v5359
          %5612 = vmatmul.bf16.gmra.mxu0 %v5504
          %v5613 = vpop.f32.mrf.mxu0
          %v5614 = vadd.f32 %v5601, %v5613
          %v5615 = vpop.f32.mrf.mxu0
          %5616 = vdwg.mxu0
          %5617 = vmatpush.bf16.msra.mxu0 %v5262
          %5618 = vmatpush.bf16.msra.mxu0 %v5260
          %5619 = vmatpush.bf16.msra.mxu0 %v5258
          %5620 = vmatpush.bf16.msra.mxu0 %v5256
          %5621 = vmatpush.bf16.msra.mxu0 %v5254
          %5622 = vmatpush.bf16.msra.mxu0 %v5252
          %5623 = vmatpush.bf16.msra.mxu0 %v5250
          %5624 = vmatpush.bf16.msra.mxu0 %v5248
          %5625 = vmatmul.bf16.gmra.mxu0 %v4738
          %v5626 = vpop.f32.mrf.mxu0
          %v5627 = vadd.f32 %v5499, %v5626
          %v5628 = vpop.f32.mrf.mxu0
          %5629 = vdwg.mxu0
          %5630 = vmatpush.bf16.msra.mxu0 %v5278
          %5631 = vmatpush.bf16.msra.mxu0 %v5276
          %5632 = vmatpush.bf16.msra.mxu0 %v5274
          %5633 = vmatpush.bf16.msra.mxu0 %v5272
          %5634 = vmatpush.bf16.msra.mxu0 %v5270
          %5635 = vmatpush.bf16.msra.mxu0 %v5268
          %5636 = vmatpush.bf16.msra.mxu0 %v5266
          %5637 = vmatpush.bf16.msra.mxu0 %v5264
          %5638 = vmatmul.bf16.gmra.mxu0 %v4739
          %v5639 = vpop.f32.mrf.mxu0
          %v5640 = vadd.f32 %v5627, %v5639
          %v5641 = vpop.f32.mrf.mxu0
          %5642 = vdwg.mxu0
          %5643 = vmatpush.bf16.msra.mxu0 %v5294
          %5644 = vmatpush.bf16.msra.mxu0 %v5292
          %5645 = vmatpush.bf16.msra.mxu0 %v5290
          %5646 = vmatpush.bf16.msra.mxu0 %v5288
          %5647 = vmatpush.bf16.msra.mxu0 %v5286
          %5648 = vmatpush.bf16.msra.mxu0 %v5284
          %5649 = vmatpush.bf16.msra.mxu0 %v5282
          %5650 = vmatpush.bf16.msra.mxu0 %v5280
          %5651 = vmatmul.bf16.gmra.mxu0 %v4740
          %v5652 = vpop.f32.mrf.mxu0
          %v5653 = vadd.f32 %v5640, %v5652
          %v5654 = vpop.f32.mrf.mxu0
          %5655 = vdwg.mxu0
          %5656 = vmatpush.bf16.msra.mxu0 %v5310
          %5657 = vmatpush.bf16.msra.mxu0 %v5308
          %5658 = vmatpush.bf16.msra.mxu0 %v5306
          %5659 = vmatpush.bf16.msra.mxu0 %v5304
          %5660 = vmatpush.bf16.msra.mxu0 %v5302
          %5661 = vmatpush.bf16.msra.mxu0 %v5300
          %5662 = vmatpush.bf16.msra.mxu0 %v5298
          %5663 = vmatpush.bf16.msra.mxu0 %v5296
          %5664 = vmatmul.bf16.gmra.mxu0 %v4741
          %v5665 = vpop.f32.mrf.mxu0
          %v5666 = vadd.f32 %v5653, %v5665
          %v5667 = vpop.f32.mrf.mxu0
          %5668 = vdwg.mxu0
          %5669 = vmatpush.bf16.msra.mxu0 %v5326
          %5670 = vmatpush.bf16.msra.mxu0 %v5324
          %5671 = vmatpush.bf16.msra.mxu0 %v5322
          %5672 = vmatpush.bf16.msra.mxu0 %v5320
          %5673 = vmatpush.bf16.msra.mxu0 %v5318
          %5674 = vmatpush.bf16.msra.mxu0 %v5316
          %5675 = vmatpush.bf16.msra.mxu0 %v5314
          %5676 = vmatpush.bf16.msra.mxu0 %v5312
          %5677 = vmatmul.bf16.gmra.mxu0 %v4742
          %v5678 = vpop.f32.mrf.mxu0
          %v5679 = vadd.f32 %v5666, %v5678
          %v5680 = vpop.f32.mrf.mxu0
          %5681 = vdwg.mxu0
          %5682 = vmatpush.bf16.msra.mxu0 %v5342
          %5683 = vmatpush.bf16.msra.mxu0 %v5340
          %5684 = vmatpush.bf16.msra.mxu0 %v5338
          %5685 = vmatpush.bf16.msra.mxu0 %v5336
          %5686 = vmatpush.bf16.msra.mxu0 %v5334
          %5687 = vmatpush.bf16.msra.mxu0 %v5332
          %5688 = vmatpush.bf16.msra.mxu0 %v5330
          %5689 = vmatpush.bf16.msra.mxu0 %v5328
          %5690 = vmatmul.bf16.gmra.mxu0 %v4743
          %v5691 = vpop.f32.mrf.mxu0
          %v5692 = vadd.f32 %v5679, %v5691
          %v5693 = vpop.f32.mrf.mxu0
          %5694 = vdwg.mxu0
          %5695 = vmatpush.bf16.msra.mxu0 %v5358
          %5696 = vmatpush.bf16.msra.mxu0 %v5356
          %5697 = vmatpush.bf16.msra.mxu0 %v5354
          %5698 = vmatpush.bf16.msra.mxu0 %v5352
          %5699 = vmatpush.bf16.msra.mxu0 %v5350
          %5700 = vmatpush.bf16.msra.mxu0 %v5348
          %5701 = vmatpush.bf16.msra.mxu0 %v5346
          %5702 = vmatpush.bf16.msra.mxu0 %v5344
          %5703 = vmatmul.bf16.gmra.mxu0 %v4744
          %v5704 = vpop.f32.mrf.mxu0
          %v5705 = vadd.f32 %v5692, %v5704
          %v5706 = vpop.f32.mrf.mxu0
          %5707 = vdwg.mxu0
          %5708 = vmatpush.bf16.msra.mxu0 0
          %5709 = vmatpush.bf16.msra.mxu0 %v5511
          %5710 = vmatpush.bf16.msra.mxu0 %v5370
          %5711 = vmatpush.bf16.msra.mxu0 %v5368
          %5712 = vmatpush.bf16.msra.mxu0 %v5366
          %5713 = vmatpush.bf16.msra.mxu0 %v5364
          %5714 = vmatpush.bf16.msra.mxu0 %v5362
          %5715 = vmatpush.bf16.msra.mxu0 %v5360
          %5716 = vmatmul.bf16.gmra.mxu0 %v5504
          %v5717 = vpop.f32.mrf.mxu0
          %v5718 = vadd.f32 %v5705, %v5717
          %v5719 = vpop.f32.mrf.mxu0
          %5720 = vdwg.mxu0
          %vm5721 = vcmp.ge.f32.partialorder %v5614, 0.0
          %vm5722 = vcmp.ge.f32.partialorder %v5718, 0.0
          %s5723 = sld [smem:[#allocation9]]
          %v5724 = vstv %s5723
          %v5725 = vmul.f32 %v5724, %v5614
          %v5726 = vmul.f32 %v5724, %v5718
          %v5727 = vsel %vm5721, %v5614, %v5725
          %v5728 = vsel %vm5722, %v5718, %v5726
          %v5729 = vperm.slane %v5727, 0
          %v5730 = vperm.slane %v5728, 0
          %v5731 = vmul.f32 %v3744, %v5729
          %v5732 = vmul.f32 %v3745, %v5730
          %v5733 = vmul.f32 %v3746, %v5729
          %v5734 = vmul.f32 %v3747, %v5730
          %v5735 = vmul.f32 %v3748, %v5729
          %v5736 = vmul.f32 %v3749, %v5730
          %v5737 = vmul.f32 %v3750, %v5729
          %v5738 = vmul.f32 %v3751, %v5730
          %v5739 = vmul.f32 %v3752, %v5729
          %v5740 = vmul.f32 %v3753, %v5730
          %v5741 = vmul.f32 %v3754, %v5729
          %v5742 = vmul.f32 %v3755, %v5730
          %v5743 = vmul.f32 %v3756, %v5729
          %v5744 = vmul.f32 %v3757, %v5730
          %v5745 = vmul.f32 %v3758, %v5729
          %v5746 = vmul.f32 %v3759, %v5730
          %vm5747 = vcmp.ge.f32.partialorder %v5731, 0.0
          %vm5748 = vcmp.ge.f32.partialorder %v5732, 0.0
          %vm5749 = vcmp.ge.f32.partialorder %v5733, 0.0
          %vm5750 = vcmp.ge.f32.partialorder %v5734, 0.0
          %vm5751 = vcmp.ge.f32.partialorder %v5735, 0.0
          %vm5752 = vcmp.ge.f32.partialorder %v5736, 0.0
          %vm5753 = vcmp.ge.f32.partialorder %v5737, 0.0
          %vm5754 = vcmp.ge.f32.partialorder %v5738, 0.0
          %vm5755 = vcmp.ge.f32.partialorder %v5739, 0.0
          %vm5756 = vcmp.ge.f32.partialorder %v5740, 0.0
          %vm5757 = vcmp.ge.f32.partialorder %v5741, 0.0
          %vm5758 = vcmp.ge.f32.partialorder %v5742, 0.0
          %vm5759 = vcmp.ge.f32.partialorder %v5743, 0.0
          %vm5760 = vcmp.ge.f32.partialorder %v5744, 0.0
          %vm5761 = vcmp.ge.f32.partialorder %v5745, 0.0
          %vm5762 = vcmp.ge.f32.partialorder %v5746, 0.0
          %s5763 = sld [smem:[#allocation9 + $0x1]]
          %v5764 = vstv %s5763
          %v5765 = vmul.f32 %v5764, %v5731
          %v5766 = vmul.f32 %v5764, %v5732
          %v5767 = vmul.f32 %v5764, %v5733
          %v5768 = vmul.f32 %v5764, %v5734
          %v5769 = vmul.f32 %v5764, %v5735
          %v5770 = vmul.f32 %v5764, %v5736
          %v5771 = vmul.f32 %v5764, %v5737
          %v5772 = vmul.f32 %v5764, %v5738
          %v5773 = vmul.f32 %v5764, %v5739
          %v5774 = vmul.f32 %v5764, %v5740
          %v5775 = vmul.f32 %v5764, %v5741
          %v5776 = vmul.f32 %v5764, %v5742
          %v5777 = vmul.f32 %v5764, %v5743
          %v5778 = vmul.f32 %v5764, %v5744
          %v5779 = vmul.f32 %v5764, %v5745
          %v5780 = vmul.f32 %v5764, %v5746
          %v5781 = vsel %vm5747, %v5731, %v5765
          %v5782 = vsel %vm5748, %v5732, %v5766
          %v5783 = vsel %vm5749, %v5733, %v5767
          %v5784 = vsel %vm5750, %v5734, %v5768
          %v5785 = vsel %vm5751, %v5735, %v5769
          %v5786 = vsel %vm5752, %v5736, %v5770
          %v5787 = vsel %vm5753, %v5737, %v5771
          %v5788 = vsel %vm5754, %v5738, %v5772
          %v5789 = vsel %vm5755, %v5739, %v5773
          %v5790 = vsel %vm5756, %v5740, %v5774
          %v5791 = vsel %vm5757, %v5741, %v5775
          %v5792 = vsel %vm5758, %v5742, %v5776
          %v5793 = vsel %vm5759, %v5743, %v5777
          %v5794 = vsel %vm5760, %v5744, %v5778
          %v5795 = vsel %vm5761, %v5745, %v5779
          %v5796 = vsel %vm5762, %v5746, %v5780
          %5797 = vst [vmem:[%s424] sm:$0xff] %v5781
          %5798 = vst.msk [vmem:[%s424 + $0x8] sm:$0xff] %vm2017, %v5782
          %5799 = vst [vmem:[%s424 + $0x10] sm:$0xff] %v5783
          %5800 = vst.msk [vmem:[%s424 + $0x18] sm:$0xff] %vm2017, %v5784
          %5801 = vst [vmem:[%s424 + $0x20] sm:$0xff] %v5785
          %5802 = vst.msk [vmem:[%s424 + $0x28] sm:$0xff] %vm2017, %v5786
          %5803 = vst [vmem:[%s424 + $0x30] sm:$0xff] %v5787
          %5804 = vst.msk [vmem:[%s424 + $0x38] sm:$0xff] %vm2017, %v5788
          %5805 = vst [vmem:[%s424 + $0x40] sm:$0xff] %v5789
          %5806 = vst.msk [vmem:[%s424 + $0x48] sm:$0xff] %vm2017, %v5790
          %5807 = vst [vmem:[%s424 + $0x50] sm:$0xff] %v5791
          %5808 = vst.msk [vmem:[%s424 + $0x58] sm:$0xff] %vm2017, %v5792
          %5809 = vst [vmem:[%s424 + $0x60] sm:$0xff] %v5793
          %5810 = vst.msk [vmem:[%s424 + $0x68] sm:$0xff] %vm2017, %v5794
          %5811 = vst [vmem:[%s424 + $0x70] sm:$0xff] %v5795
          %5812 = vst.msk [vmem:[%s424 + $0x78] sm:$0xff] %vm2017, %v5796
        $region80: #{xception_a_forward.5} parent=55 // pred_fallthru
          _
        %s5813 = sand.u32 %s255, 1
        %s5814 = scalar_lea.sflag [#allocation6], %s5813
        %s5815 = sand.u32 %s255, 1
        %s5816 = smul.addr %s5815, 128
        %s5817 = scalar_lea.vmem [#allocation11], %s5816
        // Predicated region
        $region81: #{xception_a_forward.5} parent=55 // pred_check
          %p5818 = pneg %p265
        $region82: #{xception_a_forward.5} parent=55 // pred_check_branch
          %5820 = sbr.rel (%p5818) target = $region84
        $region83: #{xception_a_forward.5} parent=55 // pred_region
          %5822 = vsyncadd %s5814, 0
          %s5823 = smul.addr %s30, 16
          %s5824 = smul.addr %s5823, 8
          %s5825 = scalar_lea.hbm %s9, %s5824
          %s5826 = sshll.u32 %s5817, 4
          %s5827 = int_to_ptr.vmem [resolvable:$true] %s5826
          %s5828 = sshll.u32 %s5825, 4
          %s5829 = int_to_ptr.hbm [resolvable:$true] %s5828
          %5834 = dma.vmem_to_hbm [thread:$0]  %s5827, 2048, %s5829, %s5814, 256, 256, 16
        $region84: #{xception_a_forward.5} parent=55 // pred_fallthru
          _
      $region56: #{xception_a_forward.5} parent=5 // pred_fallthru
        _
      %p5835 = scmp.le.s32.totalorder 2, %s21
      // Predicated region
      $region85: #{xception_a_forward.5} parent=5 // pred_check
        %p5836 = pneg %p5835
      $region86: #{xception_a_forward.5} parent=5 // pred_check_branch
        %5838 = sbr.rel (%p5836) target = $region88
      $region87: #{xception_a_forward.5} parent=5 // pred_region
        %s5839 = ssub.s32 %s21, 2
        // Predicated region
        $region89: #{xception_a_forward.5} parent=87 // pred_check
          %p5840 = pneg %p271
        $region90: #{xception_a_forward.5} parent=87 // pred_check_branch
          %5842 = sbr.rel (%p5840) target = $region92
        $region91: #{xception_a_forward.5} parent=87 // pred_region
          %s5843 = sand.u32 %s256, 1
          %s5844 = scalar_lea.sflag [#allocation6], %s5843
          %s5845 = sand.u32 %s256, 1
          %s5846 = smul.addr %s5845, 128
          %s5847 = scalar_lea.vmem [#allocation11], %s5846
          %5849 = dma.done %s5844, 2048
        $region92: #{xception_a_forward.5} parent=87 // pred_fallthru
          _
      $region88: #{xception_a_forward.5} parent=5 // pred_fallthru
        _
    $region6: #{xception_a_forward.5} parent=1 // loop_footer
      %s25 = sadd.s32 1, %s21
    $region7: #{xception_a_forward.5} parent=1 // loop_footer_branch
      %20 = sbr.rel target = $region3
    $region8: #{xception_a_forward.5} parent=1 // loop_exit
      _
    %5850 = vsyncpa [#allocation5], 1
    %s5851 = scalar_lea.sflag [#allocation5], 1
    %5852 = vsyncpa %s5851, 1
    %5853 = vsyncpa [#allocation6], 1
    %s5854 = scalar_lea.sflag [#allocation6], 1
    %5855 = vsyncpa %s5854, 1
    %5856 = vsyncpa [#allocation7], 1
    %s5857 = scalar_lea.sflag [#allocation7], 1
    %5858 = vsyncpa %s5857, 1
    %5859 = vsyncpa [#allocation10], 1

</llo_original>
